<compile_context>
chip_gen: v7x
topology: tpu7x:2x2x1
jax: 0.10.0
libtpu: 0.0.40
codegen_flags: <defaults>
</compile_context>

<pallas_src>
import numpy as np
import jax
import jax.numpy as jnp
from jax.experimental import pallas as pl
from jax.experimental.pallas import tpu as pltpu

LEAKY_SLOPE = 0.2
CP = 8                 # final conv output channels, padded 3 -> 8
UP_TILE_PIX = 1024     # pixels per up-sample row tile
CONV_TILE_PIX = 2048   # pixels per conv row tile (block)
CONV_STRIP_PIX = 256   # pixels per in-kernel accumulation strip


def _row_tile(rows, width, max_pixels):
    """Largest row count that divides `rows` with rows*width <= max_pixels."""
    t = max(1, min(rows, max_pixels // max(width, 1)))
    while rows % t:
        t -= 1
    return t


# ----------------------------------------------------------------------------
# Kernel 1: tiny dense matmul + bias + LeakyReLU (first ConvTranspose on 1x1)
# ----------------------------------------------------------------------------
def _dense_leaky_kernel(x_ref, w_ref, b_ref, o_ref):
    y = jnp.dot(x_ref[...], w_ref[...], preferred_element_type=jnp.float32)
    y = y + b_ref[...]
    y = jnp.where(y >= 0, y, LEAKY_SLOPE * y)
    o_ref[...] = y.astype(o_ref.dtype)


def dense_leaky(x, w, b):
    m, n = x.shape[0], w.shape[1]
    vm = pl.BlockSpec(memory_space=pltpu.MemorySpace.VMEM)
    return pl.pallas_call(
        _dense_leaky_kernel,
        out_shape=jax.ShapeDtypeStruct((m, n), jnp.bfloat16),
        in_specs=[vm, vm, vm],
        out_specs=vm,
    )(x, w, b)


# ----------------------------------------------------------------------------
# Kernel 2: ConvTranspose(64, 64, k=2, s=2) as row-tiled matmul with the
# pixel shuffle absorbed into the output layout.
# ----------------------------------------------------------------------------
def _upsample_kernel(x_ref, w_ref, b_ref, o_ref):
    th, wdt, cin = x_ref.shape[1], x_ref.shape[2], x_ref.shape[3]
    x = x_ref[0].reshape(th * wdt, cin)
    y = jnp.dot(x, w_ref[0], preferred_element_type=jnp.float32)
    y = y + b_ref[...]
    y = jnp.where(y >= 0, y, LEAKY_SLOPE * y)
    o_ref[...] = y.reshape(o_ref.shape).astype(o_ref.dtype)


def upsample_x2(x, wk, bk):
    # x: (B, H, W, Cin) bf16 ; wk: (2, Cin, 2*Cout) bf16 ; bk: (1, 2*Cout) f32
    B, H, W, Cin = x.shape
    two_cout = wk.shape[-1]
    cout = two_cout // 2
    th = _row_tile(H, W, UP_TILE_PIX)
    grid = (B, H // th, 2)
    out = pl.pallas_call(
        _upsample_kernel,
        out_shape=jax.ShapeDtypeStruct((B, H, 2, W, two_cout), jnp.bfloat16),
        grid_spec=pltpu.PrefetchScalarGridSpec(
            num_scalar_prefetch=0,
            grid=grid,
            in_specs=[
                pl.BlockSpec((1, th, W, Cin), lambda b, i, kh: (b, i, 0, 0)),
                pl.BlockSpec((1, Cin, two_cout), lambda b, i, kh: (kh, 0, 0)),
                pl.BlockSpec((1, two_cout), lambda b, i, kh: (0, 0)),
            ],
            out_specs=pl.BlockSpec((1, th, 1, W, two_cout),
                                   lambda b, i, kh: (b, i, kh, 0, 0)),
        ),
        compiler_params=pltpu.CompilerParams(
            dimension_semantics=("parallel", "parallel", "arbitrary")),
    )(x, wk, bk)
    # (B, H, 2, W, 2*Cout) in row-major order IS (B, 2H, 2W, Cout): free reshape.
    return out.reshape(B, 2 * H, 2 * W, cout)


# ----------------------------------------------------------------------------
# Kernel 3: 3x3 "same" conv (flipped ConvTranspose kernel) + bias + tanh,
# row-tiled with halo rows and in-kernel zero padding.
# ----------------------------------------------------------------------------
def _make_conv_kernel(TH, W, RH):
    def conv3x3_tanh_kernel(xm_ref, xt_ref, xb_ref, w_ref, b_ref, o_ref, xpad):
        i = pl.program_id(1)
        nt = pl.num_programs(1)
        C = xm_ref.shape[-1]
        cp = o_ref.shape[-1]

        # Build the zero-padded tile (TH+2, W+2, C) in VMEM scratch.
        xpad[...] = jnp.zeros(xpad.shape, xpad.dtype)
        xpad[1:TH + 1, 1:W + 1, :] = xm_ref[0]

        @pl.when(i > 0)
        def _():
            xpad[0:1, 1:W + 1, :] = xt_ref[0]

        @pl.when(i < nt - 1)
        def _():
            xpad[TH + 1:TH + 2, 1:W + 1, :] = xb_ref[0]

        bias = b_ref[...]
        # Accumulate the 9 taps per small row strip (bounded register pressure);
        # patches are static ref views of the padded scratch.
        for r in range(TH // RH):
            acc = jnp.zeros((RH * W, cp), jnp.float32)
            for kh in range(3):
                for kw in range(3):
                    patch = xpad[r * RH + kh:r * RH + kh + RH,
                                 kw:kw + W, :].reshape(RH * W, C)
                    acc = acc + jnp.dot(patch, w_ref[kh, kw],
                                        preferred_element_type=jnp.float32)
            y = jnp.tanh(acc + bias)
            o_ref[0, r * RH:(r + 1) * RH, :, :] = y.reshape(RH, W, cp)

    return conv3x3_tanh_kernel


def conv3x3_tanh(x, wf, bf):
    # x: (B, H, W, C) bf16 ; wf: (3, 3, C, CP) bf16 ; bf: (1, CP) f32
    B, H, W, C = x.shape
    cp = wf.shape[-1]
    TH = _row_tile(H, W, CONV_TILE_PIX)
    RH = _row_tile(TH, W, CONV_STRIP_PIX)
    grid = (B, H // TH)
    kernel = _make_conv_kernel(TH, W, RH)
    return pl.pallas_call(
        kernel,
        out_shape=jax.ShapeDtypeStruct((B, H, W, cp), jnp.float32),
        grid_spec=pltpu.PrefetchScalarGridSpec(
            num_scalar_prefetch=0,
            grid=grid,
            in_specs=[
                # current row tile
                pl.BlockSpec((1, TH, W, C), lambda b, i: (b, i, 0, 0)),
                # 1-row top halo (clamped; masked out at the image edge)
                pl.BlockSpec((1, 1, W, C),
                             lambda b, i: (b, jnp.maximum(i * TH - 1, 0), 0, 0)),
                # 1-row bottom halo (clamped; masked out at the image edge)
                pl.BlockSpec((1, 1, W, C),
                             lambda b, i: (b, jnp.minimum((i + 1) * TH, H - 1), 0, 0)),
                # weights / bias stay resident
                pl.BlockSpec((3, 3, C, cp), lambda b, i: (0, 0, 0, 0)),
                pl.BlockSpec((1, cp), lambda b, i: (0, 0)),
            ],
            out_specs=pl.BlockSpec((1, TH, W, cp), lambda b, i: (b, i, 0, 0)),
            scratch_shapes=[pltpu.VMEM((TH + 2, W + 2, C), jnp.bfloat16)],
        ),
        compiler_params=pltpu.CompilerParams(
            dimension_semantics=("parallel", "arbitrary")),
    )(x, x, x, wf, bf)


# ----------------------------------------------------------------------------
# Parameter init (deterministic, PyTorch ConvTranspose2d layout (Cin,Cout,kH,kW)).
# ----------------------------------------------------------------------------
def init_params(key, latent_size, img_size):
    inter = 64

    def conv_t_init(k, cin, cout, ksz):
        kw_, kb_ = jax.random.split(k)
        bound = 1.0 / np.sqrt(cin * ksz * ksz)
        w = jax.random.uniform(kw_, (cin, cout, ksz, ksz), jnp.float32,
                               minval=-bound, maxval=bound)
        b = jax.random.uniform(kb_, (cout,), jnp.float32,
                               minval=-bound, maxval=bound)
        return w, b

    n_up = int(np.log2(img_size // 8))
    assert 8 * (2 ** n_up) == img_size
    keys = jax.random.split(key, n_up + 2)
    first = conv_t_init(keys[0], latent_size, inter, 8)
    ups = [conv_t_init(keys[1 + i], inter, inter, 2) for i in range(n_up)]
    last = conv_t_init(keys[-1], inter, 3, 3)
    return {"first": first, "ups": ups, "last": last}


# ----------------------------------------------------------------------------
# Forward pass (Pallas kernels for every matmul / conv / activation hot path)
# ----------------------------------------------------------------------------
def vae_decoder_forward(latent, params, img_size):
    B = latent.shape[0]
    inter = params["first"][0].shape[1]
    z = latent.reshape(B, -1).astype(jnp.bfloat16)

    # --- layer 1: ConvTranspose(latent, 64, k=8, s=1) on a 1x1 input ---------
    w1, b1 = params["first"]
    w1r = jnp.transpose(w1, (0, 2, 3, 1)).reshape(w1.shape[0], 8 * 8 * inter)
    b1r = jnp.tile(b1, 8 * 8)[None, :]
    y = dense_leaky(z, w1r.astype(jnp.bfloat16), b1r)        # (B, 8*8*inter)
    x = y.reshape(B, 8, 8, inter)                             # NHWC, bf16

    # --- up-sampling layers: ConvTranspose(64, 64, k=2, s=2) -----------------
    for (w2, b2) in params["ups"]:
        cin, cout = w2.shape[0], w2.shape[1]
        # wk[kh][cin, kw*cout + c] = w2[cin, c, kh, kw]
        wk = jnp.transpose(w2, (2, 0, 3, 1)).reshape(2, cin, 2 * cout)
        bk = jnp.tile(b2, 2)[None, :].astype(jnp.float32)
        x = upsample_x2(x, wk.astype(jnp.bfloat16), bk)
    assert x.shape[1] == img_size and x.shape[2] == img_size

    # --- final layer: ConvTranspose(64, 3, k=3, s=1, p=1) + tanh -------------
    w3, b3 = params["last"]
    c3 = w3.shape[1]
    wf = jnp.transpose(w3[:, :, ::-1, ::-1], (2, 3, 0, 1))    # (3,3,Cin,3)
    wf = jnp.pad(wf, ((0, 0), (0, 0), (0, 0), (0, CP - c3)))
    bf = jnp.pad(b3, (0, CP - c3))[None, :].astype(jnp.float32)
    out = conv3x3_tanh(x, wf.astype(jnp.bfloat16), bf)        # (B,H,W,CP) f32
    out = out[:, :, :, :c3]
    return jnp.transpose(out, (0, 3, 1, 2))                   # NCHW, like PyTorch


# ----------------------------------------------------------------------------
# Pure-JAX f32 reference (written directly from the ConvTranspose2d definition)
# ----------------------------------------------------------------------------
def reference_forward(latent, params):
    HI = jax.lax.Precision.HIGHEST
    B = latent.shape[0]
    z = latent.reshape(B, -1)

    w1, b1 = params["first"]
    x = jnp.einsum("bc,cohw->bohw", z, w1, precision=HI)
    x = x + b1[None, :, None, None]
    x = jnp.where(x >= 0, x, LEAKY_SLOPE * x)

    for (w2, b2) in params["ups"]:
        Bb, C, H, W = x.shape
        y = jnp.einsum("bchw,cokl->bohwkl", x, w2, precision=HI)
        y = y.transpose(0, 1, 2, 4, 3, 5).reshape(Bb, w2.shape[1], 2 * H, 2 * W)
        y = y + b2[None, :, None, None]
        x = jnp.where(y >= 0, y, LEAKY_SLOPE * y)

    w3, b3 = params["last"]
    Bb, C, H, W = x.shape
    cout = w3.shape[1]
    full = jnp.zeros((Bb, cout, H + 2, W + 2), jnp.float32)
    for kh in range(3):
        for kw in range(3):
            contrib = jnp.einsum("bchw,co->bohw", x, w3[:, :, kh, kw],
                                 precision=HI)
            full = full.at[:, :, kh:kh + H, kw:kw + W].add(contrib)
    out = full[:, :, 1:1 + H, 1:1 + W] + b3[None, :, None, None]
    return jnp.tanh(out)


if __name__ == "__main__":
    B, latent_size, img_size = 2, 16, 16
    key = jax.random.PRNGKey(0)
    kp, kz = jax.random.split(key)
    params = init_params(kp, latent_size, img_size)
    latent = jax.random.normal(kz, (B, latent_size), jnp.float32)

    fwd = jax.jit(vae_decoder_forward, static_argnums=2)
    out = jax.block_until_ready(fwd(latent, params, img_size))
    assert out.shape == (B, 3, img_size, img_size), out.shape

    ref = jax.block_until_ready(reference_forward(latent, params))
    # bf16 activations / weights with f32 accumulation: compare at 1e-2.
    np.testing.assert_allclose(np.asarray(out), np.asarray(ref),
                               atol=1e-2, rtol=1e-2)
    print("KERNEL_OK")
</pallas_src>

<mosaic_0001>
module attributes {stable_mosaic.version = 11 : i64} {
  func.func @_dense_leaky_kernel(%arg0: memref<2x16xbf16, #tpu.memory_space<vmem>>, %arg1: memref<16x4096xbf16, #tpu.memory_space<vmem>>, %arg2: memref<1x4096xf32, #tpu.memory_space<vmem>>, %arg3: memref<2x4096xbf16, #tpu.memory_space<vmem>>) attributes {dimension_semantics = [], scalar_prefetch = 0 : i64, scratch_operands = 0 : i64, tpu.core_type = #tpu.core_type<tc>} {
    %c0 = arith.constant 0 : index
    %c0_0 = arith.constant 0 : index
    %0 = vector.load %arg0[%c0, %c0_0] : memref<2x16xbf16, #tpu.memory_space<vmem>>, vector<2x16xbf16>
    %c0_1 = arith.constant 0 : index
    %c0_2 = arith.constant 0 : index
    %1 = vector.load %arg1[%c0_1, %c0_2] : memref<16x4096xbf16, #tpu.memory_space<vmem>>, vector<16x4096xbf16>
    %cst = arith.constant dense<0.000000e+00> : vector<2x4096xf32>
    %2 = tpu.matmul %0, %1, %cst {dimension_numbers = #tpu.dot_dimension_numbers<[1], [0], [0], [1], [0, 0, 1, 1], [], []>} : vector<2x16xbf16>, vector<16x4096xbf16>, vector<2x4096xf32> -> vector<2x4096xf32>
    %c0_3 = arith.constant 0 : index
    %c0_4 = arith.constant 0 : index
    %3 = vector.load %arg2[%c0_3, %c0_4] : memref<1x4096xf32, #tpu.memory_space<vmem>>, vector<1x4096xf32>
    %4 = vector.broadcast %3 : vector<1x4096xf32> to vector<2x4096xf32>
    %5 = arith.addf %2, %4 : vector<2x4096xf32>
    %cst_5 = arith.constant 0.000000e+00 : f32
    %6 = vector.broadcast %cst_5 : f32 to vector<2x4096xf32>
    %7 = arith.cmpf oge, %5, %6 : vector<2x4096xf32>
    %cst_6 = arith.constant 2.000000e-01 : f32
    %8 = vector.broadcast %cst_6 : f32 to vector<2x4096xf32>
    %9 = arith.mulf %8, %5 : vector<2x4096xf32>
    %10 = arith.select %7, %5, %9 : vector<2x4096xi1>, vector<2x4096xf32>
    %11 = arith.truncf %10 : vector<2x4096xf32> to vector<2x4096xbf16>
    %c0_7 = arith.constant 0 : index
    %c0_8 = arith.constant 0 : index
    %12 = vector.load %arg3[%c0_7, %c0_8] : memref<2x4096xbf16, #tpu.memory_space<vmem>>, vector<2x4096xbf16>
    tpu.vector_store %arg3[%c0_7, %c0_8], %11 {strides = array<i32>} : memref<2x4096xbf16, #tpu.memory_space<vmem>>, vector<2x4096xbf16>,
    return
  }
}

module attributes {stable_mosaic.version = 11 : i64} {
  func.func @_upsample_kernel(%arg0: i32, %arg1: i32, %arg2: i32, %arg3: memref<1x8x8x64xbf16, #tpu.memory_space<vmem>>, %arg4: memref<1x64x128xbf16, #tpu.memory_space<vmem>>, %arg5: memref<1x128xf32, #tpu.memory_space<vmem>>, %arg6: memref<1x8x1x8x128xbf16, #tpu.memory_space<vmem>>) attributes {dimension_semantics = [#tpu.dimension_semantics<parallel>, #tpu.dimension_semantics<parallel>, #tpu.dimension_semantics<arbitrary>], iteration_bounds = array<i64: 2, 1, 2>, scalar_prefetch = 0 : i64, scratch_operands = 0 : i64, tpu.core_type = #tpu.core_type<tc>, window_params = [{transform_indices = @transform_0, window_bounds = array<i64: 1, 8, 8, 64>}, {transform_indices = @transform_1, window_bounds = array<i64: 1, 64, 128>}, {pipeline_mode = #tpu.pipeline_mode<synchronous>, transform_indices = @transform_2, window_bounds = array<i64: 1, 128>}, {transform_indices = @transform_3, window_bounds = array<i64: 1, 8, 1, 8, 128>}]} {
    %c0 = arith.constant 0 : index
    %c0_0 = arith.constant 0 : index
    %c0_1 = arith.constant 0 : index
    %c0_2 = arith.constant 0 : index
    %0 = vector.load %arg3[%c0, %c0_0, %c0_1, %c0_2] : memref<1x8x8x64xbf16, #tpu.memory_space<vmem>>, vector<1x8x8x64xbf16>
    %1 = vector.shape_cast %0 : vector<1x8x8x64xbf16> to vector<8x8x64xbf16>
    %2 = vector.shape_cast %1 : vector<8x8x64xbf16> to vector<64x64xbf16>
    %c0_3 = arith.constant 0 : index
    %c0_4 = arith.constant 0 : index
    %c0_5 = arith.constant 0 : index
    %3 = vector.load %arg4[%c0_3, %c0_4, %c0_5] : memref<1x64x128xbf16, #tpu.memory_space<vmem>>, vector<1x64x128xbf16>
    %4 = vector.shape_cast %3 : vector<1x64x128xbf16> to vector<64x128xbf16>
    %cst = arith.constant dense<0.000000e+00> : vector<64x128xf32>
    %5 = tpu.matmul %2, %4, %cst {dimension_numbers = #tpu.dot_dimension_numbers<[1], [0], [0], [1], [0, 0, 1, 1], [], []>} : vector<64x64xbf16>, vector<64x128xbf16>, vector<64x128xf32> -> vector<64x128xf32>
    %c0_6 = arith.constant 0 : index
    %c0_7 = arith.constant 0 : index
    %6 = vector.load %arg5[%c0_6, %c0_7] : memref<1x128xf32, #tpu.memory_space<vmem>>, vector<1x128xf32>
    %7 = vector.broadcast %6 : vector<1x128xf32> to vector<64x128xf32>
    %8 = arith.addf %5, %7 : vector<64x128xf32>
    %cst_8 = arith.constant 0.000000e+00 : f32
    %9 = vector.broadcast %cst_8 : f32 to vector<64x128xf32>
    %10 = arith.cmpf oge, %8, %9 : vector<64x128xf32>
    %cst_9 = arith.constant 2.000000e-01 : f32
    %11 = vector.broadcast %cst_9 : f32 to vector<64x128xf32>
    %12 = arith.mulf %11, %8 : vector<64x128xf32>
    %13 = arith.select %10, %8, %12 : vector<64x128xi1>, vector<64x128xf32>
    %14 = vector.shape_cast %13 : vector<64x128xf32> to vector<1x8x1x8x128xf32>
    %15 = arith.truncf %14 : vector<1x8x1x8x128xf32> to vector<1x8x1x8x128xbf16>
    %c0_10 = arith.constant 0 : index
    %c0_11 = arith.constant 0 : index
    %c0_12 = arith.constant 0 : index
    %c0_13 = arith.constant 0 : index
    %c0_14 = arith.constant 0 : index
    %16 = vector.load %arg6[%c0_10, %c0_11, %c0_12, %c0_13, %c0_14] : memref<1x8x1x8x128xbf16, #tpu.memory_space<vmem>>, vector<1x8x1x8x128xbf16>
    tpu.vector_store %arg6[%c0_10, %c0_11, %c0_12, %c0_13, %c0_14], %15 {strides = array<i32>} : memref<1x8x1x8x128xbf16, #tpu.memory_space<vmem>>, vector<1x8x1x8x128xbf16>,
    return
  }
  func.func @transform_0(%arg0: i32, %arg1: i32, %arg2: i32) -> (i32, i32, i32, i32) {
    %c0_i32 = arith.constant 0 : i32
    %c0_i32_0 = arith.constant 0 : i32
    %c0_i32_1 = arith.constant 0 : i32
    return %arg0, %arg1, %c0_i32, %c0_i32_0 : i32, i32, i32, i32
  }
  func.func @transform_1(%arg0: i32, %arg1: i32, %arg2: i32) -> (i32, i32, i32) {
    %c0_i32 = arith.constant 0 : i32
    %c0_i32_0 = arith.constant 0 : i32
    %c0_i32_1 = arith.constant 0 : i32
    return %arg2, %c0_i32, %c0_i32_0 : i32, i32, i32
  }
  func.func @transform_2(%arg0: i32, %arg1: i32, %arg2: i32) -> (i32, i32) {
    %c0_i32 = arith.constant 0 : i32
    %c0_i32_0 = arith.constant 0 : i32
    %c0_i32_1 = arith.constant 0 : i32
    return %c0_i32, %c0_i32_0 : i32, i32
  }
  func.func @transform_3(%arg0: i32, %arg1: i32, %arg2: i32) -> (i32, i32, i32, i32, i32) {
    %c0_i32 = arith.constant 0 : i32
    %c0_i32_0 = arith.constant 0 : i32
    %c0_i32_1 = arith.constant 0 : i32
    return %arg0, %arg1, %arg2, %c0_i32, %c0_i32_0 : i32, i32, i32, i32, i32
  }
}

module attributes {stable_mosaic.version = 11 : i64} {
  func.func @conv3x3_tanh_kernel(%arg0: i32, %arg1: i32, %arg2: memref<1x16x16x64xbf16, #tpu.memory_space<vmem>>, %arg3: memref<1x1x16x64xbf16, #tpu.memory_space<vmem>>, %arg4: memref<1x1x16x64xbf16, #tpu.memory_space<vmem>>, %arg5: memref<3x3x64x8xbf16, #tpu.memory_space<vmem>>, %arg6: memref<1x8xf32, #tpu.memory_space<vmem>>, %arg7: memref<1x16x16x8xf32, #tpu.memory_space<vmem>>, %arg8: memref<18x18x64xbf16, #tpu.memory_space<vmem>>) attributes {dimension_semantics = [#tpu.dimension_semantics<parallel>, #tpu.dimension_semantics<arbitrary>], iteration_bounds = array<i64: 2, 1>, scalar_prefetch = 0 : i64, scratch_operands = 1 : i64, tpu.core_type = #tpu.core_type<tc>, window_params = [{transform_indices = @transform_0, window_bounds = array<i64: 1, 16, 16, 64>}, {transform_indices = @transform_1, window_bounds = array<i64: 1, 1, 16, 64>}, {transform_indices = @transform_2, window_bounds = array<i64: 1, 1, 16, 64>}, {pipeline_mode = #tpu.pipeline_mode<synchronous>, transform_indices = @transform_3, window_bounds = array<i64: 3, 3, 64, 8>}, {pipeline_mode = #tpu.pipeline_mode<synchronous>, transform_indices = @transform_4, window_bounds = array<i64: 1, 8>}, {transform_indices = @transform_5, window_bounds = array<i64: 1, 16, 16, 8>}]} {
    %cst = arith.constant 0.000000e+00 : bf16
    %0 = vector.broadcast %cst : bf16 to vector<18x18x64xbf16>
    %c0 = arith.constant 0 : index
    %c0_0 = arith.constant 0 : index
    %c0_1 = arith.constant 0 : index
    %1 = vector.load %arg8[%c0, %c0_0, %c0_1] : memref<18x18x64xbf16, #tpu.memory_space<vmem>>, vector<18x18x64xbf16>
    tpu.vector_store %arg8[%c0, %c0_0, %c0_1], %0 {strides = array<i32>} : memref<18x18x64xbf16, #tpu.memory_space<vmem>>, vector<18x18x64xbf16>,
    %c0_2 = arith.constant 0 : index
    %c0_3 = arith.constant 0 : index
    %c0_4 = arith.constant 0 : index
    %c0_5 = arith.constant 0 : index
    %2 = vector.load %arg2[%c0_2, %c0_3, %c0_4, %c0_5] : memref<1x16x16x64xbf16, #tpu.memory_space<vmem>>, vector<1x16x16x64xbf16>
    %3 = vector.shape_cast %2 : vector<1x16x16x64xbf16> to vector<16x16x64xbf16>
    %c1 = arith.constant 1 : index
    %c1_6 = arith.constant 1 : index
    %c0_7 = arith.constant 0 : index
    %4 = vector.load %arg8[%c1, %c1_6, %c0_7] : memref<18x18x64xbf16, #tpu.memory_space<vmem>>, vector<16x16x64xbf16>
    tpu.vector_store %arg8[%c1, %c1_6, %c0_7], %3 {strides = array<i32>} : memref<18x18x64xbf16, #tpu.memory_space<vmem>>, vector<16x16x64xbf16>,
    %c0_i32 = arith.constant 0 : i32
    %5 = arith.cmpi sgt, %arg1, %c0_i32 : i32
    %6 = arith.extui %5 : i1 to i32
    %c0_i32_8 = arith.constant 0 : i32
    %7 = arith.cmpi ne, %6, %c0_i32_8 : i32
    scf.if %7 {
      %c0_89 = arith.constant 0 : index
      %c0_90 = arith.constant 0 : index
      %c0_91 = arith.constant 0 : index
      %c0_92 = arith.constant 0 : index
      %74 = vector.load %arg3[%c0_89, %c0_90, %c0_91, %c0_92] : memref<1x1x16x64xbf16, #tpu.memory_space<vmem>>, vector<1x1x16x64xbf16>
      %75 = vector.shape_cast %74 : vector<1x1x16x64xbf16> to vector<1x16x64xbf16>
      %c0_93 = arith.constant 0 : index
      %c1_94 = arith.constant 1 : index
      %c0_95 = arith.constant 0 : index
      %76 = vector.load %arg8[%c0_93, %c1_94, %c0_95] : memref<18x18x64xbf16, #tpu.memory_space<vmem>>, vector<1x16x64xbf16>
      tpu.vector_store %arg8[%c0_93, %c1_94, %c0_95], %75 {strides = array<i32>} : memref<18x18x64xbf16, #tpu.memory_space<vmem>>, vector<1x16x64xbf16>,
    } else {
    }
    %c0_i32_9 = arith.constant 0 : i32
    %8 = arith.cmpi slt, %arg1, %c0_i32_9 : i32
    %9 = arith.extui %8 : i1 to i32
    %c0_i32_10 = arith.constant 0 : i32
    %10 = arith.cmpi ne, %9, %c0_i32_10 : i32
    scf.if %10 {
      %c0_89 = arith.constant 0 : index
      %c0_90 = arith.constant 0 : index
      %c0_91 = arith.constant 0 : index
      %c0_92 = arith.constant 0 : index
      %74 = vector.load %arg4[%c0_89, %c0_90, %c0_91, %c0_92] : memref<1x1x16x64xbf16, #tpu.memory_space<vmem>>, vector<1x1x16x64xbf16>
      %75 = vector.shape_cast %74 : vector<1x1x16x64xbf16> to vector<1x16x64xbf16>
      %c17 = arith.constant 17 : index
      %c1_93 = arith.constant 1 : index
      %c0_94 = arith.constant 0 : index
      %76 = vector.load %arg8[%c17, %c1_93, %c0_94] : memref<18x18x64xbf16, #tpu.memory_space<vmem>>, vector<1x16x64xbf16>
      tpu.vector_store %arg8[%c17, %c1_93, %c0_94], %75 {strides = array<i32>} : memref<18x18x64xbf16, #tpu.memory_space<vmem>>, vector<1x16x64xbf16>,
    } else {
    }
    %c0_11 = arith.constant 0 : index
    %c0_12 = arith.constant 0 : index
    %11 = vector.load %arg6[%c0_11, %c0_12] : memref<1x8xf32, #tpu.memory_space<vmem>>, vector<1x8xf32>
    %cst_13 = arith.constant 0.000000e+00 : f32
    %12 = vector.broadcast %cst_13 : f32 to vector<256x8xf32>
    %c0_14 = arith.constant 0 : index
    %c0_15 = arith.constant 0 : index
    %c0_16 = arith.constant 0 : index
    %13 = vector.load %arg8[%c0_14, %c0_15, %c0_16] : memref<18x18x64xbf16, #tpu.memory_space<vmem>>, vector<16x16x64xbf16>
    %14 = vector.shape_cast %13 : vector<16x16x64xbf16> to vector<256x64xbf16>
    %c0_17 = arith.constant 0 : index
    %c0_18 = arith.constant 0 : index
    %c0_19 = arith.constant 0 : index
    %c0_20 = arith.constant 0 : index
    %15 = vector.load %arg5[%c0_17, %c0_18, %c0_19, %c0_20] : memref<3x3x64x8xbf16, #tpu.memory_space<vmem>>, vector<1x1x64x8xbf16>
    %16 = vector.shape_cast %15 : vector<1x1x64x8xbf16> to vector<64x8xbf16>
    %cst_21 = arith.constant dense<0.000000e+00> : vector<256x8xf32>
    %17 = tpu.matmul %14, %16, %cst_21 {dimension_numbers = #tpu.dot_dimension_numbers<[1], [0], [0], [1], [0, 0, 1, 1], [], []>} : vector<256x64xbf16>, vector<64x8xbf16>, vector<256x8xf32> -> vector<256x8xf32>
    %18 = arith.addf %12, %17 : vector<256x8xf32>
    %c0_22 = arith.constant 0 : index
    %c1_23 = arith.constant 1 : index
    %c0_24 = arith.constant 0 : index
    %19 = vector.load %arg8[%c0_22, %c1_23, %c0_24] : memref<18x18x64xbf16, #tpu.memory_space<vmem>>, vector<16x16x64xbf16>
    %20 = vector.shape_cast %19 : vector<16x16x64xbf16> to vector<256x64xbf16>
    %c0_25 = arith.constant 0 : index
    %c1_26 = arith.constant 1 : index
    %c0_27 = arith.constant 0 : index
    %c0_28 = arith.constant 0 : index
    %21 = vector.load %arg5[%c0_25, %c1_26, %c0_27, %c0_28] : memref<3x3x64x8xbf16, #tpu.memory_space<vmem>>, vector<1x1x64x8xbf16>
    %22 = vector.shape_cast %21 : vector<1x1x64x8xbf16> to vector<64x8xbf16>
    %cst_29 = arith.constant dense<0.000000e+00> : vector<256x8xf32>
    %23 = tpu.matmul %20, %22, %cst_29 {dimension_numbers = #tpu.dot_dimension_numbers<[1], [0], [0], [1], [0, 0, 1, 1], [], []>} : vector<256x64xbf16>, vector<64x8xbf16>, vector<256x8xf32> -> vector<256x8xf32>
    %24 = arith.addf %18, %23 : vector<256x8xf32>
    %c0_30 = arith.constant 0 : index
    %c2 = arith.constant 2 : index
    %c0_31 = arith.constant 0 : index
    %25 = vector.load %arg8[%c0_30, %c2, %c0_31] : memref<18x18x64xbf16, #tpu.memory_space<vmem>>, vector<16x16x64xbf16>
    %26 = vector.shape_cast %25 : vector<16x16x64xbf16> to vector<256x64xbf16>
    %c0_32 = arith.constant 0 : index
    %c2_33 = arith.constant 2 : index
    %c0_34 = arith.constant 0 : index
    %c0_35 = arith.constant 0 : index
    %27 = vector.load %arg5[%c0_32, %c2_33, %c0_34, %c0_35] : memref<3x3x64x8xbf16, #tpu.memory_space<vmem>>, vector<1x1x64x8xbf16>
    %28 = vector.shape_cast %27 : vector<1x1x64x8xbf16> to vector<64x8xbf16>
    %cst_36 = arith.constant dense<0.000000e+00> : vector<256x8xf32>
    %29 = tpu.matmul %26, %28, %cst_36 {dimension_numbers = #tpu.dot_dimension_numbers<[1], [0], [0], [1], [0, 0, 1, 1], [], []>} : vector<256x64xbf16>, vector<64x8xbf16>, vector<256x8xf32> -> vector<256x8xf32>
    %30 = arith.addf %24, %29 : vector<256x8xf32>
    %c1_37 = arith.constant 1 : index
    %c0_38 = arith.constant 0 : index
    %c0_39 = arith.constant 0 : index
    %31 = vector.load %arg8[%c1_37, %c0_38, %c0_39] : memref<18x18x64xbf16, #tpu.memory_space<vmem>>, vector<16x16x64xbf16>
    %32 = vector.shape_cast %31 : vector<16x16x64xbf16> to vector<256x64xbf16>
    %c1_40 = arith.constant 1 : index
    %c0_41 = arith.constant 0 : index
    %c0_42 = arith.constant 0 : index
    %c0_43 = arith.constant 0 : index
    %33 = vector.load %arg5[%c1_40, %c0_41, %c0_42, %c0_43] : memref<3x3x64x8xbf16, #tpu.memory_space<vmem>>, vector<1x1x64x8xbf16>
    %34 = vector.shape_cast %33 : vector<1x1x64x8xbf16> to vector<64x8xbf16>
    %cst_44 = arith.constant dense<0.000000e+00> : vector<256x8xf32>
    %35 = tpu.matmul %32, %34, %cst_44 {dimension_numbers = #tpu.dot_dimension_numbers<[1], [0], [0], [1], [0, 0, 1, 1], [], []>} : vector<256x64xbf16>, vector<64x8xbf16>, vector<256x8xf32> -> vector<256x8xf32>
    %36 = arith.addf %30, %35 : vector<256x8xf32>
    %c1_45 = arith.constant 1 : index
    %c1_46 = arith.constant 1 : index
    %c0_47 = arith.constant 0 : index
    %37 = vector.load %arg8[%c1_45, %c1_46, %c0_47] : memref<18x18x64xbf16, #tpu.memory_space<vmem>>, vector<16x16x64xbf16>
    %38 = vector.shape_cast %37 : vector<16x16x64xbf16> to vector<256x64xbf16>
    %c1_48 = arith.constant 1 : index
    %c1_49 = arith.constant 1 : index
    %c0_50 = arith.constant 0 : index
    %c0_51 = arith.constant 0 : index
    %39 = vector.load %arg5[%c1_48, %c1_49, %c0_50, %c0_51] : memref<3x3x64x8xbf16, #tpu.memory_space<vmem>>, vector<1x1x64x8xbf16>
    %40 = vector.shape_cast %39 : vector<1x1x64x8xbf16> to vector<64x8xbf16>
    %cst_52 = arith.constant dense<0.000000e+00> : vector<256x8xf32>
    %41 = tpu.matmul %38, %40, %cst_52 {dimension_numbers = #tpu.dot_dimension_numbers<[1], [0], [0], [1], [0, 0, 1, 1], [], []>} : vector<256x64xbf16>, vector<64x8xbf16>, vector<256x8xf32> -> vector<256x8xf32>
    %42 = arith.addf %36, %41 : vector<256x8xf32>
    %c1_53 = arith.constant 1 : index
    %c2_54 = arith.constant 2 : index
    %c0_55 = arith.constant 0 : index
    %43 = vector.load %arg8[%c1_53, %c2_54, %c0_55] : memref<18x18x64xbf16, #tpu.memory_space<vmem>>, vector<16x16x64xbf16>
    %44 = vector.shape_cast %43 : vector<16x16x64xbf16> to vector<256x64xbf16>
    %c1_56 = arith.constant 1 : index
    %c2_57 = arith.constant 2 : index
    %c0_58 = arith.constant 0 : index
    %c0_59 = arith.constant 0 : index
    %45 = vector.load %arg5[%c1_56, %c2_57, %c0_58, %c0_59] : memref<3x3x64x8xbf16, #tpu.memory_space<vmem>>, vector<1x1x64x8xbf16>
    %46 = vector.shape_cast %45 : vector<1x1x64x8xbf16> to vector<64x8xbf16>
    %cst_60 = arith.constant dense<0.000000e+00> : vector<256x8xf32>
    %47 = tpu.matmul %44, %46, %cst_60 {dimension_numbers = #tpu.dot_dimension_numbers<[1], [0], [0], [1], [0, 0, 1, 1], [], []>} : vector<256x64xbf16>, vector<64x8xbf16>, vector<256x8xf32> -> vector<256x8xf32>
    %48 = arith.addf %42, %47 : vector<256x8xf32>
    %c2_61 = arith.constant 2 : index
    %c0_62 = arith.constant 0 : index
    %c0_63 = arith.constant 0 : index
    %49 = vector.load %arg8[%c2_61, %c0_62, %c0_63] : memref<18x18x64xbf16, #tpu.memory_space<vmem>>, vector<16x16x64xbf16>
    %50 = vector.shape_cast %49 : vector<16x16x64xbf16> to vector<256x64xbf16>
    %c2_64 = arith.constant 2 : index
    %c0_65 = arith.constant 0 : index
    %c0_66 = arith.constant 0 : index
    %c0_67 = arith.constant 0 : index
    %51 = vector.load %arg5[%c2_64, %c0_65, %c0_66, %c0_67] : memref<3x3x64x8xbf16, #tpu.memory_space<vmem>>, vector<1x1x64x8xbf16>
    %52 = vector.shape_cast %51 : vector<1x1x64x8xbf16> to vector<64x8xbf16>
    %cst_68 = arith.constant dense<0.000000e+00> : vector<256x8xf32>
    %53 = tpu.matmul %50, %52, %cst_68 {dimension_numbers = #tpu.dot_dimension_numbers<[1], [0], [0], [1], [0, 0, 1, 1], [], []>} : vector<256x64xbf16>, vector<64x8xbf16>, vector<256x8xf32> -> vector<256x8xf32>
    %54 = arith.addf %48, %53 : vector<256x8xf32>
    %c2_69 = arith.constant 2 : index
    %c1_70 = arith.constant 1 : index
    %c0_71 = arith.constant 0 : index
    %55 = vector.load %arg8[%c2_69, %c1_70, %c0_71] : memref<18x18x64xbf16, #tpu.memory_space<vmem>>, vector<16x16x64xbf16>
    %56 = vector.shape_cast %55 : vector<16x16x64xbf16> to vector<256x64xbf16>
    %c2_72 = arith.constant 2 : index
    %c1_73 = arith.constant 1 : index
    %c0_74 = arith.constant 0 : index
    %c0_75 = arith.constant 0 : index
    %57 = vector.load %arg5[%c2_72, %c1_73, %c0_74, %c0_75] : memref<3x3x64x8xbf16, #tpu.memory_space<vmem>>, vector<1x1x64x8xbf16>
    %58 = vector.shape_cast %57 : vector<1x1x64x8xbf16> to vector<64x8xbf16>
    %cst_76 = arith.constant dense<0.000000e+00> : vector<256x8xf32>
    %59 = tpu.matmul %56, %58, %cst_76 {dimension_numbers = #tpu.dot_dimension_numbers<[1], [0], [0], [1], [0, 0, 1, 1], [], []>} : vector<256x64xbf16>, vector<64x8xbf16>, vector<256x8xf32> -> vector<256x8xf32>
    %60 = arith.addf %54, %59 : vector<256x8xf32>
    %c2_77 = arith.constant 2 : index
    %c2_78 = arith.constant 2 : index
    %c0_79 = arith.constant 0 : index
    %61 = vector.load %arg8[%c2_77, %c2_78, %c0_79] : memref<18x18x64xbf16, #tpu.memory_space<vmem>>, vector<16x16x64xbf16>
    %62 = vector.shape_cast %61 : vector<16x16x64xbf16> to vector<256x64xbf16>
    %c2_80 = arith.constant 2 : index
    %c2_81 = arith.constant 2 : index
    %c0_82 = arith.constant 0 : index
    %c0_83 = arith.constant 0 : index
    %63 = vector.load %arg5[%c2_80, %c2_81, %c0_82, %c0_83] : memref<3x3x64x8xbf16, #tpu.memory_space<vmem>>, vector<1x1x64x8xbf16>
    %64 = vector.shape_cast %63 : vector<1x1x64x8xbf16> to vector<64x8xbf16>
    %cst_84 = arith.constant dense<0.000000e+00> : vector<256x8xf32>
    %65 = tpu.matmul %62, %64, %cst_84 {dimension_numbers = #tpu.dot_dimension_numbers<[1], [0], [0], [1], [0, 0, 1, 1], [], []>} : vector<256x64xbf16>, vector<64x8xbf16>, vector<256x8xf32> -> vector<256x8xf32>
    %66 = arith.addf %60, %65 : vector<256x8xf32>
    %67 = vector.broadcast %11 : vector<1x8xf32> to vector<256x8xf32>
    %68 = arith.addf %66, %67 : vector<256x8xf32>
    %69 = math.tanh %68 : vector<256x8xf32>
    %70 = vector.shape_cast %69 : vector<256x8xf32> to vector<16x16x8xf32>
    %c0_85 = arith.constant 0 : index
    %c0_86 = arith.constant 0 : index
    %c0_87 = arith.constant 0 : index
    %c0_88 = arith.constant 0 : index
    %71 = vector.load %arg7[%c0_85, %c0_86, %c0_87, %c0_88] : memref<1x16x16x8xf32, #tpu.memory_space<vmem>>, vector<1x16x16x8xf32>
    %72 = vector.shape_cast %71 : vector<1x16x16x8xf32> to vector<16x16x8xf32>
    %73 = vector.shape_cast %70 : vector<16x16x8xf32> to vector<1x16x16x8xf32>
    tpu.vector_store %arg7[%c0_85, %c0_86, %c0_87, %c0_88], %73 {strides = array<i32>} : memref<1x16x16x8xf32, #tpu.memory_space<vmem>>, vector<1x16x16x8xf32>,
    return
  }
  func.func @transform_0(%arg0: i32, %arg1: i32) -> (i32, i32, i32, i32) {
    %c0_i32 = arith.constant 0 : i32
    %c0_i32_0 = arith.constant 0 : i32
    %c0_i32_1 = arith.constant 0 : i32
    return %arg0, %arg1, %c0_i32, %c0_i32_0 : i32, i32, i32, i32
  }
  func.func @transform_1(%arg0: i32, %arg1: i32) -> (i32, i32, i32, i32) {
    %c16_i32 = arith.constant 16 : i32
    %0 = arith.muli %arg1, %c16_i32 : i32
    %c1_i32 = arith.constant 1 : i32
    %1 = arith.subi %0, %c1_i32 : i32
    %c0_i32 = arith.constant 0 : i32
    %2 = arith.maxsi %1, %c0_i32 : i32
    %c0_i32_0 = arith.constant 0 : i32
    %c0_i32_1 = arith.constant 0 : i32
    %c0_i32_2 = arith.constant 0 : i32
    return %arg0, %2, %c0_i32_0, %c0_i32_1 : i32, i32, i32, i32
  }
  func.func @transform_2(%arg0: i32, %arg1: i32) -> (i32, i32, i32, i32) {
    %c1_i32 = arith.constant 1 : i32
    %0 = arith.addi %arg1, %c1_i32 : i32
    %c16_i32 = arith.constant 16 : i32
    %1 = arith.muli %0, %c16_i32 : i32
    %c15_i32 = arith.constant 15 : i32
    %2 = arith.minsi %1, %c15_i32 : i32
    %c0_i32 = arith.constant 0 : i32
    %c0_i32_0 = arith.constant 0 : i32
    %c0_i32_1 = arith.constant 0 : i32
    return %arg0, %2, %c0_i32, %c0_i32_0 : i32, i32, i32, i32
  }
  func.func @transform_3(%arg0: i32, %arg1: i32) -> (i32, i32, i32, i32) {
    %c0_i32 = arith.constant 0 : i32
    %c0_i32_0 = arith.constant 0 : i32
    %c0_i32_1 = arith.constant 0 : i32
    %c0_i32_2 = arith.constant 0 : i32
    %c0_i32_3 = arith.constant 0 : i32
    return %c0_i32, %c0_i32_0, %c0_i32_1, %c0_i32_2 : i32, i32, i32, i32
  }
  func.func @transform_4(%arg0: i32, %arg1: i32) -> (i32, i32) {
    %c0_i32 = arith.constant 0 : i32
    %c0_i32_0 = arith.constant 0 : i32
    %c0_i32_1 = arith.constant 0 : i32
    return %c0_i32, %c0_i32_0 : i32, i32
  }
  func.func @transform_5(%arg0: i32, %arg1: i32) -> (i32, i32, i32, i32) {
    %c0_i32 = arith.constant 0 : i32
    %c0_i32_0 = arith.constant 0 : i32
    %c0_i32_1 = arith.constant 0 : i32
    return %arg0, %arg1, %c0_i32, %c0_i32_0 : i32, i32, i32, i32
  }
}

</mosaic_0001>

<llo_original>
// kernel: tile.13
$region0: #{tile.13}
  #allocation0 [shape = 's32[1]{0}', space=sflag, size = 0x4, scoped, tag = 'scoped memory for tile.13']
  %s0 = inlined_call_operand.vmem [shape: f32[64], index: 0, kind: input, shape index: {}]
  %s1 = inlined_call_operand.vmem [shape: f32[64,64], index: 1, kind: output, shape index: {}]
  // Predicated region
  $region2: #{tile.13} parent=0 // pred_check
    _
  $region3: #{tile.13} parent=0 // pred_check_branch
    %3 = sbr.rel (0) target = $region5
  $region4: #{tile.13} parent=0 // pred_region
    _
  $region5: #{tile.13} parent=0 // pred_fallthru
    _
  %v4 = vld [vmem:[%s0] ss:$0 sm:$0xff]
  %5 = vst [vmem:[%s1] sm:$0xff] %v4
  %s6 = scalar_lea.vmem %s1, 8
  %7 = vst [vmem:[%s6] sm:$0xff] %v4
  %s8 = scalar_lea.vmem %s1, 16
  %9 = vst [vmem:[%s8] sm:$0xff] %v4
  %s10 = scalar_lea.vmem %s1, 24
  %11 = vst [vmem:[%s10] sm:$0xff] %v4
  %s12 = scalar_lea.vmem %s1, 32
  %13 = vst [vmem:[%s12] sm:$0xff] %v4
  %s14 = scalar_lea.vmem %s1, 40
  %15 = vst [vmem:[%s14] sm:$0xff] %v4
  %s16 = scalar_lea.vmem %s1, 48
  %17 = vst [vmem:[%s16] sm:$0xff] %v4
  %s18 = scalar_lea.vmem %s1, 56
  %19 = vst [vmem:[%s18] sm:$0xff] %v4

// kernel: tile.14
$region0: #{tile.14}
  %s0 = inlined_call_operand.vmem [shape: f32[64,64], index: 0, kind: input, shape index: {}]
  %s1 = inlined_call_operand.vmem [shape: f32[1,4096], index: 1, kind: output, shape index: {}]
  $region1: #{tile.14} parent=0
    #allocation0 [shape = 'u8[131072]{0}', space=vmem, size = 0x20000, scoped, tag = 'scoped mem for output reshape']
    %v2 = vld [vmem:[%s0] ss:$2 sm:$0xff]
    %vm3 = vcmask 523264
    %4 = vst.msk [vmem:[#allocation0] ss:$8 sm:$0xf] %vm3, %v2
    %5 = vst.msk [vmem:[#allocation0] ss:$8 sm:$0xf0] %vm3, %v2
    %s6 = scalar_lea.vmem %s0, 16
    %v7 = vld [vmem:[%s6] ss:$2 sm:$0xff]
    %vm8 = vcmask 523264
    %s9 = scalar_lea.vmem [#allocation0], 64
    %10 = vst.msk [vmem:[%s9] ss:$8 sm:$0xf] %vm8, %v7
    %s11 = scalar_lea.vmem [#allocation0], 64
    %12 = vst.msk [vmem:[%s11] ss:$8 sm:$0xf0] %vm8, %v7
    %s13 = scalar_lea.vmem %s0, 32
    %v14 = vld [vmem:[%s13] ss:$2 sm:$0xff]
    %vm15 = vcmask 523264
    %s16 = scalar_lea.vmem [#allocation0], 128
    %17 = vst.msk [vmem:[%s16] ss:$8 sm:$0xf] %vm15, %v14
    %s18 = scalar_lea.vmem [#allocation0], 128
    %19 = vst.msk [vmem:[%s18] ss:$8 sm:$0xf0] %vm15, %v14
    %s20 = scalar_lea.vmem %s0, 48
    %v21 = vld [vmem:[%s20] ss:$2 sm:$0xff]
    %vm22 = vcmask 523264
    %s23 = scalar_lea.vmem [#allocation0], 192
    %24 = vst.msk [vmem:[%s23] ss:$8 sm:$0xf] %vm22, %v21
    %s25 = scalar_lea.vmem [#allocation0], 192
    %26 = vst.msk [vmem:[%s25] ss:$8 sm:$0xf0] %vm22, %v21
    %s27 = scalar_lea.vmem %s0, 1
    %v28 = vld [vmem:[%s27] ss:$2 sm:$0xff]
    %29 = vrot.lane.b32.xlu0 %v28, 64
    %v30 = vpop.permute.xlu0 %29
    %vm31 = vcmask 1048064
    %32 = vst.msk [vmem:[#allocation0] ss:$8 sm:$0xf] %vm31, %v30
    %33 = vst.msk [vmem:[#allocation0] ss:$8 sm:$0xf0] %vm31, %v30
    %s34 = scalar_lea.vmem %s0, 17
    %v35 = vld [vmem:[%s34] ss:$2 sm:$0xff]
    %36 = vrot.lane.b32.xlu0 %v35, 64
    %v37 = vpop.permute.xlu0 %36
    %vm38 = vcmask 1048064
    %s39 = scalar_lea.vmem [#allocation0], 64
    %40 = vst.msk [vmem:[%s39] ss:$8 sm:$0xf] %vm38, %v37
    %s41 = scalar_lea.vmem [#allocation0], 64
    %42 = vst.msk [vmem:[%s41] ss:$8 sm:$0xf0] %vm38, %v37
    %s43 = scalar_lea.vmem %s0, 33
    %v44 = vld [vmem:[%s43] ss:$2 sm:$0xff]
    %45 = vrot.lane.b32.xlu0 %v44, 64
    %v46 = vpop.permute.xlu0 %45
    %vm47 = vcmask 1048064
    %s48 = scalar_lea.vmem [#allocation0], 128
    %49 = vst.msk [vmem:[%s48] ss:$8 sm:$0xf] %vm47, %v46
    %s50 = scalar_lea.vmem [#allocation0], 128
    %51 = vst.msk [vmem:[%s50] ss:$8 sm:$0xf0] %vm47, %v46
    %s52 = scalar_lea.vmem %s0, 49
    %v53 = vld [vmem:[%s52] ss:$2 sm:$0xff]
    %54 = vrot.lane.b32.xlu0 %v53, 64
    %v55 = vpop.permute.xlu0 %54
    %vm56 = vcmask 1048064
    %s57 = scalar_lea.vmem [#allocation0], 192
    %58 = vst.msk [vmem:[%s57] ss:$8 sm:$0xf] %vm56, %v55
    %s59 = scalar_lea.vmem [#allocation0], 192
    %60 = vst.msk [vmem:[%s59] ss:$8 sm:$0xf0] %vm56, %v55
    %s62 = sshllo.u32 0, 1
    %v64 = vld [vmem:[#allocation0] sm:%s62]
    %s65 = sshllo.u32 0, 1
    %66 = vst [vmem:[%s1] sm:%s65] %v64
    %s67 = scalar_lea.vmem [#allocation0], 8
    %v68 = vld [vmem:[%s67] sm:%s62]
    %s69 = sshllo.u32 0, 1
    %s70 = scalar_lea.vmem %s1, 1
    %71 = vst [vmem:[%s70] sm:%s69] %v68
    %s72 = scalar_lea.vmem [#allocation0], 16
    %v73 = vld [vmem:[%s72] sm:%s62]
    %s74 = sshllo.u32 0, 1
    %s75 = smul.addr 1, 2
    %s76 = scalar_lea.vmem %s1, %s75
    %77 = vst [vmem:[%s76] sm:%s74] %v73
    %s78 = scalar_lea.vmem [#allocation0], 24
    %v79 = vld [vmem:[%s78] sm:%s62]
    %s80 = sshllo.u32 0, 1
    %s81 = smul.addr 1, 3
    %s82 = scalar_lea.vmem %s1, %s81
    %83 = vst [vmem:[%s82] sm:%s80] %v79
    %s84 = scalar_lea.vmem [#allocation0], 32
    %v85 = vld [vmem:[%s84] sm:%s62]
    %s86 = sshllo.u32 0, 1
    %s87 = smul.addr 1, 4
    %s88 = scalar_lea.vmem %s1, %s87
    %89 = vst [vmem:[%s88] sm:%s86] %v85
    %s90 = scalar_lea.vmem [#allocation0], 40
    %v91 = vld [vmem:[%s90] sm:%s62]
    %s92 = sshllo.u32 0, 1
    %s93 = smul.addr 1, 5
    %s94 = scalar_lea.vmem %s1, %s93
    %95 = vst [vmem:[%s94] sm:%s92] %v91
    %s96 = scalar_lea.vmem [#allocation0], 48
    %v97 = vld [vmem:[%s96] sm:%s62]
    %s98 = sshllo.u32 0, 1
    %s99 = smul.addr 1, 6
    %s100 = scalar_lea.vmem %s1, %s99
    %101 = vst [vmem:[%s100] sm:%s98] %v97
    %s102 = scalar_lea.vmem [#allocation0], 56
    %v103 = vld [vmem:[%s102] sm:%s62]
    %s104 = sshllo.u32 0, 1
    %s105 = smul.addr 1, 7
    %s106 = scalar_lea.vmem %s1, %s105
    %107 = vst [vmem:[%s106] sm:%s104] %v103
    %s108 = scalar_lea.vmem [#allocation0], 64
    %v109 = vld [vmem:[%s108] sm:%s62]
    %s110 = sshllo.u32 0, 1
    %s111 = smul.addr 1, 8
    %s112 = scalar_lea.vmem %s1, %s111
    %113 = vst [vmem:[%s112] sm:%s110] %v109
    %s114 = scalar_lea.vmem [#allocation0], 72
    %v115 = vld [vmem:[%s114] sm:%s62]
    %s116 = sshllo.u32 0, 1
    %s117 = smul.addr 1, 9
    %s118 = scalar_lea.vmem %s1, %s117
    %119 = vst [vmem:[%s118] sm:%s116] %v115
    %s120 = scalar_lea.vmem [#allocation0], 80
    %v121 = vld [vmem:[%s120] sm:%s62]
    %s122 = sshllo.u32 0, 1
    %s123 = smul.addr 1, 10
    %s124 = scalar_lea.vmem %s1, %s123
    %125 = vst [vmem:[%s124] sm:%s122] %v121
    %s126 = scalar_lea.vmem [#allocation0], 88
    %v127 = vld [vmem:[%s126] sm:%s62]
    %s128 = sshllo.u32 0, 1
    %s129 = smul.addr 1, 11
    %s130 = scalar_lea.vmem %s1, %s129
    %131 = vst [vmem:[%s130] sm:%s128] %v127
    %s132 = scalar_lea.vmem [#allocation0], 96
    %v133 = vld [vmem:[%s132] sm:%s62]
    %s134 = sshllo.u32 0, 1
    %s135 = smul.addr 1, 12
    %s136 = scalar_lea.vmem %s1, %s135
    %137 = vst [vmem:[%s136] sm:%s134] %v133
    %s138 = scalar_lea.vmem [#allocation0], 104
    %v139 = vld [vmem:[%s138] sm:%s62]
    %s140 = sshllo.u32 0, 1
    %s141 = smul.addr 1, 13
    %s142 = scalar_lea.vmem %s1, %s141
    %143 = vst [vmem:[%s142] sm:%s140] %v139
    %s144 = scalar_lea.vmem [#allocation0], 112
    %v145 = vld [vmem:[%s144] sm:%s62]
    %s146 = sshllo.u32 0, 1
    %s147 = smul.addr 1, 14
    %s148 = scalar_lea.vmem %s1, %s147
    %149 = vst [vmem:[%s148] sm:%s146] %v145
    %s150 = scalar_lea.vmem [#allocation0], 120
    %v151 = vld [vmem:[%s150] sm:%s62]
    %s152 = sshllo.u32 0, 1
    %s153 = smul.addr 1, 15
    %s154 = scalar_lea.vmem %s1, %s153
    %155 = vst [vmem:[%s154] sm:%s152] %v151
    %s156 = scalar_lea.vmem [#allocation0], 128
    %v157 = vld [vmem:[%s156] sm:%s62]
    %s158 = sshllo.u32 0, 1
    %s159 = smul.addr 1, 16
    %s160 = scalar_lea.vmem %s1, %s159
    %161 = vst [vmem:[%s160] sm:%s158] %v157
    %s162 = scalar_lea.vmem [#allocation0], 136
    %v163 = vld [vmem:[%s162] sm:%s62]
    %s164 = sshllo.u32 0, 1
    %s165 = smul.addr 1, 17
    %s166 = scalar_lea.vmem %s1, %s165
    %167 = vst [vmem:[%s166] sm:%s164] %v163
    %s168 = scalar_lea.vmem [#allocation0], 144
    %v169 = vld [vmem:[%s168] sm:%s62]
    %s170 = sshllo.u32 0, 1
    %s171 = smul.addr 1, 18
    %s172 = scalar_lea.vmem %s1, %s171
    %173 = vst [vmem:[%s172] sm:%s170] %v169
    %s174 = scalar_lea.vmem [#allocation0], 152
    %v175 = vld [vmem:[%s174] sm:%s62]
    %s176 = sshllo.u32 0, 1
    %s177 = smul.addr 1, 19
    %s178 = scalar_lea.vmem %s1, %s177
    %179 = vst [vmem:[%s178] sm:%s176] %v175
    %s180 = scalar_lea.vmem [#allocation0], 160
    %v181 = vld [vmem:[%s180] sm:%s62]
    %s182 = sshllo.u32 0, 1
    %s183 = smul.addr 1, 20
    %s184 = scalar_lea.vmem %s1, %s183
    %185 = vst [vmem:[%s184] sm:%s182] %v181
    %s186 = scalar_lea.vmem [#allocation0], 168
    %v187 = vld [vmem:[%s186] sm:%s62]
    %s188 = sshllo.u32 0, 1
    %s189 = smul.addr 1, 21
    %s190 = scalar_lea.vmem %s1, %s189
    %191 = vst [vmem:[%s190] sm:%s188] %v187
    %s192 = scalar_lea.vmem [#allocation0], 176
    %v193 = vld [vmem:[%s192] sm:%s62]
    %s194 = sshllo.u32 0, 1
    %s195 = smul.addr 1, 22
    %s196 = scalar_lea.vmem %s1, %s195
    %197 = vst [vmem:[%s196] sm:%s194] %v193
    %s198 = scalar_lea.vmem [#allocation0], 184
    %v199 = vld [vmem:[%s198] sm:%s62]
    %s200 = sshllo.u32 0, 1
    %s201 = smul.addr 1, 23
    %s202 = scalar_lea.vmem %s1, %s201
    %203 = vst [vmem:[%s202] sm:%s200] %v199
    %s204 = scalar_lea.vmem [#allocation0], 192
    %v205 = vld [vmem:[%s204] sm:%s62]
    %s206 = sshllo.u32 0, 1
    %s207 = smul.addr 1, 24
    %s208 = scalar_lea.vmem %s1, %s207
    %209 = vst [vmem:[%s208] sm:%s206] %v205
    %s210 = scalar_lea.vmem [#allocation0], 200
    %v211 = vld [vmem:[%s210] sm:%s62]
    %s212 = sshllo.u32 0, 1
    %s213 = smul.addr 1, 25
    %s214 = scalar_lea.vmem %s1, %s213
    %215 = vst [vmem:[%s214] sm:%s212] %v211
    %s216 = scalar_lea.vmem [#allocation0], 208
    %v217 = vld [vmem:[%s216] sm:%s62]
    %s218 = sshllo.u32 0, 1
    %s219 = smul.addr 1, 26
    %s220 = scalar_lea.vmem %s1, %s219
    %221 = vst [vmem:[%s220] sm:%s218] %v217
    %s222 = scalar_lea.vmem [#allocation0], 216
    %v223 = vld [vmem:[%s222] sm:%s62]
    %s224 = sshllo.u32 0, 1
    %s225 = smul.addr 1, 27
    %s226 = scalar_lea.vmem %s1, %s225
    %227 = vst [vmem:[%s226] sm:%s224] %v223
    %s228 = scalar_lea.vmem [#allocation0], 224
    %v229 = vld [vmem:[%s228] sm:%s62]
    %s230 = sshllo.u32 0, 1
    %s231 = smul.addr 1, 28
    %s232 = scalar_lea.vmem %s1, %s231
    %233 = vst [vmem:[%s232] sm:%s230] %v229
    %s234 = scalar_lea.vmem [#allocation0], 232
    %v235 = vld [vmem:[%s234] sm:%s62]
    %s236 = sshllo.u32 0, 1
    %s237 = smul.addr 1, 29
    %s238 = scalar_lea.vmem %s1, %s237
    %239 = vst [vmem:[%s238] sm:%s236] %v235
    %s240 = scalar_lea.vmem [#allocation0], 240
    %v241 = vld [vmem:[%s240] sm:%s62]
    %s242 = sshllo.u32 0, 1
    %s243 = smul.addr 1, 30
    %s244 = scalar_lea.vmem %s1, %s243
    %245 = vst [vmem:[%s244] sm:%s242] %v241
    %s246 = scalar_lea.vmem [#allocation0], 248
    %v247 = vld [vmem:[%s246] sm:%s62]
    %s248 = sshllo.u32 0, 1
    %s249 = smul.addr 1, 31
    %s250 = scalar_lea.vmem %s1, %s249
    %251 = vst [vmem:[%s250] sm:%s248] %v247

// kernel: tile.18
$region0: #{tile.18}
  #allocation0 [shape = 's32[1]{0}', space=sflag, size = 0x4, scoped, tag = 'scoped memory for tile.18']
  %s0 = inlined_call_operand.vmem [shape: f32[64], index: 0, kind: input, shape index: {}]
  %s1 = inlined_call_operand.vmem [shape: f32[2,64], index: 1, kind: output, shape index: {}]
  // Predicated region
  $region2: #{tile.18} parent=0 // pred_check
    _
  $region3: #{tile.18} parent=0 // pred_check_branch
    %3 = sbr.rel (0) target = $region5
  $region4: #{tile.18} parent=0 // pred_region
    _
  $region5: #{tile.18} parent=0 // pred_fallthru
    _
  %v4 = vld [vmem:[%s0] ss:$0 sm:$0xff]
  %5 = vst [vmem:[%s1] sm:$0x3] %v4

// kernel: tile.19
$region0: #{tile.19}
  %s0 = inlined_call_operand.vmem [shape: f32[2,64], index: 0, kind: input, shape index: {}]
  %s1 = inlined_call_operand.vmem [shape: f32[1,128], index: 1, kind: output, shape index: {}]
  $region1: #{tile.19} parent=0
    #allocation0 [shape = 'u8[4096]{0}', space=vmem, size = 0x1000, scoped, tag = 'scoped mem for output reshape']
    #allocation1 [shape = 'u8[4096]{0}', space=vmem, size = 0x1000, scoped, tag = 'scoped mem for input reshape']
    %s3 = sshllo.u32 0, 2
    %v4 = vld [vmem:[%s0] sm:%s3]
    %5 = vst [vmem:[#allocation1] sm:%s3] %v4
    %v6 = vld [vmem:[#allocation1] sm:$0x1]
    %vm7 = vcmask 523264
    %8 = vst.msk [vmem:[#allocation0] sm:$0x1] %vm7, %v6
    %s9 = scalar_lea.vmem [#allocation1], 1
    %v10 = vld [vmem:[%s9] sm:$0x1]
    %11 = vrot.lane.b32.xlu0 %v10, 64
    %v12 = vpop.permute.xlu0 %11
    %vm13 = vcmask 1048064
    %14 = vst.msk [vmem:[#allocation0] sm:$0x1] %vm13, %v12
    %s16 = sshllo.u32 0, 1
    %v18 = vld [vmem:[#allocation0] sm:%s16]
    %s19 = sshllo.u32 0, 1
    %20 = vst [vmem:[%s1] sm:%s19] %v18

// kernel: vae_decoder_forward.3
$region0: #{vae_decoder_forward.3}
  #allocation0 [shape = 'u32[]', space=smem, size = 0x4, offset = 0x4, fixed_abs, tag = 'smem constant byte address 0x4 - core index']
  #allocation1 [shape = 'u32[144,128]{1,0:T(1,128)}', space=vmem, size = 0x12000, scoped, tag = 'internal scratch']
  %s0 = inlined_call_operand.vmem [shape: bf16[2,16], index: 0, kind: input, shape index: {}]
  %s1 = inlined_call_operand.vmem [shape: bf16[16,4096], index: 1, kind: input, shape index: {}]
  %s2 = inlined_call_operand.vmem [shape: f32[1,4096], index: 2, kind: input, shape index: {}]
  %s3 = inlined_call_operand.vmem [shape: bf16[2,4096], index: 3, kind: output, shape index: {}]
  %s4 = sld [smem:[#allocation0]]
  $region22: #{vae_decoder_forward.3} parent=0
    _
  %s6 = ssub.s32 1, %s4
  %s7 = scalar_select 0, %s6, %s4
  // Predicated region
  $region2: #{vae_decoder_forward.3} parent=0 // pred_check
    _
  $region3: #{vae_decoder_forward.3} parent=0 // pred_check_branch
    %9 = sbr.rel (0) target = $region5
  $region4: #{vae_decoder_forward.3} parent=0 // pred_region
    _
  $region5: #{vae_decoder_forward.3} parent=0 // pred_fallthru
    _
  // Predicated region
  $region6: #{vae_decoder_forward.3} parent=0 // pred_check
    _
  $region7: #{vae_decoder_forward.3} parent=0 // pred_check_branch
    %11 = sbr.rel (0) target = $region9
  $region8: #{vae_decoder_forward.3} parent=0 // pred_region
    _
  $region9: #{vae_decoder_forward.3} parent=0 // pred_fallthru
    _
  // Predicated region
  $region10: #{vae_decoder_forward.3} parent=0 // pred_check
    _
  $region11: #{vae_decoder_forward.3} parent=0 // pred_check_branch
    %13 = sbr.rel (0) target = $region13
  $region12: #{vae_decoder_forward.3} parent=0 // pred_region
    _
  $region13: #{vae_decoder_forward.3} parent=0 // pred_fallthru
    _
  %v15 = vld [vmem:[%s0] sm:$0x1]
  %v16 = vld [vmem:[%s1] sm:$0xff]
  %v17 = vld [vmem:[%s1 + $0x8] sm:$0xff]
  %v18 = vld [vmem:[%s1 + $0x10] sm:$0xff]
  %v19 = vld [vmem:[%s1 + $0x18] sm:$0xff]
  %v20 = vld [vmem:[%s1 + $0x20] sm:$0xff]
  %v21 = vld [vmem:[%s1 + $0x28] sm:$0xff]
  %v22 = vld [vmem:[%s1 + $0x30] sm:$0xff]
  %v23 = vld [vmem:[%s1 + $0x38] sm:$0xff]
  %v24 = vld [vmem:[%s1 + $0x40] sm:$0xff]
  %v25 = vld [vmem:[%s1 + $0x48] sm:$0xff]
  %v26 = vld [vmem:[%s1 + $0x50] sm:$0xff]
  %v27 = vld [vmem:[%s1 + $0x58] sm:$0xff]
  %v28 = vld [vmem:[%s1 + $0x60] sm:$0xff]
  %v29 = vld [vmem:[%s1 + $0x68] sm:$0xff]
  %v30 = vld [vmem:[%s1 + $0x70] sm:$0xff]
  %v31 = vld [vmem:[%s1 + $0x78] sm:$0xff]
  %v32 = vld [vmem:[%s1 + $0x80] sm:$0xff]
  %v33 = vld [vmem:[%s1 + $0x88] sm:$0xff]
  %v34 = vld [vmem:[%s1 + $0x90] sm:$0xff]
  %v35 = vld [vmem:[%s1 + $0x98] sm:$0xff]
  %v36 = vld [vmem:[%s1 + $0xa0] sm:$0xff]
  %v37 = vld [vmem:[%s1 + $0xa8] sm:$0xff]
  %v38 = vld [vmem:[%s1 + $0xb0] sm:$0xff]
  %v39 = vld [vmem:[%s1 + $0xb8] sm:$0xff]
  %v40 = vld [vmem:[%s1 + $0xc0] sm:$0xff]
  %v41 = vld [vmem:[%s1 + $0xc8] sm:$0xff]
  %v42 = vld [vmem:[%s1 + $0xd0] sm:$0xff]
  %v43 = vld [vmem:[%s1 + $0xd8] sm:$0xff]
  %v44 = vld [vmem:[%s1 + $0xe0] sm:$0xff]
  %v45 = vld [vmem:[%s1 + $0xe8] sm:$0xff]
  %v46 = vld [vmem:[%s1 + $0xf0] sm:$0xff]
  %v47 = vld [vmem:[%s1 + $0xf8] sm:$0xff]
  %v48 = vld [vmem:[%s2] sm:$0xff]
  %v49 = vld [vmem:[%s2 + $0x8] sm:$0xff]
  %v50 = vld [vmem:[%s2 + $0x10] sm:$0xff]
  %v51 = vld [vmem:[%s2 + $0x18] sm:$0xff]
  %v56 = vlaneseq
  %v57 = vshrl.u32 %v56, 7
  %v58 = vsub.s32 0, %v57
  %v59 = vrot.slane %v48, %v58
  %v60 = vlaneseq
  %v61 = vshrl.u32 %v60, 7
  %v62 = vsub.s32 1, %v61
  %v63 = vrot.slane %v48, %v62
  %v64 = vlaneseq
  %v65 = vshrl.u32 %v64, 7
  %v66 = vsub.s32 2, %v65
  %v67 = vrot.slane %v48, %v66
  %v68 = vlaneseq
  %v69 = vshrl.u32 %v68, 7
  %v70 = vsub.s32 3, %v69
  %v71 = vrot.slane %v48, %v70
  %v72 = vlaneseq
  %v73 = vshrl.u32 %v72, 7
  %v74 = vsub.s32 4, %v73
  %v75 = vrot.slane %v48, %v74
  %v76 = vlaneseq
  %v77 = vshrl.u32 %v76, 7
  %v78 = vsub.s32 5, %v77
  %v79 = vrot.slane %v48, %v78
  %v80 = vlaneseq
  %v81 = vshrl.u32 %v80, 7
  %v82 = vsub.s32 6, %v81
  %v83 = vrot.slane %v48, %v82
  %v84 = vlaneseq
  %v85 = vshrl.u32 %v84, 7
  %v86 = vsub.s32 7, %v85
  %v87 = vrot.slane %v48, %v86
  %v88 = vlaneseq
  %v89 = vshrl.u32 %v88, 7
  %v90 = vsub.s32 0, %v89
  %v91 = vrot.slane %v49, %v90
  %v92 = vlaneseq
  %v93 = vshrl.u32 %v92, 7
  %v94 = vsub.s32 1, %v93
  %v95 = vrot.slane %v49, %v94
  %v96 = vlaneseq
  %v97 = vshrl.u32 %v96, 7
  %v98 = vsub.s32 2, %v97
  %v99 = vrot.slane %v49, %v98
  %v100 = vlaneseq
  %v101 = vshrl.u32 %v100, 7
  %v102 = vsub.s32 3, %v101
  %v103 = vrot.slane %v49, %v102
  %v104 = vlaneseq
  %v105 = vshrl.u32 %v104, 7
  %v106 = vsub.s32 4, %v105
  %v107 = vrot.slane %v49, %v106
  %v108 = vlaneseq
  %v109 = vshrl.u32 %v108, 7
  %v110 = vsub.s32 5, %v109
  %v111 = vrot.slane %v49, %v110
  %v112 = vlaneseq
  %v113 = vshrl.u32 %v112, 7
  %v114 = vsub.s32 6, %v113
  %v115 = vrot.slane %v49, %v114
  %v116 = vlaneseq
  %v117 = vshrl.u32 %v116, 7
  %v118 = vsub.s32 7, %v117
  %v119 = vrot.slane %v49, %v118
  %v120 = vlaneseq
  %v121 = vshrl.u32 %v120, 7
  %v122 = vsub.s32 0, %v121
  %v123 = vrot.slane %v50, %v122
  %v124 = vlaneseq
  %v125 = vshrl.u32 %v124, 7
  %v126 = vsub.s32 1, %v125
  %v127 = vrot.slane %v50, %v126
  %v128 = vlaneseq
  %v129 = vshrl.u32 %v128, 7
  %v130 = vsub.s32 2, %v129
  %v131 = vrot.slane %v50, %v130
  %v132 = vlaneseq
  %v133 = vshrl.u32 %v132, 7
  %v134 = vsub.s32 3, %v133
  %v135 = vrot.slane %v50, %v134
  %v136 = vlaneseq
  %v137 = vshrl.u32 %v136, 7
  %v138 = vsub.s32 4, %v137
  %v139 = vrot.slane %v50, %v138
  %v140 = vlaneseq
  %v141 = vshrl.u32 %v140, 7
  %v142 = vsub.s32 5, %v141
  %v143 = vrot.slane %v50, %v142
  %v144 = vlaneseq
  %v145 = vshrl.u32 %v144, 7
  %v146 = vsub.s32 6, %v145
  %v147 = vrot.slane %v50, %v146
  %v148 = vlaneseq
  %v149 = vshrl.u32 %v148, 7
  %v150 = vsub.s32 7, %v149
  %v151 = vrot.slane %v50, %v150
  %v152 = vlaneseq
  %v153 = vshrl.u32 %v152, 7
  %v154 = vsub.s32 0, %v153
  %v155 = vrot.slane %v51, %v154
  %v156 = vlaneseq
  %v157 = vshrl.u32 %v156, 7
  %v158 = vsub.s32 1, %v157
  %v159 = vrot.slane %v51, %v158
  %v160 = vlaneseq
  %v161 = vshrl.u32 %v160, 7
  %v162 = vsub.s32 2, %v161
  %v163 = vrot.slane %v51, %v162
  %v164 = vlaneseq
  %v165 = vshrl.u32 %v164, 7
  %v166 = vsub.s32 3, %v165
  %v167 = vrot.slane %v51, %v166
  %v168 = vlaneseq
  %v169 = vshrl.u32 %v168, 7
  %v170 = vsub.s32 4, %v169
  %v171 = vrot.slane %v51, %v170
  %v172 = vlaneseq
  %v173 = vshrl.u32 %v172, 7
  %v174 = vsub.s32 5, %v173
  %v175 = vrot.slane %v51, %v174
  %v176 = vlaneseq
  %v177 = vshrl.u32 %v176, 7
  %v178 = vsub.s32 6, %v177
  %v179 = vrot.slane %v51, %v178
  %v180 = vlaneseq
  %v181 = vshrl.u32 %v180, 7
  %v182 = vsub.s32 7, %v181
  %v183 = vrot.slane %v51, %v182
  %v248 = vunpack.c.l.b16 %v16
  %v249 = vunpack.c.h.b16 %v16
  %v250 = vunpack.c.l.b16 %v17
  %v251 = vunpack.c.h.b16 %v17
  %v252 = vunpack.c.l.b16 %v18
  %v253 = vunpack.c.h.b16 %v18
  %v254 = vunpack.c.l.b16 %v19
  %v255 = vunpack.c.h.b16 %v19
  %v256 = vunpack.c.l.b16 %v20
  %v257 = vunpack.c.h.b16 %v20
  %v258 = vunpack.c.l.b16 %v21
  %v259 = vunpack.c.h.b16 %v21
  %v260 = vunpack.c.l.b16 %v22
  %v261 = vunpack.c.h.b16 %v22
  %v262 = vunpack.c.l.b16 %v23
  %v263 = vunpack.c.h.b16 %v23
  %v264 = vunpack.c.l.b16 %v24
  %v265 = vunpack.c.h.b16 %v24
  %v266 = vunpack.c.l.b16 %v25
  %v267 = vunpack.c.h.b16 %v25
  %v268 = vunpack.c.l.b16 %v26
  %v269 = vunpack.c.h.b16 %v26
  %v270 = vunpack.c.l.b16 %v27
  %v271 = vunpack.c.h.b16 %v27
  %v272 = vunpack.c.l.b16 %v28
  %v273 = vunpack.c.h.b16 %v28
  %v274 = vunpack.c.l.b16 %v29
  %v275 = vunpack.c.h.b16 %v29
  %v276 = vunpack.c.l.b16 %v30
  %v277 = vunpack.c.h.b16 %v30
  %v278 = vunpack.c.l.b16 %v31
  %v279 = vunpack.c.h.b16 %v31
  %v280 = vunpack.c.l.b16 %v32
  %v281 = vunpack.c.h.b16 %v32
  %v282 = vunpack.c.l.b16 %v33
  %v283 = vunpack.c.h.b16 %v33
  %v284 = vunpack.c.l.b16 %v34
  %v285 = vunpack.c.h.b16 %v34
  %v286 = vunpack.c.l.b16 %v35
  %v287 = vunpack.c.h.b16 %v35
  %v288 = vunpack.c.l.b16 %v36
  %v289 = vunpack.c.h.b16 %v36
  %v290 = vunpack.c.l.b16 %v37
  %v291 = vunpack.c.h.b16 %v37
  %v292 = vunpack.c.l.b16 %v38
  %v293 = vunpack.c.h.b16 %v38
  %v294 = vunpack.c.l.b16 %v39
  %v295 = vunpack.c.h.b16 %v39
  %v296 = vunpack.c.l.b16 %v40
  %v297 = vunpack.c.h.b16 %v40
  %v298 = vunpack.c.l.b16 %v41
  %v299 = vunpack.c.h.b16 %v41
  %v300 = vunpack.c.l.b16 %v42
  %v301 = vunpack.c.h.b16 %v42
  %v302 = vunpack.c.l.b16 %v43
  %v303 = vunpack.c.h.b16 %v43
  %v304 = vunpack.c.l.b16 %v44
  %v305 = vunpack.c.h.b16 %v44
  %v306 = vunpack.c.l.b16 %v45
  %v307 = vunpack.c.h.b16 %v45
  %v308 = vunpack.c.l.b16 %v46
  %v309 = vunpack.c.h.b16 %v46
  %v310 = vunpack.c.l.b16 %v47
  %v311 = vunpack.c.h.b16 %v47
  %v312 = vpack.c.b16 %v280, %v248
  %v313 = vpack.c.b16 %v281, %v249
  %v314 = vpack.c.b16 %v282, %v250
  %v315 = vpack.c.b16 %v283, %v251
  %v316 = vpack.c.b16 %v284, %v252
  %v317 = vpack.c.b16 %v285, %v253
  %v318 = vpack.c.b16 %v286, %v254
  %v319 = vpack.c.b16 %v287, %v255
  %v320 = vpack.c.b16 %v288, %v256
  %v321 = vpack.c.b16 %v289, %v257
  %v322 = vpack.c.b16 %v290, %v258
  %v323 = vpack.c.b16 %v291, %v259
  %v324 = vpack.c.b16 %v292, %v260
  %v325 = vpack.c.b16 %v293, %v261
  %v326 = vpack.c.b16 %v294, %v262
  %v327 = vpack.c.b16 %v295, %v263
  %v328 = vpack.c.b16 %v296, %v264
  %v329 = vpack.c.b16 %v297, %v265
  %v330 = vpack.c.b16 %v298, %v266
  %v331 = vpack.c.b16 %v299, %v267
  %v332 = vpack.c.b16 %v300, %v268
  %v333 = vpack.c.b16 %v301, %v269
  %v334 = vpack.c.b16 %v302, %v270
  %v335 = vpack.c.b16 %v303, %v271
  %v336 = vpack.c.b16 %v304, %v272
  %v337 = vpack.c.b16 %v305, %v273
  %v338 = vpack.c.b16 %v306, %v274
  %v339 = vpack.c.b16 %v307, %v275
  %v340 = vpack.c.b16 %v308, %v276
  %v341 = vpack.c.b16 %v309, %v277
  %v342 = vpack.c.b16 %v310, %v278
  %v343 = vpack.c.b16 %v311, %v279
  %vm376 = vcmask 130048
  %v378 = vsel %vm376, %v15, 0
  %380 = vmatprep.subr.bf16.mxu0 %v313
  %381 = vmatpush1.bf16.msra.mxu0 %v312
  %382 = vmatprep.subr.bf16.mxu0 0
  %383 = vmatpush1.bf16.msra.mxu0 0
  %384 = vmatprep.subr.bf16.mxu0 0
  %385 = vmatpush1.bf16.msra.mxu0 0
  %386 = vmatprep.subr.bf16.mxu0 0
  %387 = vmatpush1.bf16.msra.mxu0 0
  %388 = vmatprep.subr.bf16.mxu0 0
  %389 = vmatpush1.bf16.msra.mxu0 0
  %390 = vmatprep.subr.bf16.mxu0 0
  %391 = vmatpush1.bf16.msra.mxu0 0
  %392 = vmatprep.subr.bf16.mxu0 0
  %393 = vmatpush1.bf16.msra.mxu0 0
  %394 = vmatprep.subr.bf16.mxu0 0
  %395 = vmatpush1.bf16.msra.mxu0 0
  %396 = vmatprep.subr.bf16.mxu0 0
  %397 = vmatpush1.bf16.msra.mxu0 0
  %398 = vmatprep.subr.bf16.mxu0 0
  %399 = vmatpush1.bf16.msra.mxu0 0
  %400 = vmatprep.subr.bf16.mxu0 0
  %401 = vmatpush1.bf16.msra.mxu0 0
  %402 = vmatprep.subr.bf16.mxu0 0
  %403 = vmatpush1.bf16.msra.mxu0 0
  %404 = vmatprep.subr.bf16.mxu0 0
  %405 = vmatpush1.bf16.msra.mxu0 0
  %406 = vmatprep.subr.bf16.mxu0 0
  %407 = vmatpush1.bf16.msra.mxu0 0
  %408 = vmatprep.subr.bf16.mxu0 0
  %409 = vmatpush1.bf16.msra.mxu0 0
  %410 = vmatprep.subr.bf16.mxu0 0
  %411 = vmatpush1.bf16.msra.mxu0 0
  %412 = vmatprep.mubr.bf16.mxu0 0
  %413 = vmatmul.mubr.bf16.gmra.mrb[0].mxu0 %v378
  %v414 = vpop.f32.mrb[0].mxu0
  %v415 = vadd.f32 %v59, %v414
  %v416 = vpop.f32.mrb[0].mxu0
  %v417 = vadd.f32 %v63, %v416
  %v418 = vpop.f32.mrb[0].mxu0
  %v419 = vpop.f32.mrb[0].mxu0
  %420 = vdwg.mxu0
  %421 = vmatprep.subr.bf16.mxu0 %v315
  %422 = vmatpush1.bf16.msra.mxu0 %v314
  %423 = vmatprep.subr.bf16.mxu0 0
  %424 = vmatpush1.bf16.msra.mxu0 0
  %425 = vmatprep.subr.bf16.mxu0 0
  %426 = vmatpush1.bf16.msra.mxu0 0
  %427 = vmatprep.subr.bf16.mxu0 0
  %428 = vmatpush1.bf16.msra.mxu0 0
  %429 = vmatprep.subr.bf16.mxu0 0
  %430 = vmatpush1.bf16.msra.mxu0 0
  %431 = vmatprep.subr.bf16.mxu0 0
  %432 = vmatpush1.bf16.msra.mxu0 0
  %433 = vmatprep.subr.bf16.mxu0 0
  %434 = vmatpush1.bf16.msra.mxu0 0
  %435 = vmatprep.subr.bf16.mxu0 0
  %436 = vmatpush1.bf16.msra.mxu0 0
  %437 = vmatprep.subr.bf16.mxu0 0
  %438 = vmatpush1.bf16.msra.mxu0 0
  %439 = vmatprep.subr.bf16.mxu0 0
  %440 = vmatpush1.bf16.msra.mxu0 0
  %441 = vmatprep.subr.bf16.mxu0 0
  %442 = vmatpush1.bf16.msra.mxu0 0
  %443 = vmatprep.subr.bf16.mxu0 0
  %444 = vmatpush1.bf16.msra.mxu0 0
  %445 = vmatprep.subr.bf16.mxu0 0
  %446 = vmatpush1.bf16.msra.mxu0 0
  %447 = vmatprep.subr.bf16.mxu0 0
  %448 = vmatpush1.bf16.msra.mxu0 0
  %449 = vmatprep.subr.bf16.mxu0 0
  %450 = vmatpush1.bf16.msra.mxu0 0
  %451 = vmatprep.subr.bf16.mxu0 0
  %452 = vmatpush1.bf16.msra.mxu0 0
  %453 = vmatprep.mubr.bf16.mxu0 0
  %454 = vmatmul.mubr.bf16.gmra.mrb[0].mxu0 %v378
  %v455 = vpop.f32.mrb[0].mxu0
  %v456 = vadd.f32 %v67, %v455
  %v457 = vpop.f32.mrb[0].mxu0
  %v458 = vadd.f32 %v71, %v457
  %v459 = vpop.f32.mrb[0].mxu0
  %v460 = vpop.f32.mrb[0].mxu0
  %461 = vdwg.mxu0
  %462 = vmatprep.subr.bf16.mxu0 %v317
  %463 = vmatpush1.bf16.msra.mxu0 %v316
  %464 = vmatprep.subr.bf16.mxu0 0
  %465 = vmatpush1.bf16.msra.mxu0 0
  %466 = vmatprep.subr.bf16.mxu0 0
  %467 = vmatpush1.bf16.msra.mxu0 0
  %468 = vmatprep.subr.bf16.mxu0 0
  %469 = vmatpush1.bf16.msra.mxu0 0
  %470 = vmatprep.subr.bf16.mxu0 0
  %471 = vmatpush1.bf16.msra.mxu0 0
  %472 = vmatprep.subr.bf16.mxu0 0
  %473 = vmatpush1.bf16.msra.mxu0 0
  %474 = vmatprep.subr.bf16.mxu0 0
  %475 = vmatpush1.bf16.msra.mxu0 0
  %476 = vmatprep.subr.bf16.mxu0 0
  %477 = vmatpush1.bf16.msra.mxu0 0
  %478 = vmatprep.subr.bf16.mxu0 0
  %479 = vmatpush1.bf16.msra.mxu0 0
  %480 = vmatprep.subr.bf16.mxu0 0
  %481 = vmatpush1.bf16.msra.mxu0 0
  %482 = vmatprep.subr.bf16.mxu0 0
  %483 = vmatpush1.bf16.msra.mxu0 0
  %484 = vmatprep.subr.bf16.mxu0 0
  %485 = vmatpush1.bf16.msra.mxu0 0
  %486 = vmatprep.subr.bf16.mxu0 0
  %487 = vmatpush1.bf16.msra.mxu0 0
  %488 = vmatprep.subr.bf16.mxu0 0
  %489 = vmatpush1.bf16.msra.mxu0 0
  %490 = vmatprep.subr.bf16.mxu0 0
  %491 = vmatpush1.bf16.msra.mxu0 0
  %492 = vmatprep.subr.bf16.mxu0 0
  %493 = vmatpush1.bf16.msra.mxu0 0
  %494 = vmatprep.mubr.bf16.mxu0 0
  %495 = vmatmul.mubr.bf16.gmra.mrb[0].mxu0 %v378
  %v496 = vpop.f32.mrb[0].mxu0
  %v497 = vadd.f32 %v75, %v496
  %v498 = vpop.f32.mrb[0].mxu0
  %v499 = vadd.f32 %v79, %v498
  %v500 = vpop.f32.mrb[0].mxu0
  %v501 = vpop.f32.mrb[0].mxu0
  %502 = vdwg.mxu0
  %503 = vmatprep.subr.bf16.mxu0 %v319
  %504 = vmatpush1.bf16.msra.mxu0 %v318
  %505 = vmatprep.subr.bf16.mxu0 0
  %506 = vmatpush1.bf16.msra.mxu0 0
  %507 = vmatprep.subr.bf16.mxu0 0
  %508 = vmatpush1.bf16.msra.mxu0 0
  %509 = vmatprep.subr.bf16.mxu0 0
  %510 = vmatpush1.bf16.msra.mxu0 0
  %511 = vmatprep.subr.bf16.mxu0 0
  %512 = vmatpush1.bf16.msra.mxu0 0
  %513 = vmatprep.subr.bf16.mxu0 0
  %514 = vmatpush1.bf16.msra.mxu0 0
  %515 = vmatprep.subr.bf16.mxu0 0
  %516 = vmatpush1.bf16.msra.mxu0 0
  %517 = vmatprep.subr.bf16.mxu0 0
  %518 = vmatpush1.bf16.msra.mxu0 0
  %519 = vmatprep.subr.bf16.mxu0 0
  %520 = vmatpush1.bf16.msra.mxu0 0
  %521 = vmatprep.subr.bf16.mxu0 0
  %522 = vmatpush1.bf16.msra.mxu0 0
  %523 = vmatprep.subr.bf16.mxu0 0
  %524 = vmatpush1.bf16.msra.mxu0 0
  %525 = vmatprep.subr.bf16.mxu0 0
  %526 = vmatpush1.bf16.msra.mxu0 0
  %527 = vmatprep.subr.bf16.mxu0 0
  %528 = vmatpush1.bf16.msra.mxu0 0
  %529 = vmatprep.subr.bf16.mxu0 0
  %530 = vmatpush1.bf16.msra.mxu0 0
  %531 = vmatprep.subr.bf16.mxu0 0
  %532 = vmatpush1.bf16.msra.mxu0 0
  %533 = vmatprep.subr.bf16.mxu0 0
  %534 = vmatpush1.bf16.msra.mxu0 0
  %535 = vmatprep.mubr.bf16.mxu0 0
  %536 = vmatmul.mubr.bf16.gmra.mrb[0].mxu0 %v378
  %v537 = vpop.f32.mrb[0].mxu0
  %v538 = vadd.f32 %v83, %v537
  %v539 = vpop.f32.mrb[0].mxu0
  %v540 = vadd.f32 %v87, %v539
  %v541 = vpop.f32.mrb[0].mxu0
  %v542 = vpop.f32.mrb[0].mxu0
  %543 = vdwg.mxu0
  %544 = vmatprep.subr.bf16.mxu0 %v321
  %545 = vmatpush1.bf16.msra.mxu0 %v320
  %546 = vmatprep.subr.bf16.mxu0 0
  %547 = vmatpush1.bf16.msra.mxu0 0
  %548 = vmatprep.subr.bf16.mxu0 0
  %549 = vmatpush1.bf16.msra.mxu0 0
  %550 = vmatprep.subr.bf16.mxu0 0
  %551 = vmatpush1.bf16.msra.mxu0 0
  %552 = vmatprep.subr.bf16.mxu0 0
  %553 = vmatpush1.bf16.msra.mxu0 0
  %554 = vmatprep.subr.bf16.mxu0 0
  %555 = vmatpush1.bf16.msra.mxu0 0
  %556 = vmatprep.subr.bf16.mxu0 0
  %557 = vmatpush1.bf16.msra.mxu0 0
  %558 = vmatprep.subr.bf16.mxu0 0
  %559 = vmatpush1.bf16.msra.mxu0 0
  %560 = vmatprep.subr.bf16.mxu0 0
  %561 = vmatpush1.bf16.msra.mxu0 0
  %562 = vmatprep.subr.bf16.mxu0 0
  %563 = vmatpush1.bf16.msra.mxu0 0
  %564 = vmatprep.subr.bf16.mxu0 0
  %565 = vmatpush1.bf16.msra.mxu0 0
  %566 = vmatprep.subr.bf16.mxu0 0
  %567 = vmatpush1.bf16.msra.mxu0 0
  %568 = vmatprep.subr.bf16.mxu0 0
  %569 = vmatpush1.bf16.msra.mxu0 0
  %570 = vmatprep.subr.bf16.mxu0 0
  %571 = vmatpush1.bf16.msra.mxu0 0
  %572 = vmatprep.subr.bf16.mxu0 0
  %573 = vmatpush1.bf16.msra.mxu0 0
  %574 = vmatprep.subr.bf16.mxu0 0
  %575 = vmatpush1.bf16.msra.mxu0 0
  %576 = vmatprep.mubr.bf16.mxu0 0
  %577 = vmatmul.mubr.bf16.gmra.mrb[0].mxu0 %v378
  %v578 = vpop.f32.mrb[0].mxu0
  %v579 = vadd.f32 %v91, %v578
  %v580 = vpop.f32.mrb[0].mxu0
  %v581 = vadd.f32 %v95, %v580
  %v582 = vpop.f32.mrb[0].mxu0
  %v583 = vpop.f32.mrb[0].mxu0
  %584 = vdwg.mxu0
  %585 = vmatprep.subr.bf16.mxu0 %v323
  %586 = vmatpush1.bf16.msra.mxu0 %v322
  %587 = vmatprep.subr.bf16.mxu0 0
  %588 = vmatpush1.bf16.msra.mxu0 0
  %589 = vmatprep.subr.bf16.mxu0 0
  %590 = vmatpush1.bf16.msra.mxu0 0
  %591 = vmatprep.subr.bf16.mxu0 0
  %592 = vmatpush1.bf16.msra.mxu0 0
  %593 = vmatprep.subr.bf16.mxu0 0
  %594 = vmatpush1.bf16.msra.mxu0 0
  %595 = vmatprep.subr.bf16.mxu0 0
  %596 = vmatpush1.bf16.msra.mxu0 0
  %597 = vmatprep.subr.bf16.mxu0 0
  %598 = vmatpush1.bf16.msra.mxu0 0
  %599 = vmatprep.subr.bf16.mxu0 0
  %600 = vmatpush1.bf16.msra.mxu0 0
  %601 = vmatprep.subr.bf16.mxu0 0
  %602 = vmatpush1.bf16.msra.mxu0 0
  %603 = vmatprep.subr.bf16.mxu0 0
  %604 = vmatpush1.bf16.msra.mxu0 0
  %605 = vmatprep.subr.bf16.mxu0 0
  %606 = vmatpush1.bf16.msra.mxu0 0
  %607 = vmatprep.subr.bf16.mxu0 0
  %608 = vmatpush1.bf16.msra.mxu0 0
  %609 = vmatprep.subr.bf16.mxu0 0
  %610 = vmatpush1.bf16.msra.mxu0 0
  %611 = vmatprep.subr.bf16.mxu0 0
  %612 = vmatpush1.bf16.msra.mxu0 0
  %613 = vmatprep.subr.bf16.mxu0 0
  %614 = vmatpush1.bf16.msra.mxu0 0
  %615 = vmatprep.subr.bf16.mxu0 0
  %616 = vmatpush1.bf16.msra.mxu0 0
  %617 = vmatprep.mubr.bf16.mxu0 0
  %618 = vmatmul.mubr.bf16.gmra.mrb[0].mxu0 %v378
  %v619 = vpop.f32.mrb[0].mxu0
  %v620 = vadd.f32 %v99, %v619
  %v621 = vpop.f32.mrb[0].mxu0
  %v622 = vadd.f32 %v103, %v621
  %v623 = vpop.f32.mrb[0].mxu0
  %v624 = vpop.f32.mrb[0].mxu0
  %625 = vdwg.mxu0
  %626 = vmatprep.subr.bf16.mxu0 %v325
  %627 = vmatpush1.bf16.msra.mxu0 %v324
  %628 = vmatprep.subr.bf16.mxu0 0
  %629 = vmatpush1.bf16.msra.mxu0 0
  %630 = vmatprep.subr.bf16.mxu0 0
  %631 = vmatpush1.bf16.msra.mxu0 0
  %632 = vmatprep.subr.bf16.mxu0 0
  %633 = vmatpush1.bf16.msra.mxu0 0
  %634 = vmatprep.subr.bf16.mxu0 0
  %635 = vmatpush1.bf16.msra.mxu0 0
  %636 = vmatprep.subr.bf16.mxu0 0
  %637 = vmatpush1.bf16.msra.mxu0 0
  %638 = vmatprep.subr.bf16.mxu0 0
  %639 = vmatpush1.bf16.msra.mxu0 0
  %640 = vmatprep.subr.bf16.mxu0 0
  %641 = vmatpush1.bf16.msra.mxu0 0
  %642 = vmatprep.subr.bf16.mxu0 0
  %643 = vmatpush1.bf16.msra.mxu0 0
  %644 = vmatprep.subr.bf16.mxu0 0
  %645 = vmatpush1.bf16.msra.mxu0 0
  %646 = vmatprep.subr.bf16.mxu0 0
  %647 = vmatpush1.bf16.msra.mxu0 0
  %648 = vmatprep.subr.bf16.mxu0 0
  %649 = vmatpush1.bf16.msra.mxu0 0
  %650 = vmatprep.subr.bf16.mxu0 0
  %651 = vmatpush1.bf16.msra.mxu0 0
  %652 = vmatprep.subr.bf16.mxu0 0
  %653 = vmatpush1.bf16.msra.mxu0 0
  %654 = vmatprep.subr.bf16.mxu0 0
  %655 = vmatpush1.bf16.msra.mxu0 0
  %656 = vmatprep.subr.bf16.mxu0 0
  %657 = vmatpush1.bf16.msra.mxu0 0
  %658 = vmatprep.mubr.bf16.mxu0 0
  %659 = vmatmul.mubr.bf16.gmra.mrb[0].mxu0 %v378
  %v660 = vpop.f32.mrb[0].mxu0
  %v661 = vadd.f32 %v107, %v660
  %v662 = vpop.f32.mrb[0].mxu0
  %v663 = vadd.f32 %v111, %v662
  %v664 = vpop.f32.mrb[0].mxu0
  %v665 = vpop.f32.mrb[0].mxu0
  %666 = vdwg.mxu0
  %667 = vmatprep.subr.bf16.mxu0 %v327
  %668 = vmatpush1.bf16.msra.mxu0 %v326
  %669 = vmatprep.subr.bf16.mxu0 0
  %670 = vmatpush1.bf16.msra.mxu0 0
  %671 = vmatprep.subr.bf16.mxu0 0
  %672 = vmatpush1.bf16.msra.mxu0 0
  %673 = vmatprep.subr.bf16.mxu0 0
  %674 = vmatpush1.bf16.msra.mxu0 0
  %675 = vmatprep.subr.bf16.mxu0 0
  %676 = vmatpush1.bf16.msra.mxu0 0
  %677 = vmatprep.subr.bf16.mxu0 0
  %678 = vmatpush1.bf16.msra.mxu0 0
  %679 = vmatprep.subr.bf16.mxu0 0
  %680 = vmatpush1.bf16.msra.mxu0 0
  %681 = vmatprep.subr.bf16.mxu0 0
  %682 = vmatpush1.bf16.msra.mxu0 0
  %683 = vmatprep.subr.bf16.mxu0 0
  %684 = vmatpush1.bf16.msra.mxu0 0
  %685 = vmatprep.subr.bf16.mxu0 0
  %686 = vmatpush1.bf16.msra.mxu0 0
  %687 = vmatprep.subr.bf16.mxu0 0
  %688 = vmatpush1.bf16.msra.mxu0 0
  %689 = vmatprep.subr.bf16.mxu0 0
  %690 = vmatpush1.bf16.msra.mxu0 0
  %691 = vmatprep.subr.bf16.mxu0 0
  %692 = vmatpush1.bf16.msra.mxu0 0
  %693 = vmatprep.subr.bf16.mxu0 0
  %694 = vmatpush1.bf16.msra.mxu0 0
  %695 = vmatprep.subr.bf16.mxu0 0
  %696 = vmatpush1.bf16.msra.mxu0 0
  %697 = vmatprep.subr.bf16.mxu0 0
  %698 = vmatpush1.bf16.msra.mxu0 0
  %699 = vmatprep.mubr.bf16.mxu0 0
  %700 = vmatmul.mubr.bf16.gmra.mrb[0].mxu0 %v378
  %v701 = vpop.f32.mrb[0].mxu0
  %v702 = vadd.f32 %v115, %v701
  %v703 = vpop.f32.mrb[0].mxu0
  %v704 = vadd.f32 %v119, %v703
  %v705 = vpop.f32.mrb[0].mxu0
  %v706 = vpop.f32.mrb[0].mxu0
  %707 = vdwg.mxu0
  %708 = vmatprep.subr.bf16.mxu0 %v329
  %709 = vmatpush1.bf16.msra.mxu0 %v328
  %710 = vmatprep.subr.bf16.mxu0 0
  %711 = vmatpush1.bf16.msra.mxu0 0
  %712 = vmatprep.subr.bf16.mxu0 0
  %713 = vmatpush1.bf16.msra.mxu0 0
  %714 = vmatprep.subr.bf16.mxu0 0
  %715 = vmatpush1.bf16.msra.mxu0 0
  %716 = vmatprep.subr.bf16.mxu0 0
  %717 = vmatpush1.bf16.msra.mxu0 0
  %718 = vmatprep.subr.bf16.mxu0 0
  %719 = vmatpush1.bf16.msra.mxu0 0
  %720 = vmatprep.subr.bf16.mxu0 0
  %721 = vmatpush1.bf16.msra.mxu0 0
  %722 = vmatprep.subr.bf16.mxu0 0
  %723 = vmatpush1.bf16.msra.mxu0 0
  %724 = vmatprep.subr.bf16.mxu0 0
  %725 = vmatpush1.bf16.msra.mxu0 0
  %726 = vmatprep.subr.bf16.mxu0 0
  %727 = vmatpush1.bf16.msra.mxu0 0
  %728 = vmatprep.subr.bf16.mxu0 0
  %729 = vmatpush1.bf16.msra.mxu0 0
  %730 = vmatprep.subr.bf16.mxu0 0
  %731 = vmatpush1.bf16.msra.mxu0 0
  %732 = vmatprep.subr.bf16.mxu0 0
  %733 = vmatpush1.bf16.msra.mxu0 0
  %734 = vmatprep.subr.bf16.mxu0 0
  %735 = vmatpush1.bf16.msra.mxu0 0
  %736 = vmatprep.subr.bf16.mxu0 0
  %737 = vmatpush1.bf16.msra.mxu0 0
  %738 = vmatprep.subr.bf16.mxu0 0
  %739 = vmatpush1.bf16.msra.mxu0 0
  %740 = vmatprep.mubr.bf16.mxu0 0
  %741 = vmatmul.mubr.bf16.gmra.mrb[0].mxu0 %v378
  %v742 = vpop.f32.mrb[0].mxu0
  %v743 = vadd.f32 %v123, %v742
  %v744 = vpop.f32.mrb[0].mxu0
  %v745 = vadd.f32 %v127, %v744
  %v746 = vpop.f32.mrb[0].mxu0
  %v747 = vpop.f32.mrb[0].mxu0
  %748 = vdwg.mxu0
  %749 = vmatprep.subr.bf16.mxu0 %v331
  %750 = vmatpush1.bf16.msra.mxu0 %v330
  %751 = vmatprep.subr.bf16.mxu0 0
  %752 = vmatpush1.bf16.msra.mxu0 0
  %753 = vmatprep.subr.bf16.mxu0 0
  %754 = vmatpush1.bf16.msra.mxu0 0
  %755 = vmatprep.subr.bf16.mxu0 0
  %756 = vmatpush1.bf16.msra.mxu0 0
  %757 = vmatprep.subr.bf16.mxu0 0
  %758 = vmatpush1.bf16.msra.mxu0 0
  %759 = vmatprep.subr.bf16.mxu0 0
  %760 = vmatpush1.bf16.msra.mxu0 0
  %761 = vmatprep.subr.bf16.mxu0 0
  %762 = vmatpush1.bf16.msra.mxu0 0
  %763 = vmatprep.subr.bf16.mxu0 0
  %764 = vmatpush1.bf16.msra.mxu0 0
  %765 = vmatprep.subr.bf16.mxu0 0
  %766 = vmatpush1.bf16.msra.mxu0 0
  %767 = vmatprep.subr.bf16.mxu0 0
  %768 = vmatpush1.bf16.msra.mxu0 0
  %769 = vmatprep.subr.bf16.mxu0 0
  %770 = vmatpush1.bf16.msra.mxu0 0
  %771 = vmatprep.subr.bf16.mxu0 0
  %772 = vmatpush1.bf16.msra.mxu0 0
  %773 = vmatprep.subr.bf16.mxu0 0
  %774 = vmatpush1.bf16.msra.mxu0 0
  %775 = vmatprep.subr.bf16.mxu0 0
  %776 = vmatpush1.bf16.msra.mxu0 0
  %777 = vmatprep.subr.bf16.mxu0 0
  %778 = vmatpush1.bf16.msra.mxu0 0
  %779 = vmatprep.subr.bf16.mxu0 0
  %780 = vmatpush1.bf16.msra.mxu0 0
  %781 = vmatprep.mubr.bf16.mxu0 0
  %782 = vmatmul.mubr.bf16.gmra.mrb[0].mxu0 %v378
  %v783 = vpop.f32.mrb[0].mxu0
  %v784 = vadd.f32 %v131, %v783
  %v785 = vpop.f32.mrb[0].mxu0
  %v786 = vadd.f32 %v135, %v785
  %v787 = vpop.f32.mrb[0].mxu0
  %v788 = vpop.f32.mrb[0].mxu0
  %789 = vdwg.mxu0
  %790 = vmatprep.subr.bf16.mxu0 %v333
  %791 = vmatpush1.bf16.msra.mxu0 %v332
  %792 = vmatprep.subr.bf16.mxu0 0
  %793 = vmatpush1.bf16.msra.mxu0 0
  %794 = vmatprep.subr.bf16.mxu0 0
  %795 = vmatpush1.bf16.msra.mxu0 0
  %796 = vmatprep.subr.bf16.mxu0 0
  %797 = vmatpush1.bf16.msra.mxu0 0
  %798 = vmatprep.subr.bf16.mxu0 0
  %799 = vmatpush1.bf16.msra.mxu0 0
  %800 = vmatprep.subr.bf16.mxu0 0
  %801 = vmatpush1.bf16.msra.mxu0 0
  %802 = vmatprep.subr.bf16.mxu0 0
  %803 = vmatpush1.bf16.msra.mxu0 0
  %804 = vmatprep.subr.bf16.mxu0 0
  %805 = vmatpush1.bf16.msra.mxu0 0
  %806 = vmatprep.subr.bf16.mxu0 0
  %807 = vmatpush1.bf16.msra.mxu0 0
  %808 = vmatprep.subr.bf16.mxu0 0
  %809 = vmatpush1.bf16.msra.mxu0 0
  %810 = vmatprep.subr.bf16.mxu0 0
  %811 = vmatpush1.bf16.msra.mxu0 0
  %812 = vmatprep.subr.bf16.mxu0 0
  %813 = vmatpush1.bf16.msra.mxu0 0
  %814 = vmatprep.subr.bf16.mxu0 0
  %815 = vmatpush1.bf16.msra.mxu0 0
  %816 = vmatprep.subr.bf16.mxu0 0
  %817 = vmatpush1.bf16.msra.mxu0 0
  %818 = vmatprep.subr.bf16.mxu0 0
  %819 = vmatpush1.bf16.msra.mxu0 0
  %820 = vmatprep.subr.bf16.mxu0 0
  %821 = vmatpush1.bf16.msra.mxu0 0
  %822 = vmatprep.mubr.bf16.mxu0 0
  %823 = vmatmul.mubr.bf16.gmra.mrb[0].mxu0 %v378
  %v824 = vpop.f32.mrb[0].mxu0
  %v825 = vadd.f32 %v139, %v824
  %v826 = vpop.f32.mrb[0].mxu0
  %v827 = vadd.f32 %v143, %v826
  %v828 = vpop.f32.mrb[0].mxu0
  %v829 = vpop.f32.mrb[0].mxu0
  %830 = vdwg.mxu0
  %831 = vmatprep.subr.bf16.mxu0 %v335
  %832 = vmatpush1.bf16.msra.mxu0 %v334
  %833 = vmatprep.subr.bf16.mxu0 0
  %834 = vmatpush1.bf16.msra.mxu0 0
  %835 = vmatprep.subr.bf16.mxu0 0
  %836 = vmatpush1.bf16.msra.mxu0 0
  %837 = vmatprep.subr.bf16.mxu0 0
  %838 = vmatpush1.bf16.msra.mxu0 0
  %839 = vmatprep.subr.bf16.mxu0 0
  %840 = vmatpush1.bf16.msra.mxu0 0
  %841 = vmatprep.subr.bf16.mxu0 0
  %842 = vmatpush1.bf16.msra.mxu0 0
  %843 = vmatprep.subr.bf16.mxu0 0
  %844 = vmatpush1.bf16.msra.mxu0 0
  %845 = vmatprep.subr.bf16.mxu0 0
  %846 = vmatpush1.bf16.msra.mxu0 0
  %847 = vmatprep.subr.bf16.mxu0 0
  %848 = vmatpush1.bf16.msra.mxu0 0
  %849 = vmatprep.subr.bf16.mxu0 0
  %850 = vmatpush1.bf16.msra.mxu0 0
  %851 = vmatprep.subr.bf16.mxu0 0
  %852 = vmatpush1.bf16.msra.mxu0 0
  %853 = vmatprep.subr.bf16.mxu0 0
  %854 = vmatpush1.bf16.msra.mxu0 0
  %855 = vmatprep.subr.bf16.mxu0 0
  %856 = vmatpush1.bf16.msra.mxu0 0
  %857 = vmatprep.subr.bf16.mxu0 0
  %858 = vmatpush1.bf16.msra.mxu0 0
  %859 = vmatprep.subr.bf16.mxu0 0
  %860 = vmatpush1.bf16.msra.mxu0 0
  %861 = vmatprep.subr.bf16.mxu0 0
  %862 = vmatpush1.bf16.msra.mxu0 0
  %863 = vmatprep.mubr.bf16.mxu0 0
  %864 = vmatmul.mubr.bf16.gmra.mrb[0].mxu0 %v378
  %v865 = vpop.f32.mrb[0].mxu0
  %v866 = vadd.f32 %v147, %v865
  %v867 = vpop.f32.mrb[0].mxu0
  %v868 = vadd.f32 %v151, %v867
  %v869 = vpop.f32.mrb[0].mxu0
  %v870 = vpop.f32.mrb[0].mxu0
  %871 = vdwg.mxu0
  %872 = vmatprep.subr.bf16.mxu0 %v337
  %873 = vmatpush1.bf16.msra.mxu0 %v336
  %874 = vmatprep.subr.bf16.mxu0 0
  %875 = vmatpush1.bf16.msra.mxu0 0
  %876 = vmatprep.subr.bf16.mxu0 0
  %877 = vmatpush1.bf16.msra.mxu0 0
  %878 = vmatprep.subr.bf16.mxu0 0
  %879 = vmatpush1.bf16.msra.mxu0 0
  %880 = vmatprep.subr.bf16.mxu0 0
  %881 = vmatpush1.bf16.msra.mxu0 0
  %882 = vmatprep.subr.bf16.mxu0 0
  %883 = vmatpush1.bf16.msra.mxu0 0
  %884 = vmatprep.subr.bf16.mxu0 0
  %885 = vmatpush1.bf16.msra.mxu0 0
  %886 = vmatprep.subr.bf16.mxu0 0
  %887 = vmatpush1.bf16.msra.mxu0 0
  %888 = vmatprep.subr.bf16.mxu0 0
  %889 = vmatpush1.bf16.msra.mxu0 0
  %890 = vmatprep.subr.bf16.mxu0 0
  %891 = vmatpush1.bf16.msra.mxu0 0
  %892 = vmatprep.subr.bf16.mxu0 0
  %893 = vmatpush1.bf16.msra.mxu0 0
  %894 = vmatprep.subr.bf16.mxu0 0
  %895 = vmatpush1.bf16.msra.mxu0 0
  %896 = vmatprep.subr.bf16.mxu0 0
  %897 = vmatpush1.bf16.msra.mxu0 0
  %898 = vmatprep.subr.bf16.mxu0 0
  %899 = vmatpush1.bf16.msra.mxu0 0
  %900 = vmatprep.subr.bf16.mxu0 0
  %901 = vmatpush1.bf16.msra.mxu0 0
  %902 = vmatprep.subr.bf16.mxu0 0
  %903 = vmatpush1.bf16.msra.mxu0 0
  %904 = vmatprep.mubr.bf16.mxu0 0
  %905 = vmatmul.mubr.bf16.gmra.mrb[0].mxu0 %v378
  %v906 = vpop.f32.mrb[0].mxu0
  %v907 = vadd.f32 %v155, %v906
  %v908 = vpop.f32.mrb[0].mxu0
  %v909 = vadd.f32 %v159, %v908
  %v910 = vpop.f32.mrb[0].mxu0
  %v911 = vpop.f32.mrb[0].mxu0
  %912 = vdwg.mxu0
  %913 = vmatprep.subr.bf16.mxu0 %v339
  %914 = vmatpush1.bf16.msra.mxu0 %v338
  %915 = vmatprep.subr.bf16.mxu0 0
  %916 = vmatpush1.bf16.msra.mxu0 0
  %917 = vmatprep.subr.bf16.mxu0 0
  %918 = vmatpush1.bf16.msra.mxu0 0
  %919 = vmatprep.subr.bf16.mxu0 0
  %920 = vmatpush1.bf16.msra.mxu0 0
  %921 = vmatprep.subr.bf16.mxu0 0
  %922 = vmatpush1.bf16.msra.mxu0 0
  %923 = vmatprep.subr.bf16.mxu0 0
  %924 = vmatpush1.bf16.msra.mxu0 0
  %925 = vmatprep.subr.bf16.mxu0 0
  %926 = vmatpush1.bf16.msra.mxu0 0
  %927 = vmatprep.subr.bf16.mxu0 0
  %928 = vmatpush1.bf16.msra.mxu0 0
  %929 = vmatprep.subr.bf16.mxu0 0
  %930 = vmatpush1.bf16.msra.mxu0 0
  %931 = vmatprep.subr.bf16.mxu0 0
  %932 = vmatpush1.bf16.msra.mxu0 0
  %933 = vmatprep.subr.bf16.mxu0 0
  %934 = vmatpush1.bf16.msra.mxu0 0
  %935 = vmatprep.subr.bf16.mxu0 0
  %936 = vmatpush1.bf16.msra.mxu0 0
  %937 = vmatprep.subr.bf16.mxu0 0
  %938 = vmatpush1.bf16.msra.mxu0 0
  %939 = vmatprep.subr.bf16.mxu0 0
  %940 = vmatpush1.bf16.msra.mxu0 0
  %941 = vmatprep.subr.bf16.mxu0 0
  %942 = vmatpush1.bf16.msra.mxu0 0
  %943 = vmatprep.subr.bf16.mxu0 0
  %944 = vmatpush1.bf16.msra.mxu0 0
  %945 = vmatprep.mubr.bf16.mxu0 0
  %946 = vmatmul.mubr.bf16.gmra.mrb[0].mxu0 %v378
  %v947 = vpop.f32.mrb[0].mxu0
  %v948 = vadd.f32 %v163, %v947
  %v949 = vpop.f32.mrb[0].mxu0
  %v950 = vadd.f32 %v167, %v949
  %v951 = vpop.f32.mrb[0].mxu0
  %v952 = vpop.f32.mrb[0].mxu0
  %953 = vdwg.mxu0
  %954 = vmatprep.subr.bf16.mxu0 %v341
  %955 = vmatpush1.bf16.msra.mxu0 %v340
  %956 = vmatprep.subr.bf16.mxu0 0
  %957 = vmatpush1.bf16.msra.mxu0 0
  %958 = vmatprep.subr.bf16.mxu0 0
  %959 = vmatpush1.bf16.msra.mxu0 0
  %960 = vmatprep.subr.bf16.mxu0 0
  %961 = vmatpush1.bf16.msra.mxu0 0
  %962 = vmatprep.subr.bf16.mxu0 0
  %963 = vmatpush1.bf16.msra.mxu0 0
  %964 = vmatprep.subr.bf16.mxu0 0
  %965 = vmatpush1.bf16.msra.mxu0 0
  %966 = vmatprep.subr.bf16.mxu0 0
  %967 = vmatpush1.bf16.msra.mxu0 0
  %968 = vmatprep.subr.bf16.mxu0 0
  %969 = vmatpush1.bf16.msra.mxu0 0
  %970 = vmatprep.subr.bf16.mxu0 0
  %971 = vmatpush1.bf16.msra.mxu0 0
  %972 = vmatprep.subr.bf16.mxu0 0
  %973 = vmatpush1.bf16.msra.mxu0 0
  %974 = vmatprep.subr.bf16.mxu0 0
  %975 = vmatpush1.bf16.msra.mxu0 0
  %976 = vmatprep.subr.bf16.mxu0 0
  %977 = vmatpush1.bf16.msra.mxu0 0
  %978 = vmatprep.subr.bf16.mxu0 0
  %979 = vmatpush1.bf16.msra.mxu0 0
  %980 = vmatprep.subr.bf16.mxu0 0
  %981 = vmatpush1.bf16.msra.mxu0 0
  %982 = vmatprep.subr.bf16.mxu0 0
  %983 = vmatpush1.bf16.msra.mxu0 0
  %984 = vmatprep.subr.bf16.mxu0 0
  %985 = vmatpush1.bf16.msra.mxu0 0
  %986 = vmatprep.mubr.bf16.mxu0 0
  %987 = vmatmul.mubr.bf16.gmra.mrb[0].mxu0 %v378
  %v988 = vpop.f32.mrb[0].mxu0
  %v989 = vadd.f32 %v171, %v988
  %v990 = vpop.f32.mrb[0].mxu0
  %v991 = vadd.f32 %v175, %v990
  %v992 = vpop.f32.mrb[0].mxu0
  %v993 = vpop.f32.mrb[0].mxu0
  %994 = vdwg.mxu0
  %995 = vmatprep.subr.bf16.mxu0 %v343
  %996 = vmatpush1.bf16.msra.mxu0 %v342
  %997 = vmatprep.subr.bf16.mxu0 0
  %998 = vmatpush1.bf16.msra.mxu0 0
  %999 = vmatprep.subr.bf16.mxu0 0
  %1000 = vmatpush1.bf16.msra.mxu0 0
  %1001 = vmatprep.subr.bf16.mxu0 0
  %1002 = vmatpush1.bf16.msra.mxu0 0
  %1003 = vmatprep.subr.bf16.mxu0 0
  %1004 = vmatpush1.bf16.msra.mxu0 0
  %1005 = vmatprep.subr.bf16.mxu0 0
  %1006 = vmatpush1.bf16.msra.mxu0 0
  %1007 = vmatprep.subr.bf16.mxu0 0
  %1008 = vmatpush1.bf16.msra.mxu0 0
  %1009 = vmatprep.subr.bf16.mxu0 0
  %1010 = vmatpush1.bf16.msra.mxu0 0
  %1011 = vmatprep.subr.bf16.mxu0 0
  %1012 = vmatpush1.bf16.msra.mxu0 0
  %1013 = vmatprep.subr.bf16.mxu0 0
  %1014 = vmatpush1.bf16.msra.mxu0 0
  %1015 = vmatprep.subr.bf16.mxu0 0
  %1016 = vmatpush1.bf16.msra.mxu0 0
  %1017 = vmatprep.subr.bf16.mxu0 0
  %1018 = vmatpush1.bf16.msra.mxu0 0
  %1019 = vmatprep.subr.bf16.mxu0 0
  %1020 = vmatpush1.bf16.msra.mxu0 0
  %1021 = vmatprep.subr.bf16.mxu0 0
  %1022 = vmatpush1.bf16.msra.mxu0 0
  %1023 = vmatprep.subr.bf16.mxu0 0
  %1024 = vmatpush1.bf16.msra.mxu0 0
  %1025 = vmatprep.subr.bf16.mxu0 0
  %1026 = vmatpush1.bf16.msra.mxu0 0
  %1027 = vmatprep.mubr.bf16.mxu0 0
  %1028 = vmatmul.mubr.bf16.gmra.mrb[0].mxu0 %v378
  %v1029 = vpop.f32.mrb[0].mxu0
  %v1030 = vadd.f32 %v179, %v1029
  %v1031 = vpop.f32.mrb[0].mxu0
  %v1032 = vadd.f32 %v183, %v1031
  %v1033 = vpop.f32.mrb[0].mxu0
  %v1034 = vpop.f32.mrb[0].mxu0
  %1035 = vdwg.mxu0
  %vm1036 = vcmp.ge.f32.partialorder %v415, 0.0
  %vm1037 = vcmp.ge.f32.partialorder %v417, 0.0
  %vm1038 = vcmp.ge.f32.partialorder %v456, 0.0
  %vm1039 = vcmp.ge.f32.partialorder %v458, 0.0
  %vm1040 = vcmp.ge.f32.partialorder %v497, 0.0
  %vm1041 = vcmp.ge.f32.partialorder %v499, 0.0
  %vm1042 = vcmp.ge.f32.partialorder %v538, 0.0
  %vm1043 = vcmp.ge.f32.partialorder %v540, 0.0
  %vm1044 = vcmp.ge.f32.partialorder %v579, 0.0
  %vm1045 = vcmp.ge.f32.partialorder %v581, 0.0
  %vm1046 = vcmp.ge.f32.partialorder %v620, 0.0
  %vm1047 = vcmp.ge.f32.partialorder %v622, 0.0
  %vm1048 = vcmp.ge.f32.partialorder %v661, 0.0
  %vm1049 = vcmp.ge.f32.partialorder %v663, 0.0
  %vm1050 = vcmp.ge.f32.partialorder %v702, 0.0
  %vm1051 = vcmp.ge.f32.partialorder %v704, 0.0
  %vm1052 = vcmp.ge.f32.partialorder %v743, 0.0
  %vm1053 = vcmp.ge.f32.partialorder %v745, 0.0
  %vm1054 = vcmp.ge.f32.partialorder %v784, 0.0
  %vm1055 = vcmp.ge.f32.partialorder %v786, 0.0
  %vm1056 = vcmp.ge.f32.partialorder %v825, 0.0
  %vm1057 = vcmp.ge.f32.partialorder %v827, 0.0
  %vm1058 = vcmp.ge.f32.partialorder %v866, 0.0
  %vm1059 = vcmp.ge.f32.partialorder %v868, 0.0
  %vm1060 = vcmp.ge.f32.partialorder %v907, 0.0
  %vm1061 = vcmp.ge.f32.partialorder %v909, 0.0
  %vm1062 = vcmp.ge.f32.partialorder %v948, 0.0
  %vm1063 = vcmp.ge.f32.partialorder %v950, 0.0
  %vm1064 = vcmp.ge.f32.partialorder %v989, 0.0
  %vm1065 = vcmp.ge.f32.partialorder %v991, 0.0
  %vm1066 = vcmp.ge.f32.partialorder %v1030, 0.0
  %vm1067 = vcmp.ge.f32.partialorder %v1032, 0.0
  %v1068 = vmul.f32 %v415, 0.2
  %v1069 = vmul.f32 %v417, 0.2
  %v1070 = vmul.f32 %v456, 0.2
  %v1071 = vmul.f32 %v458, 0.2
  %v1072 = vmul.f32 %v497, 0.2
  %v1073 = vmul.f32 %v499, 0.2
  %v1074 = vmul.f32 %v538, 0.2
  %v1075 = vmul.f32 %v540, 0.2
  %v1076 = vmul.f32 %v579, 0.2
  %v1077 = vmul.f32 %v581, 0.2
  %v1078 = vmul.f32 %v620, 0.2
  %v1079 = vmul.f32 %v622, 0.2
  %v1080 = vmul.f32 %v661, 0.2
  %v1081 = vmul.f32 %v663, 0.2
  %v1082 = vmul.f32 %v702, 0.2
  %v1083 = vmul.f32 %v704, 0.2
  %v1084 = vmul.f32 %v743, 0.2
  %v1085 = vmul.f32 %v745, 0.2
  %v1086 = vmul.f32 %v784, 0.2
  %v1087 = vmul.f32 %v786, 0.2
  %v1088 = vmul.f32 %v825, 0.2
  %v1089 = vmul.f32 %v827, 0.2
  %v1090 = vmul.f32 %v866, 0.2
  %v1091 = vmul.f32 %v868, 0.2
  %v1092 = vmul.f32 %v907, 0.2
  %v1093 = vmul.f32 %v909, 0.2
  %v1094 = vmul.f32 %v948, 0.2
  %v1095 = vmul.f32 %v950, 0.2
  %v1096 = vmul.f32 %v989, 0.2
  %v1097 = vmul.f32 %v991, 0.2
  %v1098 = vmul.f32 %v1030, 0.2
  %v1099 = vmul.f32 %v1032, 0.2
  %v1100 = vsel %vm1036, %v415, %v1068
  %v1101 = vsel %vm1037, %v417, %v1069
  %v1102 = vsel %vm1038, %v456, %v1070
  %v1103 = vsel %vm1039, %v458, %v1071
  %v1104 = vsel %vm1040, %v497, %v1072
  %v1105 = vsel %vm1041, %v499, %v1073
  %v1106 = vsel %vm1042, %v538, %v1074
  %v1107 = vsel %vm1043, %v540, %v1075
  %v1108 = vsel %vm1044, %v579, %v1076
  %v1109 = vsel %vm1045, %v581, %v1077
  %v1110 = vsel %vm1046, %v620, %v1078
  %v1111 = vsel %vm1047, %v622, %v1079
  %v1112 = vsel %vm1048, %v661, %v1080
  %v1113 = vsel %vm1049, %v663, %v1081
  %v1114 = vsel %vm1050, %v702, %v1082
  %v1115 = vsel %vm1051, %v704, %v1083
  %v1116 = vsel %vm1052, %v743, %v1084
  %v1117 = vsel %vm1053, %v745, %v1085
  %v1118 = vsel %vm1054, %v784, %v1086
  %v1119 = vsel %vm1055, %v786, %v1087
  %v1120 = vsel %vm1056, %v825, %v1088
  %v1121 = vsel %vm1057, %v827, %v1089
  %v1122 = vsel %vm1058, %v866, %v1090
  %v1123 = vsel %vm1059, %v868, %v1091
  %v1124 = vsel %vm1060, %v907, %v1092
  %v1125 = vsel %vm1061, %v909, %v1093
  %v1126 = vsel %vm1062, %v948, %v1094
  %v1127 = vsel %vm1063, %v950, %v1095
  %v1128 = vsel %vm1064, %v989, %v1096
  %v1129 = vsel %vm1065, %v991, %v1097
  %v1130 = vsel %vm1066, %v1030, %v1098
  %v1131 = vsel %vm1067, %v1032, %v1099
  %v1132 = vpack.c.bf16 %v1100, %v1100
  %v1133 = vpack.c.bf16 %v1101, %v1101
  %v1134 = vpack.c.bf16 %v1102, %v1102
  %v1135 = vpack.c.bf16 %v1103, %v1103
  %v1136 = vpack.c.bf16 %v1104, %v1104
  %v1137 = vpack.c.bf16 %v1105, %v1105
  %v1138 = vpack.c.bf16 %v1106, %v1106
  %v1139 = vpack.c.bf16 %v1107, %v1107
  %v1140 = vpack.c.bf16 %v1108, %v1108
  %v1141 = vpack.c.bf16 %v1109, %v1109
  %v1142 = vpack.c.bf16 %v1110, %v1110
  %v1143 = vpack.c.bf16 %v1111, %v1111
  %v1144 = vpack.c.bf16 %v1112, %v1112
  %v1145 = vpack.c.bf16 %v1113, %v1113
  %v1146 = vpack.c.bf16 %v1114, %v1114
  %v1147 = vpack.c.bf16 %v1115, %v1115
  %v1148 = vpack.c.bf16 %v1116, %v1116
  %v1149 = vpack.c.bf16 %v1117, %v1117
  %v1150 = vpack.c.bf16 %v1118, %v1118
  %v1151 = vpack.c.bf16 %v1119, %v1119
  %v1152 = vpack.c.bf16 %v1120, %v1120
  %v1153 = vpack.c.bf16 %v1121, %v1121
  %v1154 = vpack.c.bf16 %v1122, %v1122
  %v1155 = vpack.c.bf16 %v1123, %v1123
  %v1156 = vpack.c.bf16 %v1124, %v1124
  %v1157 = vpack.c.bf16 %v1125, %v1125
  %v1158 = vpack.c.bf16 %v1126, %v1126
  %v1159 = vpack.c.bf16 %v1127, %v1127
  %v1160 = vpack.c.bf16 %v1128, %v1128
  %v1161 = vpack.c.bf16 %v1129, %v1129
  %v1162 = vpack.c.bf16 %v1130, %v1130
  %v1163 = vpack.c.bf16 %v1131, %v1131
  %v1196 = vcombine.low %v1132, %v1133
  %v1197 = vcombine.low %v1134, %v1135
  %v1198 = vcombine.low %v1136, %v1137
  %v1199 = vcombine.low %v1138, %v1139
  %v1201 = vunpack.c.l.s4 1966171168
  %v1202 = vunpack.c.0.s8 %v1201
  %v1203 = vlaneseq
  %v1204 = vshrl.u32 %v1203, 7
  %v1205 = vsub.s32 %v1202, %v1204
  %v1206 = vrot.slane %v1196, %v1205
  %v1208 = vunpack.c.l.s4 1966171168
  %v1209 = vunpack.c.0.s8 %v1208
  %v1210 = vlaneseq
  %v1211 = vshrl.u32 %v1210, 7
  %v1212 = vsub.s32 %v1209, %v1211
  %v1213 = vrot.slane %v1197, %v1212
  %v1215 = vunpack.c.l.s4 1966171168
  %v1216 = vunpack.c.0.s8 %v1215
  %v1217 = vlaneseq
  %v1218 = vshrl.u32 %v1217, 7
  %v1219 = vsub.s32 %v1216, %v1218
  %v1220 = vrot.slane %v1198, %v1219
  %v1222 = vunpack.c.l.s4 1966171168
  %v1223 = vunpack.c.0.s8 %v1222
  %v1224 = vlaneseq
  %v1225 = vshrl.u32 %v1224, 7
  %v1226 = vsub.s32 %v1223, %v1225
  %v1227 = vrot.slane %v1199, %v1226
  %v1228 = vcombine.low %v1206, %v1213
  %v1229 = vcombine.low %v1220, %v1227
  %v1231 = vunpack.c.l.s4 1966171168
  %v1232 = vunpack.c.0.s8 %v1231
  %v1233 = vlaneseq
  %v1234 = vshrl.u32 %v1233, 7
  %v1235 = vsub.s32 %v1232, %v1234
  %v1236 = vrot.slane %v1228, %v1235
  %v1238 = vunpack.c.l.s4 1966171168
  %v1239 = vunpack.c.0.s8 %v1238
  %v1240 = vlaneseq
  %v1241 = vshrl.u32 %v1240, 7
  %v1242 = vsub.s32 %v1239, %v1241
  %v1243 = vrot.slane %v1229, %v1242
  %v1244 = vcombine.low %v1236, %v1243
  %v1245 = vcombine.low %v1140, %v1141
  %v1246 = vcombine.low %v1142, %v1143
  %v1247 = vcombine.low %v1144, %v1145
  %v1248 = vcombine.low %v1146, %v1147
  %v1250 = vunpack.c.l.s4 1966171168
  %v1251 = vunpack.c.0.s8 %v1250
  %v1252 = vlaneseq
  %v1253 = vshrl.u32 %v1252, 7
  %v1254 = vsub.s32 %v1251, %v1253
  %v1255 = vrot.slane %v1245, %v1254
  %v1257 = vunpack.c.l.s4 1966171168
  %v1258 = vunpack.c.0.s8 %v1257
  %v1259 = vlaneseq
  %v1260 = vshrl.u32 %v1259, 7
  %v1261 = vsub.s32 %v1258, %v1260
  %v1262 = vrot.slane %v1246, %v1261
  %v1264 = vunpack.c.l.s4 1966171168
  %v1265 = vunpack.c.0.s8 %v1264
  %v1266 = vlaneseq
  %v1267 = vshrl.u32 %v1266, 7
  %v1268 = vsub.s32 %v1265, %v1267
  %v1269 = vrot.slane %v1247, %v1268
  %v1271 = vunpack.c.l.s4 1966171168
  %v1272 = vunpack.c.0.s8 %v1271
  %v1273 = vlaneseq
  %v1274 = vshrl.u32 %v1273, 7
  %v1275 = vsub.s32 %v1272, %v1274
  %v1276 = vrot.slane %v1248, %v1275
  %v1277 = vcombine.low %v1255, %v1262
  %v1278 = vcombine.low %v1269, %v1276
  %v1280 = vunpack.c.l.s4 1966171168
  %v1281 = vunpack.c.0.s8 %v1280
  %v1282 = vlaneseq
  %v1283 = vshrl.u32 %v1282, 7
  %v1284 = vsub.s32 %v1281, %v1283
  %v1285 = vrot.slane %v1277, %v1284
  %v1287 = vunpack.c.l.s4 1966171168
  %v1288 = vunpack.c.0.s8 %v1287
  %v1289 = vlaneseq
  %v1290 = vshrl.u32 %v1289, 7
  %v1291 = vsub.s32 %v1288, %v1290
  %v1292 = vrot.slane %v1278, %v1291
  %v1293 = vcombine.low %v1285, %v1292
  %v1294 = vcombine.low %v1148, %v1149
  %v1295 = vcombine.low %v1150, %v1151
  %v1296 = vcombine.low %v1152, %v1153
  %v1297 = vcombine.low %v1154, %v1155
  %v1299 = vunpack.c.l.s4 1966171168
  %v1300 = vunpack.c.0.s8 %v1299
  %v1301 = vlaneseq
  %v1302 = vshrl.u32 %v1301, 7
  %v1303 = vsub.s32 %v1300, %v1302
  %v1304 = vrot.slane %v1294, %v1303
  %v1306 = vunpack.c.l.s4 1966171168
  %v1307 = vunpack.c.0.s8 %v1306
  %v1308 = vlaneseq
  %v1309 = vshrl.u32 %v1308, 7
  %v1310 = vsub.s32 %v1307, %v1309
  %v1311 = vrot.slane %v1295, %v1310
  %v1313 = vunpack.c.l.s4 1966171168
  %v1314 = vunpack.c.0.s8 %v1313
  %v1315 = vlaneseq
  %v1316 = vshrl.u32 %v1315, 7
  %v1317 = vsub.s32 %v1314, %v1316
  %v1318 = vrot.slane %v1296, %v1317
  %v1320 = vunpack.c.l.s4 1966171168
  %v1321 = vunpack.c.0.s8 %v1320
  %v1322 = vlaneseq
  %v1323 = vshrl.u32 %v1322, 7
  %v1324 = vsub.s32 %v1321, %v1323
  %v1325 = vrot.slane %v1297, %v1324
  %v1326 = vcombine.low %v1304, %v1311
  %v1327 = vcombine.low %v1318, %v1325
  %v1329 = vunpack.c.l.s4 1966171168
  %v1330 = vunpack.c.0.s8 %v1329
  %v1331 = vlaneseq
  %v1332 = vshrl.u32 %v1331, 7
  %v1333 = vsub.s32 %v1330, %v1332
  %v1334 = vrot.slane %v1326, %v1333
  %v1336 = vunpack.c.l.s4 1966171168
  %v1337 = vunpack.c.0.s8 %v1336
  %v1338 = vlaneseq
  %v1339 = vshrl.u32 %v1338, 7
  %v1340 = vsub.s32 %v1337, %v1339
  %v1341 = vrot.slane %v1327, %v1340
  %v1342 = vcombine.low %v1334, %v1341
  %v1343 = vcombine.low %v1156, %v1157
  %v1344 = vcombine.low %v1158, %v1159
  %v1345 = vcombine.low %v1160, %v1161
  %v1346 = vcombine.low %v1162, %v1163
  %v1348 = vunpack.c.l.s4 1966171168
  %v1349 = vunpack.c.0.s8 %v1348
  %v1350 = vlaneseq
  %v1351 = vshrl.u32 %v1350, 7
  %v1352 = vsub.s32 %v1349, %v1351
  %v1353 = vrot.slane %v1343, %v1352
  %v1355 = vunpack.c.l.s4 1966171168
  %v1356 = vunpack.c.0.s8 %v1355
  %v1357 = vlaneseq
  %v1358 = vshrl.u32 %v1357, 7
  %v1359 = vsub.s32 %v1356, %v1358
  %v1360 = vrot.slane %v1344, %v1359
  %v1362 = vunpack.c.l.s4 1966171168
  %v1363 = vunpack.c.0.s8 %v1362
  %v1364 = vlaneseq
  %v1365 = vshrl.u32 %v1364, 7
  %v1366 = vsub.s32 %v1363, %v1365
  %v1367 = vrot.slane %v1345, %v1366
  %v1369 = vunpack.c.l.s4 1966171168
  %v1370 = vunpack.c.0.s8 %v1369
  %v1371 = vlaneseq
  %v1372 = vshrl.u32 %v1371, 7
  %v1373 = vsub.s32 %v1370, %v1372
  %v1374 = vrot.slane %v1346, %v1373
  %v1375 = vcombine.low %v1353, %v1360
  %v1376 = vcombine.low %v1367, %v1374
  %v1378 = vunpack.c.l.s4 1966171168
  %v1379 = vunpack.c.0.s8 %v1378
  %v1380 = vlaneseq
  %v1381 = vshrl.u32 %v1380, 7
  %v1382 = vsub.s32 %v1379, %v1381
  %v1383 = vrot.slane %v1375, %v1382
  %v1385 = vunpack.c.l.s4 1966171168
  %v1386 = vunpack.c.0.s8 %v1385
  %v1387 = vlaneseq
  %v1388 = vshrl.u32 %v1387, 7
  %v1389 = vsub.s32 %v1386, %v1388
  %v1390 = vrot.slane %v1376, %v1389
  %v1391 = vcombine.low %v1383, %v1390
  %1396 = vst [vmem:[%s3] sm:$0xff] %v1244
  %1397 = vst [vmem:[%s3 + $0x8] sm:$0xff] %v1293
  %1398 = vst [vmem:[%s3 + $0x10] sm:$0xff] %v1342
  %1399 = vst [vmem:[%s3 + $0x18] sm:$0xff] %v1391
  // Predicated region
  $region14: #{vae_decoder_forward.3} parent=0 // pred_check
    _
  $region15: #{vae_decoder_forward.3} parent=0 // pred_check_branch
    %1401 = sbr.rel (0) target = $region17
  $region16: #{vae_decoder_forward.3} parent=0 // pred_region
    _
  $region17: #{vae_decoder_forward.3} parent=0 // pred_fallthru
    _
  // Predicated region
  $region18: #{vae_decoder_forward.3} parent=0 // pred_check
    _
  $region19: #{vae_decoder_forward.3} parent=0 // pred_check_branch
    %1403 = sbr.rel (0) target = $region21
  $region20: #{vae_decoder_forward.3} parent=0 // pred_region
    _
  $region21: #{vae_decoder_forward.3} parent=0 // pred_fallthru
    _

// kernel: vae_decoder_forward.4
$region0: #{vae_decoder_forward.4}
  #allocation0 [shape = 'u32[]', space=smem, size = 0x4, offset = 0x4, fixed_abs, tag = 'smem constant byte address 0x4 - core index']
  #allocation1 [shape = 'u32[144,128]{1,0:T(1,128)}', space=vmem, size = 0x12000, scoped, tag = 'internal scratch']
  %s0 = inlined_call_operand.vmem [shape: bf16[2,8,8,64], index: 0, kind: input, shape index: {}]
  %s1 = inlined_call_operand.vmem [shape: bf16[2,64,128], index: 1, kind: input, shape index: {}]
  %s2 = inlined_call_operand.vmem [shape: f32[1,128], index: 2, kind: input, shape index: {}]
  %s3 = inlined_call_operand.vmem [shape: bf16[2,8,2,8,128], index: 3, kind: output, shape index: {}]
  %s4 = sld [smem:[#allocation0]]
  $region82: #{vae_decoder_forward.4} parent=0
    _
  %s6 = ssub.s32 1, %s4
  %s7 = scalar_select 0, %s6, %s4
  $region1: #{vae_decoder_forward.4} parent=0
    #allocation2 [shape = 'u8[32768]{0}', space=vmem, size = 0x8000, scoped, tag = 'output window, operand 0']
    loop: start=0, step=1, limit=6
    $region2: #{vae_decoder_forward.4} parent=1 // loop_pre_header
      _
    $region3: #{vae_decoder_forward.4} parent=1 // loop_header
      %s9 = sphi 0, %s13
      %p10 = scmp.ge.s32.totalorder %s9, 6
      %s16 = sphi 0, %s35
      %s17 = sphi 0, %s31
      %s18 = sphi 0, %s27
      %s19 = sphi 0, %s16
      %s20 = sphi 0, %s17
      %s21 = sphi 0, %s18
      %s22 = sphi 0, %s19
      %s23 = sphi 0, %s20
      %s24 = sphi 0, %s21
      %s40 = sphi 0, %s42
      %s43 = sphi 0, %s40
      %s44 = sphi 0, %s43
      %s60 = sphi 0, %s44
      %s66 = sphi 0, %s68
      %s69 = sphi 0, %s66
      %s70 = sphi 0, %s69
      %s86 = sphi 0, %s70
      %s90 = sphi 0, %s90
      %s92 = sphi 0, %s90
      %s93 = sphi 0, %s92
      %s107 = sphi 0, %s93
      %s117 = sphi 0, %s119
      %s120 = sphi 0, %s117
      %s121 = sphi 0, %s120
      %s137 = sphi 0, %s121
    $region4: #{vae_decoder_forward.4} parent=1 // loop_header_branch
      %12 = sbr.rel (%p10) target = $region8
    $region5: #{vae_decoder_forward.4} parent=1 // loop_body
      %s14 = ssub.s32 %s9, 1
      %s15 = ssub.s32 %s9, 2
      %s25 = sadd.s32 1, %s18
      %p26 = scmp.ge.s32.totalorder %s25, 2
      %s27 = scalar_select %p26, 0, %s25
      %s28 = sadd.s32 1, %s17
      %s29 = scalar_select %p26, %s28, %s17
      %p30 = scmp.ge.s32.totalorder %s29, 1
      %s31 = scalar_select %p30, 0, %s29
      %s32 = sadd.s32 1, %s16
      %s33 = scalar_select %p30, %s32, %s16
      %p34 = scmp.ge.s32.totalorder %s33, 2
      %s35 = scalar_select %p34, 0, %s33
      %s36 = ssub.s32 %s16, %s35
      %s37 = ssub.s32 %s17, %s31
      %s38 = sor.u32 %s36, %s37
      %p39 = scmp.eq.s32.totalorder %s38, 0
      %s41 = sadd.s32 %s40, 1
      %s42 = scalar_select %p39, %s40, %s41
      %p45 = pneg %p39
      %p46 = scmp.eq.s32.totalorder %s9, 3
      %p47 = por %p45, %p46
      %p48 = scmp.ne.s32.totalorder %s40, %s43
      %p49 = scmp.eq.s32.totalorder %s9, 0
      %p50 = por %p48, %p49
      %p51 = scmp.ne.s32.totalorder %s40, %s43
      %p52 = scmp.eq.s32.totalorder %s14, 3
      %p53 = por %p51, %p52
      %p54 = scmp.ne.s32.totalorder %s43, %s44
      %p55 = scmp.eq.s32.totalorder %s14, 0
      %p56 = por %p54, %p55
      %p57 = scmp.ne.s32.totalorder %s43, %s44
      %p58 = scmp.eq.s32.totalorder %s15, 3
      %p59 = por %p57, %p58
      %p61 = scmp.ne.s32.totalorder %s44, %s60
      %p62 = scmp.eq.s32.totalorder %s15, 0
      %p63 = por %p61, %p62
      %s64 = ssub.s32 %s18, %s27
      %p65 = scmp.eq.s32.totalorder %s64, 0
      %s67 = sadd.s32 %s66, 1
      %s68 = scalar_select %p65, %s66, %s67
      %p71 = pneg %p65
      %p72 = scmp.eq.s32.totalorder %s9, 3
      %p73 = por %p71, %p72
      %p74 = scmp.ne.s32.totalorder %s66, %s69
      %p75 = scmp.eq.s32.totalorder %s9, 0
      %p76 = por %p74, %p75
      %p77 = scmp.ne.s32.totalorder %s66, %s69
      %p78 = scmp.eq.s32.totalorder %s14, 3
      %p79 = por %p77, %p78
      %p80 = scmp.ne.s32.totalorder %s69, %s70
      %p81 = scmp.eq.s32.totalorder %s14, 0
      %p82 = por %p80, %p81
      %p83 = scmp.ne.s32.totalorder %s69, %s70
      %p84 = scmp.eq.s32.totalorder %s15, 3
      %p85 = por %p83, %p84
      %p87 = scmp.ne.s32.totalorder %s70, %s86
      %p88 = scmp.eq.s32.totalorder %s15, 0
      %p89 = por %p87, %p88
      %s91 = sadd.s32 %s90, 1
      %p94 = scmp.eq.s32.totalorder %s9, 3
      %p95 = scmp.ne.s32.totalorder %s90, %s92
      %p96 = scmp.eq.s32.totalorder %s9, 0
      %p97 = por %p95, %p96
      %p98 = scmp.ne.s32.totalorder %s90, %s92
      %p99 = scmp.eq.s32.totalorder %s14, 3
      %p100 = por %p98, %p99
      %p101 = scmp.ne.s32.totalorder %s92, %s93
      %p102 = scmp.eq.s32.totalorder %s14, 0
      %p103 = por %p101, %p102
      %p104 = scmp.ne.s32.totalorder %s92, %s93
      %p105 = scmp.eq.s32.totalorder %s15, 3
      %p106 = por %p104, %p105
      %p108 = scmp.ne.s32.totalorder %s93, %s107
      %p109 = scmp.eq.s32.totalorder %s15, 0
      %p110 = por %p108, %p109
      %s111 = ssub.s32 %s16, %s35
      %s112 = ssub.s32 %s17, %s31
      %s113 = sor.u32 %s111, %s112
      %s114 = ssub.s32 %s18, %s27
      %s115 = sor.u32 %s113, %s114
      %p116 = scmp.eq.s32.totalorder %s115, 0
      %s118 = sadd.s32 %s117, 1
      %s119 = scalar_select %p116, %s117, %s118
      %p122 = pneg %p116
      %p123 = scmp.eq.s32.totalorder %s9, 3
      %p124 = por %p122, %p123
      %p125 = scmp.ne.s32.totalorder %s117, %s120
      %p126 = scmp.eq.s32.totalorder %s9, 0
      %p127 = por %p125, %p126
      %p128 = scmp.ne.s32.totalorder %s117, %s120
      %p129 = scmp.eq.s32.totalorder %s14, 3
      %p130 = por %p128, %p129
      %p131 = scmp.ne.s32.totalorder %s120, %s121
      %p132 = scmp.eq.s32.totalorder %s14, 0
      %p133 = por %p131, %p132
      %p134 = scmp.ne.s32.totalorder %s120, %s121
      %p135 = scmp.eq.s32.totalorder %s15, 3
      %p136 = por %p134, %p135
      %p138 = scmp.ne.s32.totalorder %s121, %s137
      %p139 = scmp.eq.s32.totalorder %s15, 0
      %p140 = por %p138, %p139
      %p141 = scmp.le.s32.totalorder 1, %s9
      %p142 = scmp.lt.s32.totalorder %s9, 5
      %p143 = pnand %p141, %p142
      %p144 = pneg %p143
      // Predicated region
      $region9: #{vae_decoder_forward.4} parent=5 // pred_check
        _
      $region10: #{vae_decoder_forward.4} parent=5 // pred_check_branch
        %146 = sbr.rel (%p143) target = $region12
      $region11: #{vae_decoder_forward.4} parent=5 // pred_region
        %s147 = ssub.s32 %s9, 1
        // Predicated region
        $region13: #{vae_decoder_forward.4} parent=11 // pred_check
          %p148 = pneg %p103
        $region14: #{vae_decoder_forward.4} parent=11 // pred_check_branch
          %150 = sbr.rel (%p148) target = $region16
        $region15: #{vae_decoder_forward.4} parent=11 // pred_region
          _
        $region16: #{vae_decoder_forward.4} parent=11 // pred_fallthru
          _
      $region12: #{vae_decoder_forward.4} parent=5 // pred_fallthru
        _
      %p151 = scmp.lt.s32.totalorder %s9, 4
      // Predicated region
      $region17: #{vae_decoder_forward.4} parent=5 // pred_check
        %p152 = pneg %p151
      $region18: #{vae_decoder_forward.4} parent=5 // pred_check_branch
        %154 = sbr.rel (%p152) target = $region20
      $region19: #{vae_decoder_forward.4} parent=5 // pred_region
        // Predicated region
        $region21: #{vae_decoder_forward.4} parent=19 // pred_check
          %p155 = pneg %p50
        $region22: #{vae_decoder_forward.4} parent=19 // pred_check_branch
          %157 = sbr.rel (%p155) target = $region24
        $region23: #{vae_decoder_forward.4} parent=19 // pred_region
          %s158 = smul.u32 8, %s17
          %p159 = scmp.lt.s32.totalorder %s16, 1
          %s160 = scalar_select %p159, %s16, 1
          %p161 = scmp.lt.s32.totalorder %s158, 7
          %s162 = scalar_select %p161, %s158, 7
          %s163 = smul.addr %s160, 8
          %s164 = sadd.s32 %s162, %s163
          %s165 = smul.addr %s164, 4
          %s166 = scalar_lea.vmem %s0, %s165
          %s167 = smul.u32 8, %s17
        $region24: #{vae_decoder_forward.4} parent=19 // pred_fallthru
          _
        // Predicated region
        $region25: #{vae_decoder_forward.4} parent=19 // pred_check
          %p168 = pneg %p76
        $region26: #{vae_decoder_forward.4} parent=19 // pred_check_branch
          %170 = sbr.rel (%p168) target = $region28
        $region27: #{vae_decoder_forward.4} parent=19 // pred_region
          %p171 = scmp.lt.s32.totalorder %s18, 1
          %s172 = scalar_select %p171, %s18, 1
          %s173 = smul.addr %s172, 8
          %s174 = smul.addr %s173, 4
          %s175 = scalar_lea.vmem %s1, %s174
        $region28: #{vae_decoder_forward.4} parent=19 // pred_fallthru
          _
      $region20: #{vae_decoder_forward.4} parent=5 // pred_fallthru
        _
      %p176 = scmp.le.s32.totalorder 1, %s9
      %p177 = scmp.lt.s32.totalorder %s9, 5
      %p178 = pnand %p176, %p177
      %p179 = pneg %p178
      // Predicated region
      $region29: #{vae_decoder_forward.4} parent=5 // pred_check
        _
      $region30: #{vae_decoder_forward.4} parent=5 // pred_check_branch
        %181 = sbr.rel (%p178) target = $region32
      $region31: #{vae_decoder_forward.4} parent=5 // pred_region
        %s182 = ssub.s32 %s9, 1
        %s183 = smul.u32 8, %s20
        %p184 = scmp.lt.s32.totalorder %s19, 1
        %s185 = scalar_select %p184, %s19, 1
        %p186 = scmp.lt.s32.totalorder %s183, 7
        %s187 = scalar_select %p186, %s183, 7
        %s188 = smul.addr %s185, 8
        %s189 = sadd.s32 %s187, %s188
        %s190 = smul.addr %s189, 4
        %s191 = scalar_lea.vmem %s0, %s190
        %p192 = pneg %p56
        %p193 = pneg %p53
        %p194 = scmp.lt.s32.totalorder %s21, 1
        %s195 = scalar_select %p194, %s21, 1
        %s196 = smul.addr %s195, 8
        %s197 = smul.addr %s196, 4
        %s198 = scalar_lea.vmem %s1, %s197
        %p199 = pneg %p82
        %p200 = pneg %p79
        %p201 = pneg %p103
        %p202 = pneg %p100
        %p203 = pneg %p133
        %p204 = pneg %p130
        %s205 = sand.u32 %s120, 1
        %s206 = sand.u32 %s120, 1
        %s207 = smul.addr %s206, 32
        %s208 = scalar_lea.vmem [#allocation2], %s207
        %s209 = smul.u32 8, %s20
        %p210 = scmp.lt.s32.totalorder %s19, 1
        %s211 = scalar_select %p210, %s19, 1
        %p212 = scmp.lt.s32.totalorder %s209, 7
        %s213 = scalar_select %p212, %s209, 7
        %s214 = smul.addr %s211, 8
        %s215 = sadd.s32 %s213, %s214
        %s216 = smul.addr %s215, 4
        %s217 = scalar_lea.vmem %s0, %s216
        %s218 = smul.u32 8, %s20
        %p219 = scmp.lt.s32.totalorder %s21, 1
        %s220 = scalar_select %p219, %s21, 1
        %s221 = smul.addr %s220, 8
        %s222 = smul.addr %s221, 4
        %s223 = scalar_lea.vmem %s1, %s222
        %s224 = smul.u32 8, %s20
        %v226 = vld [vmem:[%s217] sm:$0xf]
        %v227 = vld [vmem:[%s217 + $0x4] sm:$0xf]
        %v228 = vld [vmem:[%s217 + $0x8] sm:$0xf]
        %v229 = vld [vmem:[%s217 + $0xc] sm:$0xf]
        %v230 = vld [vmem:[%s217 + $0x10] sm:$0xf]
        %v231 = vld [vmem:[%s217 + $0x14] sm:$0xf]
        %v232 = vld [vmem:[%s217 + $0x18] sm:$0xf]
        %v233 = vld [vmem:[%s217 + $0x1c] sm:$0xf]
        %v234 = vld [vmem:[%s223] sm:$0xf]
        %v235 = vld [vmem:[%s223 + $0x4] sm:$0xf]
        %v236 = vld [vmem:[%s223 + $0x8] sm:$0xf]
        %v237 = vld [vmem:[%s223 + $0xc] sm:$0xf]
        %v238 = vld [vmem:[%s223 + $0x10] sm:$0xf]
        %v239 = vld [vmem:[%s223 + $0x14] sm:$0xf]
        %v240 = vld [vmem:[%s223 + $0x18] sm:$0xf]
        %v241 = vld [vmem:[%s223 + $0x1c] sm:$0xf]
        %v242 = vld [vmem:[%s2] sm:$0x1]
        %v244 = vlaneseq
        %v245 = vshrl.u32 %v244, 7
        %v246 = vsub.s32 0, %v245
        %v247 = vrot.slane %v242, %v246
        %v257 = vunpack.c.l.b16 %v226
        %v258 = vunpack.c.l.b16 %v227
        %v259 = vunpack.c.l.b16 %v228
        %v260 = vunpack.c.l.b16 %v229
        %v261 = vunpack.c.l.b16 %v230
        %v262 = vunpack.c.l.b16 %v231
        %v263 = vunpack.c.l.b16 %v232
        %v264 = vunpack.c.l.b16 %v233
        %v265 = vpack.c.b16 %v258, %v257
        %v266 = vpack.c.b16 %v260, %v259
        %v267 = vpack.c.b16 %v262, %v261
        %v268 = vpack.c.b16 %v264, %v263
        %v277 = vunpack.c.l.b16 %v234
        %v278 = vunpack.c.l.b16 %v235
        %v279 = vunpack.c.l.b16 %v236
        %v280 = vunpack.c.l.b16 %v237
        %v281 = vunpack.c.l.b16 %v238
        %v282 = vunpack.c.l.b16 %v239
        %v283 = vunpack.c.l.b16 %v240
        %v284 = vunpack.c.l.b16 %v241
        %v285 = vpack.c.b16 %v278, %v277
        %v286 = vpack.c.b16 %v280, %v279
        %v287 = vpack.c.b16 %v282, %v281
        %v288 = vpack.c.b16 %v284, %v283
        %vm293 = vcmask 523264
        %v295 = vsel %vm293, %v265, 0
        %v298 = vsel %vm293, %v266, 0
        %v301 = vsel %vm293, %v267, 0
        %v304 = vsel %vm293, %v268, 0
        %306 = vmatprep.subr.bf16.mxu0 0
        %307 = vmatpush1.bf16.msra.mxu0 %v285
        %308 = vmatprep.subr.bf16.mxu0 0
        %309 = vmatpush1.bf16.msra.mxu0 %v286
        %310 = vmatprep.subr.bf16.mxu0 0
        %311 = vmatpush1.bf16.msra.mxu0 %v287
        %312 = vmatprep.subr.bf16.mxu0 0
        %313 = vmatpush1.bf16.msra.mxu0 %v288
        %314 = vmatprep.subr.bf16.mxu0 0
        %315 = vmatpush1.bf16.msra.mxu0 0
        %316 = vmatprep.subr.bf16.mxu0 0
        %317 = vmatpush1.bf16.msra.mxu0 0
        %318 = vmatprep.subr.bf16.mxu0 0
        %319 = vmatpush1.bf16.msra.mxu0 0
        %320 = vmatprep.subr.bf16.mxu0 0
        %321 = vmatpush1.bf16.msra.mxu0 0
        %322 = vmatprep.subr.bf16.mxu0 0
        %323 = vmatpush1.bf16.msra.mxu0 0
        %324 = vmatprep.subr.bf16.mxu0 0
        %325 = vmatpush1.bf16.msra.mxu0 0
        %326 = vmatprep.subr.bf16.mxu0 0
        %327 = vmatpush1.bf16.msra.mxu0 0
        %328 = vmatprep.subr.bf16.mxu0 0
        %329 = vmatpush1.bf16.msra.mxu0 0
        %330 = vmatprep.subr.bf16.mxu0 0
        %331 = vmatpush1.bf16.msra.mxu0 0
        %332 = vmatprep.subr.bf16.mxu0 0
        %333 = vmatpush1.bf16.msra.mxu0 0
        %334 = vmatprep.subr.bf16.mxu0 0
        %335 = vmatpush1.bf16.msra.mxu0 0
        %336 = vmatprep.subr.bf16.mxu0 0
        %337 = vmatpush1.bf16.msra.mxu0 0
        %338 = vmatprep.mubr.bf16.mxu0 0
        %339 = vmatmul.mubr.bf16.gmra.mrb[0].mxu0 %v295
        %v340 = vpop.f32.mrb[0].mxu0
        %v341 = vadd.f32 %v247, %v340
        %v342 = vpop.f32.mrb[0].mxu0
        %v343 = vpop.f32.mrb[0].mxu0
        %v344 = vadd.f32 %v247, %v343
        %v345 = vpop.f32.mrb[0].mxu0
        %346 = vmatprep.mubr.bf16.mxu0 0
        %347 = vmatmul.mubr.bf16.gmra.mrb[0].mxu0 %v298
        %v348 = vpop.f32.mrb[0].mxu0
        %v349 = vadd.f32 %v247, %v348
        %v350 = vpop.f32.mrb[0].mxu0
        %v351 = vpop.f32.mrb[0].mxu0
        %v352 = vadd.f32 %v247, %v351
        %v353 = vpop.f32.mrb[0].mxu0
        %354 = vmatprep.mubr.bf16.mxu0 0
        %355 = vmatmul.mubr.bf16.gmra.mrb[0].mxu0 %v301
        %v356 = vpop.f32.mrb[0].mxu0
        %v357 = vadd.f32 %v247, %v356
        %v358 = vpop.f32.mrb[0].mxu0
        %v359 = vpop.f32.mrb[0].mxu0
        %v360 = vadd.f32 %v247, %v359
        %v361 = vpop.f32.mrb[0].mxu0
        %362 = vmatprep.mubr.bf16.mxu0 0
        %363 = vmatmul.mubr.bf16.gmra.mrb[0].mxu0 %v304
        %v364 = vpop.f32.mrb[0].mxu0
        %v365 = vadd.f32 %v247, %v364
        %v366 = vpop.f32.mrb[0].mxu0
        %v367 = vpop.f32.mrb[0].mxu0
        %v368 = vadd.f32 %v247, %v367
        %v369 = vpop.f32.mrb[0].mxu0
        %370 = vdwg.mxu0
        %vm371 = vcmp.ge.f32.partialorder %v341, 0.0
        %vm372 = vcmp.ge.f32.partialorder %v344, 0.0
        %vm373 = vcmp.ge.f32.partialorder %v349, 0.0
        %vm374 = vcmp.ge.f32.partialorder %v352, 0.0
        %vm375 = vcmp.ge.f32.partialorder %v357, 0.0
        %vm376 = vcmp.ge.f32.partialorder %v360, 0.0
        %vm377 = vcmp.ge.f32.partialorder %v365, 0.0
        %vm378 = vcmp.ge.f32.partialorder %v368, 0.0
        %v379 = vmul.f32 %v341, 0.2
        %v380 = vmul.f32 %v344, 0.2
        %v381 = vmul.f32 %v349, 0.2
        %v382 = vmul.f32 %v352, 0.2
        %v383 = vmul.f32 %v357, 0.2
        %v384 = vmul.f32 %v360, 0.2
        %v385 = vmul.f32 %v365, 0.2
        %v386 = vmul.f32 %v368, 0.2
        %v387 = vsel %vm371, %v341, %v379
        %v388 = vsel %vm372, %v344, %v380
        %v389 = vsel %vm373, %v349, %v381
        %v390 = vsel %vm374, %v352, %v382
        %v391 = vsel %vm375, %v357, %v383
        %v392 = vsel %vm376, %v360, %v384
        %v393 = vsel %vm377, %v365, %v385
        %v394 = vsel %vm378, %v368, %v386
        %v395 = vpack.c.bf16 %v387, %v387
        %v396 = vpack.c.bf16 %v388, %v388
        %v397 = vpack.c.bf16 %v389, %v389
        %v398 = vpack.c.bf16 %v390, %v390
        %v399 = vpack.c.bf16 %v391, %v391
        %v400 = vpack.c.bf16 %v392, %v392
        %v401 = vpack.c.bf16 %v393, %v393
        %v402 = vpack.c.bf16 %v394, %v394
        %403 = vst [vmem:[%s208] sm:$0xf] %v395
        %404 = vst [vmem:[%s208 + $0x4] sm:$0xf] %v396
        %405 = vst [vmem:[%s208 + $0x8] sm:$0xf] %v397
        %406 = vst [vmem:[%s208 + $0xc] sm:$0xf] %v398
        %407 = vst [vmem:[%s208 + $0x10] sm:$0xf] %v399
        %408 = vst [vmem:[%s208 + $0x14] sm:$0xf] %v400
        %409 = vst [vmem:[%s208 + $0x18] sm:$0xf] %v401
        %410 = vst [vmem:[%s208 + $0x1c] sm:$0xf] %v402
        %s411 = sand.u32 %s120, 1
        %s412 = sand.u32 %s120, 1
        %s413 = smul.addr %s412, 32
        %s414 = scalar_lea.vmem [#allocation2], %s413
        // Predicated region
        $region33: #{vae_decoder_forward.4} parent=31 // pred_check
          %p415 = pneg %p130
        $region34: #{vae_decoder_forward.4} parent=31 // pred_check_branch
          %417 = sbr.rel (%p415) target = $region36
        $region35: #{vae_decoder_forward.4} parent=31 // pred_region
          %s418 = smul.u32 8, %s20
          %s419 = smul.addr %s418, 2
          %s420 = sadd.s32 %s21, %s419
          %s421 = smul.addr %s19, 16
          %s422 = sadd.s32 %s420, %s421
          %s423 = smul.addr %s422, 4
          %s424 = scalar_lea.vmem %s3, %s423
          // Predicated region
          $region37: #{vae_decoder_forward.4} parent=35 // pred_check
            _
          $region38: #{vae_decoder_forward.4} parent=35 // pred_check_branch
            %426 = sbr.rel (0) target = $region40
          $region39: #{vae_decoder_forward.4} parent=35 // pred_region
            // Predicated region
            $region41: #{vae_decoder_forward.4} parent=39 // pred_check
              _
            $region42: #{vae_decoder_forward.4} parent=39 // pred_check_branch
              %428 = sbr.rel target = $region44
            $region43: #{vae_decoder_forward.4} parent=39 // pred_region
              // Predicated region
              $region56: #{vae_decoder_forward.4} parent=43 // pred_check
                _
              $region57: #{vae_decoder_forward.4} parent=43 // pred_check_branch
                %457 = sbr.rel (0) target = $region59
              $region58: #{vae_decoder_forward.4} parent=43 // pred_region
                loop: start=0, step=1, limit=1
                $region60: #{vae_decoder_forward.4} parent=58 // loop_pre_header
                  _
                $region61: #{vae_decoder_forward.4} parent=58 // loop_header
                  %s459 = sphi 0, %s463
                  %p460 = scmp.ge.s32.totalorder %s459, 1
                  %s464 = sphi %s414, %s414
                  %s465 = sphi %s424, %s424
                $region62: #{vae_decoder_forward.4} parent=58 // loop_header_branch
                  %462 = sbr.rel (%p460) target = $region66
                $region63: #{vae_decoder_forward.4} parent=58 // loop_body
                  _
                $region64: #{vae_decoder_forward.4} parent=58 // loop_footer
                  %s463 = sadd.s32 1, %s459
                $region65: #{vae_decoder_forward.4} parent=58 // loop_footer_branch
                  %458 = sbr.rel target = $region61
                $region66: #{vae_decoder_forward.4} parent=58 // loop_exit
                  _
                loop: start=0, step=1, limit=1
                $region67: #{vae_decoder_forward.4} parent=58 // loop_pre_header
                  _
                $region68: #{vae_decoder_forward.4} parent=58 // loop_header
                  %s468 = sphi 0, %s472
                  %p469 = scmp.ge.s32.totalorder %s468, 1
                  %s473 = sphi %s414, %s414
                  %s474 = sphi %s424, %s424
                $region69: #{vae_decoder_forward.4} parent=58 // loop_header_branch
                  %471 = sbr.rel (%p469) target = $region73
                $region70: #{vae_decoder_forward.4} parent=58 // loop_body
                  %v475 = vld [vmem:[%s473] sm:$0xf]
                  %476 = vst [vmem:[%s474] sm:$0xf] %v475
                  %v477 = vld [vmem:[%s473 + $0x4] sm:$0xf]
                  %478 = vst [vmem:[%s474 + $0x8] sm:$0xf] %v477
                  %v479 = vld [vmem:[%s473 + $0x8] sm:$0xf]
                  %480 = vst [vmem:[%s474 + $0x10] sm:$0xf] %v479
                  %v481 = vld [vmem:[%s473 + $0xc] sm:$0xf]
                  %482 = vst [vmem:[%s474 + $0x18] sm:$0xf] %v481
                  %v483 = vld [vmem:[%s473 + $0x10] sm:$0xf]
                  %484 = vst [vmem:[%s474 + $0x20] sm:$0xf] %v483
                  %v485 = vld [vmem:[%s473 + $0x14] sm:$0xf]
                  %486 = vst [vmem:[%s474 + $0x28] sm:$0xf] %v485
                  %v487 = vld [vmem:[%s473 + $0x18] sm:$0xf]
                  %488 = vst [vmem:[%s474 + $0x30] sm:$0xf] %v487
                  %v489 = vld [vmem:[%s473 + $0x1c] sm:$0xf]
                  %490 = vst [vmem:[%s474 + $0x38] sm:$0xf] %v489
                $region71: #{vae_decoder_forward.4} parent=58 // loop_footer
                  %s472 = sadd.s32 1, %s468
                $region72: #{vae_decoder_forward.4} parent=58 // loop_footer_branch
                  %467 = sbr.rel target = $region68
                $region73: #{vae_decoder_forward.4} parent=58 // loop_exit
                  _
              $region59: #{vae_decoder_forward.4} parent=43 // pred_fallthru
                _
            $region44: #{vae_decoder_forward.4} parent=39 // pred_fallthru
              _
            // Predicated region
            $region45: #{vae_decoder_forward.4} parent=39 // pred_check
              _
            $region46: #{vae_decoder_forward.4} parent=39 // pred_check_branch
              %430 = sbr.rel (0) target = $region48
            $region47: #{vae_decoder_forward.4} parent=39 // pred_region
              loop: start=0, step=1, limit=1
              $region49: #{vae_decoder_forward.4} parent=47 // loop_pre_header
                _
              $region50: #{vae_decoder_forward.4} parent=47 // loop_header
                %s433 = sphi 0, %s437
                %p434 = scmp.ge.s32.totalorder %s433, 1
                %s438 = sphi %s414, %s414
                %s439 = sphi %s424, %s424
              $region51: #{vae_decoder_forward.4} parent=47 // loop_header_branch
                %436 = sbr.rel (%p434) target = $region55
              $region52: #{vae_decoder_forward.4} parent=47 // loop_body
                %v440 = vld [vmem:[%s438] sm:$0xf]
                %441 = vst [vmem:[%s439] sm:$0xf] %v440
                %v442 = vld [vmem:[%s438 + $0x4] sm:$0xf]
                %443 = vst [vmem:[%s439 + $0x8] sm:$0xf] %v442
                %v444 = vld [vmem:[%s438 + $0x8] sm:$0xf]
                %445 = vst [vmem:[%s439 + $0x10] sm:$0xf] %v444
                %v446 = vld [vmem:[%s438 + $0xc] sm:$0xf]
                %447 = vst [vmem:[%s439 + $0x18] sm:$0xf] %v446
                %v448 = vld [vmem:[%s438 + $0x10] sm:$0xf]
                %449 = vst [vmem:[%s439 + $0x20] sm:$0xf] %v448
                %v450 = vld [vmem:[%s438 + $0x14] sm:$0xf]
                %451 = vst [vmem:[%s439 + $0x28] sm:$0xf] %v450
                %v452 = vld [vmem:[%s438 + $0x18] sm:$0xf]
                %453 = vst [vmem:[%s439 + $0x30] sm:$0xf] %v452
                %v454 = vld [vmem:[%s438 + $0x1c] sm:$0xf]
                %455 = vst [vmem:[%s439 + $0x38] sm:$0xf] %v454
              $region53: #{vae_decoder_forward.4} parent=47 // loop_footer
                %s437 = sadd.s32 1, %s433
              $region54: #{vae_decoder_forward.4} parent=47 // loop_footer_branch
                %432 = sbr.rel target = $region50
              $region55: #{vae_decoder_forward.4} parent=47 // loop_exit
                _
            $region48: #{vae_decoder_forward.4} parent=39 // pred_fallthru
              _
          $region40: #{vae_decoder_forward.4} parent=35 // pred_fallthru
            _
          %491 = vnop
        $region36: #{vae_decoder_forward.4} parent=31 // pred_fallthru
          _
      $region32: #{vae_decoder_forward.4} parent=5 // pred_fallthru
        _
      %p492 = scmp.le.s32.totalorder 2, %s9
      // Predicated region
      $region74: #{vae_decoder_forward.4} parent=5 // pred_check
        %p493 = pneg %p492
      $region75: #{vae_decoder_forward.4} parent=5 // pred_check_branch
        %495 = sbr.rel (%p493) target = $region77
      $region76: #{vae_decoder_forward.4} parent=5 // pred_region
        %s496 = ssub.s32 %s9, 2
        // Predicated region
        $region78: #{vae_decoder_forward.4} parent=76 // pred_check
          %p497 = pneg %p136
        $region79: #{vae_decoder_forward.4} parent=76 // pred_check_branch
          %499 = sbr.rel (%p497) target = $region81
        $region80: #{vae_decoder_forward.4} parent=76 // pred_region
          %s500 = sand.u32 %s121, 1
          %s501 = sand.u32 %s121, 1
          %s502 = smul.addr %s501, 32
          %s503 = scalar_lea.vmem [#allocation2], %s502
        $region81: #{vae_decoder_forward.4} parent=76 // pred_fallthru
          _
      $region77: #{vae_decoder_forward.4} parent=5 // pred_fallthru
        _
    $region6: #{vae_decoder_forward.4} parent=1 // loop_footer
      %s13 = sadd.s32 1, %s9
    $region7: #{vae_decoder_forward.4} parent=1 // loop_footer_branch
      %8 = sbr.rel target = $region3
    $region8: #{vae_decoder_forward.4} parent=1 // loop_exit
      _

// kernel: vae_decoder_forward.5
$region0: #{vae_decoder_forward.5}
  #allocation0 [shape = 'u32[]', space=smem, size = 0x4, offset = 0x4, fixed_abs, tag = 'smem constant byte address 0x4 - core index']
  #allocation1 [shape = 'u32[144,128]{1,0:T(1,128)}', space=vmem, size = 0x12000, scoped, tag = 'internal scratch']
  #allocation2 [shape = 'bf16[18,18,64]{2,1,0:T(8,128)(2,1)}', space=vmem, size = 0x1b000, scoped, tag = 'scratch operand']
  %s0 = inlined_call_operand.vmem [shape: bf16[2,16,16,64], index: 0, kind: input, shape index: {}, may-alias: {0,1,2}]
  %s1 = inlined_call_operand.vmem [shape: bf16[2,16,16,64], index: 1, kind: input, shape index: {}, may-alias: {0,1,2}]
  %s2 = inlined_call_operand.vmem [shape: bf16[2,16,16,64], index: 2, kind: input, shape index: {}, may-alias: {0,1,2}]
  %s3 = inlined_call_operand.vmem [shape: bf16[3,3,64,8], index: 3, kind: input, shape index: {}]
  %s4 = inlined_call_operand.vmem [shape: f32[1,8], index: 4, kind: input, shape index: {}]
  %s5 = inlined_call_operand.vmem [shape: f32[2,16,16,8], index: 5, kind: output, shape index: {}]
  %s6 = sld [smem:[#allocation0]]
  $region61: #{vae_decoder_forward.5} parent=0
    _
  %s8 = ssub.s32 1, %s6
  %s9 = scalar_select 0, %s8, %s6
  loop: start=0, step=1, limit=4
  $region2: #{vae_decoder_forward.5} parent=0 // loop_pre_header
    _
  $region3: #{vae_decoder_forward.5} parent=0 // loop_header
    %s11 = sphi 0, %s15
    %p12 = scmp.ge.s32.totalorder %s11, 4
    %s18 = sphi 0, %s30
    %s19 = sphi 0, %s26
    %s20 = sphi 0, %s18
    %s21 = sphi 0, %s19
    %s22 = sphi 0, %s20
    %s23 = sphi 0, %s21
    %s35 = sphi 0, %s37
    %s38 = sphi 0, %s35
    %s39 = sphi 0, %s38
    %s55 = sphi 0, %s39
    %s71 = sphi 0, %s73
    %s74 = sphi 0, %s71
    %s75 = sphi 0, %s74
    %s91 = sphi 0, %s75
    %s107 = sphi 0, %s109
    %s110 = sphi 0, %s107
    %s111 = sphi 0, %s110
    %s127 = sphi 0, %s111
    %s131 = sphi 0, %s131
    %s133 = sphi 0, %s131
    %s134 = sphi 0, %s133
    %s148 = sphi 0, %s134
    %s152 = sphi 0, %s152
    %s154 = sphi 0, %s152
    %s155 = sphi 0, %s154
    %s169 = sphi 0, %s155
    %s177 = sphi 0, %s179
    %s180 = sphi 0, %s177
    %s181 = sphi 0, %s180
    %s197 = sphi 0, %s181
  $region4: #{vae_decoder_forward.5} parent=0 // loop_header_branch
    %14 = sbr.rel (%p12) target = $region8
  $region5: #{vae_decoder_forward.5} parent=0 // loop_body
    %s16 = ssub.s32 %s11, 1
    %s17 = ssub.s32 %s11, 2
    %s24 = sadd.s32 1, %s19
    %p25 = scmp.ge.s32.totalorder %s24, 1
    %s26 = scalar_select %p25, 0, %s24
    %s27 = sadd.s32 1, %s18
    %s28 = scalar_select %p25, %s27, %s18
    %p29 = scmp.ge.s32.totalorder %s28, 2
    %s30 = scalar_select %p29, 0, %s28
    %s31 = ssub.s32 %s18, %s30
    %s32 = ssub.s32 %s19, %s26
    %s33 = sor.u32 %s31, %s32
    %p34 = scmp.eq.s32.totalorder %s33, 0
    %s36 = sadd.s32 %s35, 1
    %s37 = scalar_select %p34, %s35, %s36
    %p40 = pneg %p34
    %p41 = scmp.eq.s32.totalorder %s11, 1
    %p42 = por %p40, %p41
    %p43 = scmp.ne.s32.totalorder %s35, %s38
    %p44 = scmp.eq.s32.totalorder %s11, 0
    %p45 = por %p43, %p44
    %p46 = scmp.ne.s32.totalorder %s35, %s38
    %p47 = scmp.eq.s32.totalorder %s16, 1
    %p48 = por %p46, %p47
    %p49 = scmp.ne.s32.totalorder %s38, %s39
    %p50 = scmp.eq.s32.totalorder %s16, 0
    %p51 = por %p49, %p50
    %p52 = scmp.ne.s32.totalorder %s38, %s39
    %p53 = scmp.eq.s32.totalorder %s17, 1
    %p54 = por %p52, %p53
    %p56 = scmp.ne.s32.totalorder %s39, %s55
    %p57 = scmp.eq.s32.totalorder %s17, 0
    %p58 = por %p56, %p57
    %s59 = smul.u32 %s19, 16
    %s60 = ssub.s32 %s59, 1
    %p61 = scmp.gt.s32.totalorder %s60, 0
    %s62 = scalar_select %p61, %s60, 0
    %s63 = smul.u32 %s26, 16
    %s64 = ssub.s32 %s63, 1
    %p65 = scmp.gt.s32.totalorder %s64, 0
    %s66 = scalar_select %p65, %s64, 0
    %s67 = ssub.s32 %s18, %s30
    %s68 = ssub.s32 %s62, %s66
    %s69 = sor.u32 %s67, %s68
    %p70 = scmp.eq.s32.totalorder %s69, 0
    %s72 = sadd.s32 %s71, 1
    %s73 = scalar_select %p70, %s71, %s72
    %p76 = pneg %p70
    %p77 = scmp.eq.s32.totalorder %s11, 1
    %p78 = por %p76, %p77
    %p79 = scmp.ne.s32.totalorder %s71, %s74
    %p80 = scmp.eq.s32.totalorder %s11, 0
    %p81 = por %p79, %p80
    %p82 = scmp.ne.s32.totalorder %s71, %s74
    %p83 = scmp.eq.s32.totalorder %s16, 1
    %p84 = por %p82, %p83
    %p85 = scmp.ne.s32.totalorder %s74, %s75
    %p86 = scmp.eq.s32.totalorder %s16, 0
    %p87 = por %p85, %p86
    %p88 = scmp.ne.s32.totalorder %s74, %s75
    %p89 = scmp.eq.s32.totalorder %s17, 1
    %p90 = por %p88, %p89
    %p92 = scmp.ne.s32.totalorder %s75, %s91
    %p93 = scmp.eq.s32.totalorder %s17, 0
    %p94 = por %p92, %p93
    %s95 = sadd.s32 %s19, 1
    %s96 = smul.u32 %s95, 16
    %p97 = scmp.lt.s32.totalorder %s96, 15
    %s98 = scalar_select %p97, %s96, 15
    %s99 = sadd.s32 %s26, 1
    %s100 = smul.u32 %s99, 16
    %p101 = scmp.lt.s32.totalorder %s100, 15
    %s102 = scalar_select %p101, %s100, 15
    %s103 = ssub.s32 %s18, %s30
    %s104 = ssub.s32 %s98, %s102
    %s105 = sor.u32 %s103, %s104
    %p106 = scmp.eq.s32.totalorder %s105, 0
    %s108 = sadd.s32 %s107, 1
    %s109 = scalar_select %p106, %s107, %s108
    %p112 = pneg %p106
    %p113 = scmp.eq.s32.totalorder %s11, 1
    %p114 = por %p112, %p113
    %p115 = scmp.ne.s32.totalorder %s107, %s110
    %p116 = scmp.eq.s32.totalorder %s11, 0
    %p117 = por %p115, %p116
    %p118 = scmp.ne.s32.totalorder %s107, %s110
    %p119 = scmp.eq.s32.totalorder %s16, 1
    %p120 = por %p118, %p119
    %p121 = scmp.ne.s32.totalorder %s110, %s111
    %p122 = scmp.eq.s32.totalorder %s16, 0
    %p123 = por %p121, %p122
    %p124 = scmp.ne.s32.totalorder %s110, %s111
    %p125 = scmp.eq.s32.totalorder %s17, 1
    %p126 = por %p124, %p125
    %p128 = scmp.ne.s32.totalorder %s111, %s127
    %p129 = scmp.eq.s32.totalorder %s17, 0
    %p130 = por %p128, %p129
    %s132 = sadd.s32 %s131, 1
    %p135 = scmp.eq.s32.totalorder %s11, 1
    %p136 = scmp.ne.s32.totalorder %s131, %s133
    %p137 = scmp.eq.s32.totalorder %s11, 0
    %p138 = por %p136, %p137
    %p139 = scmp.ne.s32.totalorder %s131, %s133
    %p140 = scmp.eq.s32.totalorder %s16, 1
    %p141 = por %p139, %p140
    %p142 = scmp.ne.s32.totalorder %s133, %s134
    %p143 = scmp.eq.s32.totalorder %s16, 0
    %p144 = por %p142, %p143
    %p145 = scmp.ne.s32.totalorder %s133, %s134
    %p146 = scmp.eq.s32.totalorder %s17, 1
    %p147 = por %p145, %p146
    %p149 = scmp.ne.s32.totalorder %s134, %s148
    %p150 = scmp.eq.s32.totalorder %s17, 0
    %p151 = por %p149, %p150
    %s153 = sadd.s32 %s152, 1
    %p156 = scmp.eq.s32.totalorder %s11, 1
    %p157 = scmp.ne.s32.totalorder %s152, %s154
    %p158 = scmp.eq.s32.totalorder %s11, 0
    %p159 = por %p157, %p158
    %p160 = scmp.ne.s32.totalorder %s152, %s154
    %p161 = scmp.eq.s32.totalorder %s16, 1
    %p162 = por %p160, %p161
    %p163 = scmp.ne.s32.totalorder %s154, %s155
    %p164 = scmp.eq.s32.totalorder %s16, 0
    %p165 = por %p163, %p164
    %p166 = scmp.ne.s32.totalorder %s154, %s155
    %p167 = scmp.eq.s32.totalorder %s17, 1
    %p168 = por %p166, %p167
    %p170 = scmp.ne.s32.totalorder %s155, %s169
    %p171 = scmp.eq.s32.totalorder %s17, 0
    %p172 = por %p170, %p171
    %s173 = ssub.s32 %s18, %s30
    %s174 = ssub.s32 %s19, %s26
    %s175 = sor.u32 %s173, %s174
    %p176 = scmp.eq.s32.totalorder %s175, 0
    %s178 = sadd.s32 %s177, 1
    %s179 = scalar_select %p176, %s177, %s178
    %p182 = pneg %p176
    %p183 = scmp.eq.s32.totalorder %s11, 1
    %p184 = por %p182, %p183
    %p185 = scmp.ne.s32.totalorder %s177, %s180
    %p186 = scmp.eq.s32.totalorder %s11, 0
    %p187 = por %p185, %p186
    %p188 = scmp.ne.s32.totalorder %s177, %s180
    %p189 = scmp.eq.s32.totalorder %s16, 1
    %p190 = por %p188, %p189
    %p191 = scmp.ne.s32.totalorder %s180, %s181
    %p192 = scmp.eq.s32.totalorder %s16, 0
    %p193 = por %p191, %p192
    %p194 = scmp.ne.s32.totalorder %s180, %s181
    %p195 = scmp.eq.s32.totalorder %s17, 1
    %p196 = por %p194, %p195
    %p198 = scmp.ne.s32.totalorder %s181, %s197
    %p199 = scmp.eq.s32.totalorder %s17, 0
    %p200 = por %p198, %p199
    %p201 = scmp.le.s32.totalorder 1, %s11
    %p202 = scmp.lt.s32.totalorder %s11, 3
    %p203 = pnand %p201, %p202
    %p204 = pneg %p203
    // Predicated region
    $region9: #{vae_decoder_forward.5} parent=5 // pred_check
      _
    $region10: #{vae_decoder_forward.5} parent=5 // pred_check_branch
      %206 = sbr.rel (%p203) target = $region12
    $region11: #{vae_decoder_forward.5} parent=5 // pred_region
      %s207 = ssub.s32 %s11, 1
      // Predicated region
      $region13: #{vae_decoder_forward.5} parent=11 // pred_check
        %p208 = pneg %p144
      $region14: #{vae_decoder_forward.5} parent=11 // pred_check_branch
        %210 = sbr.rel (%p208) target = $region16
      $region15: #{vae_decoder_forward.5} parent=11 // pred_region
        _
      $region16: #{vae_decoder_forward.5} parent=11 // pred_fallthru
        _
      // Predicated region
      $region17: #{vae_decoder_forward.5} parent=11 // pred_check
        %p211 = pneg %p165
      $region18: #{vae_decoder_forward.5} parent=11 // pred_check_branch
        %213 = sbr.rel (%p211) target = $region20
      $region19: #{vae_decoder_forward.5} parent=11 // pred_region
        _
      $region20: #{vae_decoder_forward.5} parent=11 // pred_fallthru
        _
    $region12: #{vae_decoder_forward.5} parent=5 // pred_fallthru
      _
    %p214 = scmp.lt.s32.totalorder %s11, 2
    // Predicated region
    $region21: #{vae_decoder_forward.5} parent=5 // pred_check
      %p215 = pneg %p214
    $region22: #{vae_decoder_forward.5} parent=5 // pred_check_branch
      %217 = sbr.rel (%p215) target = $region24
    $region23: #{vae_decoder_forward.5} parent=5 // pred_region
      // Predicated region
      $region25: #{vae_decoder_forward.5} parent=23 // pred_check
        %p218 = pneg %p45
      $region26: #{vae_decoder_forward.5} parent=23 // pred_check_branch
        %220 = sbr.rel (%p218) target = $region28
      $region27: #{vae_decoder_forward.5} parent=23 // pred_region
        %s221 = smul.u32 16, %s19
        %p222 = scmp.lt.s32.totalorder %s18, 1
        %s223 = scalar_select %p222, %s18, 1
        %p224 = scmp.lt.s32.totalorder %s221, 15
        %s225 = scalar_select %p224, %s221, 15
        %s226 = smul.addr %s225, 2
        %s227 = smul.addr %s223, 32
        %s228 = sadd.s32 %s226, %s227
        %s229 = smul.addr %s228, 4
        %s230 = scalar_lea.vmem %s0, %s229
        %s231 = smul.u32 16, %s19
      $region28: #{vae_decoder_forward.5} parent=23 // pred_fallthru
        _
      // Predicated region
      $region29: #{vae_decoder_forward.5} parent=23 // pred_check
        %p232 = pneg %p81
      $region30: #{vae_decoder_forward.5} parent=23 // pred_check_branch
        %234 = sbr.rel (%p232) target = $region32
      $region31: #{vae_decoder_forward.5} parent=23 // pred_region
        %s235 = smul.u32 %s19, 16
        %s236 = ssub.s32 %s235, 1
        %p237 = scmp.gt.s32.totalorder %s236, 0
        %s238 = scalar_select %p237, %s236, 0
        %p239 = scmp.lt.s32.totalorder %s18, 1
        %s240 = scalar_select %p239, %s18, 1
        %p241 = scmp.lt.s32.totalorder %s238, 15
        %s242 = scalar_select %p241, %s238, 15
        %s243 = smul.addr %s242, 2
        %s244 = smul.addr %s240, 32
        %s245 = sadd.s32 %s243, %s244
        %s246 = smul.addr %s245, 4
        %s247 = scalar_lea.vmem %s1, %s246
        %s248 = smul.u32 %s19, 16
        %s249 = ssub.s32 %s248, 1
        %p250 = scmp.gt.s32.totalorder %s249, 0
        %s251 = scalar_select %p250, %s249, 0
      $region32: #{vae_decoder_forward.5} parent=23 // pred_fallthru
        _
      // Predicated region
      $region33: #{vae_decoder_forward.5} parent=23 // pred_check
        %p252 = pneg %p117
      $region34: #{vae_decoder_forward.5} parent=23 // pred_check_branch
        %254 = sbr.rel (%p252) target = $region36
      $region35: #{vae_decoder_forward.5} parent=23 // pred_region
        %s255 = sadd.s32 %s19, 1
        %s256 = smul.u32 %s255, 16
        %p257 = scmp.lt.s32.totalorder %s256, 15
        %s258 = scalar_select %p257, %s256, 15
        %p259 = scmp.lt.s32.totalorder %s18, 1
        %s260 = scalar_select %p259, %s18, 1
        %p261 = scmp.lt.s32.totalorder %s258, 15
        %s262 = scalar_select %p261, %s258, 15
        %s263 = smul.addr %s262, 2
        %s264 = smul.addr %s260, 32
        %s265 = sadd.s32 %s263, %s264
        %s266 = smul.addr %s265, 4
        %s267 = scalar_lea.vmem %s2, %s266
        %s268 = sadd.s32 %s19, 1
        %s269 = smul.u32 %s268, 16
        %p270 = scmp.lt.s32.totalorder %s269, 15
        %s271 = scalar_select %p270, %s269, 15
      $region36: #{vae_decoder_forward.5} parent=23 // pred_fallthru
        _
    $region24: #{vae_decoder_forward.5} parent=5 // pred_fallthru
      _
    %p272 = scmp.le.s32.totalorder 1, %s11
    %p273 = scmp.lt.s32.totalorder %s11, 3
    %p274 = pnand %p272, %p273
    %p275 = pneg %p274
    // Predicated region
    $region37: #{vae_decoder_forward.5} parent=5 // pred_check
      _
    $region38: #{vae_decoder_forward.5} parent=5 // pred_check_branch
      %277 = sbr.rel (%p274) target = $region40
    $region39: #{vae_decoder_forward.5} parent=5 // pred_region
      %s278 = ssub.s32 %s11, 1
      %s279 = smul.u32 16, %s21
      %p280 = scmp.lt.s32.totalorder %s20, 1
      %s281 = scalar_select %p280, %s20, 1
      %p282 = scmp.lt.s32.totalorder %s279, 15
      %s283 = scalar_select %p282, %s279, 15
      %s284 = smul.addr %s283, 2
      %s285 = smul.addr %s281, 32
      %s286 = sadd.s32 %s284, %s285
      %s287 = smul.addr %s286, 4
      %s288 = scalar_lea.vmem %s0, %s287
      %p289 = pneg %p51
      %p290 = pneg %p48
      %s291 = smul.u32 %s21, 16
      %s292 = ssub.s32 %s291, 1
      %p293 = scmp.gt.s32.totalorder %s292, 0
      %s294 = scalar_select %p293, %s292, 0
      %p295 = scmp.lt.s32.totalorder %s20, 1
      %s296 = scalar_select %p295, %s20, 1
      %p297 = scmp.lt.s32.totalorder %s294, 15
      %s298 = scalar_select %p297, %s294, 15
      %s299 = smul.addr %s298, 2
      %s300 = smul.addr %s296, 32
      %s301 = sadd.s32 %s299, %s300
      %s302 = smul.addr %s301, 4
      %s303 = scalar_lea.vmem %s1, %s302
      %p304 = pneg %p87
      %p305 = pneg %p84
      %s306 = sadd.s32 %s21, 1
      %s307 = smul.u32 %s306, 16
      %p308 = scmp.lt.s32.totalorder %s307, 15
      %s309 = scalar_select %p308, %s307, 15
      %p310 = scmp.lt.s32.totalorder %s20, 1
      %s311 = scalar_select %p310, %s20, 1
      %p312 = scmp.lt.s32.totalorder %s309, 15
      %s313 = scalar_select %p312, %s309, 15
      %s314 = smul.addr %s313, 2
      %s315 = smul.addr %s311, 32
      %s316 = sadd.s32 %s314, %s315
      %s317 = smul.addr %s316, 4
      %s318 = scalar_lea.vmem %s2, %s317
      %p319 = pneg %p123
      %p320 = pneg %p120
      %p321 = pneg %p144
      %p322 = pneg %p141
      %p323 = pneg %p165
      %p324 = pneg %p162
      %p325 = pneg %p193
      %p326 = pneg %p190
      %s327 = smul.u32 16, %s21
      %p328 = scmp.lt.s32.totalorder %s20, 1
      %s329 = scalar_select %p328, %s20, 1
      %p330 = scmp.lt.s32.totalorder %s327, 15
      %s331 = scalar_select %p330, %s327, 15
      %s332 = smul.addr %s331, 2
      %s333 = smul.addr %s329, 32
      %s334 = sadd.s32 %s332, %s333
      %s335 = smul.addr %s334, 8
      %s336 = scalar_lea.vmem %s5, %s335
      %s337 = smul.u32 16, %s21
      %p338 = scmp.lt.s32.totalorder %s20, 1
      %s339 = scalar_select %p338, %s20, 1
      %p340 = scmp.lt.s32.totalorder %s337, 15
      %s341 = scalar_select %p340, %s337, 15
      %s342 = smul.addr %s341, 2
      %s343 = smul.addr %s339, 32
      %s344 = sadd.s32 %s342, %s343
      %s345 = smul.addr %s344, 4
      %s346 = scalar_lea.vmem %s0, %s345
      %s347 = smul.u32 16, %s21
      %s348 = smul.u32 %s21, 16
      %s349 = ssub.s32 %s348, 1
      %p350 = scmp.gt.s32.totalorder %s349, 0
      %s351 = scalar_select %p350, %s349, 0
      %p352 = scmp.lt.s32.totalorder %s20, 1
      %s353 = scalar_select %p352, %s20, 1
      %p354 = scmp.lt.s32.totalorder %s351, 15
      %s355 = scalar_select %p354, %s351, 15
      %s356 = smul.addr %s355, 2
      %s357 = smul.addr %s353, 32
      %s358 = sadd.s32 %s356, %s357
      %s359 = smul.addr %s358, 4
      %s360 = scalar_lea.vmem %s1, %s359
      %s361 = smul.u32 %s21, 16
      %s362 = ssub.s32 %s361, 1
      %p363 = scmp.gt.s32.totalorder %s362, 0
      %s364 = scalar_select %p363, %s362, 0
      %s365 = sadd.s32 %s21, 1
      %s366 = smul.u32 %s365, 16
      %p367 = scmp.lt.s32.totalorder %s366, 15
      %s368 = scalar_select %p367, %s366, 15
      %p369 = scmp.lt.s32.totalorder %s20, 1
      %s370 = scalar_select %p369, %s20, 1
      %p371 = scmp.lt.s32.totalorder %s368, 15
      %s372 = scalar_select %p371, %s368, 15
      %s373 = smul.addr %s372, 2
      %s374 = smul.addr %s370, 32
      %s375 = sadd.s32 %s373, %s374
      %s376 = smul.addr %s375, 4
      %s377 = scalar_lea.vmem %s2, %s376
      %s378 = sadd.s32 %s21, 1
      %s379 = smul.u32 %s378, 16
      %p380 = scmp.lt.s32.totalorder %s379, 15
      %s381 = scalar_select %p380, %s379, 15
      %s382 = smul.u32 16, %s21
      %p383 = scmp.lt.s32.totalorder %s20, 1
      %s384 = scalar_select %p383, %s20, 1
      %p385 = scmp.lt.s32.totalorder %s382, 15
      %s386 = scalar_select %p385, %s382, 15
      %s387 = smul.addr %s386, 2
      %s388 = smul.addr %s384, 32
      %s389 = sadd.s32 %s387, %s388
      %s390 = smul.addr %s389, 8
      %s391 = scalar_lea.vmem %s5, %s390
      %s392 = smul.u32 16, %s21
      %vm394 = vcmask 519168
      %395 = vst.msk [vmem:[#allocation2] sm:$0xf] %vm394, 0
      %396 = vst.msk [vmem:[#allocation2 + $0x4] sm:$0xf] %vm394, 0
      %vm397 = vcmask 516096
      %398 = vst.msk [vmem:[#allocation2 + $0x8] sm:$0x1] %vm397, 0
      %399 = vst.msk [vmem:[#allocation2 + $0xc] sm:$0xf] %vm394, 0
      %400 = vst.msk [vmem:[#allocation2 + $0x10] sm:$0xf] %vm394, 0
      %401 = vst.msk [vmem:[#allocation2 + $0x14] sm:$0x1] %vm397, 0
      %402 = vst.msk [vmem:[#allocation2 + $0x18] sm:$0xf] %vm394, 0
      %403 = vst.msk [vmem:[#allocation2 + $0x1c] sm:$0xf] %vm394, 0
      %404 = vst.msk [vmem:[#allocation2 + $0x20] sm:$0x1] %vm397, 0
      %405 = vst.msk [vmem:[#allocation2 + $0x24] sm:$0xf] %vm394, 0
      %406 = vst.msk [vmem:[#allocation2 + $0x28] sm:$0xf] %vm394, 0
      %407 = vst.msk [vmem:[#allocation2 + $0x2c] sm:$0x1] %vm397, 0
      %408 = vst.msk [vmem:[#allocation2 + $0x30] sm:$0xf] %vm394, 0
      %409 = vst.msk [vmem:[#allocation2 + $0x34] sm:$0xf] %vm394, 0
      %410 = vst.msk [vmem:[#allocation2 + $0x38] sm:$0x1] %vm397, 0
      %411 = vst.msk [vmem:[#allocation2 + $0x3c] sm:$0xf] %vm394, 0
      %412 = vst.msk [vmem:[#allocation2 + $0x40] sm:$0xf] %vm394, 0
      %413 = vst.msk [vmem:[#allocation2 + $0x44] sm:$0x1] %vm397, 0
      %414 = vst.msk [vmem:[#allocation2 + $0x48] sm:$0xf] %vm394, 0
      %415 = vst.msk [vmem:[#allocation2 + $0x4c] sm:$0xf] %vm394, 0
      %416 = vst.msk [vmem:[#allocation2 + $0x50] sm:$0x1] %vm397, 0
      %417 = vst.msk [vmem:[#allocation2 + $0x54] sm:$0xf] %vm394, 0
      %418 = vst.msk [vmem:[#allocation2 + $0x58] sm:$0xf] %vm394, 0
      %419 = vst.msk [vmem:[#allocation2 + $0x5c] sm:$0x1] %vm397, 0
      %420 = vst.msk [vmem:[#allocation2 + $0x60] sm:$0xf] %vm394, 0
      %421 = vst.msk [vmem:[#allocation2 + $0x64] sm:$0xf] %vm394, 0
      %422 = vst.msk [vmem:[#allocation2 + $0x68] sm:$0x1] %vm397, 0
      %423 = vst.msk [vmem:[#allocation2 + $0x6c] sm:$0xf] %vm394, 0
      %424 = vst.msk [vmem:[#allocation2 + $0x70] sm:$0xf] %vm394, 0
      %425 = vst.msk [vmem:[#allocation2 + $0x74] sm:$0x1] %vm397, 0
      %426 = vst.msk [vmem:[#allocation2 + $0x78] sm:$0xf] %vm394, 0
      %427 = vst.msk [vmem:[#allocation2 + $0x7c] sm:$0xf] %vm394, 0
      %428 = vst.msk [vmem:[#allocation2 + $0x80] sm:$0x1] %vm397, 0
      %429 = vst.msk [vmem:[#allocation2 + $0x84] sm:$0xf] %vm394, 0
      %430 = vst.msk [vmem:[#allocation2 + $0x88] sm:$0xf] %vm394, 0
      %431 = vst.msk [vmem:[#allocation2 + $0x8c] sm:$0x1] %vm397, 0
      %432 = vst.msk [vmem:[#allocation2 + $0x90] sm:$0xf] %vm394, 0
      %433 = vst.msk [vmem:[#allocation2 + $0x94] sm:$0xf] %vm394, 0
      %434 = vst.msk [vmem:[#allocation2 + $0x98] sm:$0x1] %vm397, 0
      %435 = vst.msk [vmem:[#allocation2 + $0x9c] sm:$0xf] %vm394, 0
      %436 = vst.msk [vmem:[#allocation2 + $0xa0] sm:$0xf] %vm394, 0
      %437 = vst.msk [vmem:[#allocation2 + $0xa4] sm:$0x1] %vm397, 0
      %438 = vst.msk [vmem:[#allocation2 + $0xa8] sm:$0xf] %vm394, 0
      %439 = vst.msk [vmem:[#allocation2 + $0xac] sm:$0xf] %vm394, 0
      %440 = vst.msk [vmem:[#allocation2 + $0xb0] sm:$0x1] %vm397, 0
      %441 = vst.msk [vmem:[#allocation2 + $0xb4] sm:$0xf] %vm394, 0
      %442 = vst.msk [vmem:[#allocation2 + $0xb8] sm:$0xf] %vm394, 0
      %443 = vst.msk [vmem:[#allocation2 + $0xbc] sm:$0x1] %vm397, 0
      %444 = vst.msk [vmem:[#allocation2 + $0xc0] sm:$0xf] %vm394, 0
      %445 = vst.msk [vmem:[#allocation2 + $0xc4] sm:$0xf] %vm394, 0
      %446 = vst.msk [vmem:[#allocation2 + $0xc8] sm:$0x1] %vm397, 0
      %447 = vst.msk [vmem:[#allocation2 + $0xcc] sm:$0xf] %vm394, 0
      %448 = vst.msk [vmem:[#allocation2 + $0xd0] sm:$0xf] %vm394, 0
      %449 = vst.msk [vmem:[#allocation2 + $0xd4] sm:$0x1] %vm397, 0
      %v450 = vld [vmem:[%s346] sm:$0xf]
      %v451 = vld [vmem:[%s346 + $0x4] sm:$0xf]
      %v452 = vld [vmem:[%s346 + $0x8] sm:$0xf]
      %v453 = vld [vmem:[%s346 + $0xc] sm:$0xf]
      %v454 = vld [vmem:[%s346 + $0x10] sm:$0xf]
      %v455 = vld [vmem:[%s346 + $0x14] sm:$0xf]
      %v456 = vld [vmem:[%s346 + $0x18] sm:$0xf]
      %v457 = vld [vmem:[%s346 + $0x1c] sm:$0xf]
      %v458 = vld [vmem:[%s346 + $0x20] sm:$0xf]
      %v459 = vld [vmem:[%s346 + $0x24] sm:$0xf]
      %v460 = vld [vmem:[%s346 + $0x28] sm:$0xf]
      %v461 = vld [vmem:[%s346 + $0x2c] sm:$0xf]
      %v462 = vld [vmem:[%s346 + $0x30] sm:$0xf]
      %v463 = vld [vmem:[%s346 + $0x34] sm:$0xf]
      %v464 = vld [vmem:[%s346 + $0x38] sm:$0xf]
      %v465 = vld [vmem:[%s346 + $0x3c] sm:$0xf]
      %v466 = vld [vmem:[%s346 + $0x40] sm:$0xf]
      %v467 = vld [vmem:[%s346 + $0x44] sm:$0xf]
      %v468 = vld [vmem:[%s346 + $0x48] sm:$0xf]
      %v469 = vld [vmem:[%s346 + $0x4c] sm:$0xf]
      %v470 = vld [vmem:[%s346 + $0x50] sm:$0xf]
      %v471 = vld [vmem:[%s346 + $0x54] sm:$0xf]
      %v472 = vld [vmem:[%s346 + $0x58] sm:$0xf]
      %v473 = vld [vmem:[%s346 + $0x5c] sm:$0xf]
      %v474 = vld [vmem:[%s346 + $0x60] sm:$0xf]
      %v475 = vld [vmem:[%s346 + $0x64] sm:$0xf]
      %v476 = vld [vmem:[%s346 + $0x68] sm:$0xf]
      %v477 = vld [vmem:[%s346 + $0x6c] sm:$0xf]
      %v478 = vld [vmem:[%s346 + $0x70] sm:$0xf]
      %v479 = vld [vmem:[%s346 + $0x74] sm:$0xf]
      %v480 = vld [vmem:[%s346 + $0x78] sm:$0xf]
      %v481 = vld [vmem:[%s346 + $0x7c] sm:$0xf]
      %vm482 = vsmask.f32 256
      %vm483 = vsmask.f32 4368
      %vm484 = vmor %vm482, %vm483
      %v486 = vshrl.u32 %v450, 16
      %v488 = vrot.slane %v486, 7
      %v489 = vshll.u32 %v450, 16
      %v491 = vor.u32 %v488, %v489
      %v492 = vrot.slane %v488, 4
      %v494 = vshrl.u32 %v451, 16
      %v496 = vrot.slane %v494, 7
      %v497 = vshll.u32 %v451, 16
      %v499 = vor.u32 %v496, %v497
      %v500 = vsel %vm484, %v492, %v499
      %v501 = vrot.slane %v496, 4
      %v503 = vshrl.u32 %v452, 16
      %v505 = vrot.slane %v503, 7
      %v506 = vshll.u32 %v452, 16
      %v508 = vor.u32 %v505, %v506
      %v509 = vrot.slane %v505, 4
      %v511 = vshrl.u32 %v453, 16
      %v513 = vrot.slane %v511, 7
      %v514 = vshll.u32 %v453, 16
      %v516 = vor.u32 %v513, %v514
      %v517 = vsel %vm484, %v509, %v516
      %v518 = vrot.slane %v513, 4
      %v520 = vshrl.u32 %v454, 16
      %v522 = vrot.slane %v520, 7
      %v523 = vshll.u32 %v454, 16
      %v525 = vor.u32 %v522, %v523
      %v526 = vrot.slane %v522, 4
      %v528 = vshrl.u32 %v455, 16
      %v530 = vrot.slane %v528, 7
      %v531 = vshll.u32 %v455, 16
      %v533 = vor.u32 %v530, %v531
      %v534 = vsel %vm484, %v526, %v533
      %v535 = vrot.slane %v530, 4
      %v537 = vshrl.u32 %v456, 16
      %v539 = vrot.slane %v537, 7
      %v540 = vshll.u32 %v456, 16
      %v542 = vor.u32 %v539, %v540
      %v543 = vrot.slane %v539, 4
      %v545 = vshrl.u32 %v457, 16
      %v547 = vrot.slane %v545, 7
      %v548 = vshll.u32 %v457, 16
      %v550 = vor.u32 %v547, %v548
      %v551 = vsel %vm484, %v543, %v550
      %v552 = vrot.slane %v547, 4
      %v554 = vshrl.u32 %v458, 16
      %v556 = vrot.slane %v554, 7
      %v557 = vshll.u32 %v458, 16
      %v559 = vor.u32 %v556, %v557
      %v560 = vrot.slane %v556, 4
      %v562 = vshrl.u32 %v459, 16
      %v564 = vrot.slane %v562, 7
      %v565 = vshll.u32 %v459, 16
      %v567 = vor.u32 %v564, %v565
      %v568 = vsel %vm484, %v560, %v567
      %v569 = vrot.slane %v564, 4
      %v571 = vshrl.u32 %v460, 16
      %v573 = vrot.slane %v571, 7
      %v574 = vshll.u32 %v460, 16
      %v576 = vor.u32 %v573, %v574
      %v577 = vrot.slane %v573, 4
      %v579 = vshrl.u32 %v461, 16
      %v581 = vrot.slane %v579, 7
      %v582 = vshll.u32 %v461, 16
      %v584 = vor.u32 %v581, %v582
      %v585 = vsel %vm484, %v577, %v584
      %v586 = vrot.slane %v581, 4
      %v588 = vshrl.u32 %v462, 16
      %v590 = vrot.slane %v588, 7
      %v591 = vshll.u32 %v462, 16
      %v593 = vor.u32 %v590, %v591
      %v594 = vrot.slane %v590, 4
      %v596 = vshrl.u32 %v463, 16
      %v598 = vrot.slane %v596, 7
      %v599 = vshll.u32 %v463, 16
      %v601 = vor.u32 %v598, %v599
      %v602 = vsel %vm484, %v594, %v601
      %v603 = vrot.slane %v598, 4
      %v605 = vshrl.u32 %v464, 16
      %v607 = vrot.slane %v605, 7
      %v608 = vshll.u32 %v464, 16
      %v610 = vor.u32 %v607, %v608
      %v611 = vrot.slane %v607, 4
      %v613 = vshrl.u32 %v465, 16
      %v615 = vrot.slane %v613, 7
      %v616 = vshll.u32 %v465, 16
      %v618 = vor.u32 %v615, %v616
      %v619 = vsel %vm484, %v611, %v618
      %v620 = vrot.slane %v615, 4
      %v622 = vshrl.u32 %v466, 16
      %v624 = vrot.slane %v622, 7
      %v625 = vshll.u32 %v466, 16
      %v627 = vor.u32 %v624, %v625
      %v628 = vrot.slane %v624, 4
      %v630 = vshrl.u32 %v467, 16
      %v632 = vrot.slane %v630, 7
      %v633 = vshll.u32 %v467, 16
      %v635 = vor.u32 %v632, %v633
      %v636 = vsel %vm484, %v628, %v635
      %v637 = vrot.slane %v632, 4
      %v639 = vshrl.u32 %v468, 16
      %v641 = vrot.slane %v639, 7
      %v642 = vshll.u32 %v468, 16
      %v644 = vor.u32 %v641, %v642
      %v645 = vrot.slane %v641, 4
      %v647 = vshrl.u32 %v469, 16
      %v649 = vrot.slane %v647, 7
      %v650 = vshll.u32 %v469, 16
      %v652 = vor.u32 %v649, %v650
      %v653 = vsel %vm484, %v645, %v652
      %v654 = vrot.slane %v649, 4
      %v656 = vshrl.u32 %v470, 16
      %v658 = vrot.slane %v656, 7
      %v659 = vshll.u32 %v470, 16
      %v661 = vor.u32 %v658, %v659
      %v662 = vrot.slane %v658, 4
      %v664 = vshrl.u32 %v471, 16
      %v666 = vrot.slane %v664, 7
      %v667 = vshll.u32 %v471, 16
      %v669 = vor.u32 %v666, %v667
      %v670 = vsel %vm484, %v662, %v669
      %v671 = vrot.slane %v666, 4
      %v673 = vshrl.u32 %v472, 16
      %v675 = vrot.slane %v673, 7
      %v676 = vshll.u32 %v472, 16
      %v678 = vor.u32 %v675, %v676
      %v679 = vrot.slane %v675, 4
      %v681 = vshrl.u32 %v473, 16
      %v683 = vrot.slane %v681, 7
      %v684 = vshll.u32 %v473, 16
      %v686 = vor.u32 %v683, %v684
      %v687 = vsel %vm484, %v679, %v686
      %v688 = vrot.slane %v683, 4
      %v690 = vshrl.u32 %v474, 16
      %v692 = vrot.slane %v690, 7
      %v693 = vshll.u32 %v474, 16
      %v695 = vor.u32 %v692, %v693
      %v696 = vrot.slane %v692, 4
      %v698 = vshrl.u32 %v475, 16
      %v700 = vrot.slane %v698, 7
      %v701 = vshll.u32 %v475, 16
      %v703 = vor.u32 %v700, %v701
      %v704 = vsel %vm484, %v696, %v703
      %v705 = vrot.slane %v700, 4
      %v707 = vshrl.u32 %v476, 16
      %v709 = vrot.slane %v707, 7
      %v710 = vshll.u32 %v476, 16
      %v712 = vor.u32 %v709, %v710
      %v713 = vrot.slane %v709, 4
      %v715 = vshrl.u32 %v477, 16
      %v717 = vrot.slane %v715, 7
      %v718 = vshll.u32 %v477, 16
      %v720 = vor.u32 %v717, %v718
      %v721 = vsel %vm484, %v713, %v720
      %v722 = vrot.slane %v717, 4
      %v724 = vshrl.u32 %v478, 16
      %v726 = vrot.slane %v724, 7
      %v727 = vshll.u32 %v478, 16
      %v729 = vor.u32 %v726, %v727
      %v730 = vrot.slane %v726, 4
      %v732 = vshrl.u32 %v479, 16
      %v734 = vrot.slane %v732, 7
      %v735 = vshll.u32 %v479, 16
      %v737 = vor.u32 %v734, %v735
      %v738 = vsel %vm484, %v730, %v737
      %v739 = vrot.slane %v734, 4
      %v741 = vshrl.u32 %v480, 16
      %v743 = vrot.slane %v741, 7
      %v744 = vshll.u32 %v480, 16
      %v746 = vor.u32 %v743, %v744
      %v747 = vrot.slane %v743, 4
      %v749 = vshrl.u32 %v481, 16
      %v751 = vrot.slane %v749, 7
      %v752 = vshll.u32 %v481, 16
      %v754 = vor.u32 %v751, %v752
      %v755 = vsel %vm484, %v747, %v754
      %v756 = vrot.slane %v751, 4
      %s805 = scalar_lea.vmem [#allocation2], 12
      %vm806 = vcmask 519168
      %vm807 = vsmask.f32 7938
      %vm808 = vmand %vm806, %vm807
      %v809 = vld [vmem:[%s805] sm:$0xf]
      %v810 = vsel %vm808, %v491, %v809
      %811 = vst [vmem:[%s805] sm:$0xf] %v810
      %812 = vst.msk [vmem:[%s805 + $0x4] sm:$0xf] %vm394, %v500
      %vm813 = vcmask 516096
      %vm814 = vmand %vm813, %vm482
      %v815 = vld [vmem:[%s805 + $0x8] sm:$0x1]
      %v816 = vsel %vm814, %v501, %v815
      %817 = vst [vmem:[%s805 + $0x8] sm:$0x1] %v816
      %v818 = vld [vmem:[%s805 + $0xc] sm:$0xf]
      %v819 = vsel %vm808, %v508, %v818
      %820 = vst [vmem:[%s805 + $0xc] sm:$0xf] %v819
      %821 = vst.msk [vmem:[%s805 + $0x10] sm:$0xf] %vm394, %v517
      %v822 = vld [vmem:[%s805 + $0x14] sm:$0x1]
      %v823 = vsel %vm814, %v518, %v822
      %824 = vst [vmem:[%s805 + $0x14] sm:$0x1] %v823
      %v825 = vld [vmem:[%s805 + $0x18] sm:$0xf]
      %v826 = vsel %vm808, %v525, %v825
      %827 = vst [vmem:[%s805 + $0x18] sm:$0xf] %v826
      %828 = vst.msk [vmem:[%s805 + $0x1c] sm:$0xf] %vm394, %v534
      %v829 = vld [vmem:[%s805 + $0x20] sm:$0x1]
      %v830 = vsel %vm814, %v535, %v829
      %831 = vst [vmem:[%s805 + $0x20] sm:$0x1] %v830
      %v832 = vld [vmem:[%s805 + $0x24] sm:$0xf]
      %v833 = vsel %vm808, %v542, %v832
      %834 = vst [vmem:[%s805 + $0x24] sm:$0xf] %v833
      %835 = vst.msk [vmem:[%s805 + $0x28] sm:$0xf] %vm394, %v551
      %v836 = vld [vmem:[%s805 + $0x2c] sm:$0x1]
      %v837 = vsel %vm814, %v552, %v836
      %838 = vst [vmem:[%s805 + $0x2c] sm:$0x1] %v837
      %v839 = vld [vmem:[%s805 + $0x30] sm:$0xf]
      %v840 = vsel %vm808, %v559, %v839
      %841 = vst [vmem:[%s805 + $0x30] sm:$0xf] %v840
      %842 = vst.msk [vmem:[%s805 + $0x34] sm:$0xf] %vm394, %v568
      %v843 = vld [vmem:[%s805 + $0x38] sm:$0x1]
      %v844 = vsel %vm814, %v569, %v843
      %845 = vst [vmem:[%s805 + $0x38] sm:$0x1] %v844
      %v846 = vld [vmem:[%s805 + $0x3c] sm:$0xf]
      %v847 = vsel %vm808, %v576, %v846
      %848 = vst [vmem:[%s805 + $0x3c] sm:$0xf] %v847
      %849 = vst.msk [vmem:[%s805 + $0x40] sm:$0xf] %vm394, %v585
      %v850 = vld [vmem:[%s805 + $0x44] sm:$0x1]
      %v851 = vsel %vm814, %v586, %v850
      %852 = vst [vmem:[%s805 + $0x44] sm:$0x1] %v851
      %v853 = vld [vmem:[%s805 + $0x48] sm:$0xf]
      %v854 = vsel %vm808, %v593, %v853
      %855 = vst [vmem:[%s805 + $0x48] sm:$0xf] %v854
      %856 = vst.msk [vmem:[%s805 + $0x4c] sm:$0xf] %vm394, %v602
      %v857 = vld [vmem:[%s805 + $0x50] sm:$0x1]
      %v858 = vsel %vm814, %v603, %v857
      %859 = vst [vmem:[%s805 + $0x50] sm:$0x1] %v858
      %v860 = vld [vmem:[%s805 + $0x54] sm:$0xf]
      %v861 = vsel %vm808, %v610, %v860
      %862 = vst [vmem:[%s805 + $0x54] sm:$0xf] %v861
      %863 = vst.msk [vmem:[%s805 + $0x58] sm:$0xf] %vm394, %v619
      %v864 = vld [vmem:[%s805 + $0x5c] sm:$0x1]
      %v865 = vsel %vm814, %v620, %v864
      %866 = vst [vmem:[%s805 + $0x5c] sm:$0x1] %v865
      %v867 = vld [vmem:[%s805 + $0x60] sm:$0xf]
      %v868 = vsel %vm808, %v627, %v867
      %869 = vst [vmem:[%s805 + $0x60] sm:$0xf] %v868
      %870 = vst.msk [vmem:[%s805 + $0x64] sm:$0xf] %vm394, %v636
      %v871 = vld [vmem:[%s805 + $0x68] sm:$0x1]
      %v872 = vsel %vm814, %v637, %v871
      %873 = vst [vmem:[%s805 + $0x68] sm:$0x1] %v872
      %v874 = vld [vmem:[%s805 + $0x6c] sm:$0xf]
      %v875 = vsel %vm808, %v644, %v874
      %876 = vst [vmem:[%s805 + $0x6c] sm:$0xf] %v875
      %877 = vst.msk [vmem:[%s805 + $0x70] sm:$0xf] %vm394, %v653
      %v878 = vld [vmem:[%s805 + $0x74] sm:$0x1]
      %v879 = vsel %vm814, %v654, %v878
      %880 = vst [vmem:[%s805 + $0x74] sm:$0x1] %v879
      %v881 = vld [vmem:[%s805 + $0x78] sm:$0xf]
      %v882 = vsel %vm808, %v661, %v881
      %883 = vst [vmem:[%s805 + $0x78] sm:$0xf] %v882
      %884 = vst.msk [vmem:[%s805 + $0x7c] sm:$0xf] %vm394, %v670
      %v885 = vld [vmem:[%s805 + $0x80] sm:$0x1]
      %v886 = vsel %vm814, %v671, %v885
      %887 = vst [vmem:[%s805 + $0x80] sm:$0x1] %v886
      %v888 = vld [vmem:[%s805 + $0x84] sm:$0xf]
      %v889 = vsel %vm808, %v678, %v888
      %890 = vst [vmem:[%s805 + $0x84] sm:$0xf] %v889
      %891 = vst.msk [vmem:[%s805 + $0x88] sm:$0xf] %vm394, %v687
      %v892 = vld [vmem:[%s805 + $0x8c] sm:$0x1]
      %v893 = vsel %vm814, %v688, %v892
      %894 = vst [vmem:[%s805 + $0x8c] sm:$0x1] %v893
      %v895 = vld [vmem:[%s805 + $0x90] sm:$0xf]
      %v896 = vsel %vm808, %v695, %v895
      %897 = vst [vmem:[%s805 + $0x90] sm:$0xf] %v896
      %898 = vst.msk [vmem:[%s805 + $0x94] sm:$0xf] %vm394, %v704
      %v899 = vld [vmem:[%s805 + $0x98] sm:$0x1]
      %v900 = vsel %vm814, %v705, %v899
      %901 = vst [vmem:[%s805 + $0x98] sm:$0x1] %v900
      %v902 = vld [vmem:[%s805 + $0x9c] sm:$0xf]
      %v903 = vsel %vm808, %v712, %v902
      %904 = vst [vmem:[%s805 + $0x9c] sm:$0xf] %v903
      %905 = vst.msk [vmem:[%s805 + $0xa0] sm:$0xf] %vm394, %v721
      %v906 = vld [vmem:[%s805 + $0xa4] sm:$0x1]
      %v907 = vsel %vm814, %v722, %v906
      %908 = vst [vmem:[%s805 + $0xa4] sm:$0x1] %v907
      %v909 = vld [vmem:[%s805 + $0xa8] sm:$0xf]
      %v910 = vsel %vm808, %v729, %v909
      %911 = vst [vmem:[%s805 + $0xa8] sm:$0xf] %v910
      %912 = vst.msk [vmem:[%s805 + $0xac] sm:$0xf] %vm394, %v738
      %v913 = vld [vmem:[%s805 + $0xb0] sm:$0x1]
      %v914 = vsel %vm814, %v739, %v913
      %915 = vst [vmem:[%s805 + $0xb0] sm:$0x1] %v914
      %v916 = vld [vmem:[%s805 + $0xb4] sm:$0xf]
      %v917 = vsel %vm808, %v746, %v916
      %918 = vst [vmem:[%s805 + $0xb4] sm:$0xf] %v917
      %919 = vst.msk [vmem:[%s805 + $0xb8] sm:$0xf] %vm394, %v755
      %v920 = vld [vmem:[%s805 + $0xbc] sm:$0x1]
      %v921 = vsel %vm814, %v756, %v920
      %922 = vst [vmem:[%s805 + $0xbc] sm:$0x1] %v921
      %p923 = scmp.gt.s32.totalorder %s21, 0
      // Predicated region
      $region41: #{vae_decoder_forward.5} parent=39 // pred_check
        %p924 = pneg %p923
      $region42: #{vae_decoder_forward.5} parent=39 // pred_check_branch
        %926 = sbr.rel (%p924) target = $region44
      $region43: #{vae_decoder_forward.5} parent=39 // pred_region
        %v927 = vld [vmem:[%s360] sm:$0xf]
        %v928 = vld [vmem:[%s360 + $0x4] sm:$0xf]
        %v930 = vshrl.u32 %v927, 16
        %v932 = vrot.slane %v930, 7
        %v933 = vshll.u32 %v927, 16
        %v935 = vor.u32 %v932, %v933
        %v936 = vrot.slane %v932, 4
        %v938 = vshrl.u32 %v928, 16
        %v940 = vrot.slane %v938, 7
        %v941 = vshll.u32 %v928, 16
        %v943 = vor.u32 %v940, %v941
        %v944 = vsel %vm484, %v936, %v943
        %v945 = vrot.slane %v940, 4
        %v949 = vld [vmem:[#allocation2] sm:$0xf]
        %v950 = vsel %vm808, %v935, %v949
        %951 = vst [vmem:[#allocation2] sm:$0xf] %v950
        %952 = vst.msk [vmem:[#allocation2 + $0x4] sm:$0xf] %vm394, %v944
        %v953 = vld [vmem:[#allocation2 + $0x8] sm:$0x1]
        %v954 = vsel %vm814, %v945, %v953
        %955 = vst [vmem:[#allocation2 + $0x8] sm:$0x1] %v954
      $region44: #{vae_decoder_forward.5} parent=39 // pred_fallthru
        _
      %p956 = scmp.lt.s32.totalorder %s21, 0
      // Predicated region
      $region45: #{vae_decoder_forward.5} parent=39 // pred_check
        %p957 = pneg %p956
      $region46: #{vae_decoder_forward.5} parent=39 // pred_check_branch
        %959 = sbr.rel (%p957) target = $region48
      $region47: #{vae_decoder_forward.5} parent=39 // pred_region
        %v960 = vld [vmem:[%s377] sm:$0xf]
        %v961 = vld [vmem:[%s377 + $0x4] sm:$0xf]
        %v963 = vshrl.u32 %v960, 16
        %v965 = vrot.slane %v963, 7
        %v966 = vshll.u32 %v960, 16
        %v968 = vor.u32 %v965, %v966
        %v969 = vrot.slane %v965, 4
        %v971 = vshrl.u32 %v961, 16
        %v973 = vrot.slane %v971, 7
        %v974 = vshll.u32 %v961, 16
        %v976 = vor.u32 %v973, %v974
        %v977 = vsel %vm484, %v969, %v976
        %v978 = vrot.slane %v973, 4
        %s982 = scalar_lea.vmem [#allocation2], 204
        %v983 = vld [vmem:[%s982] sm:$0xf]
        %v984 = vsel %vm808, %v968, %v983
        %985 = vst [vmem:[%s982] sm:$0xf] %v984
        %986 = vst.msk [vmem:[%s982 + $0x4] sm:$0xf] %vm394, %v977
        %v987 = vld [vmem:[%s982 + $0x8] sm:$0x1]
        %v988 = vsel %vm814, %v978, %v987
        %989 = vst [vmem:[%s982 + $0x8] sm:$0x1] %v988
      $region48: #{vae_decoder_forward.5} parent=39 // pred_fallthru
        _
      %v990 = vld [vmem:[%s4] sm:$0x1]
      %v991 = vld [vmem:[#allocation2] sm:$0xf]
      %v992 = vld [vmem:[#allocation2 + $0x4] sm:$0xf]
      %v993 = vld [vmem:[#allocation2 + $0xc] sm:$0xf]
      %v994 = vld [vmem:[#allocation2 + $0x10] sm:$0xf]
      %v995 = vld [vmem:[#allocation2 + $0x18] sm:$0xf]
      %v996 = vld [vmem:[#allocation2 + $0x1c] sm:$0xf]
      %v997 = vld [vmem:[#allocation2 + $0x24] sm:$0xf]
      %v998 = vld [vmem:[#allocation2 + $0x28] sm:$0xf]
      %v999 = vld [vmem:[#allocation2 + $0x30] sm:$0xf]
      %v1000 = vld [vmem:[#allocation2 + $0x34] sm:$0xf]
      %v1001 = vld [vmem:[#allocation2 + $0x3c] sm:$0xf]
      %v1002 = vld [vmem:[#allocation2 + $0x40] sm:$0xf]
      %v1003 = vld [vmem:[#allocation2 + $0x48] sm:$0xf]
      %v1004 = vld [vmem:[#allocation2 + $0x4c] sm:$0xf]
      %v1005 = vld [vmem:[#allocation2 + $0x54] sm:$0xf]
      %v1006 = vld [vmem:[#allocation2 + $0x58] sm:$0xf]
      %v1007 = vld [vmem:[#allocation2 + $0x60] sm:$0xf]
      %v1008 = vld [vmem:[#allocation2 + $0x64] sm:$0xf]
      %v1009 = vld [vmem:[#allocation2 + $0x6c] sm:$0xf]
      %v1010 = vld [vmem:[#allocation2 + $0x70] sm:$0xf]
      %v1011 = vld [vmem:[#allocation2 + $0x78] sm:$0xf]
      %v1012 = vld [vmem:[#allocation2 + $0x7c] sm:$0xf]
      %v1013 = vld [vmem:[#allocation2 + $0x84] sm:$0xf]
      %v1014 = vld [vmem:[#allocation2 + $0x88] sm:$0xf]
      %v1015 = vld [vmem:[#allocation2 + $0x90] sm:$0xf]
      %v1016 = vld [vmem:[#allocation2 + $0x94] sm:$0xf]
      %v1017 = vld [vmem:[#allocation2 + $0x9c] sm:$0xf]
      %v1018 = vld [vmem:[#allocation2 + $0xa0] sm:$0xf]
      %v1019 = vld [vmem:[#allocation2 + $0xa8] sm:$0xf]
      %v1020 = vld [vmem:[#allocation2 + $0xac] sm:$0xf]
      %v1021 = vld [vmem:[#allocation2 + $0xb4] sm:$0xf]
      %v1022 = vld [vmem:[#allocation2 + $0xb8] sm:$0xf]
      %v1023 = vld [vmem:[%s3] sm:$0xf]
      %v1024 = vld [vmem:[%s3 + $0x4] sm:$0xf]
      %v1025 = vld [vmem:[%s3 + $0x8] sm:$0xf]
      %v1026 = vld [vmem:[%s3 + $0xc] sm:$0xf]
      %v1027 = vld [vmem:[%s3 + $0x10] sm:$0xf]
      %v1028 = vld [vmem:[%s3 + $0x14] sm:$0xf]
      %v1029 = vld [vmem:[%s3 + $0x18] sm:$0xf]
      %v1030 = vld [vmem:[%s3 + $0x1c] sm:$0xf]
      %v1031 = vld [vmem:[#allocation2 + $0x8] sm:$0x1]
      %v1032 = vld [vmem:[#allocation2 + $0x14] sm:$0x1]
      %v1033 = vld [vmem:[#allocation2 + $0x20] sm:$0x1]
      %v1034 = vld [vmem:[#allocation2 + $0x2c] sm:$0x1]
      %v1035 = vld [vmem:[#allocation2 + $0x38] sm:$0x1]
      %v1036 = vld [vmem:[#allocation2 + $0x44] sm:$0x1]
      %v1037 = vld [vmem:[#allocation2 + $0x50] sm:$0x1]
      %v1038 = vld [vmem:[#allocation2 + $0x5c] sm:$0x1]
      %v1039 = vld [vmem:[#allocation2 + $0x68] sm:$0x1]
      %v1040 = vld [vmem:[#allocation2 + $0x74] sm:$0x1]
      %v1041 = vld [vmem:[#allocation2 + $0x80] sm:$0x1]
      %v1042 = vld [vmem:[#allocation2 + $0x8c] sm:$0x1]
      %v1043 = vld [vmem:[#allocation2 + $0x98] sm:$0x1]
      %v1044 = vld [vmem:[#allocation2 + $0xa4] sm:$0x1]
      %v1045 = vld [vmem:[#allocation2 + $0xb0] sm:$0x1]
      %v1046 = vld [vmem:[#allocation2 + $0xbc] sm:$0x1]
      %vm1047 = vsmask.f32 3328
      %vm1048 = vsmask.f32 7440
      %vm1049 = vmor %vm1047, %vm1048
      %v1051 = vshrl.u32 %v991, 16
      %v1053 = vrot.slane %v1051, 4
      %v1054 = vshll.u32 %v991, 16
      %v1056 = vrot.slane %v1054, 5
      %v1057 = vor.u32 %v1053, %v1056
      %v1058 = vrot.slane %v1057, 4
      %v1060 = vshll.u32 %v992, 16
      %v1062 = vrot.slane %v1060, 5
      %v1063 = vsel %vm1049, %v1058, %v1062
      %v1064 = vshrl.u32 %v992, 16
      %v1066 = vrot.slane %v1064, 4
      %v1067 = vor.u32 %v1066, %v1062
      %v1068 = vrot.slane %v1067, 4
      %v1070 = vshll.u32 %v1031, 16
      %v1072 = vrot.slane %v1070, 5
      %v1073 = vsel %vm1049, %v1068, %v1072
      %v1075 = vshrl.u32 %v993, 16
      %v1077 = vrot.slane %v1075, 4
      %v1078 = vshll.u32 %v993, 16
      %v1080 = vrot.slane %v1078, 5
      %v1081 = vor.u32 %v1077, %v1080
      %v1082 = vrot.slane %v1081, 4
      %v1084 = vshll.u32 %v994, 16
      %v1086 = vrot.slane %v1084, 5
      %v1087 = vsel %vm1049, %v1082, %v1086
      %v1088 = vshrl.u32 %v994, 16
      %v1090 = vrot.slane %v1088, 4
      %v1091 = vor.u32 %v1090, %v1086
      %v1092 = vrot.slane %v1091, 4
      %v1094 = vshll.u32 %v1032, 16
      %v1096 = vrot.slane %v1094, 5
      %v1097 = vsel %vm1049, %v1092, %v1096
      %v1099 = vshrl.u32 %v995, 16
      %v1101 = vrot.slane %v1099, 4
      %v1102 = vshll.u32 %v995, 16
      %v1104 = vrot.slane %v1102, 5
      %v1105 = vor.u32 %v1101, %v1104
      %v1106 = vrot.slane %v1105, 4
      %v1108 = vshll.u32 %v996, 16
      %v1110 = vrot.slane %v1108, 5
      %v1111 = vsel %vm1049, %v1106, %v1110
      %v1112 = vshrl.u32 %v996, 16
      %v1114 = vrot.slane %v1112, 4
      %v1115 = vor.u32 %v1114, %v1110
      %v1116 = vrot.slane %v1115, 4
      %v1118 = vshll.u32 %v1033, 16
      %v1120 = vrot.slane %v1118, 5
      %v1121 = vsel %vm1049, %v1116, %v1120
      %v1123 = vshrl.u32 %v997, 16
      %v1125 = vrot.slane %v1123, 4
      %v1126 = vshll.u32 %v997, 16
      %v1128 = vrot.slane %v1126, 5
      %v1129 = vor.u32 %v1125, %v1128
      %v1130 = vrot.slane %v1129, 4
      %v1132 = vshll.u32 %v998, 16
      %v1134 = vrot.slane %v1132, 5
      %v1135 = vsel %vm1049, %v1130, %v1134
      %v1136 = vshrl.u32 %v998, 16
      %v1138 = vrot.slane %v1136, 4
      %v1139 = vor.u32 %v1138, %v1134
      %v1140 = vrot.slane %v1139, 4
      %v1142 = vshll.u32 %v1034, 16
      %v1144 = vrot.slane %v1142, 5
      %v1145 = vsel %vm1049, %v1140, %v1144
      %v1147 = vshrl.u32 %v999, 16
      %v1149 = vrot.slane %v1147, 4
      %v1150 = vshll.u32 %v999, 16
      %v1152 = vrot.slane %v1150, 5
      %v1153 = vor.u32 %v1149, %v1152
      %v1154 = vrot.slane %v1153, 4
      %v1156 = vshll.u32 %v1000, 16
      %v1158 = vrot.slane %v1156, 5
      %v1159 = vsel %vm1049, %v1154, %v1158
      %v1160 = vshrl.u32 %v1000, 16
      %v1162 = vrot.slane %v1160, 4
      %v1163 = vor.u32 %v1162, %v1158
      %v1164 = vrot.slane %v1163, 4
      %v1166 = vshll.u32 %v1035, 16
      %v1168 = vrot.slane %v1166, 5
      %v1169 = vsel %vm1049, %v1164, %v1168
      %v1171 = vshrl.u32 %v1001, 16
      %v1173 = vrot.slane %v1171, 4
      %v1174 = vshll.u32 %v1001, 16
      %v1176 = vrot.slane %v1174, 5
      %v1177 = vor.u32 %v1173, %v1176
      %v1178 = vrot.slane %v1177, 4
      %v1180 = vshll.u32 %v1002, 16
      %v1182 = vrot.slane %v1180, 5
      %v1183 = vsel %vm1049, %v1178, %v1182
      %v1184 = vshrl.u32 %v1002, 16
      %v1186 = vrot.slane %v1184, 4
      %v1187 = vor.u32 %v1186, %v1182
      %v1188 = vrot.slane %v1187, 4
      %v1190 = vshll.u32 %v1036, 16
      %v1192 = vrot.slane %v1190, 5
      %v1193 = vsel %vm1049, %v1188, %v1192
      %v1195 = vshrl.u32 %v1003, 16
      %v1197 = vrot.slane %v1195, 4
      %v1198 = vshll.u32 %v1003, 16
      %v1200 = vrot.slane %v1198, 5
      %v1201 = vor.u32 %v1197, %v1200
      %v1202 = vrot.slane %v1201, 4
      %v1204 = vshll.u32 %v1004, 16
      %v1206 = vrot.slane %v1204, 5
      %v1207 = vsel %vm1049, %v1202, %v1206
      %v1208 = vshrl.u32 %v1004, 16
      %v1210 = vrot.slane %v1208, 4
      %v1211 = vor.u32 %v1210, %v1206
      %v1212 = vrot.slane %v1211, 4
      %v1214 = vshll.u32 %v1037, 16
      %v1216 = vrot.slane %v1214, 5
      %v1217 = vsel %vm1049, %v1212, %v1216
      %v1219 = vshrl.u32 %v1005, 16
      %v1221 = vrot.slane %v1219, 4
      %v1222 = vshll.u32 %v1005, 16
      %v1224 = vrot.slane %v1222, 5
      %v1225 = vor.u32 %v1221, %v1224
      %v1226 = vrot.slane %v1225, 4
      %v1228 = vshll.u32 %v1006, 16
      %v1230 = vrot.slane %v1228, 5
      %v1231 = vsel %vm1049, %v1226, %v1230
      %v1232 = vshrl.u32 %v1006, 16
      %v1234 = vrot.slane %v1232, 4
      %v1235 = vor.u32 %v1234, %v1230
      %v1236 = vrot.slane %v1235, 4
      %v1238 = vshll.u32 %v1038, 16
      %v1240 = vrot.slane %v1238, 5
      %v1241 = vsel %vm1049, %v1236, %v1240
      %v1243 = vshrl.u32 %v1007, 16
      %v1245 = vrot.slane %v1243, 4
      %v1246 = vshll.u32 %v1007, 16
      %v1248 = vrot.slane %v1246, 5
      %v1249 = vor.u32 %v1245, %v1248
      %v1250 = vrot.slane %v1249, 4
      %v1252 = vshll.u32 %v1008, 16
      %v1254 = vrot.slane %v1252, 5
      %v1255 = vsel %vm1049, %v1250, %v1254
      %v1256 = vshrl.u32 %v1008, 16
      %v1258 = vrot.slane %v1256, 4
      %v1259 = vor.u32 %v1258, %v1254
      %v1260 = vrot.slane %v1259, 4
      %v1262 = vshll.u32 %v1039, 16
      %v1264 = vrot.slane %v1262, 5
      %v1265 = vsel %vm1049, %v1260, %v1264
      %v1267 = vshrl.u32 %v1009, 16
      %v1269 = vrot.slane %v1267, 4
      %v1270 = vshll.u32 %v1009, 16
      %v1272 = vrot.slane %v1270, 5
      %v1273 = vor.u32 %v1269, %v1272
      %v1274 = vrot.slane %v1273, 4
      %v1276 = vshll.u32 %v1010, 16
      %v1278 = vrot.slane %v1276, 5
      %v1279 = vsel %vm1049, %v1274, %v1278
      %v1280 = vshrl.u32 %v1010, 16
      %v1282 = vrot.slane %v1280, 4
      %v1283 = vor.u32 %v1282, %v1278
      %v1284 = vrot.slane %v1283, 4
      %v1286 = vshll.u32 %v1040, 16
      %v1288 = vrot.slane %v1286, 5
      %v1289 = vsel %vm1049, %v1284, %v1288
      %v1291 = vshrl.u32 %v1011, 16
      %v1293 = vrot.slane %v1291, 4
      %v1294 = vshll.u32 %v1011, 16
      %v1296 = vrot.slane %v1294, 5
      %v1297 = vor.u32 %v1293, %v1296
      %v1298 = vrot.slane %v1297, 4
      %v1300 = vshll.u32 %v1012, 16
      %v1302 = vrot.slane %v1300, 5
      %v1303 = vsel %vm1049, %v1298, %v1302
      %v1304 = vshrl.u32 %v1012, 16
      %v1306 = vrot.slane %v1304, 4
      %v1307 = vor.u32 %v1306, %v1302
      %v1308 = vrot.slane %v1307, 4
      %v1310 = vshll.u32 %v1041, 16
      %v1312 = vrot.slane %v1310, 5
      %v1313 = vsel %vm1049, %v1308, %v1312
      %v1315 = vshrl.u32 %v1013, 16
      %v1317 = vrot.slane %v1315, 4
      %v1318 = vshll.u32 %v1013, 16
      %v1320 = vrot.slane %v1318, 5
      %v1321 = vor.u32 %v1317, %v1320
      %v1322 = vrot.slane %v1321, 4
      %v1324 = vshll.u32 %v1014, 16
      %v1326 = vrot.slane %v1324, 5
      %v1327 = vsel %vm1049, %v1322, %v1326
      %v1328 = vshrl.u32 %v1014, 16
      %v1330 = vrot.slane %v1328, 4
      %v1331 = vor.u32 %v1330, %v1326
      %v1332 = vrot.slane %v1331, 4
      %v1334 = vshll.u32 %v1042, 16
      %v1336 = vrot.slane %v1334, 5
      %v1337 = vsel %vm1049, %v1332, %v1336
      %v1339 = vshrl.u32 %v1015, 16
      %v1341 = vrot.slane %v1339, 4
      %v1342 = vshll.u32 %v1015, 16
      %v1344 = vrot.slane %v1342, 5
      %v1345 = vor.u32 %v1341, %v1344
      %v1346 = vrot.slane %v1345, 4
      %v1348 = vshll.u32 %v1016, 16
      %v1350 = vrot.slane %v1348, 5
      %v1351 = vsel %vm1049, %v1346, %v1350
      %v1352 = vshrl.u32 %v1016, 16
      %v1354 = vrot.slane %v1352, 4
      %v1355 = vor.u32 %v1354, %v1350
      %v1356 = vrot.slane %v1355, 4
      %v1358 = vshll.u32 %v1043, 16
      %v1360 = vrot.slane %v1358, 5
      %v1361 = vsel %vm1049, %v1356, %v1360
      %v1363 = vshrl.u32 %v1017, 16
      %v1365 = vrot.slane %v1363, 4
      %v1366 = vshll.u32 %v1017, 16
      %v1368 = vrot.slane %v1366, 5
      %v1369 = vor.u32 %v1365, %v1368
      %v1370 = vrot.slane %v1369, 4
      %v1372 = vshll.u32 %v1018, 16
      %v1374 = vrot.slane %v1372, 5
      %v1375 = vsel %vm1049, %v1370, %v1374
      %v1376 = vshrl.u32 %v1018, 16
      %v1378 = vrot.slane %v1376, 4
      %v1379 = vor.u32 %v1378, %v1374
      %v1380 = vrot.slane %v1379, 4
      %v1382 = vshll.u32 %v1044, 16
      %v1384 = vrot.slane %v1382, 5
      %v1385 = vsel %vm1049, %v1380, %v1384
      %v1387 = vshrl.u32 %v1019, 16
      %v1389 = vrot.slane %v1387, 4
      %v1390 = vshll.u32 %v1019, 16
      %v1392 = vrot.slane %v1390, 5
      %v1393 = vor.u32 %v1389, %v1392
      %v1394 = vrot.slane %v1393, 4
      %v1396 = vshll.u32 %v1020, 16
      %v1398 = vrot.slane %v1396, 5
      %v1399 = vsel %vm1049, %v1394, %v1398
      %v1400 = vshrl.u32 %v1020, 16
      %v1402 = vrot.slane %v1400, 4
      %v1403 = vor.u32 %v1402, %v1398
      %v1404 = vrot.slane %v1403, 4
      %v1406 = vshll.u32 %v1045, 16
      %v1408 = vrot.slane %v1406, 5
      %v1409 = vsel %vm1049, %v1404, %v1408
      %v1411 = vshrl.u32 %v1021, 16
      %v1413 = vrot.slane %v1411, 4
      %v1414 = vshll.u32 %v1021, 16
      %v1416 = vrot.slane %v1414, 5
      %v1417 = vor.u32 %v1413, %v1416
      %v1418 = vrot.slane %v1417, 4
      %v1420 = vshll.u32 %v1022, 16
      %v1422 = vrot.slane %v1420, 5
      %v1423 = vsel %vm1049, %v1418, %v1422
      %v1424 = vshrl.u32 %v1022, 16
      %v1426 = vrot.slane %v1424, 4
      %v1427 = vor.u32 %v1426, %v1422
      %v1428 = vrot.slane %v1427, 4
      %v1430 = vshll.u32 %v1046, 16
      %v1432 = vrot.slane %v1430, 5
      %v1433 = vsel %vm1049, %v1428, %v1432
      %s1434 = scalar_lea.vmem %s3, 32
      %v1435 = vld [vmem:[%s1434] sm:$0xf]
      %v1436 = vld [vmem:[%s1434 + $0x4] sm:$0xf]
      %v1437 = vld [vmem:[%s1434 + $0x8] sm:$0xf]
      %v1438 = vld [vmem:[%s1434 + $0xc] sm:$0xf]
      %v1439 = vld [vmem:[%s1434 + $0x10] sm:$0xf]
      %v1440 = vld [vmem:[%s1434 + $0x14] sm:$0xf]
      %v1441 = vld [vmem:[%s1434 + $0x18] sm:$0xf]
      %v1442 = vld [vmem:[%s1434 + $0x1c] sm:$0xf]
      %v1443 = vunpack.c.l.b16 %v1063
      %v1444 = vunpack.c.l.b16 %v1073
      %v1445 = vunpack.c.l.b16 %v1087
      %v1446 = vunpack.c.l.b16 %v1097
      %v1447 = vunpack.c.l.b16 %v1111
      %v1448 = vunpack.c.l.b16 %v1121
      %v1449 = vunpack.c.l.b16 %v1135
      %v1450 = vunpack.c.l.b16 %v1145
      %v1451 = vunpack.c.l.b16 %v1159
      %v1452 = vunpack.c.l.b16 %v1169
      %v1453 = vunpack.c.l.b16 %v1183
      %v1454 = vunpack.c.l.b16 %v1193
      %v1455 = vunpack.c.l.b16 %v1207
      %v1456 = vunpack.c.l.b16 %v1217
      %v1457 = vunpack.c.l.b16 %v1231
      %v1458 = vunpack.c.l.b16 %v1241
      %v1459 = vunpack.c.l.b16 %v1255
      %v1460 = vunpack.c.l.b16 %v1265
      %v1461 = vunpack.c.l.b16 %v1279
      %v1462 = vunpack.c.l.b16 %v1289
      %v1463 = vunpack.c.l.b16 %v1303
      %v1464 = vunpack.c.l.b16 %v1313
      %v1465 = vunpack.c.l.b16 %v1327
      %v1466 = vunpack.c.l.b16 %v1337
      %v1467 = vunpack.c.l.b16 %v1351
      %v1468 = vunpack.c.l.b16 %v1361
      %v1469 = vunpack.c.l.b16 %v1375
      %v1470 = vunpack.c.l.b16 %v1385
      %v1471 = vunpack.c.l.b16 %v1399
      %v1472 = vunpack.c.l.b16 %v1409
      %v1473 = vunpack.c.l.b16 %v1423
      %v1474 = vunpack.c.l.b16 %v1433
      %v1475 = vpack.c.b16 %v1444, %v1443
      %v1476 = vpack.c.b16 %v1446, %v1445
      %v1477 = vpack.c.b16 %v1448, %v1447
      %v1478 = vpack.c.b16 %v1450, %v1449
      %v1479 = vpack.c.b16 %v1452, %v1451
      %v1480 = vpack.c.b16 %v1454, %v1453
      %v1481 = vpack.c.b16 %v1456, %v1455
      %v1482 = vpack.c.b16 %v1458, %v1457
      %v1483 = vpack.c.b16 %v1460, %v1459
      %v1484 = vpack.c.b16 %v1462, %v1461
      %v1485 = vpack.c.b16 %v1464, %v1463
      %v1486 = vpack.c.b16 %v1466, %v1465
      %v1487 = vpack.c.b16 %v1468, %v1467
      %v1488 = vpack.c.b16 %v1470, %v1469
      %v1489 = vpack.c.b16 %v1472, %v1471
      %v1490 = vpack.c.b16 %v1474, %v1473
      %v1499 = vunpack.c.l.b16 %v1435
      %v1500 = vunpack.c.l.b16 %v1436
      %v1501 = vunpack.c.l.b16 %v1437
      %v1502 = vunpack.c.l.b16 %v1438
      %v1503 = vunpack.c.l.b16 %v1439
      %v1504 = vunpack.c.l.b16 %v1440
      %v1505 = vunpack.c.l.b16 %v1441
      %v1506 = vunpack.c.l.b16 %v1442
      %v1507 = vpack.c.b16 %v1500, %v1499
      %v1508 = vpack.c.b16 %v1502, %v1501
      %v1509 = vpack.c.b16 %v1504, %v1503
      %v1510 = vpack.c.b16 %v1506, %v1505
      %vm1515 = vcmask 523264
      %v1517 = vsel %vm1515, %v1475, 0
      %v1520 = vsel %vm1515, %v1476, 0
      %v1523 = vsel %vm1515, %v1477, 0
      %v1526 = vsel %vm1515, %v1478, 0
      %v1529 = vsel %vm1515, %v1479, 0
      %v1532 = vsel %vm1515, %v1480, 0
      %v1535 = vsel %vm1515, %v1481, 0
      %v1538 = vsel %vm1515, %v1482, 0
      %v1541 = vsel %vm1515, %v1483, 0
      %v1544 = vsel %vm1515, %v1484, 0
      %v1547 = vsel %vm1515, %v1485, 0
      %v1550 = vsel %vm1515, %v1486, 0
      %v1553 = vsel %vm1515, %v1487, 0
      %v1556 = vsel %vm1515, %v1488, 0
      %v1559 = vsel %vm1515, %v1489, 0
      %v1562 = vsel %vm1515, %v1490, 0
      %1564 = vmatprep.subr.bf16.mxu0 0
      %1565 = vmatpush1.bf16.msra.mxu0 %v1507
      %1566 = vmatprep.subr.bf16.mxu0 0
      %1567 = vmatpush1.bf16.msra.mxu0 %v1508
      %1568 = vmatprep.subr.bf16.mxu0 0
      %1569 = vmatpush1.bf16.msra.mxu0 %v1509
      %1570 = vmatprep.subr.bf16.mxu0 0
      %1571 = vmatpush1.bf16.msra.mxu0 %v1510
      %1572 = vmatprep.subr.bf16.mxu0 0
      %1573 = vmatpush1.bf16.msra.mxu0 0
      %1574 = vmatprep.subr.bf16.mxu0 0
      %1575 = vmatpush1.bf16.msra.mxu0 0
      %1576 = vmatprep.subr.bf16.mxu0 0
      %1577 = vmatpush1.bf16.msra.mxu0 0
      %1578 = vmatprep.subr.bf16.mxu0 0
      %1579 = vmatpush1.bf16.msra.mxu0 0
      %1580 = vmatprep.subr.bf16.mxu0 0
      %1581 = vmatpush1.bf16.msra.mxu0 0
      %1582 = vmatprep.subr.bf16.mxu0 0
      %1583 = vmatpush1.bf16.msra.mxu0 0
      %1584 = vmatprep.subr.bf16.mxu0 0
      %1585 = vmatpush1.bf16.msra.mxu0 0
      %1586 = vmatprep.subr.bf16.mxu0 0
      %1587 = vmatpush1.bf16.msra.mxu0 0
      %1588 = vmatprep.subr.bf16.mxu0 0
      %1589 = vmatpush1.bf16.msra.mxu0 0
      %1590 = vmatprep.subr.bf16.mxu0 0
      %1591 = vmatpush1.bf16.msra.mxu0 0
      %1592 = vmatprep.subr.bf16.mxu0 0
      %1593 = vmatpush1.bf16.msra.mxu0 0
      %1594 = vmatprep.subr.bf16.mxu0 0
      %1595 = vmatpush1.bf16.msra.mxu0 0
      %1596 = vmatprep.mubr.bf16.mxu0 0
      %1597 = vmatmul.mubr.bf16.gmra.mrb[0].mxu0 %v1517
      %v1598 = vpop.f32.mrb[0].mxu0
      %v1599 = vadd.f32 0.0, %v1598
      %v1600 = vpop.f32.mrb[0].mxu0
      %v1601 = vpop.f32.mrb[0].mxu0
      %v1602 = vadd.f32 0.0, %v1601
      %v1603 = vpop.f32.mrb[0].mxu0
      %1604 = vmatprep.mubr.bf16.mxu0 0
      %1605 = vmatmul.mubr.bf16.gmra.mrb[0].mxu0 %v1520
      %v1606 = vpop.f32.mrb[0].mxu0
      %v1607 = vadd.f32 0.0, %v1606
      %v1608 = vpop.f32.mrb[0].mxu0
      %v1609 = vpop.f32.mrb[0].mxu0
      %v1610 = vadd.f32 0.0, %v1609
      %v1611 = vpop.f32.mrb[0].mxu0
      %1612 = vmatprep.mubr.bf16.mxu0 0
      %1613 = vmatmul.mubr.bf16.gmra.mrb[0].mxu0 %v1523
      %v1614 = vpop.f32.mrb[0].mxu0
      %v1615 = vadd.f32 0.0, %v1614
      %v1616 = vpop.f32.mrb[0].mxu0
      %v1617 = vpop.f32.mrb[0].mxu0
      %v1618 = vadd.f32 0.0, %v1617
      %v1619 = vpop.f32.mrb[0].mxu0
      %1620 = vmatprep.mubr.bf16.mxu0 0
      %1621 = vmatmul.mubr.bf16.gmra.mrb[0].mxu0 %v1526
      %v1622 = vpop.f32.mrb[0].mxu0
      %v1623 = vadd.f32 0.0, %v1622
      %v1624 = vpop.f32.mrb[0].mxu0
      %v1625 = vpop.f32.mrb[0].mxu0
      %v1626 = vadd.f32 0.0, %v1625
      %v1627 = vpop.f32.mrb[0].mxu0
      %1628 = vmatprep.mubr.bf16.mxu0 0
      %1629 = vmatmul.mubr.bf16.gmra.mrb[0].mxu0 %v1529
      %v1630 = vpop.f32.mrb[0].mxu0
      %v1631 = vadd.f32 0.0, %v1630
      %v1632 = vpop.f32.mrb[0].mxu0
      %v1633 = vpop.f32.mrb[0].mxu0
      %v1634 = vadd.f32 0.0, %v1633
      %v1635 = vpop.f32.mrb[0].mxu0
      %1636 = vmatprep.mubr.bf16.mxu0 0
      %1637 = vmatmul.mubr.bf16.gmra.mrb[0].mxu0 %v1532
      %v1638 = vpop.f32.mrb[0].mxu0
      %v1639 = vadd.f32 0.0, %v1638
      %v1640 = vpop.f32.mrb[0].mxu0
      %v1641 = vpop.f32.mrb[0].mxu0
      %v1642 = vadd.f32 0.0, %v1641
      %v1643 = vpop.f32.mrb[0].mxu0
      %1644 = vmatprep.mubr.bf16.mxu0 0
      %1645 = vmatmul.mubr.bf16.gmra.mrb[0].mxu0 %v1535
      %v1646 = vpop.f32.mrb[0].mxu0
      %v1647 = vadd.f32 0.0, %v1646
      %v1648 = vpop.f32.mrb[0].mxu0
      %v1649 = vpop.f32.mrb[0].mxu0
      %v1650 = vadd.f32 0.0, %v1649
      %v1651 = vpop.f32.mrb[0].mxu0
      %1652 = vmatprep.mubr.bf16.mxu0 0
      %1653 = vmatmul.mubr.bf16.gmra.mrb[0].mxu0 %v1538
      %v1654 = vpop.f32.mrb[0].mxu0
      %v1655 = vadd.f32 0.0, %v1654
      %v1656 = vpop.f32.mrb[0].mxu0
      %v1657 = vpop.f32.mrb[0].mxu0
      %v1658 = vadd.f32 0.0, %v1657
      %v1659 = vpop.f32.mrb[0].mxu0
      %1660 = vmatprep.mubr.bf16.mxu0 0
      %1661 = vmatmul.mubr.bf16.gmra.mrb[0].mxu0 %v1541
      %v1662 = vpop.f32.mrb[0].mxu0
      %v1663 = vadd.f32 0.0, %v1662
      %v1664 = vpop.f32.mrb[0].mxu0
      %v1665 = vpop.f32.mrb[0].mxu0
      %v1666 = vadd.f32 0.0, %v1665
      %v1667 = vpop.f32.mrb[0].mxu0
      %1668 = vmatprep.mubr.bf16.mxu0 0
      %1669 = vmatmul.mubr.bf16.gmra.mrb[0].mxu0 %v1544
      %v1670 = vpop.f32.mrb[0].mxu0
      %v1671 = vadd.f32 0.0, %v1670
      %v1672 = vpop.f32.mrb[0].mxu0
      %v1673 = vpop.f32.mrb[0].mxu0
      %v1674 = vadd.f32 0.0, %v1673
      %v1675 = vpop.f32.mrb[0].mxu0
      %1676 = vmatprep.mubr.bf16.mxu0 0
      %1677 = vmatmul.mubr.bf16.gmra.mrb[0].mxu0 %v1547
      %v1678 = vpop.f32.mrb[0].mxu0
      %v1679 = vadd.f32 0.0, %v1678
      %v1680 = vpop.f32.mrb[0].mxu0
      %v1681 = vpop.f32.mrb[0].mxu0
      %v1682 = vadd.f32 0.0, %v1681
      %v1683 = vpop.f32.mrb[0].mxu0
      %1684 = vmatprep.mubr.bf16.mxu0 0
      %1685 = vmatmul.mubr.bf16.gmra.mrb[0].mxu0 %v1550
      %v1686 = vpop.f32.mrb[0].mxu0
      %v1687 = vadd.f32 0.0, %v1686
      %v1688 = vpop.f32.mrb[0].mxu0
      %v1689 = vpop.f32.mrb[0].mxu0
      %v1690 = vadd.f32 0.0, %v1689
      %v1691 = vpop.f32.mrb[0].mxu0
      %1692 = vmatprep.mubr.bf16.mxu0 0
      %1693 = vmatmul.mubr.bf16.gmra.mrb[0].mxu0 %v1553
      %v1694 = vpop.f32.mrb[0].mxu0
      %v1695 = vadd.f32 0.0, %v1694
      %v1696 = vpop.f32.mrb[0].mxu0
      %v1697 = vpop.f32.mrb[0].mxu0
      %v1698 = vadd.f32 0.0, %v1697
      %v1699 = vpop.f32.mrb[0].mxu0
      %1700 = vmatprep.mubr.bf16.mxu0 0
      %1701 = vmatmul.mubr.bf16.gmra.mrb[0].mxu0 %v1556
      %v1702 = vpop.f32.mrb[0].mxu0
      %v1703 = vadd.f32 0.0, %v1702
      %v1704 = vpop.f32.mrb[0].mxu0
      %v1705 = vpop.f32.mrb[0].mxu0
      %v1706 = vadd.f32 0.0, %v1705
      %v1707 = vpop.f32.mrb[0].mxu0
      %1708 = vmatprep.mubr.bf16.mxu0 0
      %1709 = vmatmul.mubr.bf16.gmra.mrb[0].mxu0 %v1559
      %v1710 = vpop.f32.mrb[0].mxu0
      %v1711 = vadd.f32 0.0, %v1710
      %v1712 = vpop.f32.mrb[0].mxu0
      %v1713 = vpop.f32.mrb[0].mxu0
      %v1714 = vadd.f32 0.0, %v1713
      %v1715 = vpop.f32.mrb[0].mxu0
      %1716 = vmatprep.mubr.bf16.mxu0 0
      %1717 = vmatmul.mubr.bf16.gmra.mrb[0].mxu0 %v1562
      %v1718 = vpop.f32.mrb[0].mxu0
      %v1719 = vadd.f32 0.0, %v1718
      %v1720 = vpop.f32.mrb[0].mxu0
      %v1721 = vpop.f32.mrb[0].mxu0
      %v1722 = vadd.f32 0.0, %v1721
      %v1723 = vpop.f32.mrb[0].mxu0
      %1724 = vdwg.mxu0
      %v1757 = vunpack.c.l.b16 %v991
      %v1758 = vunpack.c.l.b16 %v992
      %v1759 = vunpack.c.l.b16 %v993
      %v1760 = vunpack.c.l.b16 %v994
      %v1761 = vunpack.c.l.b16 %v995
      %v1762 = vunpack.c.l.b16 %v996
      %v1763 = vunpack.c.l.b16 %v997
      %v1764 = vunpack.c.l.b16 %v998
      %v1765 = vunpack.c.l.b16 %v999
      %v1766 = vunpack.c.l.b16 %v1000
      %v1767 = vunpack.c.l.b16 %v1001
      %v1768 = vunpack.c.l.b16 %v1002
      %v1769 = vunpack.c.l.b16 %v1003
      %v1770 = vunpack.c.l.b16 %v1004
      %v1771 = vunpack.c.l.b16 %v1005
      %v1772 = vunpack.c.l.b16 %v1006
      %v1773 = vunpack.c.l.b16 %v1007
      %v1774 = vunpack.c.l.b16 %v1008
      %v1775 = vunpack.c.l.b16 %v1009
      %v1776 = vunpack.c.l.b16 %v1010
      %v1777 = vunpack.c.l.b16 %v1011
      %v1778 = vunpack.c.l.b16 %v1012
      %v1779 = vunpack.c.l.b16 %v1013
      %v1780 = vunpack.c.l.b16 %v1014
      %v1781 = vunpack.c.l.b16 %v1015
      %v1782 = vunpack.c.l.b16 %v1016
      %v1783 = vunpack.c.l.b16 %v1017
      %v1784 = vunpack.c.l.b16 %v1018
      %v1785 = vunpack.c.l.b16 %v1019
      %v1786 = vunpack.c.l.b16 %v1020
      %v1787 = vunpack.c.l.b16 %v1021
      %v1788 = vunpack.c.l.b16 %v1022
      %v1789 = vpack.c.b16 %v1758, %v1757
      %v1790 = vpack.c.b16 %v1760, %v1759
      %v1791 = vpack.c.b16 %v1762, %v1761
      %v1792 = vpack.c.b16 %v1764, %v1763
      %v1793 = vpack.c.b16 %v1766, %v1765
      %v1794 = vpack.c.b16 %v1768, %v1767
      %v1795 = vpack.c.b16 %v1770, %v1769
      %v1796 = vpack.c.b16 %v1772, %v1771
      %v1797 = vpack.c.b16 %v1774, %v1773
      %v1798 = vpack.c.b16 %v1776, %v1775
      %v1799 = vpack.c.b16 %v1778, %v1777
      %v1800 = vpack.c.b16 %v1780, %v1779
      %v1801 = vpack.c.b16 %v1782, %v1781
      %v1802 = vpack.c.b16 %v1784, %v1783
      %v1803 = vpack.c.b16 %v1786, %v1785
      %v1804 = vpack.c.b16 %v1788, %v1787
      %v1813 = vunpack.c.l.b16 %v1023
      %v1814 = vunpack.c.l.b16 %v1024
      %v1815 = vunpack.c.l.b16 %v1025
      %v1816 = vunpack.c.l.b16 %v1026
      %v1817 = vunpack.c.l.b16 %v1027
      %v1818 = vunpack.c.l.b16 %v1028
      %v1819 = vunpack.c.l.b16 %v1029
      %v1820 = vunpack.c.l.b16 %v1030
      %v1821 = vpack.c.b16 %v1814, %v1813
      %v1822 = vpack.c.b16 %v1816, %v1815
      %v1823 = vpack.c.b16 %v1818, %v1817
      %v1824 = vpack.c.b16 %v1820, %v1819
      %v1830 = vsel %vm1515, %v1789, 0
      %v1833 = vsel %vm1515, %v1790, 0
      %v1836 = vsel %vm1515, %v1791, 0
      %v1839 = vsel %vm1515, %v1792, 0
      %v1842 = vsel %vm1515, %v1793, 0
      %v1845 = vsel %vm1515, %v1794, 0
      %v1848 = vsel %vm1515, %v1795, 0
      %v1851 = vsel %vm1515, %v1796, 0
      %v1854 = vsel %vm1515, %v1797, 0
      %v1857 = vsel %vm1515, %v1798, 0
      %v1860 = vsel %vm1515, %v1799, 0
      %v1863 = vsel %vm1515, %v1800, 0
      %v1866 = vsel %vm1515, %v1801, 0
      %v1869 = vsel %vm1515, %v1802, 0
      %v1872 = vsel %vm1515, %v1803, 0
      %v1875 = vsel %vm1515, %v1804, 0
      %1877 = vmatprep.subr.bf16.mxu0 0
      %1878 = vmatpush1.bf16.msra.mxu0 %v1821
      %1879 = vmatprep.subr.bf16.mxu0 0
      %1880 = vmatpush1.bf16.msra.mxu0 %v1822
      %1881 = vmatprep.subr.bf16.mxu0 0
      %1882 = vmatpush1.bf16.msra.mxu0 %v1823
      %1883 = vmatprep.subr.bf16.mxu0 0
      %1884 = vmatpush1.bf16.msra.mxu0 %v1824
      %1885 = vmatprep.subr.bf16.mxu0 0
      %1886 = vmatpush1.bf16.msra.mxu0 0
      %1887 = vmatprep.subr.bf16.mxu0 0
      %1888 = vmatpush1.bf16.msra.mxu0 0
      %1889 = vmatprep.subr.bf16.mxu0 0
      %1890 = vmatpush1.bf16.msra.mxu0 0
      %1891 = vmatprep.subr.bf16.mxu0 0
      %1892 = vmatpush1.bf16.msra.mxu0 0
      %1893 = vmatprep.subr.bf16.mxu0 0
      %1894 = vmatpush1.bf16.msra.mxu0 0
      %1895 = vmatprep.subr.bf16.mxu0 0
      %1896 = vmatpush1.bf16.msra.mxu0 0
      %1897 = vmatprep.subr.bf16.mxu0 0
      %1898 = vmatpush1.bf16.msra.mxu0 0
      %1899 = vmatprep.subr.bf16.mxu0 0
      %1900 = vmatpush1.bf16.msra.mxu0 0
      %1901 = vmatprep.subr.bf16.mxu0 0
      %1902 = vmatpush1.bf16.msra.mxu0 0
      %1903 = vmatprep.subr.bf16.mxu0 0
      %1904 = vmatpush1.bf16.msra.mxu0 0
      %1905 = vmatprep.subr.bf16.mxu0 0
      %1906 = vmatpush1.bf16.msra.mxu0 0
      %1907 = vmatprep.subr.bf16.mxu0 0
      %1908 = vmatpush1.bf16.msra.mxu0 0
      %1909 = vmatprep.mubr.bf16.mxu0 0
      %1910 = vmatmul.mubr.bf16.gmra.mrb[0].mxu0 %v1830
      %v1911 = vpop.f32.mrb[0].mxu0
      %v1912 = vadd.f32 %v1599, %v1911
      %v1913 = vpop.f32.mrb[0].mxu0
      %v1914 = vpop.f32.mrb[0].mxu0
      %v1915 = vadd.f32 %v1602, %v1914
      %v1916 = vpop.f32.mrb[0].mxu0
      %1917 = vmatprep.mubr.bf16.mxu0 0
      %1918 = vmatmul.mubr.bf16.gmra.mrb[0].mxu0 %v1833
      %v1919 = vpop.f32.mrb[0].mxu0
      %v1920 = vadd.f32 %v1607, %v1919
      %v1921 = vpop.f32.mrb[0].mxu0
      %v1922 = vpop.f32.mrb[0].mxu0
      %v1923 = vadd.f32 %v1610, %v1922
      %v1924 = vpop.f32.mrb[0].mxu0
      %1925 = vmatprep.mubr.bf16.mxu0 0
      %1926 = vmatmul.mubr.bf16.gmra.mrb[0].mxu0 %v1836
      %v1927 = vpop.f32.mrb[0].mxu0
      %v1928 = vadd.f32 %v1615, %v1927
      %v1929 = vpop.f32.mrb[0].mxu0
      %v1930 = vpop.f32.mrb[0].mxu0
      %v1931 = vadd.f32 %v1618, %v1930
      %v1932 = vpop.f32.mrb[0].mxu0
      %1933 = vmatprep.mubr.bf16.mxu0 0
      %1934 = vmatmul.mubr.bf16.gmra.mrb[0].mxu0 %v1839
      %v1935 = vpop.f32.mrb[0].mxu0
      %v1936 = vadd.f32 %v1623, %v1935
      %v1937 = vpop.f32.mrb[0].mxu0
      %v1938 = vpop.f32.mrb[0].mxu0
      %v1939 = vadd.f32 %v1626, %v1938
      %v1940 = vpop.f32.mrb[0].mxu0
      %1941 = vmatprep.mubr.bf16.mxu0 0
      %1942 = vmatmul.mubr.bf16.gmra.mrb[0].mxu0 %v1842
      %v1943 = vpop.f32.mrb[0].mxu0
      %v1944 = vadd.f32 %v1631, %v1943
      %v1945 = vpop.f32.mrb[0].mxu0
      %v1946 = vpop.f32.mrb[0].mxu0
      %v1947 = vadd.f32 %v1634, %v1946
      %v1948 = vpop.f32.mrb[0].mxu0
      %1949 = vmatprep.mubr.bf16.mxu0 0
      %1950 = vmatmul.mubr.bf16.gmra.mrb[0].mxu0 %v1845
      %v1951 = vpop.f32.mrb[0].mxu0
      %v1952 = vadd.f32 %v1639, %v1951
      %v1953 = vpop.f32.mrb[0].mxu0
      %v1954 = vpop.f32.mrb[0].mxu0
      %v1955 = vadd.f32 %v1642, %v1954
      %v1956 = vpop.f32.mrb[0].mxu0
      %1957 = vmatprep.mubr.bf16.mxu0 0
      %1958 = vmatmul.mubr.bf16.gmra.mrb[0].mxu0 %v1848
      %v1959 = vpop.f32.mrb[0].mxu0
      %v1960 = vadd.f32 %v1647, %v1959
      %v1961 = vpop.f32.mrb[0].mxu0
      %v1962 = vpop.f32.mrb[0].mxu0
      %v1963 = vadd.f32 %v1650, %v1962
      %v1964 = vpop.f32.mrb[0].mxu0
      %1965 = vmatprep.mubr.bf16.mxu0 0
      %1966 = vmatmul.mubr.bf16.gmra.mrb[0].mxu0 %v1851
      %v1967 = vpop.f32.mrb[0].mxu0
      %v1968 = vadd.f32 %v1655, %v1967
      %v1969 = vpop.f32.mrb[0].mxu0
      %v1970 = vpop.f32.mrb[0].mxu0
      %v1971 = vadd.f32 %v1658, %v1970
      %v1972 = vpop.f32.mrb[0].mxu0
      %1973 = vmatprep.mubr.bf16.mxu0 0
      %1974 = vmatmul.mubr.bf16.gmra.mrb[0].mxu0 %v1854
      %v1975 = vpop.f32.mrb[0].mxu0
      %v1976 = vadd.f32 %v1663, %v1975
      %v1977 = vpop.f32.mrb[0].mxu0
      %v1978 = vpop.f32.mrb[0].mxu0
      %v1979 = vadd.f32 %v1666, %v1978
      %v1980 = vpop.f32.mrb[0].mxu0
      %1981 = vmatprep.mubr.bf16.mxu0 0
      %1982 = vmatmul.mubr.bf16.gmra.mrb[0].mxu0 %v1857
      %v1983 = vpop.f32.mrb[0].mxu0
      %v1984 = vadd.f32 %v1671, %v1983
      %v1985 = vpop.f32.mrb[0].mxu0
      %v1986 = vpop.f32.mrb[0].mxu0
      %v1987 = vadd.f32 %v1674, %v1986
      %v1988 = vpop.f32.mrb[0].mxu0
      %1989 = vmatprep.mubr.bf16.mxu0 0
      %1990 = vmatmul.mubr.bf16.gmra.mrb[0].mxu0 %v1860
      %v1991 = vpop.f32.mrb[0].mxu0
      %v1992 = vadd.f32 %v1679, %v1991
      %v1993 = vpop.f32.mrb[0].mxu0
      %v1994 = vpop.f32.mrb[0].mxu0
      %v1995 = vadd.f32 %v1682, %v1994
      %v1996 = vpop.f32.mrb[0].mxu0
      %1997 = vmatprep.mubr.bf16.mxu0 0
      %1998 = vmatmul.mubr.bf16.gmra.mrb[0].mxu0 %v1863
      %v1999 = vpop.f32.mrb[0].mxu0
      %v2000 = vadd.f32 %v1687, %v1999
      %v2001 = vpop.f32.mrb[0].mxu0
      %v2002 = vpop.f32.mrb[0].mxu0
      %v2003 = vadd.f32 %v1690, %v2002
      %v2004 = vpop.f32.mrb[0].mxu0
      %2005 = vmatprep.mubr.bf16.mxu0 0
      %2006 = vmatmul.mubr.bf16.gmra.mrb[0].mxu0 %v1866
      %v2007 = vpop.f32.mrb[0].mxu0
      %v2008 = vadd.f32 %v1695, %v2007
      %v2009 = vpop.f32.mrb[0].mxu0
      %v2010 = vpop.f32.mrb[0].mxu0
      %v2011 = vadd.f32 %v1698, %v2010
      %v2012 = vpop.f32.mrb[0].mxu0
      %2013 = vmatprep.mubr.bf16.mxu0 0
      %2014 = vmatmul.mubr.bf16.gmra.mrb[0].mxu0 %v1869
      %v2015 = vpop.f32.mrb[0].mxu0
      %v2016 = vadd.f32 %v1703, %v2015
      %v2017 = vpop.f32.mrb[0].mxu0
      %v2018 = vpop.f32.mrb[0].mxu0
      %v2019 = vadd.f32 %v1706, %v2018
      %v2020 = vpop.f32.mrb[0].mxu0
      %2021 = vmatprep.mubr.bf16.mxu0 0
      %2022 = vmatmul.mubr.bf16.gmra.mrb[0].mxu0 %v1872
      %v2023 = vpop.f32.mrb[0].mxu0
      %v2024 = vadd.f32 %v1711, %v2023
      %v2025 = vpop.f32.mrb[0].mxu0
      %v2026 = vpop.f32.mrb[0].mxu0
      %v2027 = vadd.f32 %v1714, %v2026
      %v2028 = vpop.f32.mrb[0].mxu0
      %2029 = vmatprep.mubr.bf16.mxu0 0
      %2030 = vmatmul.mubr.bf16.gmra.mrb[0].mxu0 %v1875
      %v2031 = vpop.f32.mrb[0].mxu0
      %v2032 = vadd.f32 %v1719, %v2031
      %v2033 = vpop.f32.mrb[0].mxu0
      %v2034 = vpop.f32.mrb[0].mxu0
      %v2035 = vadd.f32 %v1722, %v2034
      %v2036 = vpop.f32.mrb[0].mxu0
      %2037 = vdwg.mxu0
      %v2038 = vld [vmem:[#allocation2] sm:$0xe]
      %v2039 = vld [vmem:[#allocation2 + $0xc] sm:$0xe]
      %v2040 = vld [vmem:[#allocation2 + $0x18] sm:$0xe]
      %v2041 = vld [vmem:[#allocation2 + $0x24] sm:$0xe]
      %v2042 = vld [vmem:[#allocation2 + $0x30] sm:$0xe]
      %v2043 = vld [vmem:[#allocation2 + $0x3c] sm:$0xe]
      %v2044 = vld [vmem:[#allocation2 + $0x48] sm:$0xe]
      %v2045 = vld [vmem:[#allocation2 + $0x54] sm:$0xe]
      %v2046 = vld [vmem:[#allocation2 + $0x60] sm:$0xe]
      %v2047 = vld [vmem:[#allocation2 + $0x6c] sm:$0xe]
      %v2048 = vld [vmem:[#allocation2 + $0x78] sm:$0xe]
      %v2049 = vld [vmem:[#allocation2 + $0x84] sm:$0xe]
      %v2050 = vld [vmem:[#allocation2 + $0x90] sm:$0xe]
      %v2051 = vld [vmem:[#allocation2 + $0x9c] sm:$0xe]
      %v2052 = vld [vmem:[#allocation2 + $0xa8] sm:$0xe]
      %v2053 = vld [vmem:[#allocation2 + $0xb4] sm:$0xe]
      %vm2086 = vcmask 1042432
      %vm2087 = vcmask 1046532
      %vm2088 = vmor %vm2086, %vm2087
      %v2089 = vrot.slane %v2038, 5
      %v2090 = vrot.slane %v2089, 4
      %v2091 = vrot.slane %v992, 5
      %v2092 = vsel %vm2088, %v2090, %v2091
      %v2093 = vrot.slane %v2091, 4
      %v2094 = vrot.slane %v1031, 5
      %v2095 = vsel %vm2088, %v2093, %v2094
      %v2096 = vrot.slane %v2039, 5
      %v2097 = vrot.slane %v2096, 4
      %v2098 = vrot.slane %v994, 5
      %v2099 = vsel %vm2088, %v2097, %v2098
      %v2100 = vrot.slane %v2098, 4
      %v2101 = vrot.slane %v1032, 5
      %v2102 = vsel %vm2088, %v2100, %v2101
      %v2103 = vrot.slane %v2040, 5
      %v2104 = vrot.slane %v2103, 4
      %v2105 = vrot.slane %v996, 5
      %v2106 = vsel %vm2088, %v2104, %v2105
      %v2107 = vrot.slane %v2105, 4
      %v2108 = vrot.slane %v1033, 5
      %v2109 = vsel %vm2088, %v2107, %v2108
      %v2110 = vrot.slane %v2041, 5
      %v2111 = vrot.slane %v2110, 4
      %v2112 = vrot.slane %v998, 5
      %v2113 = vsel %vm2088, %v2111, %v2112
      %v2114 = vrot.slane %v2112, 4
      %v2115 = vrot.slane %v1034, 5
      %v2116 = vsel %vm2088, %v2114, %v2115
      %v2117 = vrot.slane %v2042, 5
      %v2118 = vrot.slane %v2117, 4
      %v2119 = vrot.slane %v1000, 5
      %v2120 = vsel %vm2088, %v2118, %v2119
      %v2121 = vrot.slane %v2119, 4
      %v2122 = vrot.slane %v1035, 5
      %v2123 = vsel %vm2088, %v2121, %v2122
      %v2124 = vrot.slane %v2043, 5
      %v2125 = vrot.slane %v2124, 4
      %v2126 = vrot.slane %v1002, 5
      %v2127 = vsel %vm2088, %v2125, %v2126
      %v2128 = vrot.slane %v2126, 4
      %v2129 = vrot.slane %v1036, 5
      %v2130 = vsel %vm2088, %v2128, %v2129
      %v2131 = vrot.slane %v2044, 5
      %v2132 = vrot.slane %v2131, 4
      %v2133 = vrot.slane %v1004, 5
      %v2134 = vsel %vm2088, %v2132, %v2133
      %v2135 = vrot.slane %v2133, 4
      %v2136 = vrot.slane %v1037, 5
      %v2137 = vsel %vm2088, %v2135, %v2136
      %v2138 = vrot.slane %v2045, 5
      %v2139 = vrot.slane %v2138, 4
      %v2140 = vrot.slane %v1006, 5
      %v2141 = vsel %vm2088, %v2139, %v2140
      %v2142 = vrot.slane %v2140, 4
      %v2143 = vrot.slane %v1038, 5
      %v2144 = vsel %vm2088, %v2142, %v2143
      %v2145 = vrot.slane %v2046, 5
      %v2146 = vrot.slane %v2145, 4
      %v2147 = vrot.slane %v1008, 5
      %v2148 = vsel %vm2088, %v2146, %v2147
      %v2149 = vrot.slane %v2147, 4
      %v2150 = vrot.slane %v1039, 5
      %v2151 = vsel %vm2088, %v2149, %v2150
      %v2152 = vrot.slane %v2047, 5
      %v2153 = vrot.slane %v2152, 4
      %v2154 = vrot.slane %v1010, 5
      %v2155 = vsel %vm2088, %v2153, %v2154
      %v2156 = vrot.slane %v2154, 4
      %v2157 = vrot.slane %v1040, 5
      %v2158 = vsel %vm2088, %v2156, %v2157
      %v2159 = vrot.slane %v2048, 5
      %v2160 = vrot.slane %v2159, 4
      %v2161 = vrot.slane %v1012, 5
      %v2162 = vsel %vm2088, %v2160, %v2161
      %v2163 = vrot.slane %v2161, 4
      %v2164 = vrot.slane %v1041, 5
      %v2165 = vsel %vm2088, %v2163, %v2164
      %v2166 = vrot.slane %v2049, 5
      %v2167 = vrot.slane %v2166, 4
      %v2168 = vrot.slane %v1014, 5
      %v2169 = vsel %vm2088, %v2167, %v2168
      %v2170 = vrot.slane %v2168, 4
      %v2171 = vrot.slane %v1042, 5
      %v2172 = vsel %vm2088, %v2170, %v2171
      %v2173 = vrot.slane %v2050, 5
      %v2174 = vrot.slane %v2173, 4
      %v2175 = vrot.slane %v1016, 5
      %v2176 = vsel %vm2088, %v2174, %v2175
      %v2177 = vrot.slane %v2175, 4
      %v2178 = vrot.slane %v1043, 5
      %v2179 = vsel %vm2088, %v2177, %v2178
      %v2180 = vrot.slane %v2051, 5
      %v2181 = vrot.slane %v2180, 4
      %v2182 = vrot.slane %v1018, 5
      %v2183 = vsel %vm2088, %v2181, %v2182
      %v2184 = vrot.slane %v2182, 4
      %v2185 = vrot.slane %v1044, 5
      %v2186 = vsel %vm2088, %v2184, %v2185
      %v2187 = vrot.slane %v2052, 5
      %v2188 = vrot.slane %v2187, 4
      %v2189 = vrot.slane %v1020, 5
      %v2190 = vsel %vm2088, %v2188, %v2189
      %v2191 = vrot.slane %v2189, 4
      %v2192 = vrot.slane %v1045, 5
      %v2193 = vsel %vm2088, %v2191, %v2192
      %v2194 = vrot.slane %v2053, 5
      %v2195 = vrot.slane %v2194, 4
      %v2196 = vrot.slane %v1022, 5
      %v2197 = vsel %vm2088, %v2195, %v2196
      %v2198 = vrot.slane %v2196, 4
      %v2199 = vrot.slane %v1046, 5
      %v2200 = vsel %vm2088, %v2198, %v2199
      %s2201 = scalar_lea.vmem %s3, 64
      %v2202 = vld [vmem:[%s2201] sm:$0xf]
      %v2203 = vld [vmem:[%s2201 + $0x4] sm:$0xf]
      %v2204 = vld [vmem:[%s2201 + $0x8] sm:$0xf]
      %v2205 = vld [vmem:[%s2201 + $0xc] sm:$0xf]
      %v2206 = vld [vmem:[%s2201 + $0x10] sm:$0xf]
      %v2207 = vld [vmem:[%s2201 + $0x14] sm:$0xf]
      %v2208 = vld [vmem:[%s2201 + $0x18] sm:$0xf]
      %v2209 = vld [vmem:[%s2201 + $0x1c] sm:$0xf]
      %v2210 = vunpack.c.l.b16 %v2092
      %v2211 = vunpack.c.l.b16 %v2095
      %v2212 = vunpack.c.l.b16 %v2099
      %v2213 = vunpack.c.l.b16 %v2102
      %v2214 = vunpack.c.l.b16 %v2106
      %v2215 = vunpack.c.l.b16 %v2109
      %v2216 = vunpack.c.l.b16 %v2113
      %v2217 = vunpack.c.l.b16 %v2116
      %v2218 = vunpack.c.l.b16 %v2120
      %v2219 = vunpack.c.l.b16 %v2123
      %v2220 = vunpack.c.l.b16 %v2127
      %v2221 = vunpack.c.l.b16 %v2130
      %v2222 = vunpack.c.l.b16 %v2134
      %v2223 = vunpack.c.l.b16 %v2137
      %v2224 = vunpack.c.l.b16 %v2141
      %v2225 = vunpack.c.l.b16 %v2144
      %v2226 = vunpack.c.l.b16 %v2148
      %v2227 = vunpack.c.l.b16 %v2151
      %v2228 = vunpack.c.l.b16 %v2155
      %v2229 = vunpack.c.l.b16 %v2158
      %v2230 = vunpack.c.l.b16 %v2162
      %v2231 = vunpack.c.l.b16 %v2165
      %v2232 = vunpack.c.l.b16 %v2169
      %v2233 = vunpack.c.l.b16 %v2172
      %v2234 = vunpack.c.l.b16 %v2176
      %v2235 = vunpack.c.l.b16 %v2179
      %v2236 = vunpack.c.l.b16 %v2183
      %v2237 = vunpack.c.l.b16 %v2186
      %v2238 = vunpack.c.l.b16 %v2190
      %v2239 = vunpack.c.l.b16 %v2193
      %v2240 = vunpack.c.l.b16 %v2197
      %v2241 = vunpack.c.l.b16 %v2200
      %v2242 = vpack.c.b16 %v2211, %v2210
      %v2243 = vpack.c.b16 %v2213, %v2212
      %v2244 = vpack.c.b16 %v2215, %v2214
      %v2245 = vpack.c.b16 %v2217, %v2216
      %v2246 = vpack.c.b16 %v2219, %v2218
      %v2247 = vpack.c.b16 %v2221, %v2220
      %v2248 = vpack.c.b16 %v2223, %v2222
      %v2249 = vpack.c.b16 %v2225, %v2224
      %v2250 = vpack.c.b16 %v2227, %v2226
      %v2251 = vpack.c.b16 %v2229, %v2228
      %v2252 = vpack.c.b16 %v2231, %v2230
      %v2253 = vpack.c.b16 %v2233, %v2232
      %v2254 = vpack.c.b16 %v2235, %v2234
      %v2255 = vpack.c.b16 %v2237, %v2236
      %v2256 = vpack.c.b16 %v2239, %v2238
      %v2257 = vpack.c.b16 %v2241, %v2240
      %v2266 = vunpack.c.l.b16 %v2202
      %v2267 = vunpack.c.l.b16 %v2203
      %v2268 = vunpack.c.l.b16 %v2204
      %v2269 = vunpack.c.l.b16 %v2205
      %v2270 = vunpack.c.l.b16 %v2206
      %v2271 = vunpack.c.l.b16 %v2207
      %v2272 = vunpack.c.l.b16 %v2208
      %v2273 = vunpack.c.l.b16 %v2209
      %v2274 = vpack.c.b16 %v2267, %v2266
      %v2275 = vpack.c.b16 %v2269, %v2268
      %v2276 = vpack.c.b16 %v2271, %v2270
      %v2277 = vpack.c.b16 %v2273, %v2272
      %v2283 = vsel %vm1515, %v2242, 0
      %v2286 = vsel %vm1515, %v2243, 0
      %v2289 = vsel %vm1515, %v2244, 0
      %v2292 = vsel %vm1515, %v2245, 0
      %v2295 = vsel %vm1515, %v2246, 0
      %v2298 = vsel %vm1515, %v2247, 0
      %v2301 = vsel %vm1515, %v2248, 0
      %v2304 = vsel %vm1515, %v2249, 0
      %v2307 = vsel %vm1515, %v2250, 0
      %v2310 = vsel %vm1515, %v2251, 0
      %v2313 = vsel %vm1515, %v2252, 0
      %v2316 = vsel %vm1515, %v2253, 0
      %v2319 = vsel %vm1515, %v2254, 0
      %v2322 = vsel %vm1515, %v2255, 0
      %v2325 = vsel %vm1515, %v2256, 0
      %v2328 = vsel %vm1515, %v2257, 0
      %2330 = vmatprep.subr.bf16.mxu0 0
      %2331 = vmatpush1.bf16.msra.mxu0 %v2274
      %2332 = vmatprep.subr.bf16.mxu0 0
      %2333 = vmatpush1.bf16.msra.mxu0 %v2275
      %2334 = vmatprep.subr.bf16.mxu0 0
      %2335 = vmatpush1.bf16.msra.mxu0 %v2276
      %2336 = vmatprep.subr.bf16.mxu0 0
      %2337 = vmatpush1.bf16.msra.mxu0 %v2277
      %2338 = vmatprep.subr.bf16.mxu0 0
      %2339 = vmatpush1.bf16.msra.mxu0 0
      %2340 = vmatprep.subr.bf16.mxu0 0
      %2341 = vmatpush1.bf16.msra.mxu0 0
      %2342 = vmatprep.subr.bf16.mxu0 0
      %2343 = vmatpush1.bf16.msra.mxu0 0
      %2344 = vmatprep.subr.bf16.mxu0 0
      %2345 = vmatpush1.bf16.msra.mxu0 0
      %2346 = vmatprep.subr.bf16.mxu0 0
      %2347 = vmatpush1.bf16.msra.mxu0 0
      %2348 = vmatprep.subr.bf16.mxu0 0
      %2349 = vmatpush1.bf16.msra.mxu0 0
      %2350 = vmatprep.subr.bf16.mxu0 0
      %2351 = vmatpush1.bf16.msra.mxu0 0
      %2352 = vmatprep.subr.bf16.mxu0 0
      %2353 = vmatpush1.bf16.msra.mxu0 0
      %2354 = vmatprep.subr.bf16.mxu0 0
      %2355 = vmatpush1.bf16.msra.mxu0 0
      %2356 = vmatprep.subr.bf16.mxu0 0
      %2357 = vmatpush1.bf16.msra.mxu0 0
      %2358 = vmatprep.subr.bf16.mxu0 0
      %2359 = vmatpush1.bf16.msra.mxu0 0
      %2360 = vmatprep.subr.bf16.mxu0 0
      %2361 = vmatpush1.bf16.msra.mxu0 0
      %2362 = vmatprep.mubr.bf16.mxu0 0
      %2363 = vmatmul.mubr.bf16.gmra.mrb[0].mxu0 %v2283
      %v2364 = vpop.f32.mrb[0].mxu0
      %v2365 = vadd.f32 0.0, %v2364
      %v2366 = vpop.f32.mrb[0].mxu0
      %v2367 = vpop.f32.mrb[0].mxu0
      %v2368 = vadd.f32 0.0, %v2367
      %v2369 = vpop.f32.mrb[0].mxu0
      %2370 = vmatprep.mubr.bf16.mxu0 0
      %2371 = vmatmul.mubr.bf16.gmra.mrb[0].mxu0 %v2286
      %v2372 = vpop.f32.mrb[0].mxu0
      %v2373 = vadd.f32 0.0, %v2372
      %v2374 = vpop.f32.mrb[0].mxu0
      %v2375 = vpop.f32.mrb[0].mxu0
      %v2376 = vadd.f32 0.0, %v2375
      %v2377 = vpop.f32.mrb[0].mxu0
      %2378 = vmatprep.mubr.bf16.mxu0 0
      %2379 = vmatmul.mubr.bf16.gmra.mrb[0].mxu0 %v2289
      %v2380 = vpop.f32.mrb[0].mxu0
      %v2381 = vadd.f32 0.0, %v2380
      %v2382 = vpop.f32.mrb[0].mxu0
      %v2383 = vpop.f32.mrb[0].mxu0
      %v2384 = vadd.f32 0.0, %v2383
      %v2385 = vpop.f32.mrb[0].mxu0
      %2386 = vmatprep.mubr.bf16.mxu0 0
      %2387 = vmatmul.mubr.bf16.gmra.mrb[0].mxu0 %v2292
      %v2388 = vpop.f32.mrb[0].mxu0
      %v2389 = vadd.f32 0.0, %v2388
      %v2390 = vpop.f32.mrb[0].mxu0
      %v2391 = vpop.f32.mrb[0].mxu0
      %v2392 = vadd.f32 0.0, %v2391
      %v2393 = vpop.f32.mrb[0].mxu0
      %2394 = vmatprep.mubr.bf16.mxu0 0
      %2395 = vmatmul.mubr.bf16.gmra.mrb[0].mxu0 %v2295
      %v2396 = vpop.f32.mrb[0].mxu0
      %v2397 = vadd.f32 0.0, %v2396
      %v2398 = vpop.f32.mrb[0].mxu0
      %v2399 = vpop.f32.mrb[0].mxu0
      %v2400 = vadd.f32 0.0, %v2399
      %v2401 = vpop.f32.mrb[0].mxu0
      %2402 = vmatprep.mubr.bf16.mxu0 0
      %2403 = vmatmul.mubr.bf16.gmra.mrb[0].mxu0 %v2298
      %v2404 = vpop.f32.mrb[0].mxu0
      %v2405 = vadd.f32 0.0, %v2404
      %v2406 = vpop.f32.mrb[0].mxu0
      %v2407 = vpop.f32.mrb[0].mxu0
      %v2408 = vadd.f32 0.0, %v2407
      %v2409 = vpop.f32.mrb[0].mxu0
      %2410 = vmatprep.mubr.bf16.mxu0 0
      %2411 = vmatmul.mubr.bf16.gmra.mrb[0].mxu0 %v2301
      %v2412 = vpop.f32.mrb[0].mxu0
      %v2413 = vadd.f32 0.0, %v2412
      %v2414 = vpop.f32.mrb[0].mxu0
      %v2415 = vpop.f32.mrb[0].mxu0
      %v2416 = vadd.f32 0.0, %v2415
      %v2417 = vpop.f32.mrb[0].mxu0
      %2418 = vmatprep.mubr.bf16.mxu0 0
      %2419 = vmatmul.mubr.bf16.gmra.mrb[0].mxu0 %v2304
      %v2420 = vpop.f32.mrb[0].mxu0
      %v2421 = vadd.f32 0.0, %v2420
      %v2422 = vpop.f32.mrb[0].mxu0
      %v2423 = vpop.f32.mrb[0].mxu0
      %v2424 = vadd.f32 0.0, %v2423
      %v2425 = vpop.f32.mrb[0].mxu0
      %2426 = vmatprep.mubr.bf16.mxu0 0
      %2427 = vmatmul.mubr.bf16.gmra.mrb[0].mxu0 %v2307
      %v2428 = vpop.f32.mrb[0].mxu0
      %v2429 = vadd.f32 0.0, %v2428
      %v2430 = vpop.f32.mrb[0].mxu0
      %v2431 = vpop.f32.mrb[0].mxu0
      %v2432 = vadd.f32 0.0, %v2431
      %v2433 = vpop.f32.mrb[0].mxu0
      %2434 = vmatprep.mubr.bf16.mxu0 0
      %2435 = vmatmul.mubr.bf16.gmra.mrb[0].mxu0 %v2310
      %v2436 = vpop.f32.mrb[0].mxu0
      %v2437 = vadd.f32 0.0, %v2436
      %v2438 = vpop.f32.mrb[0].mxu0
      %v2439 = vpop.f32.mrb[0].mxu0
      %v2440 = vadd.f32 0.0, %v2439
      %v2441 = vpop.f32.mrb[0].mxu0
      %2442 = vmatprep.mubr.bf16.mxu0 0
      %2443 = vmatmul.mubr.bf16.gmra.mrb[0].mxu0 %v2313
      %v2444 = vpop.f32.mrb[0].mxu0
      %v2445 = vadd.f32 0.0, %v2444
      %v2446 = vpop.f32.mrb[0].mxu0
      %v2447 = vpop.f32.mrb[0].mxu0
      %v2448 = vadd.f32 0.0, %v2447
      %v2449 = vpop.f32.mrb[0].mxu0
      %2450 = vmatprep.mubr.bf16.mxu0 0
      %2451 = vmatmul.mubr.bf16.gmra.mrb[0].mxu0 %v2316
      %v2452 = vpop.f32.mrb[0].mxu0
      %v2453 = vadd.f32 0.0, %v2452
      %v2454 = vpop.f32.mrb[0].mxu0
      %v2455 = vpop.f32.mrb[0].mxu0
      %v2456 = vadd.f32 0.0, %v2455
      %v2457 = vpop.f32.mrb[0].mxu0
      %2458 = vmatprep.mubr.bf16.mxu0 0
      %2459 = vmatmul.mubr.bf16.gmra.mrb[0].mxu0 %v2319
      %v2460 = vpop.f32.mrb[0].mxu0
      %v2461 = vadd.f32 0.0, %v2460
      %v2462 = vpop.f32.mrb[0].mxu0
      %v2463 = vpop.f32.mrb[0].mxu0
      %v2464 = vadd.f32 0.0, %v2463
      %v2465 = vpop.f32.mrb[0].mxu0
      %2466 = vmatprep.mubr.bf16.mxu0 0
      %2467 = vmatmul.mubr.bf16.gmra.mrb[0].mxu0 %v2322
      %v2468 = vpop.f32.mrb[0].mxu0
      %v2469 = vadd.f32 0.0, %v2468
      %v2470 = vpop.f32.mrb[0].mxu0
      %v2471 = vpop.f32.mrb[0].mxu0
      %v2472 = vadd.f32 0.0, %v2471
      %v2473 = vpop.f32.mrb[0].mxu0
      %2474 = vmatprep.mubr.bf16.mxu0 0
      %2475 = vmatmul.mubr.bf16.gmra.mrb[0].mxu0 %v2325
      %v2476 = vpop.f32.mrb[0].mxu0
      %v2477 = vadd.f32 0.0, %v2476
      %v2478 = vpop.f32.mrb[0].mxu0
      %v2479 = vpop.f32.mrb[0].mxu0
      %v2480 = vadd.f32 0.0, %v2479
      %v2481 = vpop.f32.mrb[0].mxu0
      %2482 = vmatprep.mubr.bf16.mxu0 0
      %2483 = vmatmul.mubr.bf16.gmra.mrb[0].mxu0 %v2328
      %v2484 = vpop.f32.mrb[0].mxu0
      %v2485 = vadd.f32 0.0, %v2484
      %v2486 = vpop.f32.mrb[0].mxu0
      %v2487 = vpop.f32.mrb[0].mxu0
      %v2488 = vadd.f32 0.0, %v2487
      %v2489 = vpop.f32.mrb[0].mxu0
      %2490 = vdwg.mxu0
      %v2491 = vadd.f32 %v1912, %v2365
      %v2492 = vadd.f32 %v1915, %v2368
      %v2493 = vadd.f32 %v1920, %v2373
      %v2494 = vadd.f32 %v1923, %v2376
      %v2495 = vadd.f32 %v1928, %v2381
      %v2496 = vadd.f32 %v1931, %v2384
      %v2497 = vadd.f32 %v1936, %v2389
      %v2498 = vadd.f32 %v1939, %v2392
      %v2499 = vadd.f32 %v1944, %v2397
      %v2500 = vadd.f32 %v1947, %v2400
      %v2501 = vadd.f32 %v1952, %v2405
      %v2502 = vadd.f32 %v1955, %v2408
      %v2503 = vadd.f32 %v1960, %v2413
      %v2504 = vadd.f32 %v1963, %v2416
      %v2505 = vadd.f32 %v1968, %v2421
      %v2506 = vadd.f32 %v1971, %v2424
      %v2507 = vadd.f32 %v1976, %v2429
      %v2508 = vadd.f32 %v1979, %v2432
      %v2509 = vadd.f32 %v1984, %v2437
      %v2510 = vadd.f32 %v1987, %v2440
      %v2511 = vadd.f32 %v1992, %v2445
      %v2512 = vadd.f32 %v1995, %v2448
      %v2513 = vadd.f32 %v2000, %v2453
      %v2514 = vadd.f32 %v2003, %v2456
      %v2515 = vadd.f32 %v2008, %v2461
      %v2516 = vadd.f32 %v2011, %v2464
      %v2517 = vadd.f32 %v2016, %v2469
      %v2518 = vadd.f32 %v2019, %v2472
      %v2519 = vadd.f32 %v2024, %v2477
      %v2520 = vadd.f32 %v2027, %v2480
      %v2521 = vadd.f32 %v2032, %v2485
      %v2522 = vadd.f32 %v2035, %v2488
      %v2523 = vld [vmem:[%s805] sm:$0xf]
      %v2524 = vld [vmem:[%s805 + $0x4] sm:$0xf]
      %v2525 = vld [vmem:[%s805 + $0xc] sm:$0xf]
      %v2526 = vld [vmem:[%s805 + $0x10] sm:$0xf]
      %v2527 = vld [vmem:[%s805 + $0x18] sm:$0xf]
      %v2528 = vld [vmem:[%s805 + $0x1c] sm:$0xf]
      %v2529 = vld [vmem:[%s805 + $0x24] sm:$0xf]
      %v2530 = vld [vmem:[%s805 + $0x28] sm:$0xf]
      %v2531 = vld [vmem:[%s805 + $0x30] sm:$0xf]
      %v2532 = vld [vmem:[%s805 + $0x34] sm:$0xf]
      %v2533 = vld [vmem:[%s805 + $0x3c] sm:$0xf]
      %v2534 = vld [vmem:[%s805 + $0x40] sm:$0xf]
      %v2535 = vld [vmem:[%s805 + $0x48] sm:$0xf]
      %v2536 = vld [vmem:[%s805 + $0x4c] sm:$0xf]
      %v2537 = vld [vmem:[%s805 + $0x54] sm:$0xf]
      %v2538 = vld [vmem:[%s805 + $0x58] sm:$0xf]
      %v2539 = vld [vmem:[%s805 + $0x60] sm:$0xf]
      %v2540 = vld [vmem:[%s805 + $0x64] sm:$0xf]
      %v2541 = vld [vmem:[%s805 + $0x6c] sm:$0xf]
      %v2542 = vld [vmem:[%s805 + $0x70] sm:$0xf]
      %v2543 = vld [vmem:[%s805 + $0x78] sm:$0xf]
      %v2544 = vld [vmem:[%s805 + $0x7c] sm:$0xf]
      %v2545 = vld [vmem:[%s805 + $0x84] sm:$0xf]
      %v2546 = vld [vmem:[%s805 + $0x88] sm:$0xf]
      %v2547 = vld [vmem:[%s805 + $0x90] sm:$0xf]
      %v2548 = vld [vmem:[%s805 + $0x94] sm:$0xf]
      %v2549 = vld [vmem:[%s805 + $0x9c] sm:$0xf]
      %v2550 = vld [vmem:[%s805 + $0xa0] sm:$0xf]
      %v2551 = vld [vmem:[%s805 + $0xa8] sm:$0xf]
      %v2552 = vld [vmem:[%s805 + $0xac] sm:$0xf]
      %v2553 = vld [vmem:[%s805 + $0xb4] sm:$0xf]
      %v2554 = vld [vmem:[%s805 + $0xb8] sm:$0xf]
      %s2555 = scalar_lea.vmem %s3, 96
      %v2556 = vld [vmem:[%s2555] sm:$0xf]
      %v2557 = vld [vmem:[%s2555 + $0x4] sm:$0xf]
      %v2558 = vld [vmem:[%s2555 + $0x8] sm:$0xf]
      %v2559 = vld [vmem:[%s2555 + $0xc] sm:$0xf]
      %v2560 = vld [vmem:[%s2555 + $0x10] sm:$0xf]
      %v2561 = vld [vmem:[%s2555 + $0x14] sm:$0xf]
      %v2562 = vld [vmem:[%s2555 + $0x18] sm:$0xf]
      %v2563 = vld [vmem:[%s2555 + $0x1c] sm:$0xf]
      %v2596 = vunpack.c.l.b16 %v2523
      %v2597 = vunpack.c.l.b16 %v2524
      %v2598 = vunpack.c.l.b16 %v2525
      %v2599 = vunpack.c.l.b16 %v2526
      %v2600 = vunpack.c.l.b16 %v2527
      %v2601 = vunpack.c.l.b16 %v2528
      %v2602 = vunpack.c.l.b16 %v2529
      %v2603 = vunpack.c.l.b16 %v2530
      %v2604 = vunpack.c.l.b16 %v2531
      %v2605 = vunpack.c.l.b16 %v2532
      %v2606 = vunpack.c.l.b16 %v2533
      %v2607 = vunpack.c.l.b16 %v2534
      %v2608 = vunpack.c.l.b16 %v2535
      %v2609 = vunpack.c.l.b16 %v2536
      %v2610 = vunpack.c.l.b16 %v2537
      %v2611 = vunpack.c.l.b16 %v2538
      %v2612 = vunpack.c.l.b16 %v2539
      %v2613 = vunpack.c.l.b16 %v2540
      %v2614 = vunpack.c.l.b16 %v2541
      %v2615 = vunpack.c.l.b16 %v2542
      %v2616 = vunpack.c.l.b16 %v2543
      %v2617 = vunpack.c.l.b16 %v2544
      %v2618 = vunpack.c.l.b16 %v2545
      %v2619 = vunpack.c.l.b16 %v2546
      %v2620 = vunpack.c.l.b16 %v2547
      %v2621 = vunpack.c.l.b16 %v2548
      %v2622 = vunpack.c.l.b16 %v2549
      %v2623 = vunpack.c.l.b16 %v2550
      %v2624 = vunpack.c.l.b16 %v2551
      %v2625 = vunpack.c.l.b16 %v2552
      %v2626 = vunpack.c.l.b16 %v2553
      %v2627 = vunpack.c.l.b16 %v2554
      %v2628 = vpack.c.b16 %v2597, %v2596
      %v2629 = vpack.c.b16 %v2599, %v2598
      %v2630 = vpack.c.b16 %v2601, %v2600
      %v2631 = vpack.c.b16 %v2603, %v2602
      %v2632 = vpack.c.b16 %v2605, %v2604
      %v2633 = vpack.c.b16 %v2607, %v2606
      %v2634 = vpack.c.b16 %v2609, %v2608
      %v2635 = vpack.c.b16 %v2611, %v2610
      %v2636 = vpack.c.b16 %v2613, %v2612
      %v2637 = vpack.c.b16 %v2615, %v2614
      %v2638 = vpack.c.b16 %v2617, %v2616
      %v2639 = vpack.c.b16 %v2619, %v2618
      %v2640 = vpack.c.b16 %v2621, %v2620
      %v2641 = vpack.c.b16 %v2623, %v2622
      %v2642 = vpack.c.b16 %v2625, %v2624
      %v2643 = vpack.c.b16 %v2627, %v2626
      %v2652 = vunpack.c.l.b16 %v2556
      %v2653 = vunpack.c.l.b16 %v2557
      %v2654 = vunpack.c.l.b16 %v2558
      %v2655 = vunpack.c.l.b16 %v2559
      %v2656 = vunpack.c.l.b16 %v2560
      %v2657 = vunpack.c.l.b16 %v2561
      %v2658 = vunpack.c.l.b16 %v2562
      %v2659 = vunpack.c.l.b16 %v2563
      %v2660 = vpack.c.b16 %v2653, %v2652
      %v2661 = vpack.c.b16 %v2655, %v2654
      %v2662 = vpack.c.b16 %v2657, %v2656
      %v2663 = vpack.c.b16 %v2659, %v2658
      %v2669 = vsel %vm1515, %v2628, 0
      %v2672 = vsel %vm1515, %v2629, 0
      %v2675 = vsel %vm1515, %v2630, 0
      %v2678 = vsel %vm1515, %v2631, 0
      %v2681 = vsel %vm1515, %v2632, 0
      %v2684 = vsel %vm1515, %v2633, 0
      %v2687 = vsel %vm1515, %v2634, 0
      %v2690 = vsel %vm1515, %v2635, 0
      %v2693 = vsel %vm1515, %v2636, 0
      %v2696 = vsel %vm1515, %v2637, 0
      %v2699 = vsel %vm1515, %v2638, 0
      %v2702 = vsel %vm1515, %v2639, 0
      %v2705 = vsel %vm1515, %v2640, 0
      %v2708 = vsel %vm1515, %v2641, 0
      %v2711 = vsel %vm1515, %v2642, 0
      %v2714 = vsel %vm1515, %v2643, 0
      %2716 = vmatprep.subr.bf16.mxu0 0
      %2717 = vmatpush1.bf16.msra.mxu0 %v2660
      %2718 = vmatprep.subr.bf16.mxu0 0
      %2719 = vmatpush1.bf16.msra.mxu0 %v2661
      %2720 = vmatprep.subr.bf16.mxu0 0
      %2721 = vmatpush1.bf16.msra.mxu0 %v2662
      %2722 = vmatprep.subr.bf16.mxu0 0
      %2723 = vmatpush1.bf16.msra.mxu0 %v2663
      %2724 = vmatprep.subr.bf16.mxu0 0
      %2725 = vmatpush1.bf16.msra.mxu0 0
      %2726 = vmatprep.subr.bf16.mxu0 0
      %2727 = vmatpush1.bf16.msra.mxu0 0
      %2728 = vmatprep.subr.bf16.mxu0 0
      %2729 = vmatpush1.bf16.msra.mxu0 0
      %2730 = vmatprep.subr.bf16.mxu0 0
      %2731 = vmatpush1.bf16.msra.mxu0 0
      %2732 = vmatprep.subr.bf16.mxu0 0
      %2733 = vmatpush1.bf16.msra.mxu0 0
      %2734 = vmatprep.subr.bf16.mxu0 0
      %2735 = vmatpush1.bf16.msra.mxu0 0
      %2736 = vmatprep.subr.bf16.mxu0 0
      %2737 = vmatpush1.bf16.msra.mxu0 0
      %2738 = vmatprep.subr.bf16.mxu0 0
      %2739 = vmatpush1.bf16.msra.mxu0 0
      %2740 = vmatprep.subr.bf16.mxu0 0
      %2741 = vmatpush1.bf16.msra.mxu0 0
      %2742 = vmatprep.subr.bf16.mxu0 0
      %2743 = vmatpush1.bf16.msra.mxu0 0
      %2744 = vmatprep.subr.bf16.mxu0 0
      %2745 = vmatpush1.bf16.msra.mxu0 0
      %2746 = vmatprep.subr.bf16.mxu0 0
      %2747 = vmatpush1.bf16.msra.mxu0 0
      %2748 = vmatprep.mubr.bf16.mxu0 0
      %2749 = vmatmul.mubr.bf16.gmra.mrb[0].mxu0 %v2669
      %v2750 = vpop.f32.mrb[0].mxu0
      %v2751 = vadd.f32 0.0, %v2750
      %v2752 = vpop.f32.mrb[0].mxu0
      %v2753 = vpop.f32.mrb[0].mxu0
      %v2754 = vadd.f32 0.0, %v2753
      %v2755 = vpop.f32.mrb[0].mxu0
      %2756 = vmatprep.mubr.bf16.mxu0 0
      %2757 = vmatmul.mubr.bf16.gmra.mrb[0].mxu0 %v2672
      %v2758 = vpop.f32.mrb[0].mxu0
      %v2759 = vadd.f32 0.0, %v2758
      %v2760 = vpop.f32.mrb[0].mxu0
      %v2761 = vpop.f32.mrb[0].mxu0
      %v2762 = vadd.f32 0.0, %v2761
      %v2763 = vpop.f32.mrb[0].mxu0
      %2764 = vmatprep.mubr.bf16.mxu0 0
      %2765 = vmatmul.mubr.bf16.gmra.mrb[0].mxu0 %v2675
      %v2766 = vpop.f32.mrb[0].mxu0
      %v2767 = vadd.f32 0.0, %v2766
      %v2768 = vpop.f32.mrb[0].mxu0
      %v2769 = vpop.f32.mrb[0].mxu0
      %v2770 = vadd.f32 0.0, %v2769
      %v2771 = vpop.f32.mrb[0].mxu0
      %2772 = vmatprep.mubr.bf16.mxu0 0
      %2773 = vmatmul.mubr.bf16.gmra.mrb[0].mxu0 %v2678
      %v2774 = vpop.f32.mrb[0].mxu0
      %v2775 = vadd.f32 0.0, %v2774
      %v2776 = vpop.f32.mrb[0].mxu0
      %v2777 = vpop.f32.mrb[0].mxu0
      %v2778 = vadd.f32 0.0, %v2777
      %v2779 = vpop.f32.mrb[0].mxu0
      %2780 = vmatprep.mubr.bf16.mxu0 0
      %2781 = vmatmul.mubr.bf16.gmra.mrb[0].mxu0 %v2681
      %v2782 = vpop.f32.mrb[0].mxu0
      %v2783 = vadd.f32 0.0, %v2782
      %v2784 = vpop.f32.mrb[0].mxu0
      %v2785 = vpop.f32.mrb[0].mxu0
      %v2786 = vadd.f32 0.0, %v2785
      %v2787 = vpop.f32.mrb[0].mxu0
      %2788 = vmatprep.mubr.bf16.mxu0 0
      %2789 = vmatmul.mubr.bf16.gmra.mrb[0].mxu0 %v2684
      %v2790 = vpop.f32.mrb[0].mxu0
      %v2791 = vadd.f32 0.0, %v2790
      %v2792 = vpop.f32.mrb[0].mxu0
      %v2793 = vpop.f32.mrb[0].mxu0
      %v2794 = vadd.f32 0.0, %v2793
      %v2795 = vpop.f32.mrb[0].mxu0
      %2796 = vmatprep.mubr.bf16.mxu0 0
      %2797 = vmatmul.mubr.bf16.gmra.mrb[0].mxu0 %v2687
      %v2798 = vpop.f32.mrb[0].mxu0
      %v2799 = vadd.f32 0.0, %v2798
      %v2800 = vpop.f32.mrb[0].mxu0
      %v2801 = vpop.f32.mrb[0].mxu0
      %v2802 = vadd.f32 0.0, %v2801
      %v2803 = vpop.f32.mrb[0].mxu0
      %2804 = vmatprep.mubr.bf16.mxu0 0
      %2805 = vmatmul.mubr.bf16.gmra.mrb[0].mxu0 %v2690
      %v2806 = vpop.f32.mrb[0].mxu0
      %v2807 = vadd.f32 0.0, %v2806
      %v2808 = vpop.f32.mrb[0].mxu0
      %v2809 = vpop.f32.mrb[0].mxu0
      %v2810 = vadd.f32 0.0, %v2809
      %v2811 = vpop.f32.mrb[0].mxu0
      %2812 = vmatprep.mubr.bf16.mxu0 0
      %2813 = vmatmul.mubr.bf16.gmra.mrb[0].mxu0 %v2693
      %v2814 = vpop.f32.mrb[0].mxu0
      %v2815 = vadd.f32 0.0, %v2814
      %v2816 = vpop.f32.mrb[0].mxu0
      %v2817 = vpop.f32.mrb[0].mxu0
      %v2818 = vadd.f32 0.0, %v2817
      %v2819 = vpop.f32.mrb[0].mxu0
      %2820 = vmatprep.mubr.bf16.mxu0 0
      %2821 = vmatmul.mubr.bf16.gmra.mrb[0].mxu0 %v2696
      %v2822 = vpop.f32.mrb[0].mxu0
      %v2823 = vadd.f32 0.0, %v2822
      %v2824 = vpop.f32.mrb[0].mxu0
      %v2825 = vpop.f32.mrb[0].mxu0
      %v2826 = vadd.f32 0.0, %v2825
      %v2827 = vpop.f32.mrb[0].mxu0
      %2828 = vmatprep.mubr.bf16.mxu0 0
      %2829 = vmatmul.mubr.bf16.gmra.mrb[0].mxu0 %v2699
      %v2830 = vpop.f32.mrb[0].mxu0
      %v2831 = vadd.f32 0.0, %v2830
      %v2832 = vpop.f32.mrb[0].mxu0
      %v2833 = vpop.f32.mrb[0].mxu0
      %v2834 = vadd.f32 0.0, %v2833
      %v2835 = vpop.f32.mrb[0].mxu0
      %2836 = vmatprep.mubr.bf16.mxu0 0
      %2837 = vmatmul.mubr.bf16.gmra.mrb[0].mxu0 %v2702
      %v2838 = vpop.f32.mrb[0].mxu0
      %v2839 = vadd.f32 0.0, %v2838
      %v2840 = vpop.f32.mrb[0].mxu0
      %v2841 = vpop.f32.mrb[0].mxu0
      %v2842 = vadd.f32 0.0, %v2841
      %v2843 = vpop.f32.mrb[0].mxu0
      %2844 = vmatprep.mubr.bf16.mxu0 0
      %2845 = vmatmul.mubr.bf16.gmra.mrb[0].mxu0 %v2705
      %v2846 = vpop.f32.mrb[0].mxu0
      %v2847 = vadd.f32 0.0, %v2846
      %v2848 = vpop.f32.mrb[0].mxu0
      %v2849 = vpop.f32.mrb[0].mxu0
      %v2850 = vadd.f32 0.0, %v2849
      %v2851 = vpop.f32.mrb[0].mxu0
      %2852 = vmatprep.mubr.bf16.mxu0 0
      %2853 = vmatmul.mubr.bf16.gmra.mrb[0].mxu0 %v2708
      %v2854 = vpop.f32.mrb[0].mxu0
      %v2855 = vadd.f32 0.0, %v2854
      %v2856 = vpop.f32.mrb[0].mxu0
      %v2857 = vpop.f32.mrb[0].mxu0
      %v2858 = vadd.f32 0.0, %v2857
      %v2859 = vpop.f32.mrb[0].mxu0
      %2860 = vmatprep.mubr.bf16.mxu0 0
      %2861 = vmatmul.mubr.bf16.gmra.mrb[0].mxu0 %v2711
      %v2862 = vpop.f32.mrb[0].mxu0
      %v2863 = vadd.f32 0.0, %v2862
      %v2864 = vpop.f32.mrb[0].mxu0
      %v2865 = vpop.f32.mrb[0].mxu0
      %v2866 = vadd.f32 0.0, %v2865
      %v2867 = vpop.f32.mrb[0].mxu0
      %2868 = vmatprep.mubr.bf16.mxu0 0
      %2869 = vmatmul.mubr.bf16.gmra.mrb[0].mxu0 %v2714
      %v2870 = vpop.f32.mrb[0].mxu0
      %v2871 = vadd.f32 0.0, %v2870
      %v2872 = vpop.f32.mrb[0].mxu0
      %v2873 = vpop.f32.mrb[0].mxu0
      %v2874 = vadd.f32 0.0, %v2873
      %v2875 = vpop.f32.mrb[0].mxu0
      %2876 = vdwg.mxu0
      %v2877 = vadd.f32 %v2491, %v2751
      %v2878 = vadd.f32 %v2492, %v2754
      %v2879 = vadd.f32 %v2493, %v2759
      %v2880 = vadd.f32 %v2494, %v2762
      %v2881 = vadd.f32 %v2495, %v2767
      %v2882 = vadd.f32 %v2496, %v2770
      %v2883 = vadd.f32 %v2497, %v2775
      %v2884 = vadd.f32 %v2498, %v2778
      %v2885 = vadd.f32 %v2499, %v2783
      %v2886 = vadd.f32 %v2500, %v2786
      %v2887 = vadd.f32 %v2501, %v2791
      %v2888 = vadd.f32 %v2502, %v2794
      %v2889 = vadd.f32 %v2503, %v2799
      %v2890 = vadd.f32 %v2504, %v2802
      %v2891 = vadd.f32 %v2505, %v2807
      %v2892 = vadd.f32 %v2506, %v2810
      %v2893 = vadd.f32 %v2507, %v2815
      %v2894 = vadd.f32 %v2508, %v2818
      %v2895 = vadd.f32 %v2509, %v2823
      %v2896 = vadd.f32 %v2510, %v2826
      %v2897 = vadd.f32 %v2511, %v2831
      %v2898 = vadd.f32 %v2512, %v2834
      %v2899 = vadd.f32 %v2513, %v2839
      %v2900 = vadd.f32 %v2514, %v2842
      %v2901 = vadd.f32 %v2515, %v2847
      %v2902 = vadd.f32 %v2516, %v2850
      %v2903 = vadd.f32 %v2517, %v2855
      %v2904 = vadd.f32 %v2518, %v2858
      %v2905 = vadd.f32 %v2519, %v2863
      %v2906 = vadd.f32 %v2520, %v2866
      %v2907 = vadd.f32 %v2521, %v2871
      %v2908 = vadd.f32 %v2522, %v2874
      %v2909 = vld [vmem:[%s805] sm:$0xf]
      %v2910 = vld [vmem:[%s805 + $0x4] sm:$0xf]
      %v2911 = vld [vmem:[%s805 + $0x8] sm:$0x1]
      %v2912 = vld [vmem:[%s805 + $0xc] sm:$0xf]
      %v2913 = vld [vmem:[%s805 + $0x10] sm:$0xf]
      %v2914 = vld [vmem:[%s805 + $0x14] sm:$0x1]
      %v2915 = vld [vmem:[%s805 + $0x18] sm:$0xf]
      %v2916 = vld [vmem:[%s805 + $0x1c] sm:$0xf]
      %v2917 = vld [vmem:[%s805 + $0x20] sm:$0x1]
      %v2918 = vld [vmem:[%s805 + $0x24] sm:$0xf]
      %v2919 = vld [vmem:[%s805 + $0x28] sm:$0xf]
      %v2920 = vld [vmem:[%s805 + $0x2c] sm:$0x1]
      %v2921 = vld [vmem:[%s805 + $0x30] sm:$0xf]
      %v2922 = vld [vmem:[%s805 + $0x34] sm:$0xf]
      %v2923 = vld [vmem:[%s805 + $0x38] sm:$0x1]
      %v2924 = vld [vmem:[%s805 + $0x3c] sm:$0xf]
      %v2925 = vld [vmem:[%s805 + $0x40] sm:$0xf]
      %v2926 = vld [vmem:[%s805 + $0x44] sm:$0x1]
      %v2927 = vld [vmem:[%s805 + $0x48] sm:$0xf]
      %v2928 = vld [vmem:[%s805 + $0x4c] sm:$0xf]
      %v2929 = vld [vmem:[%s805 + $0x50] sm:$0x1]
      %v2930 = vld [vmem:[%s805 + $0x54] sm:$0xf]
      %v2931 = vld [vmem:[%s805 + $0x58] sm:$0xf]
      %v2932 = vld [vmem:[%s805 + $0x5c] sm:$0x1]
      %v2933 = vld [vmem:[%s805 + $0x60] sm:$0xf]
      %v2934 = vld [vmem:[%s805 + $0x64] sm:$0xf]
      %v2935 = vld [vmem:[%s805 + $0x68] sm:$0x1]
      %v2936 = vld [vmem:[%s805 + $0x6c] sm:$0xf]
      %v2937 = vld [vmem:[%s805 + $0x70] sm:$0xf]
      %v2938 = vld [vmem:[%s805 + $0x74] sm:$0x1]
      %v2939 = vld [vmem:[%s805 + $0x78] sm:$0xf]
      %v2940 = vld [vmem:[%s805 + $0x7c] sm:$0xf]
      %v2941 = vld [vmem:[%s805 + $0x80] sm:$0x1]
      %v2942 = vld [vmem:[%s805 + $0x84] sm:$0xf]
      %v2943 = vld [vmem:[%s805 + $0x88] sm:$0xf]
      %v2944 = vld [vmem:[%s805 + $0x8c] sm:$0x1]
      %v2945 = vld [vmem:[%s805 + $0x90] sm:$0xf]
      %v2946 = vld [vmem:[%s805 + $0x94] sm:$0xf]
      %v2947 = vld [vmem:[%s805 + $0x98] sm:$0x1]
      %v2948 = vld [vmem:[%s805 + $0x9c] sm:$0xf]
      %v2949 = vld [vmem:[%s805 + $0xa0] sm:$0xf]
      %v2950 = vld [vmem:[%s805 + $0xa4] sm:$0x1]
      %v2951 = vld [vmem:[%s805 + $0xa8] sm:$0xf]
      %v2952 = vld [vmem:[%s805 + $0xac] sm:$0xf]
      %v2953 = vld [vmem:[%s805 + $0xb0] sm:$0x1]
      %v2954 = vld [vmem:[%s805 + $0xb4] sm:$0xf]
      %v2955 = vld [vmem:[%s805 + $0xb8] sm:$0xf]
      %v2956 = vld [vmem:[%s805 + $0xbc] sm:$0x1]
      %v2958 = vshrl.u32 %v2909, 16
      %v2960 = vrot.slane %v2958, 4
      %v2961 = vshll.u32 %v2909, 16
      %v2963 = vrot.slane %v2961, 5
      %v2964 = vor.u32 %v2960, %v2963
      %v2965 = vrot.slane %v2964, 4
      %v2967 = vshll.u32 %v2910, 16
      %v2969 = vrot.slane %v2967, 5
      %v2970 = vsel %vm1049, %v2965, %v2969
      %v2971 = vshrl.u32 %v2910, 16
      %v2973 = vrot.slane %v2971, 4
      %v2974 = vor.u32 %v2973, %v2969
      %v2975 = vrot.slane %v2974, 4
      %v2977 = vshll.u32 %v2911, 16
      %v2979 = vrot.slane %v2977, 5
      %v2980 = vsel %vm1049, %v2975, %v2979
      %v2982 = vshrl.u32 %v2912, 16
      %v2984 = vrot.slane %v2982, 4
      %v2985 = vshll.u32 %v2912, 16
      %v2987 = vrot.slane %v2985, 5
      %v2988 = vor.u32 %v2984, %v2987
      %v2989 = vrot.slane %v2988, 4
      %v2991 = vshll.u32 %v2913, 16
      %v2993 = vrot.slane %v2991, 5
      %v2994 = vsel %vm1049, %v2989, %v2993
      %v2995 = vshrl.u32 %v2913, 16
      %v2997 = vrot.slane %v2995, 4
      %v2998 = vor.u32 %v2997, %v2993
      %v2999 = vrot.slane %v2998, 4
      %v3001 = vshll.u32 %v2914, 16
      %v3003 = vrot.slane %v3001, 5
      %v3004 = vsel %vm1049, %v2999, %v3003
      %v3006 = vshrl.u32 %v2915, 16
      %v3008 = vrot.slane %v3006, 4
      %v3009 = vshll.u32 %v2915, 16
      %v3011 = vrot.slane %v3009, 5
      %v3012 = vor.u32 %v3008, %v3011
      %v3013 = vrot.slane %v3012, 4
      %v3015 = vshll.u32 %v2916, 16
      %v3017 = vrot.slane %v3015, 5
      %v3018 = vsel %vm1049, %v3013, %v3017
      %v3019 = vshrl.u32 %v2916, 16
      %v3021 = vrot.slane %v3019, 4
      %v3022 = vor.u32 %v3021, %v3017
      %v3023 = vrot.slane %v3022, 4
      %v3025 = vshll.u32 %v2917, 16
      %v3027 = vrot.slane %v3025, 5
      %v3028 = vsel %vm1049, %v3023, %v3027
      %v3030 = vshrl.u32 %v2918, 16
      %v3032 = vrot.slane %v3030, 4
      %v3033 = vshll.u32 %v2918, 16
      %v3035 = vrot.slane %v3033, 5
      %v3036 = vor.u32 %v3032, %v3035
      %v3037 = vrot.slane %v3036, 4
      %v3039 = vshll.u32 %v2919, 16
      %v3041 = vrot.slane %v3039, 5
      %v3042 = vsel %vm1049, %v3037, %v3041
      %v3043 = vshrl.u32 %v2919, 16
      %v3045 = vrot.slane %v3043, 4
      %v3046 = vor.u32 %v3045, %v3041
      %v3047 = vrot.slane %v3046, 4
      %v3049 = vshll.u32 %v2920, 16
      %v3051 = vrot.slane %v3049, 5
      %v3052 = vsel %vm1049, %v3047, %v3051
      %v3054 = vshrl.u32 %v2921, 16
      %v3056 = vrot.slane %v3054, 4
      %v3057 = vshll.u32 %v2921, 16
      %v3059 = vrot.slane %v3057, 5
      %v3060 = vor.u32 %v3056, %v3059
      %v3061 = vrot.slane %v3060, 4
      %v3063 = vshll.u32 %v2922, 16
      %v3065 = vrot.slane %v3063, 5
      %v3066 = vsel %vm1049, %v3061, %v3065
      %v3067 = vshrl.u32 %v2922, 16
      %v3069 = vrot.slane %v3067, 4
      %v3070 = vor.u32 %v3069, %v3065
      %v3071 = vrot.slane %v3070, 4
      %v3073 = vshll.u32 %v2923, 16
      %v3075 = vrot.slane %v3073, 5
      %v3076 = vsel %vm1049, %v3071, %v3075
      %v3078 = vshrl.u32 %v2924, 16
      %v3080 = vrot.slane %v3078, 4
      %v3081 = vshll.u32 %v2924, 16
      %v3083 = vrot.slane %v3081, 5
      %v3084 = vor.u32 %v3080, %v3083
      %v3085 = vrot.slane %v3084, 4
      %v3087 = vshll.u32 %v2925, 16
      %v3089 = vrot.slane %v3087, 5
      %v3090 = vsel %vm1049, %v3085, %v3089
      %v3091 = vshrl.u32 %v2925, 16
      %v3093 = vrot.slane %v3091, 4
      %v3094 = vor.u32 %v3093, %v3089
      %v3095 = vrot.slane %v3094, 4
      %v3097 = vshll.u32 %v2926, 16
      %v3099 = vrot.slane %v3097, 5
      %v3100 = vsel %vm1049, %v3095, %v3099
      %v3102 = vshrl.u32 %v2927, 16
      %v3104 = vrot.slane %v3102, 4
      %v3105 = vshll.u32 %v2927, 16
      %v3107 = vrot.slane %v3105, 5
      %v3108 = vor.u32 %v3104, %v3107
      %v3109 = vrot.slane %v3108, 4
      %v3111 = vshll.u32 %v2928, 16
      %v3113 = vrot.slane %v3111, 5
      %v3114 = vsel %vm1049, %v3109, %v3113
      %v3115 = vshrl.u32 %v2928, 16
      %v3117 = vrot.slane %v3115, 4
      %v3118 = vor.u32 %v3117, %v3113
      %v3119 = vrot.slane %v3118, 4
      %v3121 = vshll.u32 %v2929, 16
      %v3123 = vrot.slane %v3121, 5
      %v3124 = vsel %vm1049, %v3119, %v3123
      %v3126 = vshrl.u32 %v2930, 16
      %v3128 = vrot.slane %v3126, 4
      %v3129 = vshll.u32 %v2930, 16
      %v3131 = vrot.slane %v3129, 5
      %v3132 = vor.u32 %v3128, %v3131
      %v3133 = vrot.slane %v3132, 4
      %v3135 = vshll.u32 %v2931, 16
      %v3137 = vrot.slane %v3135, 5
      %v3138 = vsel %vm1049, %v3133, %v3137
      %v3139 = vshrl.u32 %v2931, 16
      %v3141 = vrot.slane %v3139, 4
      %v3142 = vor.u32 %v3141, %v3137
      %v3143 = vrot.slane %v3142, 4
      %v3145 = vshll.u32 %v2932, 16
      %v3147 = vrot.slane %v3145, 5
      %v3148 = vsel %vm1049, %v3143, %v3147
      %v3150 = vshrl.u32 %v2933, 16
      %v3152 = vrot.slane %v3150, 4
      %v3153 = vshll.u32 %v2933, 16
      %v3155 = vrot.slane %v3153, 5
      %v3156 = vor.u32 %v3152, %v3155
      %v3157 = vrot.slane %v3156, 4
      %v3159 = vshll.u32 %v2934, 16
      %v3161 = vrot.slane %v3159, 5
      %v3162 = vsel %vm1049, %v3157, %v3161
      %v3163 = vshrl.u32 %v2934, 16
      %v3165 = vrot.slane %v3163, 4
      %v3166 = vor.u32 %v3165, %v3161
      %v3167 = vrot.slane %v3166, 4
      %v3169 = vshll.u32 %v2935, 16
      %v3171 = vrot.slane %v3169, 5
      %v3172 = vsel %vm1049, %v3167, %v3171
      %v3174 = vshrl.u32 %v2936, 16
      %v3176 = vrot.slane %v3174, 4
      %v3177 = vshll.u32 %v2936, 16
      %v3179 = vrot.slane %v3177, 5
      %v3180 = vor.u32 %v3176, %v3179
      %v3181 = vrot.slane %v3180, 4
      %v3183 = vshll.u32 %v2937, 16
      %v3185 = vrot.slane %v3183, 5
      %v3186 = vsel %vm1049, %v3181, %v3185
      %v3187 = vshrl.u32 %v2937, 16
      %v3189 = vrot.slane %v3187, 4
      %v3190 = vor.u32 %v3189, %v3185
      %v3191 = vrot.slane %v3190, 4
      %v3193 = vshll.u32 %v2938, 16
      %v3195 = vrot.slane %v3193, 5
      %v3196 = vsel %vm1049, %v3191, %v3195
      %v3198 = vshrl.u32 %v2939, 16
      %v3200 = vrot.slane %v3198, 4
      %v3201 = vshll.u32 %v2939, 16
      %v3203 = vrot.slane %v3201, 5
      %v3204 = vor.u32 %v3200, %v3203
      %v3205 = vrot.slane %v3204, 4
      %v3207 = vshll.u32 %v2940, 16
      %v3209 = vrot.slane %v3207, 5
      %v3210 = vsel %vm1049, %v3205, %v3209
      %v3211 = vshrl.u32 %v2940, 16
      %v3213 = vrot.slane %v3211, 4
      %v3214 = vor.u32 %v3213, %v3209
      %v3215 = vrot.slane %v3214, 4
      %v3217 = vshll.u32 %v2941, 16
      %v3219 = vrot.slane %v3217, 5
      %v3220 = vsel %vm1049, %v3215, %v3219
      %v3222 = vshrl.u32 %v2942, 16
      %v3224 = vrot.slane %v3222, 4
      %v3225 = vshll.u32 %v2942, 16
      %v3227 = vrot.slane %v3225, 5
      %v3228 = vor.u32 %v3224, %v3227
      %v3229 = vrot.slane %v3228, 4
      %v3231 = vshll.u32 %v2943, 16
      %v3233 = vrot.slane %v3231, 5
      %v3234 = vsel %vm1049, %v3229, %v3233
      %v3235 = vshrl.u32 %v2943, 16
      %v3237 = vrot.slane %v3235, 4
      %v3238 = vor.u32 %v3237, %v3233
      %v3239 = vrot.slane %v3238, 4
      %v3241 = vshll.u32 %v2944, 16
      %v3243 = vrot.slane %v3241, 5
      %v3244 = vsel %vm1049, %v3239, %v3243
      %v3246 = vshrl.u32 %v2945, 16
      %v3248 = vrot.slane %v3246, 4
      %v3249 = vshll.u32 %v2945, 16
      %v3251 = vrot.slane %v3249, 5
      %v3252 = vor.u32 %v3248, %v3251
      %v3253 = vrot.slane %v3252, 4
      %v3255 = vshll.u32 %v2946, 16
      %v3257 = vrot.slane %v3255, 5
      %v3258 = vsel %vm1049, %v3253, %v3257
      %v3259 = vshrl.u32 %v2946, 16
      %v3261 = vrot.slane %v3259, 4
      %v3262 = vor.u32 %v3261, %v3257
      %v3263 = vrot.slane %v3262, 4
      %v3265 = vshll.u32 %v2947, 16
      %v3267 = vrot.slane %v3265, 5
      %v3268 = vsel %vm1049, %v3263, %v3267
      %v3270 = vshrl.u32 %v2948, 16
      %v3272 = vrot.slane %v3270, 4
      %v3273 = vshll.u32 %v2948, 16
      %v3275 = vrot.slane %v3273, 5
      %v3276 = vor.u32 %v3272, %v3275
      %v3277 = vrot.slane %v3276, 4
      %v3279 = vshll.u32 %v2949, 16
      %v3281 = vrot.slane %v3279, 5
      %v3282 = vsel %vm1049, %v3277, %v3281
      %v3283 = vshrl.u32 %v2949, 16
      %v3285 = vrot.slane %v3283, 4
      %v3286 = vor.u32 %v3285, %v3281
      %v3287 = vrot.slane %v3286, 4
      %v3289 = vshll.u32 %v2950, 16
      %v3291 = vrot.slane %v3289, 5
      %v3292 = vsel %vm1049, %v3287, %v3291
      %v3294 = vshrl.u32 %v2951, 16
      %v3296 = vrot.slane %v3294, 4
      %v3297 = vshll.u32 %v2951, 16
      %v3299 = vrot.slane %v3297, 5
      %v3300 = vor.u32 %v3296, %v3299
      %v3301 = vrot.slane %v3300, 4
      %v3303 = vshll.u32 %v2952, 16
      %v3305 = vrot.slane %v3303, 5
      %v3306 = vsel %vm1049, %v3301, %v3305
      %v3307 = vshrl.u32 %v2952, 16
      %v3309 = vrot.slane %v3307, 4
      %v3310 = vor.u32 %v3309, %v3305
      %v3311 = vrot.slane %v3310, 4
      %v3313 = vshll.u32 %v2953, 16
      %v3315 = vrot.slane %v3313, 5
      %v3316 = vsel %vm1049, %v3311, %v3315
      %v3318 = vshrl.u32 %v2954, 16
      %v3320 = vrot.slane %v3318, 4
      %v3321 = vshll.u32 %v2954, 16
      %v3323 = vrot.slane %v3321, 5
      %v3324 = vor.u32 %v3320, %v3323
      %v3325 = vrot.slane %v3324, 4
      %v3327 = vshll.u32 %v2955, 16
      %v3329 = vrot.slane %v3327, 5
      %v3330 = vsel %vm1049, %v3325, %v3329
      %v3331 = vshrl.u32 %v2955, 16
      %v3333 = vrot.slane %v3331, 4
      %v3334 = vor.u32 %v3333, %v3329
      %v3335 = vrot.slane %v3334, 4
      %v3337 = vshll.u32 %v2956, 16
      %v3339 = vrot.slane %v3337, 5
      %v3340 = vsel %vm1049, %v3335, %v3339
      %s3341 = scalar_lea.vmem %s3, 128
      %v3342 = vld [vmem:[%s3341] sm:$0xf]
      %v3343 = vld [vmem:[%s3341 + $0x4] sm:$0xf]
      %v3344 = vld [vmem:[%s3341 + $0x8] sm:$0xf]
      %v3345 = vld [vmem:[%s3341 + $0xc] sm:$0xf]
      %v3346 = vld [vmem:[%s3341 + $0x10] sm:$0xf]
      %v3347 = vld [vmem:[%s3341 + $0x14] sm:$0xf]
      %v3348 = vld [vmem:[%s3341 + $0x18] sm:$0xf]
      %v3349 = vld [vmem:[%s3341 + $0x1c] sm:$0xf]
      %v3350 = vunpack.c.l.b16 %v2970
      %v3351 = vunpack.c.l.b16 %v2980
      %v3352 = vunpack.c.l.b16 %v2994
      %v3353 = vunpack.c.l.b16 %v3004
      %v3354 = vunpack.c.l.b16 %v3018
      %v3355 = vunpack.c.l.b16 %v3028
      %v3356 = vunpack.c.l.b16 %v3042
      %v3357 = vunpack.c.l.b16 %v3052
      %v3358 = vunpack.c.l.b16 %v3066
      %v3359 = vunpack.c.l.b16 %v3076
      %v3360 = vunpack.c.l.b16 %v3090
      %v3361 = vunpack.c.l.b16 %v3100
      %v3362 = vunpack.c.l.b16 %v3114
      %v3363 = vunpack.c.l.b16 %v3124
      %v3364 = vunpack.c.l.b16 %v3138
      %v3365 = vunpack.c.l.b16 %v3148
      %v3366 = vunpack.c.l.b16 %v3162
      %v3367 = vunpack.c.l.b16 %v3172
      %v3368 = vunpack.c.l.b16 %v3186
      %v3369 = vunpack.c.l.b16 %v3196
      %v3370 = vunpack.c.l.b16 %v3210
      %v3371 = vunpack.c.l.b16 %v3220
      %v3372 = vunpack.c.l.b16 %v3234
      %v3373 = vunpack.c.l.b16 %v3244
      %v3374 = vunpack.c.l.b16 %v3258
      %v3375 = vunpack.c.l.b16 %v3268
      %v3376 = vunpack.c.l.b16 %v3282
      %v3377 = vunpack.c.l.b16 %v3292
      %v3378 = vunpack.c.l.b16 %v3306
      %v3379 = vunpack.c.l.b16 %v3316
      %v3380 = vunpack.c.l.b16 %v3330
      %v3381 = vunpack.c.l.b16 %v3340
      %v3382 = vpack.c.b16 %v3351, %v3350
      %v3383 = vpack.c.b16 %v3353, %v3352
      %v3384 = vpack.c.b16 %v3355, %v3354
      %v3385 = vpack.c.b16 %v3357, %v3356
      %v3386 = vpack.c.b16 %v3359, %v3358
      %v3387 = vpack.c.b16 %v3361, %v3360
      %v3388 = vpack.c.b16 %v3363, %v3362
      %v3389 = vpack.c.b16 %v3365, %v3364
      %v3390 = vpack.c.b16 %v3367, %v3366
      %v3391 = vpack.c.b16 %v3369, %v3368
      %v3392 = vpack.c.b16 %v3371, %v3370
      %v3393 = vpack.c.b16 %v3373, %v3372
      %v3394 = vpack.c.b16 %v3375, %v3374
      %v3395 = vpack.c.b16 %v3377, %v3376
      %v3396 = vpack.c.b16 %v3379, %v3378
      %v3397 = vpack.c.b16 %v3381, %v3380
      %v3406 = vunpack.c.l.b16 %v3342
      %v3407 = vunpack.c.l.b16 %v3343
      %v3408 = vunpack.c.l.b16 %v3344
      %v3409 = vunpack.c.l.b16 %v3345
      %v3410 = vunpack.c.l.b16 %v3346
      %v3411 = vunpack.c.l.b16 %v3347
      %v3412 = vunpack.c.l.b16 %v3348
      %v3413 = vunpack.c.l.b16 %v3349
      %v3414 = vpack.c.b16 %v3407, %v3406
      %v3415 = vpack.c.b16 %v3409, %v3408
      %v3416 = vpack.c.b16 %v3411, %v3410
      %v3417 = vpack.c.b16 %v3413, %v3412
      %v3423 = vsel %vm1515, %v3382, 0
      %v3426 = vsel %vm1515, %v3383, 0
      %v3429 = vsel %vm1515, %v3384, 0
      %v3432 = vsel %vm1515, %v3385, 0
      %v3435 = vsel %vm1515, %v3386, 0
      %v3438 = vsel %vm1515, %v3387, 0
      %v3441 = vsel %vm1515, %v3388, 0
      %v3444 = vsel %vm1515, %v3389, 0
      %v3447 = vsel %vm1515, %v3390, 0
      %v3450 = vsel %vm1515, %v3391, 0
      %v3453 = vsel %vm1515, %v3392, 0
      %v3456 = vsel %vm1515, %v3393, 0
      %v3459 = vsel %vm1515, %v3394, 0
      %v3462 = vsel %vm1515, %v3395, 0
      %v3465 = vsel %vm1515, %v3396, 0
      %v3468 = vsel %vm1515, %v3397, 0
      %3470 = vmatprep.subr.bf16.mxu0 0
      %3471 = vmatpush1.bf16.msra.mxu0 %v3414
      %3472 = vmatprep.subr.bf16.mxu0 0
      %3473 = vmatpush1.bf16.msra.mxu0 %v3415
      %3474 = vmatprep.subr.bf16.mxu0 0
      %3475 = vmatpush1.bf16.msra.mxu0 %v3416
      %3476 = vmatprep.subr.bf16.mxu0 0
      %3477 = vmatpush1.bf16.msra.mxu0 %v3417
      %3478 = vmatprep.subr.bf16.mxu0 0
      %3479 = vmatpush1.bf16.msra.mxu0 0
      %3480 = vmatprep.subr.bf16.mxu0 0
      %3481 = vmatpush1.bf16.msra.mxu0 0
      %3482 = vmatprep.subr.bf16.mxu0 0
      %3483 = vmatpush1.bf16.msra.mxu0 0
      %3484 = vmatprep.subr.bf16.mxu0 0
      %3485 = vmatpush1.bf16.msra.mxu0 0
      %3486 = vmatprep.subr.bf16.mxu0 0
      %3487 = vmatpush1.bf16.msra.mxu0 0
      %3488 = vmatprep.subr.bf16.mxu0 0
      %3489 = vmatpush1.bf16.msra.mxu0 0
      %3490 = vmatprep.subr.bf16.mxu0 0
      %3491 = vmatpush1.bf16.msra.mxu0 0
      %3492 = vmatprep.subr.bf16.mxu0 0
      %3493 = vmatpush1.bf16.msra.mxu0 0
      %3494 = vmatprep.subr.bf16.mxu0 0
      %3495 = vmatpush1.bf16.msra.mxu0 0
      %3496 = vmatprep.subr.bf16.mxu0 0
      %3497 = vmatpush1.bf16.msra.mxu0 0
      %3498 = vmatprep.subr.bf16.mxu0 0
      %3499 = vmatpush1.bf16.msra.mxu0 0
      %3500 = vmatprep.subr.bf16.mxu0 0
      %3501 = vmatpush1.bf16.msra.mxu0 0
      %3502 = vmatprep.mubr.bf16.mxu0 0
      %3503 = vmatmul.mubr.bf16.gmra.mrb[0].mxu0 %v3423
      %v3504 = vpop.f32.mrb[0].mxu0
      %v3505 = vadd.f32 0.0, %v3504
      %v3506 = vpop.f32.mrb[0].mxu0
      %v3507 = vpop.f32.mrb[0].mxu0
      %v3508 = vadd.f32 0.0, %v3507
      %v3509 = vpop.f32.mrb[0].mxu0
      %3510 = vmatprep.mubr.bf16.mxu0 0
      %3511 = vmatmul.mubr.bf16.gmra.mrb[0].mxu0 %v3426
      %v3512 = vpop.f32.mrb[0].mxu0
      %v3513 = vadd.f32 0.0, %v3512
      %v3514 = vpop.f32.mrb[0].mxu0
      %v3515 = vpop.f32.mrb[0].mxu0
      %v3516 = vadd.f32 0.0, %v3515
      %v3517 = vpop.f32.mrb[0].mxu0
      %3518 = vmatprep.mubr.bf16.mxu0 0
      %3519 = vmatmul.mubr.bf16.gmra.mrb[0].mxu0 %v3429
      %v3520 = vpop.f32.mrb[0].mxu0
      %v3521 = vadd.f32 0.0, %v3520
      %v3522 = vpop.f32.mrb[0].mxu0
      %v3523 = vpop.f32.mrb[0].mxu0
      %v3524 = vadd.f32 0.0, %v3523
      %v3525 = vpop.f32.mrb[0].mxu0
      %3526 = vmatprep.mubr.bf16.mxu0 0
      %3527 = vmatmul.mubr.bf16.gmra.mrb[0].mxu0 %v3432
      %v3528 = vpop.f32.mrb[0].mxu0
      %v3529 = vadd.f32 0.0, %v3528
      %v3530 = vpop.f32.mrb[0].mxu0
      %v3531 = vpop.f32.mrb[0].mxu0
      %v3532 = vadd.f32 0.0, %v3531
      %v3533 = vpop.f32.mrb[0].mxu0
      %3534 = vmatprep.mubr.bf16.mxu0 0
      %3535 = vmatmul.mubr.bf16.gmra.mrb[0].mxu0 %v3435
      %v3536 = vpop.f32.mrb[0].mxu0
      %v3537 = vadd.f32 0.0, %v3536
      %v3538 = vpop.f32.mrb[0].mxu0
      %v3539 = vpop.f32.mrb[0].mxu0
      %v3540 = vadd.f32 0.0, %v3539
      %v3541 = vpop.f32.mrb[0].mxu0
      %3542 = vmatprep.mubr.bf16.mxu0 0
      %3543 = vmatmul.mubr.bf16.gmra.mrb[0].mxu0 %v3438
      %v3544 = vpop.f32.mrb[0].mxu0
      %v3545 = vadd.f32 0.0, %v3544
      %v3546 = vpop.f32.mrb[0].mxu0
      %v3547 = vpop.f32.mrb[0].mxu0
      %v3548 = vadd.f32 0.0, %v3547
      %v3549 = vpop.f32.mrb[0].mxu0
      %3550 = vmatprep.mubr.bf16.mxu0 0
      %3551 = vmatmul.mubr.bf16.gmra.mrb[0].mxu0 %v3441
      %v3552 = vpop.f32.mrb[0].mxu0
      %v3553 = vadd.f32 0.0, %v3552
      %v3554 = vpop.f32.mrb[0].mxu0
      %v3555 = vpop.f32.mrb[0].mxu0
      %v3556 = vadd.f32 0.0, %v3555
      %v3557 = vpop.f32.mrb[0].mxu0
      %3558 = vmatprep.mubr.bf16.mxu0 0
      %3559 = vmatmul.mubr.bf16.gmra.mrb[0].mxu0 %v3444
      %v3560 = vpop.f32.mrb[0].mxu0
      %v3561 = vadd.f32 0.0, %v3560
      %v3562 = vpop.f32.mrb[0].mxu0
      %v3563 = vpop.f32.mrb[0].mxu0
      %v3564 = vadd.f32 0.0, %v3563
      %v3565 = vpop.f32.mrb[0].mxu0
      %3566 = vmatprep.mubr.bf16.mxu0 0
      %3567 = vmatmul.mubr.bf16.gmra.mrb[0].mxu0 %v3447
      %v3568 = vpop.f32.mrb[0].mxu0
      %v3569 = vadd.f32 0.0, %v3568
      %v3570 = vpop.f32.mrb[0].mxu0
      %v3571 = vpop.f32.mrb[0].mxu0
      %v3572 = vadd.f32 0.0, %v3571
      %v3573 = vpop.f32.mrb[0].mxu0
      %3574 = vmatprep.mubr.bf16.mxu0 0
      %3575 = vmatmul.mubr.bf16.gmra.mrb[0].mxu0 %v3450
      %v3576 = vpop.f32.mrb[0].mxu0
      %v3577 = vadd.f32 0.0, %v3576
      %v3578 = vpop.f32.mrb[0].mxu0
      %v3579 = vpop.f32.mrb[0].mxu0
      %v3580 = vadd.f32 0.0, %v3579
      %v3581 = vpop.f32.mrb[0].mxu0
      %3582 = vmatprep.mubr.bf16.mxu0 0
      %3583 = vmatmul.mubr.bf16.gmra.mrb[0].mxu0 %v3453
      %v3584 = vpop.f32.mrb[0].mxu0
      %v3585 = vadd.f32 0.0, %v3584
      %v3586 = vpop.f32.mrb[0].mxu0
      %v3587 = vpop.f32.mrb[0].mxu0
      %v3588 = vadd.f32 0.0, %v3587
      %v3589 = vpop.f32.mrb[0].mxu0
      %3590 = vmatprep.mubr.bf16.mxu0 0
      %3591 = vmatmul.mubr.bf16.gmra.mrb[0].mxu0 %v3456
      %v3592 = vpop.f32.mrb[0].mxu0
      %v3593 = vadd.f32 0.0, %v3592
      %v3594 = vpop.f32.mrb[0].mxu0
      %v3595 = vpop.f32.mrb[0].mxu0
      %v3596 = vadd.f32 0.0, %v3595
      %v3597 = vpop.f32.mrb[0].mxu0
      %3598 = vmatprep.mubr.bf16.mxu0 0
      %3599 = vmatmul.mubr.bf16.gmra.mrb[0].mxu0 %v3459
      %v3600 = vpop.f32.mrb[0].mxu0
      %v3601 = vadd.f32 0.0, %v3600
      %v3602 = vpop.f32.mrb[0].mxu0
      %v3603 = vpop.f32.mrb[0].mxu0
      %v3604 = vadd.f32 0.0, %v3603
      %v3605 = vpop.f32.mrb[0].mxu0
      %3606 = vmatprep.mubr.bf16.mxu0 0
      %3607 = vmatmul.mubr.bf16.gmra.mrb[0].mxu0 %v3462
      %v3608 = vpop.f32.mrb[0].mxu0
      %v3609 = vadd.f32 0.0, %v3608
      %v3610 = vpop.f32.mrb[0].mxu0
      %v3611 = vpop.f32.mrb[0].mxu0
      %v3612 = vadd.f32 0.0, %v3611
      %v3613 = vpop.f32.mrb[0].mxu0
      %3614 = vmatprep.mubr.bf16.mxu0 0
      %3615 = vmatmul.mubr.bf16.gmra.mrb[0].mxu0 %v3465
      %v3616 = vpop.f32.mrb[0].mxu0
      %v3617 = vadd.f32 0.0, %v3616
      %v3618 = vpop.f32.mrb[0].mxu0
      %v3619 = vpop.f32.mrb[0].mxu0
      %v3620 = vadd.f32 0.0, %v3619
      %v3621 = vpop.f32.mrb[0].mxu0
      %3622 = vmatprep.mubr.bf16.mxu0 0
      %3623 = vmatmul.mubr.bf16.gmra.mrb[0].mxu0 %v3468
      %v3624 = vpop.f32.mrb[0].mxu0
      %v3625 = vadd.f32 0.0, %v3624
      %v3626 = vpop.f32.mrb[0].mxu0
      %v3627 = vpop.f32.mrb[0].mxu0
      %v3628 = vadd.f32 0.0, %v3627
      %v3629 = vpop.f32.mrb[0].mxu0
      %3630 = vdwg.mxu0
      %v3631 = vadd.f32 %v2877, %v3505
      %v3632 = vadd.f32 %v2878, %v3508
      %v3633 = vadd.f32 %v2879, %v3513
      %v3634 = vadd.f32 %v2880, %v3516
      %v3635 = vadd.f32 %v2881, %v3521
      %v3636 = vadd.f32 %v2882, %v3524
      %v3637 = vadd.f32 %v2883, %v3529
      %v3638 = vadd.f32 %v2884, %v3532
      %v3639 = vadd.f32 %v2885, %v3537
      %v3640 = vadd.f32 %v2886, %v3540
      %v3641 = vadd.f32 %v2887, %v3545
      %v3642 = vadd.f32 %v2888, %v3548
      %v3643 = vadd.f32 %v2889, %v3553
      %v3644 = vadd.f32 %v2890, %v3556
      %v3645 = vadd.f32 %v2891, %v3561
      %v3646 = vadd.f32 %v2892, %v3564
      %v3647 = vadd.f32 %v2893, %v3569
      %v3648 = vadd.f32 %v2894, %v3572
      %v3649 = vadd.f32 %v2895, %v3577
      %v3650 = vadd.f32 %v2896, %v3580
      %v3651 = vadd.f32 %v2897, %v3585
      %v3652 = vadd.f32 %v2898, %v3588
      %v3653 = vadd.f32 %v2899, %v3593
      %v3654 = vadd.f32 %v2900, %v3596
      %v3655 = vadd.f32 %v2901, %v3601
      %v3656 = vadd.f32 %v2902, %v3604
      %v3657 = vadd.f32 %v2903, %v3609
      %v3658 = vadd.f32 %v2904, %v3612
      %v3659 = vadd.f32 %v2905, %v3617
      %v3660 = vadd.f32 %v2906, %v3620
      %v3661 = vadd.f32 %v2907, %v3625
      %v3662 = vadd.f32 %v2908, %v3628
      %v3663 = vld [vmem:[%s805] sm:$0xe]
      %v3664 = vld [vmem:[%s805 + $0xc] sm:$0xe]
      %v3665 = vld [vmem:[%s805 + $0x18] sm:$0xe]
      %v3666 = vld [vmem:[%s805 + $0x24] sm:$0xe]
      %v3667 = vld [vmem:[%s805 + $0x30] sm:$0xe]
      %v3668 = vld [vmem:[%s805 + $0x3c] sm:$0xe]
      %v3669 = vld [vmem:[%s805 + $0x48] sm:$0xe]
      %v3670 = vld [vmem:[%s805 + $0x54] sm:$0xe]
      %v3671 = vld [vmem:[%s805 + $0x60] sm:$0xe]
      %v3672 = vld [vmem:[%s805 + $0x6c] sm:$0xe]
      %v3673 = vld [vmem:[%s805 + $0x78] sm:$0xe]
      %v3674 = vld [vmem:[%s805 + $0x84] sm:$0xe]
      %v3675 = vld [vmem:[%s805 + $0x90] sm:$0xe]
      %v3676 = vld [vmem:[%s805 + $0x9c] sm:$0xe]
      %v3677 = vld [vmem:[%s805 + $0xa8] sm:$0xe]
      %v3678 = vld [vmem:[%s805 + $0xb4] sm:$0xe]
      %v3727 = vrot.slane %v3663, 5
      %v3728 = vrot.slane %v3727, 4
      %v3729 = vrot.slane %v2910, 5
      %v3730 = vsel %vm2088, %v3728, %v3729
      %v3731 = vrot.slane %v3729, 4
      %v3732 = vrot.slane %v2911, 5
      %v3733 = vsel %vm2088, %v3731, %v3732
      %v3734 = vrot.slane %v3664, 5
      %v3735 = vrot.slane %v3734, 4
      %v3736 = vrot.slane %v2913, 5
      %v3737 = vsel %vm2088, %v3735, %v3736
      %v3738 = vrot.slane %v3736, 4
      %v3739 = vrot.slane %v2914, 5
      %v3740 = vsel %vm2088, %v3738, %v3739
      %v3741 = vrot.slane %v3665, 5
      %v3742 = vrot.slane %v3741, 4
      %v3743 = vrot.slane %v2916, 5
      %v3744 = vsel %vm2088, %v3742, %v3743
      %v3745 = vrot.slane %v3743, 4
      %v3746 = vrot.slane %v2917, 5
      %v3747 = vsel %vm2088, %v3745, %v3746
      %v3748 = vrot.slane %v3666, 5
      %v3749 = vrot.slane %v3748, 4
      %v3750 = vrot.slane %v2919, 5
      %v3751 = vsel %vm2088, %v3749, %v3750
      %v3752 = vrot.slane %v3750, 4
      %v3753 = vrot.slane %v2920, 5
      %v3754 = vsel %vm2088, %v3752, %v3753
      %v3755 = vrot.slane %v3667, 5
      %v3756 = vrot.slane %v3755, 4
      %v3757 = vrot.slane %v2922, 5
      %v3758 = vsel %vm2088, %v3756, %v3757
      %v3759 = vrot.slane %v3757, 4
      %v3760 = vrot.slane %v2923, 5
      %v3761 = vsel %vm2088, %v3759, %v3760
      %v3762 = vrot.slane %v3668, 5
      %v3763 = vrot.slane %v3762, 4
      %v3764 = vrot.slane %v2925, 5
      %v3765 = vsel %vm2088, %v3763, %v3764
      %v3766 = vrot.slane %v3764, 4
      %v3767 = vrot.slane %v2926, 5
      %v3768 = vsel %vm2088, %v3766, %v3767
      %v3769 = vrot.slane %v3669, 5
      %v3770 = vrot.slane %v3769, 4
      %v3771 = vrot.slane %v2928, 5
      %v3772 = vsel %vm2088, %v3770, %v3771
      %v3773 = vrot.slane %v3771, 4
      %v3774 = vrot.slane %v2929, 5
      %v3775 = vsel %vm2088, %v3773, %v3774
      %v3776 = vrot.slane %v3670, 5
      %v3777 = vrot.slane %v3776, 4
      %v3778 = vrot.slane %v2931, 5
      %v3779 = vsel %vm2088, %v3777, %v3778
      %v3780 = vrot.slane %v3778, 4
      %v3781 = vrot.slane %v2932, 5
      %v3782 = vsel %vm2088, %v3780, %v3781
      %v3783 = vrot.slane %v3671, 5
      %v3784 = vrot.slane %v3783, 4
      %v3785 = vrot.slane %v2934, 5
      %v3786 = vsel %vm2088, %v3784, %v3785
      %v3787 = vrot.slane %v3785, 4
      %v3788 = vrot.slane %v2935, 5
      %v3789 = vsel %vm2088, %v3787, %v3788
      %v3790 = vrot.slane %v3672, 5
      %v3791 = vrot.slane %v3790, 4
      %v3792 = vrot.slane %v2937, 5
      %v3793 = vsel %vm2088, %v3791, %v3792
      %v3794 = vrot.slane %v3792, 4
      %v3795 = vrot.slane %v2938, 5
      %v3796 = vsel %vm2088, %v3794, %v3795
      %v3797 = vrot.slane %v3673, 5
      %v3798 = vrot.slane %v3797, 4
      %v3799 = vrot.slane %v2940, 5
      %v3800 = vsel %vm2088, %v3798, %v3799
      %v3801 = vrot.slane %v3799, 4
      %v3802 = vrot.slane %v2941, 5
      %v3803 = vsel %vm2088, %v3801, %v3802
      %v3804 = vrot.slane %v3674, 5
      %v3805 = vrot.slane %v3804, 4
      %v3806 = vrot.slane %v2943, 5
      %v3807 = vsel %vm2088, %v3805, %v3806
      %v3808 = vrot.slane %v3806, 4
      %v3809 = vrot.slane %v2944, 5
      %v3810 = vsel %vm2088, %v3808, %v3809
      %v3811 = vrot.slane %v3675, 5
      %v3812 = vrot.slane %v3811, 4
      %v3813 = vrot.slane %v2946, 5
      %v3814 = vsel %vm2088, %v3812, %v3813
      %v3815 = vrot.slane %v3813, 4
      %v3816 = vrot.slane %v2947, 5
      %v3817 = vsel %vm2088, %v3815, %v3816
      %v3818 = vrot.slane %v3676, 5
      %v3819 = vrot.slane %v3818, 4
      %v3820 = vrot.slane %v2949, 5
      %v3821 = vsel %vm2088, %v3819, %v3820
      %v3822 = vrot.slane %v3820, 4
      %v3823 = vrot.slane %v2950, 5
      %v3824 = vsel %vm2088, %v3822, %v3823
      %v3825 = vrot.slane %v3677, 5
      %v3826 = vrot.slane %v3825, 4
      %v3827 = vrot.slane %v2952, 5
      %v3828 = vsel %vm2088, %v3826, %v3827
      %v3829 = vrot.slane %v3827, 4
      %v3830 = vrot.slane %v2953, 5
      %v3831 = vsel %vm2088, %v3829, %v3830
      %v3832 = vrot.slane %v3678, 5
      %v3833 = vrot.slane %v3832, 4
      %v3834 = vrot.slane %v2955, 5
      %v3835 = vsel %vm2088, %v3833, %v3834
      %v3836 = vrot.slane %v3834, 4
      %v3837 = vrot.slane %v2956, 5
      %v3838 = vsel %vm2088, %v3836, %v3837
      %s3839 = scalar_lea.vmem %s3, 160
      %v3840 = vld [vmem:[%s3839] sm:$0xf]
      %v3841 = vld [vmem:[%s3839 + $0x4] sm:$0xf]
      %v3842 = vld [vmem:[%s3839 + $0x8] sm:$0xf]
      %v3843 = vld [vmem:[%s3839 + $0xc] sm:$0xf]
      %v3844 = vld [vmem:[%s3839 + $0x10] sm:$0xf]
      %v3845 = vld [vmem:[%s3839 + $0x14] sm:$0xf]
      %v3846 = vld [vmem:[%s3839 + $0x18] sm:$0xf]
      %v3847 = vld [vmem:[%s3839 + $0x1c] sm:$0xf]
      %v3848 = vunpack.c.l.b16 %v3730
      %v3849 = vunpack.c.l.b16 %v3733
      %v3850 = vunpack.c.l.b16 %v3737
      %v3851 = vunpack.c.l.b16 %v3740
      %v3852 = vunpack.c.l.b16 %v3744
      %v3853 = vunpack.c.l.b16 %v3747
      %v3854 = vunpack.c.l.b16 %v3751
      %v3855 = vunpack.c.l.b16 %v3754
      %v3856 = vunpack.c.l.b16 %v3758
      %v3857 = vunpack.c.l.b16 %v3761
      %v3858 = vunpack.c.l.b16 %v3765
      %v3859 = vunpack.c.l.b16 %v3768
      %v3860 = vunpack.c.l.b16 %v3772
      %v3861 = vunpack.c.l.b16 %v3775
      %v3862 = vunpack.c.l.b16 %v3779
      %v3863 = vunpack.c.l.b16 %v3782
      %v3864 = vunpack.c.l.b16 %v3786
      %v3865 = vunpack.c.l.b16 %v3789
      %v3866 = vunpack.c.l.b16 %v3793
      %v3867 = vunpack.c.l.b16 %v3796
      %v3868 = vunpack.c.l.b16 %v3800
      %v3869 = vunpack.c.l.b16 %v3803
      %v3870 = vunpack.c.l.b16 %v3807
      %v3871 = vunpack.c.l.b16 %v3810
      %v3872 = vunpack.c.l.b16 %v3814
      %v3873 = vunpack.c.l.b16 %v3817
      %v3874 = vunpack.c.l.b16 %v3821
      %v3875 = vunpack.c.l.b16 %v3824
      %v3876 = vunpack.c.l.b16 %v3828
      %v3877 = vunpack.c.l.b16 %v3831
      %v3878 = vunpack.c.l.b16 %v3835
      %v3879 = vunpack.c.l.b16 %v3838
      %v3880 = vpack.c.b16 %v3849, %v3848
      %v3881 = vpack.c.b16 %v3851, %v3850
      %v3882 = vpack.c.b16 %v3853, %v3852
      %v3883 = vpack.c.b16 %v3855, %v3854
      %v3884 = vpack.c.b16 %v3857, %v3856
      %v3885 = vpack.c.b16 %v3859, %v3858
      %v3886 = vpack.c.b16 %v3861, %v3860
      %v3887 = vpack.c.b16 %v3863, %v3862
      %v3888 = vpack.c.b16 %v3865, %v3864
      %v3889 = vpack.c.b16 %v3867, %v3866
      %v3890 = vpack.c.b16 %v3869, %v3868
      %v3891 = vpack.c.b16 %v3871, %v3870
      %v3892 = vpack.c.b16 %v3873, %v3872
      %v3893 = vpack.c.b16 %v3875, %v3874
      %v3894 = vpack.c.b16 %v3877, %v3876
      %v3895 = vpack.c.b16 %v3879, %v3878
      %v3904 = vunpack.c.l.b16 %v3840
      %v3905 = vunpack.c.l.b16 %v3841
      %v3906 = vunpack.c.l.b16 %v3842
      %v3907 = vunpack.c.l.b16 %v3843
      %v3908 = vunpack.c.l.b16 %v3844
      %v3909 = vunpack.c.l.b16 %v3845
      %v3910 = vunpack.c.l.b16 %v3846
      %v3911 = vunpack.c.l.b16 %v3847
      %v3912 = vpack.c.b16 %v3905, %v3904
      %v3913 = vpack.c.b16 %v3907, %v3906
      %v3914 = vpack.c.b16 %v3909, %v3908
      %v3915 = vpack.c.b16 %v3911, %v3910
      %v3921 = vsel %vm1515, %v3880, 0
      %v3924 = vsel %vm1515, %v3881, 0
      %v3927 = vsel %vm1515, %v3882, 0
      %v3930 = vsel %vm1515, %v3883, 0
      %v3933 = vsel %vm1515, %v3884, 0
      %v3936 = vsel %vm1515, %v3885, 0
      %v3939 = vsel %vm1515, %v3886, 0
      %v3942 = vsel %vm1515, %v3887, 0
      %v3945 = vsel %vm1515, %v3888, 0
      %v3948 = vsel %vm1515, %v3889, 0
      %v3951 = vsel %vm1515, %v3890, 0
      %v3954 = vsel %vm1515, %v3891, 0
      %v3957 = vsel %vm1515, %v3892, 0
      %v3960 = vsel %vm1515, %v3893, 0
      %v3963 = vsel %vm1515, %v3894, 0
      %v3966 = vsel %vm1515, %v3895, 0
      %3968 = vmatprep.subr.bf16.mxu0 0
      %3969 = vmatpush1.bf16.msra.mxu0 %v3912
      %3970 = vmatprep.subr.bf16.mxu0 0
      %3971 = vmatpush1.bf16.msra.mxu0 %v3913
      %3972 = vmatprep.subr.bf16.mxu0 0
      %3973 = vmatpush1.bf16.msra.mxu0 %v3914
      %3974 = vmatprep.subr.bf16.mxu0 0
      %3975 = vmatpush1.bf16.msra.mxu0 %v3915
      %3976 = vmatprep.subr.bf16.mxu0 0
      %3977 = vmatpush1.bf16.msra.mxu0 0
      %3978 = vmatprep.subr.bf16.mxu0 0
      %3979 = vmatpush1.bf16.msra.mxu0 0
      %3980 = vmatprep.subr.bf16.mxu0 0
      %3981 = vmatpush1.bf16.msra.mxu0 0
      %3982 = vmatprep.subr.bf16.mxu0 0
      %3983 = vmatpush1.bf16.msra.mxu0 0
      %3984 = vmatprep.subr.bf16.mxu0 0
      %3985 = vmatpush1.bf16.msra.mxu0 0
      %3986 = vmatprep.subr.bf16.mxu0 0
      %3987 = vmatpush1.bf16.msra.mxu0 0
      %3988 = vmatprep.subr.bf16.mxu0 0
      %3989 = vmatpush1.bf16.msra.mxu0 0
      %3990 = vmatprep.subr.bf16.mxu0 0
      %3991 = vmatpush1.bf16.msra.mxu0 0
      %3992 = vmatprep.subr.bf16.mxu0 0
      %3993 = vmatpush1.bf16.msra.mxu0 0
      %3994 = vmatprep.subr.bf16.mxu0 0
      %3995 = vmatpush1.bf16.msra.mxu0 0
      %3996 = vmatprep.subr.bf16.mxu0 0
      %3997 = vmatpush1.bf16.msra.mxu0 0
      %3998 = vmatprep.subr.bf16.mxu0 0
      %3999 = vmatpush1.bf16.msra.mxu0 0
      %4000 = vmatprep.mubr.bf16.mxu0 0
      %4001 = vmatmul.mubr.bf16.gmra.mrb[0].mxu0 %v3921
      %v4002 = vpop.f32.mrb[0].mxu0
      %v4003 = vadd.f32 0.0, %v4002
      %v4004 = vpop.f32.mrb[0].mxu0
      %v4005 = vpop.f32.mrb[0].mxu0
      %v4006 = vadd.f32 0.0, %v4005
      %v4007 = vpop.f32.mrb[0].mxu0
      %4008 = vmatprep.mubr.bf16.mxu0 0
      %4009 = vmatmul.mubr.bf16.gmra.mrb[0].mxu0 %v3924
      %v4010 = vpop.f32.mrb[0].mxu0
      %v4011 = vadd.f32 0.0, %v4010
      %v4012 = vpop.f32.mrb[0].mxu0
      %v4013 = vpop.f32.mrb[0].mxu0
      %v4014 = vadd.f32 0.0, %v4013
      %v4015 = vpop.f32.mrb[0].mxu0
      %4016 = vmatprep.mubr.bf16.mxu0 0
      %4017 = vmatmul.mubr.bf16.gmra.mrb[0].mxu0 %v3927
      %v4018 = vpop.f32.mrb[0].mxu0
      %v4019 = vadd.f32 0.0, %v4018
      %v4020 = vpop.f32.mrb[0].mxu0
      %v4021 = vpop.f32.mrb[0].mxu0
      %v4022 = vadd.f32 0.0, %v4021
      %v4023 = vpop.f32.mrb[0].mxu0
      %4024 = vmatprep.mubr.bf16.mxu0 0
      %4025 = vmatmul.mubr.bf16.gmra.mrb[0].mxu0 %v3930
      %v4026 = vpop.f32.mrb[0].mxu0
      %v4027 = vadd.f32 0.0, %v4026
      %v4028 = vpop.f32.mrb[0].mxu0
      %v4029 = vpop.f32.mrb[0].mxu0
      %v4030 = vadd.f32 0.0, %v4029
      %v4031 = vpop.f32.mrb[0].mxu0
      %4032 = vmatprep.mubr.bf16.mxu0 0
      %4033 = vmatmul.mubr.bf16.gmra.mrb[0].mxu0 %v3933
      %v4034 = vpop.f32.mrb[0].mxu0
      %v4035 = vadd.f32 0.0, %v4034
      %v4036 = vpop.f32.mrb[0].mxu0
      %v4037 = vpop.f32.mrb[0].mxu0
      %v4038 = vadd.f32 0.0, %v4037
      %v4039 = vpop.f32.mrb[0].mxu0
      %4040 = vmatprep.mubr.bf16.mxu0 0
      %4041 = vmatmul.mubr.bf16.gmra.mrb[0].mxu0 %v3936
      %v4042 = vpop.f32.mrb[0].mxu0
      %v4043 = vadd.f32 0.0, %v4042
      %v4044 = vpop.f32.mrb[0].mxu0
      %v4045 = vpop.f32.mrb[0].mxu0
      %v4046 = vadd.f32 0.0, %v4045
      %v4047 = vpop.f32.mrb[0].mxu0
      %4048 = vmatprep.mubr.bf16.mxu0 0
      %4049 = vmatmul.mubr.bf16.gmra.mrb[0].mxu0 %v3939
      %v4050 = vpop.f32.mrb[0].mxu0
      %v4051 = vadd.f32 0.0, %v4050
      %v4052 = vpop.f32.mrb[0].mxu0
      %v4053 = vpop.f32.mrb[0].mxu0
      %v4054 = vadd.f32 0.0, %v4053
      %v4055 = vpop.f32.mrb[0].mxu0
      %4056 = vmatprep.mubr.bf16.mxu0 0
      %4057 = vmatmul.mubr.bf16.gmra.mrb[0].mxu0 %v3942
      %v4058 = vpop.f32.mrb[0].mxu0
      %v4059 = vadd.f32 0.0, %v4058
      %v4060 = vpop.f32.mrb[0].mxu0
      %v4061 = vpop.f32.mrb[0].mxu0
      %v4062 = vadd.f32 0.0, %v4061
      %v4063 = vpop.f32.mrb[0].mxu0
      %4064 = vmatprep.mubr.bf16.mxu0 0
      %4065 = vmatmul.mubr.bf16.gmra.mrb[0].mxu0 %v3945
      %v4066 = vpop.f32.mrb[0].mxu0
      %v4067 = vadd.f32 0.0, %v4066
      %v4068 = vpop.f32.mrb[0].mxu0
      %v4069 = vpop.f32.mrb[0].mxu0
      %v4070 = vadd.f32 0.0, %v4069
      %v4071 = vpop.f32.mrb[0].mxu0
      %4072 = vmatprep.mubr.bf16.mxu0 0
      %4073 = vmatmul.mubr.bf16.gmra.mrb[0].mxu0 %v3948
      %v4074 = vpop.f32.mrb[0].mxu0
      %v4075 = vadd.f32 0.0, %v4074
      %v4076 = vpop.f32.mrb[0].mxu0
      %v4077 = vpop.f32.mrb[0].mxu0
      %v4078 = vadd.f32 0.0, %v4077
      %v4079 = vpop.f32.mrb[0].mxu0
      %4080 = vmatprep.mubr.bf16.mxu0 0
      %4081 = vmatmul.mubr.bf16.gmra.mrb[0].mxu0 %v3951
      %v4082 = vpop.f32.mrb[0].mxu0
      %v4083 = vadd.f32 0.0, %v4082
      %v4084 = vpop.f32.mrb[0].mxu0
      %v4085 = vpop.f32.mrb[0].mxu0
      %v4086 = vadd.f32 0.0, %v4085
      %v4087 = vpop.f32.mrb[0].mxu0
      %4088 = vmatprep.mubr.bf16.mxu0 0
      %4089 = vmatmul.mubr.bf16.gmra.mrb[0].mxu0 %v3954
      %v4090 = vpop.f32.mrb[0].mxu0
      %v4091 = vadd.f32 0.0, %v4090
      %v4092 = vpop.f32.mrb[0].mxu0
      %v4093 = vpop.f32.mrb[0].mxu0
      %v4094 = vadd.f32 0.0, %v4093
      %v4095 = vpop.f32.mrb[0].mxu0
      %4096 = vmatprep.mubr.bf16.mxu0 0
      %4097 = vmatmul.mubr.bf16.gmra.mrb[0].mxu0 %v3957
      %v4098 = vpop.f32.mrb[0].mxu0
      %v4099 = vadd.f32 0.0, %v4098
      %v4100 = vpop.f32.mrb[0].mxu0
      %v4101 = vpop.f32.mrb[0].mxu0
      %v4102 = vadd.f32 0.0, %v4101
      %v4103 = vpop.f32.mrb[0].mxu0
      %4104 = vmatprep.mubr.bf16.mxu0 0
      %4105 = vmatmul.mubr.bf16.gmra.mrb[0].mxu0 %v3960
      %v4106 = vpop.f32.mrb[0].mxu0
      %v4107 = vadd.f32 0.0, %v4106
      %v4108 = vpop.f32.mrb[0].mxu0
      %v4109 = vpop.f32.mrb[0].mxu0
      %v4110 = vadd.f32 0.0, %v4109
      %v4111 = vpop.f32.mrb[0].mxu0
      %4112 = vmatprep.mubr.bf16.mxu0 0
      %4113 = vmatmul.mubr.bf16.gmra.mrb[0].mxu0 %v3963
      %v4114 = vpop.f32.mrb[0].mxu0
      %v4115 = vadd.f32 0.0, %v4114
      %v4116 = vpop.f32.mrb[0].mxu0
      %v4117 = vpop.f32.mrb[0].mxu0
      %v4118 = vadd.f32 0.0, %v4117
      %v4119 = vpop.f32.mrb[0].mxu0
      %4120 = vmatprep.mubr.bf16.mxu0 0
      %4121 = vmatmul.mubr.bf16.gmra.mrb[0].mxu0 %v3966
      %v4122 = vpop.f32.mrb[0].mxu0
      %v4123 = vadd.f32 0.0, %v4122
      %v4124 = vpop.f32.mrb[0].mxu0
      %v4125 = vpop.f32.mrb[0].mxu0
      %v4126 = vadd.f32 0.0, %v4125
      %v4127 = vpop.f32.mrb[0].mxu0
      %4128 = vdwg.mxu0
      %v4129 = vadd.f32 %v3631, %v4003
      %v4130 = vadd.f32 %v3632, %v4006
      %v4131 = vadd.f32 %v3633, %v4011
      %v4132 = vadd.f32 %v3634, %v4014
      %v4133 = vadd.f32 %v3635, %v4019
      %v4134 = vadd.f32 %v3636, %v4022
      %v4135 = vadd.f32 %v3637, %v4027
      %v4136 = vadd.f32 %v3638, %v4030
      %v4137 = vadd.f32 %v3639, %v4035
      %v4138 = vadd.f32 %v3640, %v4038
      %v4139 = vadd.f32 %v3641, %v4043
      %v4140 = vadd.f32 %v3642, %v4046
      %v4141 = vadd.f32 %v3643, %v4051
      %v4142 = vadd.f32 %v3644, %v4054
      %v4143 = vadd.f32 %v3645, %v4059
      %v4144 = vadd.f32 %v3646, %v4062
      %v4145 = vadd.f32 %v3647, %v4067
      %v4146 = vadd.f32 %v3648, %v4070
      %v4147 = vadd.f32 %v3649, %v4075
      %v4148 = vadd.f32 %v3650, %v4078
      %v4149 = vadd.f32 %v3651, %v4083
      %v4150 = vadd.f32 %v3652, %v4086
      %v4151 = vadd.f32 %v3653, %v4091
      %v4152 = vadd.f32 %v3654, %v4094
      %v4153 = vadd.f32 %v3655, %v4099
      %v4154 = vadd.f32 %v3656, %v4102
      %v4155 = vadd.f32 %v3657, %v4107
      %v4156 = vadd.f32 %v3658, %v4110
      %v4157 = vadd.f32 %v3659, %v4115
      %v4158 = vadd.f32 %v3660, %v4118
      %v4159 = vadd.f32 %v3661, %v4123
      %v4160 = vadd.f32 %v3662, %v4126
      %s4161 = scalar_lea.vmem [#allocation2], 24
      %v4162 = vld [vmem:[%s4161] sm:$0xf]
      %v4163 = vld [vmem:[%s4161 + $0x4] sm:$0xf]
      %v4164 = vld [vmem:[%s4161 + $0xc] sm:$0xf]
      %v4165 = vld [vmem:[%s4161 + $0x10] sm:$0xf]
      %v4166 = vld [vmem:[%s4161 + $0x18] sm:$0xf]
      %v4167 = vld [vmem:[%s4161 + $0x1c] sm:$0xf]
      %v4168 = vld [vmem:[%s4161 + $0x24] sm:$0xf]
      %v4169 = vld [vmem:[%s4161 + $0x28] sm:$0xf]
      %v4170 = vld [vmem:[%s4161 + $0x30] sm:$0xf]
      %v4171 = vld [vmem:[%s4161 + $0x34] sm:$0xf]
      %v4172 = vld [vmem:[%s4161 + $0x3c] sm:$0xf]
      %v4173 = vld [vmem:[%s4161 + $0x40] sm:$0xf]
      %v4174 = vld [vmem:[%s4161 + $0x48] sm:$0xf]
      %v4175 = vld [vmem:[%s4161 + $0x4c] sm:$0xf]
      %v4176 = vld [vmem:[%s4161 + $0x54] sm:$0xf]
      %v4177 = vld [vmem:[%s4161 + $0x58] sm:$0xf]
      %v4178 = vld [vmem:[%s4161 + $0x60] sm:$0xf]
      %v4179 = vld [vmem:[%s4161 + $0x64] sm:$0xf]
      %v4180 = vld [vmem:[%s4161 + $0x6c] sm:$0xf]
      %v4181 = vld [vmem:[%s4161 + $0x70] sm:$0xf]
      %v4182 = vld [vmem:[%s4161 + $0x78] sm:$0xf]
      %v4183 = vld [vmem:[%s4161 + $0x7c] sm:$0xf]
      %v4184 = vld [vmem:[%s4161 + $0x84] sm:$0xf]
      %v4185 = vld [vmem:[%s4161 + $0x88] sm:$0xf]
      %v4186 = vld [vmem:[%s4161 + $0x90] sm:$0xf]
      %v4187 = vld [vmem:[%s4161 + $0x94] sm:$0xf]
      %v4188 = vld [vmem:[%s4161 + $0x9c] sm:$0xf]
      %v4189 = vld [vmem:[%s4161 + $0xa0] sm:$0xf]
      %v4190 = vld [vmem:[%s4161 + $0xa8] sm:$0xf]
      %v4191 = vld [vmem:[%s4161 + $0xac] sm:$0xf]
      %v4192 = vld [vmem:[%s4161 + $0xb4] sm:$0xf]
      %v4193 = vld [vmem:[%s4161 + $0xb8] sm:$0xf]
      %s4194 = scalar_lea.vmem %s3, 192
      %v4195 = vld [vmem:[%s4194] sm:$0xf]
      %v4196 = vld [vmem:[%s4194 + $0x4] sm:$0xf]
      %v4197 = vld [vmem:[%s4194 + $0x8] sm:$0xf]
      %v4198 = vld [vmem:[%s4194 + $0xc] sm:$0xf]
      %v4199 = vld [vmem:[%s4194 + $0x10] sm:$0xf]
      %v4200 = vld [vmem:[%s4194 + $0x14] sm:$0xf]
      %v4201 = vld [vmem:[%s4194 + $0x18] sm:$0xf]
      %v4202 = vld [vmem:[%s4194 + $0x1c] sm:$0xf]
      %v4235 = vunpack.c.l.b16 %v4162
      %v4236 = vunpack.c.l.b16 %v4163
      %v4237 = vunpack.c.l.b16 %v4164
      %v4238 = vunpack.c.l.b16 %v4165
      %v4239 = vunpack.c.l.b16 %v4166
      %v4240 = vunpack.c.l.b16 %v4167
      %v4241 = vunpack.c.l.b16 %v4168
      %v4242 = vunpack.c.l.b16 %v4169
      %v4243 = vunpack.c.l.b16 %v4170
      %v4244 = vunpack.c.l.b16 %v4171
      %v4245 = vunpack.c.l.b16 %v4172
      %v4246 = vunpack.c.l.b16 %v4173
      %v4247 = vunpack.c.l.b16 %v4174
      %v4248 = vunpack.c.l.b16 %v4175
      %v4249 = vunpack.c.l.b16 %v4176
      %v4250 = vunpack.c.l.b16 %v4177
      %v4251 = vunpack.c.l.b16 %v4178
      %v4252 = vunpack.c.l.b16 %v4179
      %v4253 = vunpack.c.l.b16 %v4180
      %v4254 = vunpack.c.l.b16 %v4181
      %v4255 = vunpack.c.l.b16 %v4182
      %v4256 = vunpack.c.l.b16 %v4183
      %v4257 = vunpack.c.l.b16 %v4184
      %v4258 = vunpack.c.l.b16 %v4185
      %v4259 = vunpack.c.l.b16 %v4186
      %v4260 = vunpack.c.l.b16 %v4187
      %v4261 = vunpack.c.l.b16 %v4188
      %v4262 = vunpack.c.l.b16 %v4189
      %v4263 = vunpack.c.l.b16 %v4190
      %v4264 = vunpack.c.l.b16 %v4191
      %v4265 = vunpack.c.l.b16 %v4192
      %v4266 = vunpack.c.l.b16 %v4193
      %v4267 = vpack.c.b16 %v4236, %v4235
      %v4268 = vpack.c.b16 %v4238, %v4237
      %v4269 = vpack.c.b16 %v4240, %v4239
      %v4270 = vpack.c.b16 %v4242, %v4241
      %v4271 = vpack.c.b16 %v4244, %v4243
      %v4272 = vpack.c.b16 %v4246, %v4245
      %v4273 = vpack.c.b16 %v4248, %v4247
      %v4274 = vpack.c.b16 %v4250, %v4249
      %v4275 = vpack.c.b16 %v4252, %v4251
      %v4276 = vpack.c.b16 %v4254, %v4253
      %v4277 = vpack.c.b16 %v4256, %v4255
      %v4278 = vpack.c.b16 %v4258, %v4257
      %v4279 = vpack.c.b16 %v4260, %v4259
      %v4280 = vpack.c.b16 %v4262, %v4261
      %v4281 = vpack.c.b16 %v4264, %v4263
      %v4282 = vpack.c.b16 %v4266, %v4265
      %v4291 = vunpack.c.l.b16 %v4195
      %v4292 = vunpack.c.l.b16 %v4196
      %v4293 = vunpack.c.l.b16 %v4197
      %v4294 = vunpack.c.l.b16 %v4198
      %v4295 = vunpack.c.l.b16 %v4199
      %v4296 = vunpack.c.l.b16 %v4200
      %v4297 = vunpack.c.l.b16 %v4201
      %v4298 = vunpack.c.l.b16 %v4202
      %v4299 = vpack.c.b16 %v4292, %v4291
      %v4300 = vpack.c.b16 %v4294, %v4293
      %v4301 = vpack.c.b16 %v4296, %v4295
      %v4302 = vpack.c.b16 %v4298, %v4297
      %v4308 = vsel %vm1515, %v4267, 0
      %v4311 = vsel %vm1515, %v4268, 0
      %v4314 = vsel %vm1515, %v4269, 0
      %v4317 = vsel %vm1515, %v4270, 0
      %v4320 = vsel %vm1515, %v4271, 0
      %v4323 = vsel %vm1515, %v4272, 0
      %v4326 = vsel %vm1515, %v4273, 0
      %v4329 = vsel %vm1515, %v4274, 0
      %v4332 = vsel %vm1515, %v4275, 0
      %v4335 = vsel %vm1515, %v4276, 0
      %v4338 = vsel %vm1515, %v4277, 0
      %v4341 = vsel %vm1515, %v4278, 0
      %v4344 = vsel %vm1515, %v4279, 0
      %v4347 = vsel %vm1515, %v4280, 0
      %v4350 = vsel %vm1515, %v4281, 0
      %v4353 = vsel %vm1515, %v4282, 0
      %4355 = vmatprep.subr.bf16.mxu0 0
      %4356 = vmatpush1.bf16.msra.mxu0 %v4299
      %4357 = vmatprep.subr.bf16.mxu0 0
      %4358 = vmatpush1.bf16.msra.mxu0 %v4300
      %4359 = vmatprep.subr.bf16.mxu0 0
      %4360 = vmatpush1.bf16.msra.mxu0 %v4301
      %4361 = vmatprep.subr.bf16.mxu0 0
      %4362 = vmatpush1.bf16.msra.mxu0 %v4302
      %4363 = vmatprep.subr.bf16.mxu0 0
      %4364 = vmatpush1.bf16.msra.mxu0 0
      %4365 = vmatprep.subr.bf16.mxu0 0
      %4366 = vmatpush1.bf16.msra.mxu0 0
      %4367 = vmatprep.subr.bf16.mxu0 0
      %4368 = vmatpush1.bf16.msra.mxu0 0
      %4369 = vmatprep.subr.bf16.mxu0 0
      %4370 = vmatpush1.bf16.msra.mxu0 0
      %4371 = vmatprep.subr.bf16.mxu0 0
      %4372 = vmatpush1.bf16.msra.mxu0 0
      %4373 = vmatprep.subr.bf16.mxu0 0
      %4374 = vmatpush1.bf16.msra.mxu0 0
      %4375 = vmatprep.subr.bf16.mxu0 0
      %4376 = vmatpush1.bf16.msra.mxu0 0
      %4377 = vmatprep.subr.bf16.mxu0 0
      %4378 = vmatpush1.bf16.msra.mxu0 0
      %4379 = vmatprep.subr.bf16.mxu0 0
      %4380 = vmatpush1.bf16.msra.mxu0 0
      %4381 = vmatprep.subr.bf16.mxu0 0
      %4382 = vmatpush1.bf16.msra.mxu0 0
      %4383 = vmatprep.subr.bf16.mxu0 0
      %4384 = vmatpush1.bf16.msra.mxu0 0
      %4385 = vmatprep.subr.bf16.mxu0 0
      %4386 = vmatpush1.bf16.msra.mxu0 0
      %4387 = vmatprep.mubr.bf16.mxu0 0
      %4388 = vmatmul.mubr.bf16.gmra.mrb[0].mxu0 %v4308
      %v4389 = vpop.f32.mrb[0].mxu0
      %v4390 = vadd.f32 0.0, %v4389
      %v4391 = vpop.f32.mrb[0].mxu0
      %v4392 = vpop.f32.mrb[0].mxu0
      %v4393 = vadd.f32 0.0, %v4392
      %v4394 = vpop.f32.mrb[0].mxu0
      %4395 = vmatprep.mubr.bf16.mxu0 0
      %4396 = vmatmul.mubr.bf16.gmra.mrb[0].mxu0 %v4311
      %v4397 = vpop.f32.mrb[0].mxu0
      %v4398 = vadd.f32 0.0, %v4397
      %v4399 = vpop.f32.mrb[0].mxu0
      %v4400 = vpop.f32.mrb[0].mxu0
      %v4401 = vadd.f32 0.0, %v4400
      %v4402 = vpop.f32.mrb[0].mxu0
      %4403 = vmatprep.mubr.bf16.mxu0 0
      %4404 = vmatmul.mubr.bf16.gmra.mrb[0].mxu0 %v4314
      %v4405 = vpop.f32.mrb[0].mxu0
      %v4406 = vadd.f32 0.0, %v4405
      %v4407 = vpop.f32.mrb[0].mxu0
      %v4408 = vpop.f32.mrb[0].mxu0
      %v4409 = vadd.f32 0.0, %v4408
      %v4410 = vpop.f32.mrb[0].mxu0
      %4411 = vmatprep.mubr.bf16.mxu0 0
      %4412 = vmatmul.mubr.bf16.gmra.mrb[0].mxu0 %v4317
      %v4413 = vpop.f32.mrb[0].mxu0
      %v4414 = vadd.f32 0.0, %v4413
      %v4415 = vpop.f32.mrb[0].mxu0
      %v4416 = vpop.f32.mrb[0].mxu0
      %v4417 = vadd.f32 0.0, %v4416
      %v4418 = vpop.f32.mrb[0].mxu0
      %4419 = vmatprep.mubr.bf16.mxu0 0
      %4420 = vmatmul.mubr.bf16.gmra.mrb[0].mxu0 %v4320
      %v4421 = vpop.f32.mrb[0].mxu0
      %v4422 = vadd.f32 0.0, %v4421
      %v4423 = vpop.f32.mrb[0].mxu0
      %v4424 = vpop.f32.mrb[0].mxu0
      %v4425 = vadd.f32 0.0, %v4424
      %v4426 = vpop.f32.mrb[0].mxu0
      %4427 = vmatprep.mubr.bf16.mxu0 0
      %4428 = vmatmul.mubr.bf16.gmra.mrb[0].mxu0 %v4323
      %v4429 = vpop.f32.mrb[0].mxu0
      %v4430 = vadd.f32 0.0, %v4429
      %v4431 = vpop.f32.mrb[0].mxu0
      %v4432 = vpop.f32.mrb[0].mxu0
      %v4433 = vadd.f32 0.0, %v4432
      %v4434 = vpop.f32.mrb[0].mxu0
      %4435 = vmatprep.mubr.bf16.mxu0 0
      %4436 = vmatmul.mubr.bf16.gmra.mrb[0].mxu0 %v4326
      %v4437 = vpop.f32.mrb[0].mxu0
      %v4438 = vadd.f32 0.0, %v4437
      %v4439 = vpop.f32.mrb[0].mxu0
      %v4440 = vpop.f32.mrb[0].mxu0
      %v4441 = vadd.f32 0.0, %v4440
      %v4442 = vpop.f32.mrb[0].mxu0
      %4443 = vmatprep.mubr.bf16.mxu0 0
      %4444 = vmatmul.mubr.bf16.gmra.mrb[0].mxu0 %v4329
      %v4445 = vpop.f32.mrb[0].mxu0
      %v4446 = vadd.f32 0.0, %v4445
      %v4447 = vpop.f32.mrb[0].mxu0
      %v4448 = vpop.f32.mrb[0].mxu0
      %v4449 = vadd.f32 0.0, %v4448
      %v4450 = vpop.f32.mrb[0].mxu0
      %4451 = vmatprep.mubr.bf16.mxu0 0
      %4452 = vmatmul.mubr.bf16.gmra.mrb[0].mxu0 %v4332
      %v4453 = vpop.f32.mrb[0].mxu0
      %v4454 = vadd.f32 0.0, %v4453
      %v4455 = vpop.f32.mrb[0].mxu0
      %v4456 = vpop.f32.mrb[0].mxu0
      %v4457 = vadd.f32 0.0, %v4456
      %v4458 = vpop.f32.mrb[0].mxu0
      %4459 = vmatprep.mubr.bf16.mxu0 0
      %4460 = vmatmul.mubr.bf16.gmra.mrb[0].mxu0 %v4335
      %v4461 = vpop.f32.mrb[0].mxu0
      %v4462 = vadd.f32 0.0, %v4461
      %v4463 = vpop.f32.mrb[0].mxu0
      %v4464 = vpop.f32.mrb[0].mxu0
      %v4465 = vadd.f32 0.0, %v4464
      %v4466 = vpop.f32.mrb[0].mxu0
      %4467 = vmatprep.mubr.bf16.mxu0 0
      %4468 = vmatmul.mubr.bf16.gmra.mrb[0].mxu0 %v4338
      %v4469 = vpop.f32.mrb[0].mxu0
      %v4470 = vadd.f32 0.0, %v4469
      %v4471 = vpop.f32.mrb[0].mxu0
      %v4472 = vpop.f32.mrb[0].mxu0
      %v4473 = vadd.f32 0.0, %v4472
      %v4474 = vpop.f32.mrb[0].mxu0
      %4475 = vmatprep.mubr.bf16.mxu0 0
      %4476 = vmatmul.mubr.bf16.gmra.mrb[0].mxu0 %v4341
      %v4477 = vpop.f32.mrb[0].mxu0
      %v4478 = vadd.f32 0.0, %v4477
      %v4479 = vpop.f32.mrb[0].mxu0
      %v4480 = vpop.f32.mrb[0].mxu0
      %v4481 = vadd.f32 0.0, %v4480
      %v4482 = vpop.f32.mrb[0].mxu0
      %4483 = vmatprep.mubr.bf16.mxu0 0
      %4484 = vmatmul.mubr.bf16.gmra.mrb[0].mxu0 %v4344
      %v4485 = vpop.f32.mrb[0].mxu0
      %v4486 = vadd.f32 0.0, %v4485
      %v4487 = vpop.f32.mrb[0].mxu0
      %v4488 = vpop.f32.mrb[0].mxu0
      %v4489 = vadd.f32 0.0, %v4488
      %v4490 = vpop.f32.mrb[0].mxu0
      %4491 = vmatprep.mubr.bf16.mxu0 0
      %4492 = vmatmul.mubr.bf16.gmra.mrb[0].mxu0 %v4347
      %v4493 = vpop.f32.mrb[0].mxu0
      %v4494 = vadd.f32 0.0, %v4493
      %v4495 = vpop.f32.mrb[0].mxu0
      %v4496 = vpop.f32.mrb[0].mxu0
      %v4497 = vadd.f32 0.0, %v4496
      %v4498 = vpop.f32.mrb[0].mxu0
      %4499 = vmatprep.mubr.bf16.mxu0 0
      %4500 = vmatmul.mubr.bf16.gmra.mrb[0].mxu0 %v4350
      %v4501 = vpop.f32.mrb[0].mxu0
      %v4502 = vadd.f32 0.0, %v4501
      %v4503 = vpop.f32.mrb[0].mxu0
      %v4504 = vpop.f32.mrb[0].mxu0
      %v4505 = vadd.f32 0.0, %v4504
      %v4506 = vpop.f32.mrb[0].mxu0
      %4507 = vmatprep.mubr.bf16.mxu0 0
      %4508 = vmatmul.mubr.bf16.gmra.mrb[0].mxu0 %v4353
      %v4509 = vpop.f32.mrb[0].mxu0
      %v4510 = vadd.f32 0.0, %v4509
      %v4511 = vpop.f32.mrb[0].mxu0
      %v4512 = vpop.f32.mrb[0].mxu0
      %v4513 = vadd.f32 0.0, %v4512
      %v4514 = vpop.f32.mrb[0].mxu0
      %4515 = vdwg.mxu0
      %v4516 = vadd.f32 %v4129, %v4390
      %v4517 = vadd.f32 %v4130, %v4393
      %v4518 = vadd.f32 %v4131, %v4398
      %v4519 = vadd.f32 %v4132, %v4401
      %v4520 = vadd.f32 %v4133, %v4406
      %v4521 = vadd.f32 %v4134, %v4409
      %v4522 = vadd.f32 %v4135, %v4414
      %v4523 = vadd.f32 %v4136, %v4417
      %v4524 = vadd.f32 %v4137, %v4422
      %v4525 = vadd.f32 %v4138, %v4425
      %v4526 = vadd.f32 %v4139, %v4430
      %v4527 = vadd.f32 %v4140, %v4433
      %v4528 = vadd.f32 %v4141, %v4438
      %v4529 = vadd.f32 %v4142, %v4441
      %v4530 = vadd.f32 %v4143, %v4446
      %v4531 = vadd.f32 %v4144, %v4449
      %v4532 = vadd.f32 %v4145, %v4454
      %v4533 = vadd.f32 %v4146, %v4457
      %v4534 = vadd.f32 %v4147, %v4462
      %v4535 = vadd.f32 %v4148, %v4465
      %v4536 = vadd.f32 %v4149, %v4470
      %v4537 = vadd.f32 %v4150, %v4473
      %v4538 = vadd.f32 %v4151, %v4478
      %v4539 = vadd.f32 %v4152, %v4481
      %v4540 = vadd.f32 %v4153, %v4486
      %v4541 = vadd.f32 %v4154, %v4489
      %v4542 = vadd.f32 %v4155, %v4494
      %v4543 = vadd.f32 %v4156, %v4497
      %v4544 = vadd.f32 %v4157, %v4502
      %v4545 = vadd.f32 %v4158, %v4505
      %v4546 = vadd.f32 %v4159, %v4510
      %v4547 = vadd.f32 %v4160, %v4513
      %v4548 = vld [vmem:[%s4161] sm:$0xf]
      %v4549 = vld [vmem:[%s4161 + $0x4] sm:$0xf]
      %v4550 = vld [vmem:[%s4161 + $0x8] sm:$0x1]
      %v4551 = vld [vmem:[%s4161 + $0xc] sm:$0xf]
      %v4552 = vld [vmem:[%s4161 + $0x10] sm:$0xf]
      %v4553 = vld [vmem:[%s4161 + $0x14] sm:$0x1]
      %v4554 = vld [vmem:[%s4161 + $0x18] sm:$0xf]
      %v4555 = vld [vmem:[%s4161 + $0x1c] sm:$0xf]
      %v4556 = vld [vmem:[%s4161 + $0x20] sm:$0x1]
      %v4557 = vld [vmem:[%s4161 + $0x24] sm:$0xf]
      %v4558 = vld [vmem:[%s4161 + $0x28] sm:$0xf]
      %v4559 = vld [vmem:[%s4161 + $0x2c] sm:$0x1]
      %v4560 = vld [vmem:[%s4161 + $0x30] sm:$0xf]
      %v4561 = vld [vmem:[%s4161 + $0x34] sm:$0xf]
      %v4562 = vld [vmem:[%s4161 + $0x38] sm:$0x1]
      %v4563 = vld [vmem:[%s4161 + $0x3c] sm:$0xf]
      %v4564 = vld [vmem:[%s4161 + $0x40] sm:$0xf]
      %v4565 = vld [vmem:[%s4161 + $0x44] sm:$0x1]
      %v4566 = vld [vmem:[%s4161 + $0x48] sm:$0xf]
      %v4567 = vld [vmem:[%s4161 + $0x4c] sm:$0xf]
      %v4568 = vld [vmem:[%s4161 + $0x50] sm:$0x1]
      %v4569 = vld [vmem:[%s4161 + $0x54] sm:$0xf]
      %v4570 = vld [vmem:[%s4161 + $0x58] sm:$0xf]
      %v4571 = vld [vmem:[%s4161 + $0x5c] sm:$0x1]
      %v4572 = vld [vmem:[%s4161 + $0x60] sm:$0xf]
      %v4573 = vld [vmem:[%s4161 + $0x64] sm:$0xf]
      %v4574 = vld [vmem:[%s4161 + $0x68] sm:$0x1]
      %v4575 = vld [vmem:[%s4161 + $0x6c] sm:$0xf]
      %v4576 = vld [vmem:[%s4161 + $0x70] sm:$0xf]
      %v4577 = vld [vmem:[%s4161 + $0x74] sm:$0x1]
      %v4578 = vld [vmem:[%s4161 + $0x78] sm:$0xf]
      %v4579 = vld [vmem:[%s4161 + $0x7c] sm:$0xf]
      %v4580 = vld [vmem:[%s4161 + $0x80] sm:$0x1]
      %v4581 = vld [vmem:[%s4161 + $0x84] sm:$0xf]
      %v4582 = vld [vmem:[%s4161 + $0x88] sm:$0xf]
      %v4583 = vld [vmem:[%s4161 + $0x8c] sm:$0x1]
      %v4584 = vld [vmem:[%s4161 + $0x90] sm:$0xf]
      %v4585 = vld [vmem:[%s4161 + $0x94] sm:$0xf]
      %v4586 = vld [vmem:[%s4161 + $0x98] sm:$0x1]
      %v4587 = vld [vmem:[%s4161 + $0x9c] sm:$0xf]
      %v4588 = vld [vmem:[%s4161 + $0xa0] sm:$0xf]
      %v4589 = vld [vmem:[%s4161 + $0xa4] sm:$0x1]
      %v4590 = vld [vmem:[%s4161 + $0xa8] sm:$0xf]
      %v4591 = vld [vmem:[%s4161 + $0xac] sm:$0xf]
      %v4592 = vld [vmem:[%s4161 + $0xb0] sm:$0x1]
      %v4593 = vld [vmem:[%s4161 + $0xb4] sm:$0xf]
      %v4594 = vld [vmem:[%s4161 + $0xb8] sm:$0xf]
      %v4595 = vld [vmem:[%s4161 + $0xbc] sm:$0x1]
      %v4597 = vshrl.u32 %v4548, 16
      %v4599 = vrot.slane %v4597, 4
      %v4600 = vshll.u32 %v4548, 16
      %v4602 = vrot.slane %v4600, 5
      %v4603 = vor.u32 %v4599, %v4602
      %v4604 = vrot.slane %v4603, 4
      %v4606 = vshll.u32 %v4549, 16
      %v4608 = vrot.slane %v4606, 5
      %v4609 = vsel %vm1049, %v4604, %v4608
      %v4610 = vshrl.u32 %v4549, 16
      %v4612 = vrot.slane %v4610, 4
      %v4613 = vor.u32 %v4612, %v4608
      %v4614 = vrot.slane %v4613, 4
      %v4616 = vshll.u32 %v4550, 16
      %v4618 = vrot.slane %v4616, 5
      %v4619 = vsel %vm1049, %v4614, %v4618
      %v4621 = vshrl.u32 %v4551, 16
      %v4623 = vrot.slane %v4621, 4
      %v4624 = vshll.u32 %v4551, 16
      %v4626 = vrot.slane %v4624, 5
      %v4627 = vor.u32 %v4623, %v4626
      %v4628 = vrot.slane %v4627, 4
      %v4630 = vshll.u32 %v4552, 16
      %v4632 = vrot.slane %v4630, 5
      %v4633 = vsel %vm1049, %v4628, %v4632
      %v4634 = vshrl.u32 %v4552, 16
      %v4636 = vrot.slane %v4634, 4
      %v4637 = vor.u32 %v4636, %v4632
      %v4638 = vrot.slane %v4637, 4
      %v4640 = vshll.u32 %v4553, 16
      %v4642 = vrot.slane %v4640, 5
      %v4643 = vsel %vm1049, %v4638, %v4642
      %v4645 = vshrl.u32 %v4554, 16
      %v4647 = vrot.slane %v4645, 4
      %v4648 = vshll.u32 %v4554, 16
      %v4650 = vrot.slane %v4648, 5
      %v4651 = vor.u32 %v4647, %v4650
      %v4652 = vrot.slane %v4651, 4
      %v4654 = vshll.u32 %v4555, 16
      %v4656 = vrot.slane %v4654, 5
      %v4657 = vsel %vm1049, %v4652, %v4656
      %v4658 = vshrl.u32 %v4555, 16
      %v4660 = vrot.slane %v4658, 4
      %v4661 = vor.u32 %v4660, %v4656
      %v4662 = vrot.slane %v4661, 4
      %v4664 = vshll.u32 %v4556, 16
      %v4666 = vrot.slane %v4664, 5
      %v4667 = vsel %vm1049, %v4662, %v4666
      %v4669 = vshrl.u32 %v4557, 16
      %v4671 = vrot.slane %v4669, 4
      %v4672 = vshll.u32 %v4557, 16
      %v4674 = vrot.slane %v4672, 5
      %v4675 = vor.u32 %v4671, %v4674
      %v4676 = vrot.slane %v4675, 4
      %v4678 = vshll.u32 %v4558, 16
      %v4680 = vrot.slane %v4678, 5
      %v4681 = vsel %vm1049, %v4676, %v4680
      %v4682 = vshrl.u32 %v4558, 16
      %v4684 = vrot.slane %v4682, 4
      %v4685 = vor.u32 %v4684, %v4680
      %v4686 = vrot.slane %v4685, 4
      %v4688 = vshll.u32 %v4559, 16
      %v4690 = vrot.slane %v4688, 5
      %v4691 = vsel %vm1049, %v4686, %v4690
      %v4693 = vshrl.u32 %v4560, 16
      %v4695 = vrot.slane %v4693, 4
      %v4696 = vshll.u32 %v4560, 16
      %v4698 = vrot.slane %v4696, 5
      %v4699 = vor.u32 %v4695, %v4698
      %v4700 = vrot.slane %v4699, 4
      %v4702 = vshll.u32 %v4561, 16
      %v4704 = vrot.slane %v4702, 5
      %v4705 = vsel %vm1049, %v4700, %v4704
      %v4706 = vshrl.u32 %v4561, 16
      %v4708 = vrot.slane %v4706, 4
      %v4709 = vor.u32 %v4708, %v4704
      %v4710 = vrot.slane %v4709, 4
      %v4712 = vshll.u32 %v4562, 16
      %v4714 = vrot.slane %v4712, 5
      %v4715 = vsel %vm1049, %v4710, %v4714
      %v4717 = vshrl.u32 %v4563, 16
      %v4719 = vrot.slane %v4717, 4
      %v4720 = vshll.u32 %v4563, 16
      %v4722 = vrot.slane %v4720, 5
      %v4723 = vor.u32 %v4719, %v4722
      %v4724 = vrot.slane %v4723, 4
      %v4726 = vshll.u32 %v4564, 16
      %v4728 = vrot.slane %v4726, 5
      %v4729 = vsel %vm1049, %v4724, %v4728
      %v4730 = vshrl.u32 %v4564, 16
      %v4732 = vrot.slane %v4730, 4
      %v4733 = vor.u32 %v4732, %v4728
      %v4734 = vrot.slane %v4733, 4
      %v4736 = vshll.u32 %v4565, 16
      %v4738 = vrot.slane %v4736, 5
      %v4739 = vsel %vm1049, %v4734, %v4738
      %v4741 = vshrl.u32 %v4566, 16
      %v4743 = vrot.slane %v4741, 4
      %v4744 = vshll.u32 %v4566, 16
      %v4746 = vrot.slane %v4744, 5
      %v4747 = vor.u32 %v4743, %v4746
      %v4748 = vrot.slane %v4747, 4
      %v4750 = vshll.u32 %v4567, 16
      %v4752 = vrot.slane %v4750, 5
      %v4753 = vsel %vm1049, %v4748, %v4752
      %v4754 = vshrl.u32 %v4567, 16
      %v4756 = vrot.slane %v4754, 4
      %v4757 = vor.u32 %v4756, %v4752
      %v4758 = vrot.slane %v4757, 4
      %v4760 = vshll.u32 %v4568, 16
      %v4762 = vrot.slane %v4760, 5
      %v4763 = vsel %vm1049, %v4758, %v4762
      %v4765 = vshrl.u32 %v4569, 16
      %v4767 = vrot.slane %v4765, 4
      %v4768 = vshll.u32 %v4569, 16
      %v4770 = vrot.slane %v4768, 5
      %v4771 = vor.u32 %v4767, %v4770
      %v4772 = vrot.slane %v4771, 4
      %v4774 = vshll.u32 %v4570, 16
      %v4776 = vrot.slane %v4774, 5
      %v4777 = vsel %vm1049, %v4772, %v4776
      %v4778 = vshrl.u32 %v4570, 16
      %v4780 = vrot.slane %v4778, 4
      %v4781 = vor.u32 %v4780, %v4776
      %v4782 = vrot.slane %v4781, 4
      %v4784 = vshll.u32 %v4571, 16
      %v4786 = vrot.slane %v4784, 5
      %v4787 = vsel %vm1049, %v4782, %v4786
      %v4789 = vshrl.u32 %v4572, 16
      %v4791 = vrot.slane %v4789, 4
      %v4792 = vshll.u32 %v4572, 16
      %v4794 = vrot.slane %v4792, 5
      %v4795 = vor.u32 %v4791, %v4794
      %v4796 = vrot.slane %v4795, 4
      %v4798 = vshll.u32 %v4573, 16
      %v4800 = vrot.slane %v4798, 5
      %v4801 = vsel %vm1049, %v4796, %v4800
      %v4802 = vshrl.u32 %v4573, 16
      %v4804 = vrot.slane %v4802, 4
      %v4805 = vor.u32 %v4804, %v4800
      %v4806 = vrot.slane %v4805, 4
      %v4808 = vshll.u32 %v4574, 16
      %v4810 = vrot.slane %v4808, 5
      %v4811 = vsel %vm1049, %v4806, %v4810
      %v4813 = vshrl.u32 %v4575, 16
      %v4815 = vrot.slane %v4813, 4
      %v4816 = vshll.u32 %v4575, 16
      %v4818 = vrot.slane %v4816, 5
      %v4819 = vor.u32 %v4815, %v4818
      %v4820 = vrot.slane %v4819, 4
      %v4822 = vshll.u32 %v4576, 16
      %v4824 = vrot.slane %v4822, 5
      %v4825 = vsel %vm1049, %v4820, %v4824
      %v4826 = vshrl.u32 %v4576, 16
      %v4828 = vrot.slane %v4826, 4
      %v4829 = vor.u32 %v4828, %v4824
      %v4830 = vrot.slane %v4829, 4
      %v4832 = vshll.u32 %v4577, 16
      %v4834 = vrot.slane %v4832, 5
      %v4835 = vsel %vm1049, %v4830, %v4834
      %v4837 = vshrl.u32 %v4578, 16
      %v4839 = vrot.slane %v4837, 4
      %v4840 = vshll.u32 %v4578, 16
      %v4842 = vrot.slane %v4840, 5
      %v4843 = vor.u32 %v4839, %v4842
      %v4844 = vrot.slane %v4843, 4
      %v4846 = vshll.u32 %v4579, 16
      %v4848 = vrot.slane %v4846, 5
      %v4849 = vsel %vm1049, %v4844, %v4848
      %v4850 = vshrl.u32 %v4579, 16
      %v4852 = vrot.slane %v4850, 4
      %v4853 = vor.u32 %v4852, %v4848
      %v4854 = vrot.slane %v4853, 4
      %v4856 = vshll.u32 %v4580, 16
      %v4858 = vrot.slane %v4856, 5
      %v4859 = vsel %vm1049, %v4854, %v4858
      %v4861 = vshrl.u32 %v4581, 16
      %v4863 = vrot.slane %v4861, 4
      %v4864 = vshll.u32 %v4581, 16
      %v4866 = vrot.slane %v4864, 5
      %v4867 = vor.u32 %v4863, %v4866
      %v4868 = vrot.slane %v4867, 4
      %v4870 = vshll.u32 %v4582, 16
      %v4872 = vrot.slane %v4870, 5
      %v4873 = vsel %vm1049, %v4868, %v4872
      %v4874 = vshrl.u32 %v4582, 16
      %v4876 = vrot.slane %v4874, 4
      %v4877 = vor.u32 %v4876, %v4872
      %v4878 = vrot.slane %v4877, 4
      %v4880 = vshll.u32 %v4583, 16
      %v4882 = vrot.slane %v4880, 5
      %v4883 = vsel %vm1049, %v4878, %v4882
      %v4885 = vshrl.u32 %v4584, 16
      %v4887 = vrot.slane %v4885, 4
      %v4888 = vshll.u32 %v4584, 16
      %v4890 = vrot.slane %v4888, 5
      %v4891 = vor.u32 %v4887, %v4890
      %v4892 = vrot.slane %v4891, 4
      %v4894 = vshll.u32 %v4585, 16
      %v4896 = vrot.slane %v4894, 5
      %v4897 = vsel %vm1049, %v4892, %v4896
      %v4898 = vshrl.u32 %v4585, 16
      %v4900 = vrot.slane %v4898, 4
      %v4901 = vor.u32 %v4900, %v4896
      %v4902 = vrot.slane %v4901, 4
      %v4904 = vshll.u32 %v4586, 16
      %v4906 = vrot.slane %v4904, 5
      %v4907 = vsel %vm1049, %v4902, %v4906
      %v4909 = vshrl.u32 %v4587, 16
      %v4911 = vrot.slane %v4909, 4
      %v4912 = vshll.u32 %v4587, 16
      %v4914 = vrot.slane %v4912, 5
      %v4915 = vor.u32 %v4911, %v4914
      %v4916 = vrot.slane %v4915, 4
      %v4918 = vshll.u32 %v4588, 16
      %v4920 = vrot.slane %v4918, 5
      %v4921 = vsel %vm1049, %v4916, %v4920
      %v4922 = vshrl.u32 %v4588, 16
      %v4924 = vrot.slane %v4922, 4
      %v4925 = vor.u32 %v4924, %v4920
      %v4926 = vrot.slane %v4925, 4
      %v4928 = vshll.u32 %v4589, 16
      %v4930 = vrot.slane %v4928, 5
      %v4931 = vsel %vm1049, %v4926, %v4930
      %v4933 = vshrl.u32 %v4590, 16
      %v4935 = vrot.slane %v4933, 4
      %v4936 = vshll.u32 %v4590, 16
      %v4938 = vrot.slane %v4936, 5
      %v4939 = vor.u32 %v4935, %v4938
      %v4940 = vrot.slane %v4939, 4
      %v4942 = vshll.u32 %v4591, 16
      %v4944 = vrot.slane %v4942, 5
      %v4945 = vsel %vm1049, %v4940, %v4944
      %v4946 = vshrl.u32 %v4591, 16
      %v4948 = vrot.slane %v4946, 4
      %v4949 = vor.u32 %v4948, %v4944
      %v4950 = vrot.slane %v4949, 4
      %v4952 = vshll.u32 %v4592, 16
      %v4954 = vrot.slane %v4952, 5
      %v4955 = vsel %vm1049, %v4950, %v4954
      %v4957 = vshrl.u32 %v4593, 16
      %v4959 = vrot.slane %v4957, 4
      %v4960 = vshll.u32 %v4593, 16
      %v4962 = vrot.slane %v4960, 5
      %v4963 = vor.u32 %v4959, %v4962
      %v4964 = vrot.slane %v4963, 4
      %v4966 = vshll.u32 %v4594, 16
      %v4968 = vrot.slane %v4966, 5
      %v4969 = vsel %vm1049, %v4964, %v4968
      %v4970 = vshrl.u32 %v4594, 16
      %v4972 = vrot.slane %v4970, 4
      %v4973 = vor.u32 %v4972, %v4968
      %v4974 = vrot.slane %v4973, 4
      %v4976 = vshll.u32 %v4595, 16
      %v4978 = vrot.slane %v4976, 5
      %v4979 = vsel %vm1049, %v4974, %v4978
      %s4980 = scalar_lea.vmem %s3, 224
      %v4981 = vld [vmem:[%s4980] sm:$0xf]
      %v4982 = vld [vmem:[%s4980 + $0x4] sm:$0xf]
      %v4983 = vld [vmem:[%s4980 + $0x8] sm:$0xf]
      %v4984 = vld [vmem:[%s4980 + $0xc] sm:$0xf]
      %v4985 = vld [vmem:[%s4980 + $0x10] sm:$0xf]
      %v4986 = vld [vmem:[%s4980 + $0x14] sm:$0xf]
      %v4987 = vld [vmem:[%s4980 + $0x18] sm:$0xf]
      %v4988 = vld [vmem:[%s4980 + $0x1c] sm:$0xf]
      %v4989 = vunpack.c.l.b16 %v4609
      %v4990 = vunpack.c.l.b16 %v4619
      %v4991 = vunpack.c.l.b16 %v4633
      %v4992 = vunpack.c.l.b16 %v4643
      %v4993 = vunpack.c.l.b16 %v4657
      %v4994 = vunpack.c.l.b16 %v4667
      %v4995 = vunpack.c.l.b16 %v4681
      %v4996 = vunpack.c.l.b16 %v4691
      %v4997 = vunpack.c.l.b16 %v4705
      %v4998 = vunpack.c.l.b16 %v4715
      %v4999 = vunpack.c.l.b16 %v4729
      %v5000 = vunpack.c.l.b16 %v4739
      %v5001 = vunpack.c.l.b16 %v4753
      %v5002 = vunpack.c.l.b16 %v4763
      %v5003 = vunpack.c.l.b16 %v4777
      %v5004 = vunpack.c.l.b16 %v4787
      %v5005 = vunpack.c.l.b16 %v4801
      %v5006 = vunpack.c.l.b16 %v4811
      %v5007 = vunpack.c.l.b16 %v4825
      %v5008 = vunpack.c.l.b16 %v4835
      %v5009 = vunpack.c.l.b16 %v4849
      %v5010 = vunpack.c.l.b16 %v4859
      %v5011 = vunpack.c.l.b16 %v4873
      %v5012 = vunpack.c.l.b16 %v4883
      %v5013 = vunpack.c.l.b16 %v4897
      %v5014 = vunpack.c.l.b16 %v4907
      %v5015 = vunpack.c.l.b16 %v4921
      %v5016 = vunpack.c.l.b16 %v4931
      %v5017 = vunpack.c.l.b16 %v4945
      %v5018 = vunpack.c.l.b16 %v4955
      %v5019 = vunpack.c.l.b16 %v4969
      %v5020 = vunpack.c.l.b16 %v4979
      %v5021 = vpack.c.b16 %v4990, %v4989
      %v5022 = vpack.c.b16 %v4992, %v4991
      %v5023 = vpack.c.b16 %v4994, %v4993
      %v5024 = vpack.c.b16 %v4996, %v4995
      %v5025 = vpack.c.b16 %v4998, %v4997
      %v5026 = vpack.c.b16 %v5000, %v4999
      %v5027 = vpack.c.b16 %v5002, %v5001
      %v5028 = vpack.c.b16 %v5004, %v5003
      %v5029 = vpack.c.b16 %v5006, %v5005
      %v5030 = vpack.c.b16 %v5008, %v5007
      %v5031 = vpack.c.b16 %v5010, %v5009
      %v5032 = vpack.c.b16 %v5012, %v5011
      %v5033 = vpack.c.b16 %v5014, %v5013
      %v5034 = vpack.c.b16 %v5016, %v5015
      %v5035 = vpack.c.b16 %v5018, %v5017
      %v5036 = vpack.c.b16 %v5020, %v5019
      %v5045 = vunpack.c.l.b16 %v4981
      %v5046 = vunpack.c.l.b16 %v4982
      %v5047 = vunpack.c.l.b16 %v4983
      %v5048 = vunpack.c.l.b16 %v4984
      %v5049 = vunpack.c.l.b16 %v4985
      %v5050 = vunpack.c.l.b16 %v4986
      %v5051 = vunpack.c.l.b16 %v4987
      %v5052 = vunpack.c.l.b16 %v4988
      %v5053 = vpack.c.b16 %v5046, %v5045
      %v5054 = vpack.c.b16 %v5048, %v5047
      %v5055 = vpack.c.b16 %v5050, %v5049
      %v5056 = vpack.c.b16 %v5052, %v5051
      %v5062 = vsel %vm1515, %v5021, 0
      %v5065 = vsel %vm1515, %v5022, 0
      %v5068 = vsel %vm1515, %v5023, 0
      %v5071 = vsel %vm1515, %v5024, 0
      %v5074 = vsel %vm1515, %v5025, 0
      %v5077 = vsel %vm1515, %v5026, 0
      %v5080 = vsel %vm1515, %v5027, 0
      %v5083 = vsel %vm1515, %v5028, 0
      %v5086 = vsel %vm1515, %v5029, 0
      %v5089 = vsel %vm1515, %v5030, 0
      %v5092 = vsel %vm1515, %v5031, 0
      %v5095 = vsel %vm1515, %v5032, 0
      %v5098 = vsel %vm1515, %v5033, 0
      %v5101 = vsel %vm1515, %v5034, 0
      %v5104 = vsel %vm1515, %v5035, 0
      %v5107 = vsel %vm1515, %v5036, 0
      %5109 = vmatprep.subr.bf16.mxu0 0
      %5110 = vmatpush1.bf16.msra.mxu0 %v5053
      %5111 = vmatprep.subr.bf16.mxu0 0
      %5112 = vmatpush1.bf16.msra.mxu0 %v5054
      %5113 = vmatprep.subr.bf16.mxu0 0
      %5114 = vmatpush1.bf16.msra.mxu0 %v5055
      %5115 = vmatprep.subr.bf16.mxu0 0
      %5116 = vmatpush1.bf16.msra.mxu0 %v5056
      %5117 = vmatprep.subr.bf16.mxu0 0
      %5118 = vmatpush1.bf16.msra.mxu0 0
      %5119 = vmatprep.subr.bf16.mxu0 0
      %5120 = vmatpush1.bf16.msra.mxu0 0
      %5121 = vmatprep.subr.bf16.mxu0 0
      %5122 = vmatpush1.bf16.msra.mxu0 0
      %5123 = vmatprep.subr.bf16.mxu0 0
      %5124 = vmatpush1.bf16.msra.mxu0 0
      %5125 = vmatprep.subr.bf16.mxu0 0
      %5126 = vmatpush1.bf16.msra.mxu0 0
      %5127 = vmatprep.subr.bf16.mxu0 0
      %5128 = vmatpush1.bf16.msra.mxu0 0
      %5129 = vmatprep.subr.bf16.mxu0 0
      %5130 = vmatpush1.bf16.msra.mxu0 0
      %5131 = vmatprep.subr.bf16.mxu0 0
      %5132 = vmatpush1.bf16.msra.mxu0 0
      %5133 = vmatprep.subr.bf16.mxu0 0
      %5134 = vmatpush1.bf16.msra.mxu0 0
      %5135 = vmatprep.subr.bf16.mxu0 0
      %5136 = vmatpush1.bf16.msra.mxu0 0
      %5137 = vmatprep.subr.bf16.mxu0 0
      %5138 = vmatpush1.bf16.msra.mxu0 0
      %5139 = vmatprep.subr.bf16.mxu0 0
      %5140 = vmatpush1.bf16.msra.mxu0 0
      %5141 = vmatprep.mubr.bf16.mxu0 0
      %5142 = vmatmul.mubr.bf16.gmra.mrb[0].mxu0 %v5062
      %v5143 = vpop.f32.mrb[0].mxu0
      %v5144 = vadd.f32 0.0, %v5143
      %v5145 = vpop.f32.mrb[0].mxu0
      %v5146 = vpop.f32.mrb[0].mxu0
      %v5147 = vadd.f32 0.0, %v5146
      %v5148 = vpop.f32.mrb[0].mxu0
      %5149 = vmatprep.mubr.bf16.mxu0 0
      %5150 = vmatmul.mubr.bf16.gmra.mrb[0].mxu0 %v5065
      %v5151 = vpop.f32.mrb[0].mxu0
      %v5152 = vadd.f32 0.0, %v5151
      %v5153 = vpop.f32.mrb[0].mxu0
      %v5154 = vpop.f32.mrb[0].mxu0
      %v5155 = vadd.f32 0.0, %v5154
      %v5156 = vpop.f32.mrb[0].mxu0
      %5157 = vmatprep.mubr.bf16.mxu0 0
      %5158 = vmatmul.mubr.bf16.gmra.mrb[0].mxu0 %v5068
      %v5159 = vpop.f32.mrb[0].mxu0
      %v5160 = vadd.f32 0.0, %v5159
      %v5161 = vpop.f32.mrb[0].mxu0
      %v5162 = vpop.f32.mrb[0].mxu0
      %v5163 = vadd.f32 0.0, %v5162
      %v5164 = vpop.f32.mrb[0].mxu0
      %5165 = vmatprep.mubr.bf16.mxu0 0
      %5166 = vmatmul.mubr.bf16.gmra.mrb[0].mxu0 %v5071
      %v5167 = vpop.f32.mrb[0].mxu0
      %v5168 = vadd.f32 0.0, %v5167
      %v5169 = vpop.f32.mrb[0].mxu0
      %v5170 = vpop.f32.mrb[0].mxu0
      %v5171 = vadd.f32 0.0, %v5170
      %v5172 = vpop.f32.mrb[0].mxu0
      %5173 = vmatprep.mubr.bf16.mxu0 0
      %5174 = vmatmul.mubr.bf16.gmra.mrb[0].mxu0 %v5074
      %v5175 = vpop.f32.mrb[0].mxu0
      %v5176 = vadd.f32 0.0, %v5175
      %v5177 = vpop.f32.mrb[0].mxu0
      %v5178 = vpop.f32.mrb[0].mxu0
      %v5179 = vadd.f32 0.0, %v5178
      %v5180 = vpop.f32.mrb[0].mxu0
      %5181 = vmatprep.mubr.bf16.mxu0 0
      %5182 = vmatmul.mubr.bf16.gmra.mrb[0].mxu0 %v5077
      %v5183 = vpop.f32.mrb[0].mxu0
      %v5184 = vadd.f32 0.0, %v5183
      %v5185 = vpop.f32.mrb[0].mxu0
      %v5186 = vpop.f32.mrb[0].mxu0
      %v5187 = vadd.f32 0.0, %v5186
      %v5188 = vpop.f32.mrb[0].mxu0
      %5189 = vmatprep.mubr.bf16.mxu0 0
      %5190 = vmatmul.mubr.bf16.gmra.mrb[0].mxu0 %v5080
      %v5191 = vpop.f32.mrb[0].mxu0
      %v5192 = vadd.f32 0.0, %v5191
      %v5193 = vpop.f32.mrb[0].mxu0
      %v5194 = vpop.f32.mrb[0].mxu0
      %v5195 = vadd.f32 0.0, %v5194
      %v5196 = vpop.f32.mrb[0].mxu0
      %5197 = vmatprep.mubr.bf16.mxu0 0
      %5198 = vmatmul.mubr.bf16.gmra.mrb[0].mxu0 %v5083
      %v5199 = vpop.f32.mrb[0].mxu0
      %v5200 = vadd.f32 0.0, %v5199
      %v5201 = vpop.f32.mrb[0].mxu0
      %v5202 = vpop.f32.mrb[0].mxu0
      %v5203 = vadd.f32 0.0, %v5202
      %v5204 = vpop.f32.mrb[0].mxu0
      %5205 = vmatprep.mubr.bf16.mxu0 0
      %5206 = vmatmul.mubr.bf16.gmra.mrb[0].mxu0 %v5086
      %v5207 = vpop.f32.mrb[0].mxu0
      %v5208 = vadd.f32 0.0, %v5207
      %v5209 = vpop.f32.mrb[0].mxu0
      %v5210 = vpop.f32.mrb[0].mxu0
      %v5211 = vadd.f32 0.0, %v5210
      %v5212 = vpop.f32.mrb[0].mxu0
      %5213 = vmatprep.mubr.bf16.mxu0 0
      %5214 = vmatmul.mubr.bf16.gmra.mrb[0].mxu0 %v5089
      %v5215 = vpop.f32.mrb[0].mxu0
      %v5216 = vadd.f32 0.0, %v5215
      %v5217 = vpop.f32.mrb[0].mxu0
      %v5218 = vpop.f32.mrb[0].mxu0
      %v5219 = vadd.f32 0.0, %v5218
      %v5220 = vpop.f32.mrb[0].mxu0
      %5221 = vmatprep.mubr.bf16.mxu0 0
      %5222 = vmatmul.mubr.bf16.gmra.mrb[0].mxu0 %v5092
      %v5223 = vpop.f32.mrb[0].mxu0
      %v5224 = vadd.f32 0.0, %v5223
      %v5225 = vpop.f32.mrb[0].mxu0
      %v5226 = vpop.f32.mrb[0].mxu0
      %v5227 = vadd.f32 0.0, %v5226
      %v5228 = vpop.f32.mrb[0].mxu0
      %5229 = vmatprep.mubr.bf16.mxu0 0
      %5230 = vmatmul.mubr.bf16.gmra.mrb[0].mxu0 %v5095
      %v5231 = vpop.f32.mrb[0].mxu0
      %v5232 = vadd.f32 0.0, %v5231
      %v5233 = vpop.f32.mrb[0].mxu0
      %v5234 = vpop.f32.mrb[0].mxu0
      %v5235 = vadd.f32 0.0, %v5234
      %v5236 = vpop.f32.mrb[0].mxu0
      %5237 = vmatprep.mubr.bf16.mxu0 0
      %5238 = vmatmul.mubr.bf16.gmra.mrb[0].mxu0 %v5098
      %v5239 = vpop.f32.mrb[0].mxu0
      %v5240 = vadd.f32 0.0, %v5239
      %v5241 = vpop.f32.mrb[0].mxu0
      %v5242 = vpop.f32.mrb[0].mxu0
      %v5243 = vadd.f32 0.0, %v5242
      %v5244 = vpop.f32.mrb[0].mxu0
      %5245 = vmatprep.mubr.bf16.mxu0 0
      %5246 = vmatmul.mubr.bf16.gmra.mrb[0].mxu0 %v5101
      %v5247 = vpop.f32.mrb[0].mxu0
      %v5248 = vadd.f32 0.0, %v5247
      %v5249 = vpop.f32.mrb[0].mxu0
      %v5250 = vpop.f32.mrb[0].mxu0
      %v5251 = vadd.f32 0.0, %v5250
      %v5252 = vpop.f32.mrb[0].mxu0
      %5253 = vmatprep.mubr.bf16.mxu0 0
      %5254 = vmatmul.mubr.bf16.gmra.mrb[0].mxu0 %v5104
      %v5255 = vpop.f32.mrb[0].mxu0
      %v5256 = vadd.f32 0.0, %v5255
      %v5257 = vpop.f32.mrb[0].mxu0
      %v5258 = vpop.f32.mrb[0].mxu0
      %v5259 = vadd.f32 0.0, %v5258
      %v5260 = vpop.f32.mrb[0].mxu0
      %5261 = vmatprep.mubr.bf16.mxu0 0
      %5262 = vmatmul.mubr.bf16.gmra.mrb[0].mxu0 %v5107
      %v5263 = vpop.f32.mrb[0].mxu0
      %v5264 = vadd.f32 0.0, %v5263
      %v5265 = vpop.f32.mrb[0].mxu0
      %v5266 = vpop.f32.mrb[0].mxu0
      %v5267 = vadd.f32 0.0, %v5266
      %v5268 = vpop.f32.mrb[0].mxu0
      %5269 = vdwg.mxu0
      %v5270 = vadd.f32 %v4516, %v5144
      %v5271 = vadd.f32 %v4517, %v5147
      %v5272 = vadd.f32 %v4518, %v5152
      %v5273 = vadd.f32 %v4519, %v5155
      %v5274 = vadd.f32 %v4520, %v5160
      %v5275 = vadd.f32 %v4521, %v5163
      %v5276 = vadd.f32 %v4522, %v5168
      %v5277 = vadd.f32 %v4523, %v5171
      %v5278 = vadd.f32 %v4524, %v5176
      %v5279 = vadd.f32 %v4525, %v5179
      %v5280 = vadd.f32 %v4526, %v5184
      %v5281 = vadd.f32 %v4527, %v5187
      %v5282 = vadd.f32 %v4528, %v5192
      %v5283 = vadd.f32 %v4529, %v5195
      %v5284 = vadd.f32 %v4530, %v5200
      %v5285 = vadd.f32 %v4531, %v5203
      %v5286 = vadd.f32 %v4532, %v5208
      %v5287 = vadd.f32 %v4533, %v5211
      %v5288 = vadd.f32 %v4534, %v5216
      %v5289 = vadd.f32 %v4535, %v5219
      %v5290 = vadd.f32 %v4536, %v5224
      %v5291 = vadd.f32 %v4537, %v5227
      %v5292 = vadd.f32 %v4538, %v5232
      %v5293 = vadd.f32 %v4539, %v5235
      %v5294 = vadd.f32 %v4540, %v5240
      %v5295 = vadd.f32 %v4541, %v5243
      %v5296 = vadd.f32 %v4542, %v5248
      %v5297 = vadd.f32 %v4543, %v5251
      %v5298 = vadd.f32 %v4544, %v5256
      %v5299 = vadd.f32 %v4545, %v5259
      %v5300 = vadd.f32 %v4546, %v5264
      %v5301 = vadd.f32 %v4547, %v5267
      %v5302 = vld [vmem:[%s4161] sm:$0xe]
      %v5303 = vld [vmem:[%s4161 + $0xc] sm:$0xe]
      %v5304 = vld [vmem:[%s4161 + $0x18] sm:$0xe]
      %v5305 = vld [vmem:[%s4161 + $0x24] sm:$0xe]
      %v5306 = vld [vmem:[%s4161 + $0x30] sm:$0xe]
      %v5307 = vld [vmem:[%s4161 + $0x3c] sm:$0xe]
      %v5308 = vld [vmem:[%s4161 + $0x48] sm:$0xe]
      %v5309 = vld [vmem:[%s4161 + $0x54] sm:$0xe]
      %v5310 = vld [vmem:[%s4161 + $0x60] sm:$0xe]
      %v5311 = vld [vmem:[%s4161 + $0x6c] sm:$0xe]
      %v5312 = vld [vmem:[%s4161 + $0x78] sm:$0xe]
      %v5313 = vld [vmem:[%s4161 + $0x84] sm:$0xe]
      %v5314 = vld [vmem:[%s4161 + $0x90] sm:$0xe]
      %v5315 = vld [vmem:[%s4161 + $0x9c] sm:$0xe]
      %v5316 = vld [vmem:[%s4161 + $0xa8] sm:$0xe]
      %v5317 = vld [vmem:[%s4161 + $0xb4] sm:$0xe]
      %v5366 = vrot.slane %v5302, 5
      %v5367 = vrot.slane %v5366, 4
      %v5368 = vrot.slane %v4549, 5
      %v5369 = vsel %vm2088, %v5367, %v5368
      %v5370 = vrot.slane %v5368, 4
      %v5371 = vrot.slane %v4550, 5
      %v5372 = vsel %vm2088, %v5370, %v5371
      %v5373 = vrot.slane %v5303, 5
      %v5374 = vrot.slane %v5373, 4
      %v5375 = vrot.slane %v4552, 5
      %v5376 = vsel %vm2088, %v5374, %v5375
      %v5377 = vrot.slane %v5375, 4
      %v5378 = vrot.slane %v4553, 5
      %v5379 = vsel %vm2088, %v5377, %v5378
      %v5380 = vrot.slane %v5304, 5
      %v5381 = vrot.slane %v5380, 4
      %v5382 = vrot.slane %v4555, 5
      %v5383 = vsel %vm2088, %v5381, %v5382
      %v5384 = vrot.slane %v5382, 4
      %v5385 = vrot.slane %v4556, 5
      %v5386 = vsel %vm2088, %v5384, %v5385
      %v5387 = vrot.slane %v5305, 5
      %v5388 = vrot.slane %v5387, 4
      %v5389 = vrot.slane %v4558, 5
      %v5390 = vsel %vm2088, %v5388, %v5389
      %v5391 = vrot.slane %v5389, 4
      %v5392 = vrot.slane %v4559, 5
      %v5393 = vsel %vm2088, %v5391, %v5392
      %v5394 = vrot.slane %v5306, 5
      %v5395 = vrot.slane %v5394, 4
      %v5396 = vrot.slane %v4561, 5
      %v5397 = vsel %vm2088, %v5395, %v5396
      %v5398 = vrot.slane %v5396, 4
      %v5399 = vrot.slane %v4562, 5
      %v5400 = vsel %vm2088, %v5398, %v5399
      %v5401 = vrot.slane %v5307, 5
      %v5402 = vrot.slane %v5401, 4
      %v5403 = vrot.slane %v4564, 5
      %v5404 = vsel %vm2088, %v5402, %v5403
      %v5405 = vrot.slane %v5403, 4
      %v5406 = vrot.slane %v4565, 5
      %v5407 = vsel %vm2088, %v5405, %v5406
      %v5408 = vrot.slane %v5308, 5
      %v5409 = vrot.slane %v5408, 4
      %v5410 = vrot.slane %v4567, 5
      %v5411 = vsel %vm2088, %v5409, %v5410
      %v5412 = vrot.slane %v5410, 4
      %v5413 = vrot.slane %v4568, 5
      %v5414 = vsel %vm2088, %v5412, %v5413
      %v5415 = vrot.slane %v5309, 5
      %v5416 = vrot.slane %v5415, 4
      %v5417 = vrot.slane %v4570, 5
      %v5418 = vsel %vm2088, %v5416, %v5417
      %v5419 = vrot.slane %v5417, 4
      %v5420 = vrot.slane %v4571, 5
      %v5421 = vsel %vm2088, %v5419, %v5420
      %v5422 = vrot.slane %v5310, 5
      %v5423 = vrot.slane %v5422, 4
      %v5424 = vrot.slane %v4573, 5
      %v5425 = vsel %vm2088, %v5423, %v5424
      %v5426 = vrot.slane %v5424, 4
      %v5427 = vrot.slane %v4574, 5
      %v5428 = vsel %vm2088, %v5426, %v5427
      %v5429 = vrot.slane %v5311, 5
      %v5430 = vrot.slane %v5429, 4
      %v5431 = vrot.slane %v4576, 5
      %v5432 = vsel %vm2088, %v5430, %v5431
      %v5433 = vrot.slane %v5431, 4
      %v5434 = vrot.slane %v4577, 5
      %v5435 = vsel %vm2088, %v5433, %v5434
      %v5436 = vrot.slane %v5312, 5
      %v5437 = vrot.slane %v5436, 4
      %v5438 = vrot.slane %v4579, 5
      %v5439 = vsel %vm2088, %v5437, %v5438
      %v5440 = vrot.slane %v5438, 4
      %v5441 = vrot.slane %v4580, 5
      %v5442 = vsel %vm2088, %v5440, %v5441
      %v5443 = vrot.slane %v5313, 5
      %v5444 = vrot.slane %v5443, 4
      %v5445 = vrot.slane %v4582, 5
      %v5446 = vsel %vm2088, %v5444, %v5445
      %v5447 = vrot.slane %v5445, 4
      %v5448 = vrot.slane %v4583, 5
      %v5449 = vsel %vm2088, %v5447, %v5448
      %v5450 = vrot.slane %v5314, 5
      %v5451 = vrot.slane %v5450, 4
      %v5452 = vrot.slane %v4585, 5
      %v5453 = vsel %vm2088, %v5451, %v5452
      %v5454 = vrot.slane %v5452, 4
      %v5455 = vrot.slane %v4586, 5
      %v5456 = vsel %vm2088, %v5454, %v5455
      %v5457 = vrot.slane %v5315, 5
      %v5458 = vrot.slane %v5457, 4
      %v5459 = vrot.slane %v4588, 5
      %v5460 = vsel %vm2088, %v5458, %v5459
      %v5461 = vrot.slane %v5459, 4
      %v5462 = vrot.slane %v4589, 5
      %v5463 = vsel %vm2088, %v5461, %v5462
      %v5464 = vrot.slane %v5316, 5
      %v5465 = vrot.slane %v5464, 4
      %v5466 = vrot.slane %v4591, 5
      %v5467 = vsel %vm2088, %v5465, %v5466
      %v5468 = vrot.slane %v5466, 4
      %v5469 = vrot.slane %v4592, 5
      %v5470 = vsel %vm2088, %v5468, %v5469
      %v5471 = vrot.slane %v5317, 5
      %v5472 = vrot.slane %v5471, 4
      %v5473 = vrot.slane %v4594, 5
      %v5474 = vsel %vm2088, %v5472, %v5473
      %v5475 = vrot.slane %v5473, 4
      %v5476 = vrot.slane %v4595, 5
      %v5477 = vsel %vm2088, %v5475, %v5476
      %s5478 = scalar_lea.vmem %s3, 256
      %v5479 = vld [vmem:[%s5478] sm:$0xf]
      %v5480 = vld [vmem:[%s5478 + $0x4] sm:$0xf]
      %v5481 = vld [vmem:[%s5478 + $0x8] sm:$0xf]
      %v5482 = vld [vmem:[%s5478 + $0xc] sm:$0xf]
      %v5483 = vld [vmem:[%s5478 + $0x10] sm:$0xf]
      %v5484 = vld [vmem:[%s5478 + $0x14] sm:$0xf]
      %v5485 = vld [vmem:[%s5478 + $0x18] sm:$0xf]
      %v5486 = vld [vmem:[%s5478 + $0x1c] sm:$0xf]
      %v5487 = vunpack.c.l.b16 %v5369
      %v5488 = vunpack.c.l.b16 %v5372
      %v5489 = vunpack.c.l.b16 %v5376
      %v5490 = vunpack.c.l.b16 %v5379
      %v5491 = vunpack.c.l.b16 %v5383
      %v5492 = vunpack.c.l.b16 %v5386
      %v5493 = vunpack.c.l.b16 %v5390
      %v5494 = vunpack.c.l.b16 %v5393
      %v5495 = vunpack.c.l.b16 %v5397
      %v5496 = vunpack.c.l.b16 %v5400
      %v5497 = vunpack.c.l.b16 %v5404
      %v5498 = vunpack.c.l.b16 %v5407
      %v5499 = vunpack.c.l.b16 %v5411
      %v5500 = vunpack.c.l.b16 %v5414
      %v5501 = vunpack.c.l.b16 %v5418
      %v5502 = vunpack.c.l.b16 %v5421
      %v5503 = vunpack.c.l.b16 %v5425
      %v5504 = vunpack.c.l.b16 %v5428
      %v5505 = vunpack.c.l.b16 %v5432
      %v5506 = vunpack.c.l.b16 %v5435
      %v5507 = vunpack.c.l.b16 %v5439
      %v5508 = vunpack.c.l.b16 %v5442
      %v5509 = vunpack.c.l.b16 %v5446
      %v5510 = vunpack.c.l.b16 %v5449
      %v5511 = vunpack.c.l.b16 %v5453
      %v5512 = vunpack.c.l.b16 %v5456
      %v5513 = vunpack.c.l.b16 %v5460
      %v5514 = vunpack.c.l.b16 %v5463
      %v5515 = vunpack.c.l.b16 %v5467
      %v5516 = vunpack.c.l.b16 %v5470
      %v5517 = vunpack.c.l.b16 %v5474
      %v5518 = vunpack.c.l.b16 %v5477
      %v5519 = vpack.c.b16 %v5488, %v5487
      %v5520 = vpack.c.b16 %v5490, %v5489
      %v5521 = vpack.c.b16 %v5492, %v5491
      %v5522 = vpack.c.b16 %v5494, %v5493
      %v5523 = vpack.c.b16 %v5496, %v5495
      %v5524 = vpack.c.b16 %v5498, %v5497
      %v5525 = vpack.c.b16 %v5500, %v5499
      %v5526 = vpack.c.b16 %v5502, %v5501
      %v5527 = vpack.c.b16 %v5504, %v5503
      %v5528 = vpack.c.b16 %v5506, %v5505
      %v5529 = vpack.c.b16 %v5508, %v5507
      %v5530 = vpack.c.b16 %v5510, %v5509
      %v5531 = vpack.c.b16 %v5512, %v5511
      %v5532 = vpack.c.b16 %v5514, %v5513
      %v5533 = vpack.c.b16 %v5516, %v5515
      %v5534 = vpack.c.b16 %v5518, %v5517
      %v5543 = vunpack.c.l.b16 %v5479
      %v5544 = vunpack.c.l.b16 %v5480
      %v5545 = vunpack.c.l.b16 %v5481
      %v5546 = vunpack.c.l.b16 %v5482
      %v5547 = vunpack.c.l.b16 %v5483
      %v5548 = vunpack.c.l.b16 %v5484
      %v5549 = vunpack.c.l.b16 %v5485
      %v5550 = vunpack.c.l.b16 %v5486
      %v5551 = vpack.c.b16 %v5544, %v5543
      %v5552 = vpack.c.b16 %v5546, %v5545
      %v5553 = vpack.c.b16 %v5548, %v5547
      %v5554 = vpack.c.b16 %v5550, %v5549
      %v5560 = vsel %vm1515, %v5519, 0
      %v5563 = vsel %vm1515, %v5520, 0
      %v5566 = vsel %vm1515, %v5521, 0
      %v5569 = vsel %vm1515, %v5522, 0
      %v5572 = vsel %vm1515, %v5523, 0
      %v5575 = vsel %vm1515, %v5524, 0
      %v5578 = vsel %vm1515, %v5525, 0
      %v5581 = vsel %vm1515, %v5526, 0
      %v5584 = vsel %vm1515, %v5527, 0
      %v5587 = vsel %vm1515, %v5528, 0
      %v5590 = vsel %vm1515, %v5529, 0
      %v5593 = vsel %vm1515, %v5530, 0
      %v5596 = vsel %vm1515, %v5531, 0
      %v5599 = vsel %vm1515, %v5532, 0
      %v5602 = vsel %vm1515, %v5533, 0
      %v5605 = vsel %vm1515, %v5534, 0
      %5607 = vmatprep.subr.bf16.mxu0 0
      %5608 = vmatpush1.bf16.msra.mxu0 %v5551
      %5609 = vmatprep.subr.bf16.mxu0 0
      %5610 = vmatpush1.bf16.msra.mxu0 %v5552
      %5611 = vmatprep.subr.bf16.mxu0 0
      %5612 = vmatpush1.bf16.msra.mxu0 %v5553
      %5613 = vmatprep.subr.bf16.mxu0 0
      %5614 = vmatpush1.bf16.msra.mxu0 %v5554
      %5615 = vmatprep.subr.bf16.mxu0 0
      %5616 = vmatpush1.bf16.msra.mxu0 0
      %5617 = vmatprep.subr.bf16.mxu0 0
      %5618 = vmatpush1.bf16.msra.mxu0 0
      %5619 = vmatprep.subr.bf16.mxu0 0
      %5620 = vmatpush1.bf16.msra.mxu0 0
      %5621 = vmatprep.subr.bf16.mxu0 0
      %5622 = vmatpush1.bf16.msra.mxu0 0
      %5623 = vmatprep.subr.bf16.mxu0 0
      %5624 = vmatpush1.bf16.msra.mxu0 0
      %5625 = vmatprep.subr.bf16.mxu0 0
      %5626 = vmatpush1.bf16.msra.mxu0 0
      %5627 = vmatprep.subr.bf16.mxu0 0
      %5628 = vmatpush1.bf16.msra.mxu0 0
      %5629 = vmatprep.subr.bf16.mxu0 0
      %5630 = vmatpush1.bf16.msra.mxu0 0
      %5631 = vmatprep.subr.bf16.mxu0 0
      %5632 = vmatpush1.bf16.msra.mxu0 0
      %5633 = vmatprep.subr.bf16.mxu0 0
      %5634 = vmatpush1.bf16.msra.mxu0 0
      %5635 = vmatprep.subr.bf16.mxu0 0
      %5636 = vmatpush1.bf16.msra.mxu0 0
      %5637 = vmatprep.subr.bf16.mxu0 0
      %5638 = vmatpush1.bf16.msra.mxu0 0
      %5639 = vmatprep.mubr.bf16.mxu0 0
      %5640 = vmatmul.mubr.bf16.gmra.mrb[0].mxu0 %v5560
      %v5641 = vpop.f32.mrb[0].mxu0
      %v5642 = vadd.f32 0.0, %v5641
      %v5643 = vpop.f32.mrb[0].mxu0
      %v5644 = vpop.f32.mrb[0].mxu0
      %v5645 = vadd.f32 0.0, %v5644
      %v5646 = vpop.f32.mrb[0].mxu0
      %5647 = vmatprep.mubr.bf16.mxu0 0
      %5648 = vmatmul.mubr.bf16.gmra.mrb[0].mxu0 %v5563
      %v5649 = vpop.f32.mrb[0].mxu0
      %v5650 = vadd.f32 0.0, %v5649
      %v5651 = vpop.f32.mrb[0].mxu0
      %v5652 = vpop.f32.mrb[0].mxu0
      %v5653 = vadd.f32 0.0, %v5652
      %v5654 = vpop.f32.mrb[0].mxu0
      %5655 = vmatprep.mubr.bf16.mxu0 0
      %5656 = vmatmul.mubr.bf16.gmra.mrb[0].mxu0 %v5566
      %v5657 = vpop.f32.mrb[0].mxu0
      %v5658 = vadd.f32 0.0, %v5657
      %v5659 = vpop.f32.mrb[0].mxu0
      %v5660 = vpop.f32.mrb[0].mxu0
      %v5661 = vadd.f32 0.0, %v5660
      %v5662 = vpop.f32.mrb[0].mxu0
      %5663 = vmatprep.mubr.bf16.mxu0 0
      %5664 = vmatmul.mubr.bf16.gmra.mrb[0].mxu0 %v5569
      %v5665 = vpop.f32.mrb[0].mxu0
      %v5666 = vadd.f32 0.0, %v5665
      %v5667 = vpop.f32.mrb[0].mxu0
      %v5668 = vpop.f32.mrb[0].mxu0
      %v5669 = vadd.f32 0.0, %v5668
      %v5670 = vpop.f32.mrb[0].mxu0
      %5671 = vmatprep.mubr.bf16.mxu0 0
      %5672 = vmatmul.mubr.bf16.gmra.mrb[0].mxu0 %v5572
      %v5673 = vpop.f32.mrb[0].mxu0
      %v5674 = vadd.f32 0.0, %v5673
      %v5675 = vpop.f32.mrb[0].mxu0
      %v5676 = vpop.f32.mrb[0].mxu0
      %v5677 = vadd.f32 0.0, %v5676
      %v5678 = vpop.f32.mrb[0].mxu0
      %5679 = vmatprep.mubr.bf16.mxu0 0
      %5680 = vmatmul.mubr.bf16.gmra.mrb[0].mxu0 %v5575
      %v5681 = vpop.f32.mrb[0].mxu0
      %v5682 = vadd.f32 0.0, %v5681
      %v5683 = vpop.f32.mrb[0].mxu0
      %v5684 = vpop.f32.mrb[0].mxu0
      %v5685 = vadd.f32 0.0, %v5684
      %v5686 = vpop.f32.mrb[0].mxu0
      %5687 = vmatprep.mubr.bf16.mxu0 0
      %5688 = vmatmul.mubr.bf16.gmra.mrb[0].mxu0 %v5578
      %v5689 = vpop.f32.mrb[0].mxu0
      %v5690 = vadd.f32 0.0, %v5689
      %v5691 = vpop.f32.mrb[0].mxu0
      %v5692 = vpop.f32.mrb[0].mxu0
      %v5693 = vadd.f32 0.0, %v5692
      %v5694 = vpop.f32.mrb[0].mxu0
      %5695 = vmatprep.mubr.bf16.mxu0 0
      %5696 = vmatmul.mubr.bf16.gmra.mrb[0].mxu0 %v5581
      %v5697 = vpop.f32.mrb[0].mxu0
      %v5698 = vadd.f32 0.0, %v5697
      %v5699 = vpop.f32.mrb[0].mxu0
      %v5700 = vpop.f32.mrb[0].mxu0
      %v5701 = vadd.f32 0.0, %v5700
      %v5702 = vpop.f32.mrb[0].mxu0
      %5703 = vmatprep.mubr.bf16.mxu0 0
      %5704 = vmatmul.mubr.bf16.gmra.mrb[0].mxu0 %v5584
      %v5705 = vpop.f32.mrb[0].mxu0
      %v5706 = vadd.f32 0.0, %v5705
      %v5707 = vpop.f32.mrb[0].mxu0
      %v5708 = vpop.f32.mrb[0].mxu0
      %v5709 = vadd.f32 0.0, %v5708
      %v5710 = vpop.f32.mrb[0].mxu0
      %5711 = vmatprep.mubr.bf16.mxu0 0
      %5712 = vmatmul.mubr.bf16.gmra.mrb[0].mxu0 %v5587
      %v5713 = vpop.f32.mrb[0].mxu0
      %v5714 = vadd.f32 0.0, %v5713
      %v5715 = vpop.f32.mrb[0].mxu0
      %v5716 = vpop.f32.mrb[0].mxu0
      %v5717 = vadd.f32 0.0, %v5716
      %v5718 = vpop.f32.mrb[0].mxu0
      %5719 = vmatprep.mubr.bf16.mxu0 0
      %5720 = vmatmul.mubr.bf16.gmra.mrb[0].mxu0 %v5590
      %v5721 = vpop.f32.mrb[0].mxu0
      %v5722 = vadd.f32 0.0, %v5721
      %v5723 = vpop.f32.mrb[0].mxu0
      %v5724 = vpop.f32.mrb[0].mxu0
      %v5725 = vadd.f32 0.0, %v5724
      %v5726 = vpop.f32.mrb[0].mxu0
      %5727 = vmatprep.mubr.bf16.mxu0 0
      %5728 = vmatmul.mubr.bf16.gmra.mrb[0].mxu0 %v5593
      %v5729 = vpop.f32.mrb[0].mxu0
      %v5730 = vadd.f32 0.0, %v5729
      %v5731 = vpop.f32.mrb[0].mxu0
      %v5732 = vpop.f32.mrb[0].mxu0
      %v5733 = vadd.f32 0.0, %v5732
      %v5734 = vpop.f32.mrb[0].mxu0
      %5735 = vmatprep.mubr.bf16.mxu0 0
      %5736 = vmatmul.mubr.bf16.gmra.mrb[0].mxu0 %v5596
      %v5737 = vpop.f32.mrb[0].mxu0
      %v5738 = vadd.f32 0.0, %v5737
      %v5739 = vpop.f32.mrb[0].mxu0
      %v5740 = vpop.f32.mrb[0].mxu0
      %v5741 = vadd.f32 0.0, %v5740
      %v5742 = vpop.f32.mrb[0].mxu0
      %5743 = vmatprep.mubr.bf16.mxu0 0
      %5744 = vmatmul.mubr.bf16.gmra.mrb[0].mxu0 %v5599
      %v5745 = vpop.f32.mrb[0].mxu0
      %v5746 = vadd.f32 0.0, %v5745
      %v5747 = vpop.f32.mrb[0].mxu0
      %v5748 = vpop.f32.mrb[0].mxu0
      %v5749 = vadd.f32 0.0, %v5748
      %v5750 = vpop.f32.mrb[0].mxu0
      %5751 = vmatprep.mubr.bf16.mxu0 0
      %5752 = vmatmul.mubr.bf16.gmra.mrb[0].mxu0 %v5602
      %v5753 = vpop.f32.mrb[0].mxu0
      %v5754 = vadd.f32 0.0, %v5753
      %v5755 = vpop.f32.mrb[0].mxu0
      %v5756 = vpop.f32.mrb[0].mxu0
      %v5757 = vadd.f32 0.0, %v5756
      %v5758 = vpop.f32.mrb[0].mxu0
      %5759 = vmatprep.mubr.bf16.mxu0 0
      %5760 = vmatmul.mubr.bf16.gmra.mrb[0].mxu0 %v5605
      %v5761 = vpop.f32.mrb[0].mxu0
      %v5762 = vadd.f32 0.0, %v5761
      %v5763 = vpop.f32.mrb[0].mxu0
      %v5764 = vpop.f32.mrb[0].mxu0
      %v5765 = vadd.f32 0.0, %v5764
      %v5766 = vpop.f32.mrb[0].mxu0
      %5767 = vdwg.mxu0
      %v5768 = vadd.f32 %v5270, %v5642
      %v5769 = vadd.f32 %v5271, %v5645
      %v5770 = vadd.f32 %v5272, %v5650
      %v5771 = vadd.f32 %v5273, %v5653
      %v5772 = vadd.f32 %v5274, %v5658
      %v5773 = vadd.f32 %v5275, %v5661
      %v5774 = vadd.f32 %v5276, %v5666
      %v5775 = vadd.f32 %v5277, %v5669
      %v5776 = vadd.f32 %v5278, %v5674
      %v5777 = vadd.f32 %v5279, %v5677
      %v5778 = vadd.f32 %v5280, %v5682
      %v5779 = vadd.f32 %v5281, %v5685
      %v5780 = vadd.f32 %v5282, %v5690
      %v5781 = vadd.f32 %v5283, %v5693
      %v5782 = vadd.f32 %v5284, %v5698
      %v5783 = vadd.f32 %v5285, %v5701
      %v5784 = vadd.f32 %v5286, %v5706
      %v5785 = vadd.f32 %v5287, %v5709
      %v5786 = vadd.f32 %v5288, %v5714
      %v5787 = vadd.f32 %v5289, %v5717
      %v5788 = vadd.f32 %v5290, %v5722
      %v5789 = vadd.f32 %v5291, %v5725
      %v5790 = vadd.f32 %v5292, %v5730
      %v5791 = vadd.f32 %v5293, %v5733
      %v5792 = vadd.f32 %v5294, %v5738
      %v5793 = vadd.f32 %v5295, %v5741
      %v5794 = vadd.f32 %v5296, %v5746
      %v5795 = vadd.f32 %v5297, %v5749
      %v5796 = vadd.f32 %v5298, %v5754
      %v5797 = vadd.f32 %v5299, %v5757
      %v5798 = vadd.f32 %v5300, %v5762
      %v5799 = vadd.f32 %v5301, %v5765
      %v5801 = vlaneseq
      %v5802 = vshrl.u32 %v5801, 7
      %v5803 = vsub.s32 0, %v5802
      %v5804 = vrot.slane %v990, %v5803
      %v5806 = vadd.f32 %v5768, %v5804
      %v5807 = vadd.f32 %v5769, %v5804
      %v5808 = vadd.f32 %v5770, %v5804
      %v5809 = vadd.f32 %v5771, %v5804
      %v5810 = vadd.f32 %v5772, %v5804
      %v5811 = vadd.f32 %v5773, %v5804
      %v5812 = vadd.f32 %v5774, %v5804
      %v5813 = vadd.f32 %v5775, %v5804
      %v5814 = vadd.f32 %v5776, %v5804
      %v5815 = vadd.f32 %v5777, %v5804
      %v5816 = vadd.f32 %v5778, %v5804
      %v5817 = vadd.f32 %v5779, %v5804
      %v5818 = vadd.f32 %v5780, %v5804
      %v5819 = vadd.f32 %v5781, %v5804
      %v5820 = vadd.f32 %v5782, %v5804
      %v5821 = vadd.f32 %v5783, %v5804
      %v5822 = vadd.f32 %v5784, %v5804
      %v5823 = vadd.f32 %v5785, %v5804
      %v5824 = vadd.f32 %v5786, %v5804
      %v5825 = vadd.f32 %v5787, %v5804
      %v5826 = vadd.f32 %v5788, %v5804
      %v5827 = vadd.f32 %v5789, %v5804
      %v5828 = vadd.f32 %v5790, %v5804
      %v5829 = vadd.f32 %v5791, %v5804
      %v5830 = vadd.f32 %v5792, %v5804
      %v5831 = vadd.f32 %v5793, %v5804
      %v5832 = vadd.f32 %v5794, %v5804
      %v5833 = vadd.f32 %v5795, %v5804
      %v5834 = vadd.f32 %v5796, %v5804
      %v5835 = vadd.f32 %v5797, %v5804
      %v5836 = vadd.f32 %v5798, %v5804
      %v5837 = vadd.f32 %v5799, %v5804
      %v5838 = vtanh.pop %v5806
      %v5839 = vtanh.pop %v5807
      %v5840 = vtanh.pop %v5808
      %v5841 = vtanh.pop %v5809
      %v5842 = vtanh.pop %v5810
      %v5843 = vtanh.pop %v5811
      %v5844 = vtanh.pop %v5812
      %v5845 = vtanh.pop %v5813
      %v5846 = vtanh.pop %v5814
      %v5847 = vtanh.pop %v5815
      %v5848 = vtanh.pop %v5816
      %v5849 = vtanh.pop %v5817
      %v5850 = vtanh.pop %v5818
      %v5851 = vtanh.pop %v5819
      %v5852 = vtanh.pop %v5820
      %v5853 = vtanh.pop %v5821
      %v5854 = vtanh.pop %v5822
      %v5855 = vtanh.pop %v5823
      %v5856 = vtanh.pop %v5824
      %v5857 = vtanh.pop %v5825
      %v5858 = vtanh.pop %v5826
      %v5859 = vtanh.pop %v5827
      %v5860 = vtanh.pop %v5828
      %v5861 = vtanh.pop %v5829
      %v5862 = vtanh.pop %v5830
      %v5863 = vtanh.pop %v5831
      %v5864 = vtanh.pop %v5832
      %v5865 = vtanh.pop %v5833
      %v5866 = vtanh.pop %v5834
      %v5867 = vtanh.pop %v5835
      %v5868 = vtanh.pop %v5836
      %v5869 = vtanh.pop %v5837
      %vm5870 = vcmask 64512
      %5871 = vst.msk [vmem:[%s391] sm:$0xff] %vm5870, %v5838
      %5872 = vst.msk [vmem:[%s391 + $0x8] sm:$0xff] %vm5870, %v5839
      %5873 = vst.msk [vmem:[%s391 + $0x10] sm:$0xff] %vm5870, %v5840
      %5874 = vst.msk [vmem:[%s391 + $0x18] sm:$0xff] %vm5870, %v5841
      %5875 = vst.msk [vmem:[%s391 + $0x20] sm:$0xff] %vm5870, %v5842
      %5876 = vst.msk [vmem:[%s391 + $0x28] sm:$0xff] %vm5870, %v5843
      %5877 = vst.msk [vmem:[%s391 + $0x30] sm:$0xff] %vm5870, %v5844
      %5878 = vst.msk [vmem:[%s391 + $0x38] sm:$0xff] %vm5870, %v5845
      %5879 = vst.msk [vmem:[%s391 + $0x40] sm:$0xff] %vm5870, %v5846
      %5880 = vst.msk [vmem:[%s391 + $0x48] sm:$0xff] %vm5870, %v5847
      %5881 = vst.msk [vmem:[%s391 + $0x50] sm:$0xff] %vm5870, %v5848
      %5882 = vst.msk [vmem:[%s391 + $0x58] sm:$0xff] %vm5870, %v5849
      %5883 = vst.msk [vmem:[%s391 + $0x60] sm:$0xff] %vm5870, %v5850
      %5884 = vst.msk [vmem:[%s391 + $0x68] sm:$0xff] %vm5870, %v5851
      %5885 = vst.msk [vmem:[%s391 + $0x70] sm:$0xff] %vm5870, %v5852
      %5886 = vst.msk [vmem:[%s391 + $0x78] sm:$0xff] %vm5870, %v5853
      %5887 = vst.msk [vmem:[%s391 + $0x80] sm:$0xff] %vm5870, %v5854
      %5888 = vst.msk [vmem:[%s391 + $0x88] sm:$0xff] %vm5870, %v5855
      %5889 = vst.msk [vmem:[%s391 + $0x90] sm:$0xff] %vm5870, %v5856
      %5890 = vst.msk [vmem:[%s391 + $0x98] sm:$0xff] %vm5870, %v5857
      %5891 = vst.msk [vmem:[%s391 + $0xa0] sm:$0xff] %vm5870, %v5858
      %5892 = vst.msk [vmem:[%s391 + $0xa8] sm:$0xff] %vm5870, %v5859
      %5893 = vst.msk [vmem:[%s391 + $0xb0] sm:$0xff] %vm5870, %v5860
      %5894 = vst.msk [vmem:[%s391 + $0xb8] sm:$0xff] %vm5870, %v5861
      %5895 = vst.msk [vmem:[%s391 + $0xc0] sm:$0xff] %vm5870, %v5862
      %5896 = vst.msk [vmem:[%s391 + $0xc8] sm:$0xff] %vm5870, %v5863
      %5897 = vst.msk [vmem:[%s391 + $0xd0] sm:$0xff] %vm5870, %v5864
      %5898 = vst.msk [vmem:[%s391 + $0xd8] sm:$0xff] %vm5870, %v5865
      %5899 = vst.msk [vmem:[%s391 + $0xe0] sm:$0xff] %vm5870, %v5866
      %5900 = vst.msk [vmem:[%s391 + $0xe8] sm:$0xff] %vm5870, %v5867
      %5901 = vst.msk [vmem:[%s391 + $0xf0] sm:$0xff] %vm5870, %v5868
      %5902 = vst.msk [vmem:[%s391 + $0xf8] sm:$0xff] %vm5870, %v5869
      %s5903 = smul.u32 16, %s21
      %p5904 = scmp.lt.s32.totalorder %s20, 1
      %s5905 = scalar_select %p5904, %s20, 1
      %p5906 = scmp.lt.s32.totalorder %s5903, 15
      %s5907 = scalar_select %p5906, %s5903, 15
      %s5908 = smul.addr %s5907, 2
      %s5909 = smul.addr %s5905, 32
      %s5910 = sadd.s32 %s5908, %s5909
      %s5911 = smul.addr %s5910, 8
      %s5912 = scalar_lea.vmem %s5, %s5911
      // Predicated region
      $region49: #{vae_decoder_forward.5} parent=39 // pred_check
        %p5913 = pneg %p190
      $region50: #{vae_decoder_forward.5} parent=39 // pred_check_branch
        %5915 = sbr.rel (%p5913) target = $region52
      $region51: #{vae_decoder_forward.5} parent=39 // pred_region
        %s5916 = smul.u32 16, %s21
      $region52: #{vae_decoder_forward.5} parent=39 // pred_fallthru
        _
    $region40: #{vae_decoder_forward.5} parent=5 // pred_fallthru
      _
    %p5917 = scmp.le.s32.totalorder 2, %s11
    // Predicated region
    $region53: #{vae_decoder_forward.5} parent=5 // pred_check
      %p5918 = pneg %p5917
    $region54: #{vae_decoder_forward.5} parent=5 // pred_check_branch
      %5920 = sbr.rel (%p5918) target = $region56
    $region55: #{vae_decoder_forward.5} parent=5 // pred_region
      %s5921 = ssub.s32 %s11, 2
      // Predicated region
      $region57: #{vae_decoder_forward.5} parent=55 // pred_check
        %p5922 = pneg %p196
      $region58: #{vae_decoder_forward.5} parent=55 // pred_check_branch
        %5924 = sbr.rel (%p5922) target = $region60
      $region59: #{vae_decoder_forward.5} parent=55 // pred_region
        %s5925 = smul.u32 16, %s23
        %p5926 = scmp.lt.s32.totalorder %s22, 1
        %s5927 = scalar_select %p5926, %s22, 1
        %p5928 = scmp.lt.s32.totalorder %s5925, 15
        %s5929 = scalar_select %p5928, %s5925, 15
        %s5930 = smul.addr %s5929, 2
        %s5931 = smul.addr %s5927, 32
        %s5932 = sadd.s32 %s5930, %s5931
        %s5933 = smul.addr %s5932, 8
        %s5934 = scalar_lea.vmem %s5, %s5933
      $region60: #{vae_decoder_forward.5} parent=55 // pred_fallthru
        _
    $region56: #{vae_decoder_forward.5} parent=5 // pred_fallthru
      _
  $region6: #{vae_decoder_forward.5} parent=0 // loop_footer
    %s15 = sadd.s32 1, %s11
  $region7: #{vae_decoder_forward.5} parent=0 // loop_footer_branch
    %10 = sbr.rel target = $region3
  $region8: #{vae_decoder_forward.5} parent=0 // loop_exit
    _

</llo_original>
